<compile_context>
chip_gen: v5e
topology: v5e:2x2
jax: 0.10.0
libtpu: 0.0.40
codegen_flags: <defaults>
</compile_context>

<pallas_src>
import math

import jax
import jax.numpy as jnp
from jax import lax
from jax.experimental import pallas as pl
from jax.experimental.pallas import tpu as pltpu

# ----------------------------- config ---------------------------------------
D_MODEL = 32
NUM_HEADS = 4
HEAD_DIM = D_MODEL // NUM_HEADS
FFN_HIDDEN = 64
NUM_LAYERS = 2
MAX_SEQ = 8
BATCH = 2
EPS = 1e-5

START_TOKEN, END_TOKEN, PADDING_TOKEN = "<S>", "<E>", "<P>"
OBJ_TO_INDEX = {START_TOKEN: 0, END_TOKEN: 1, PADDING_TOKEN: 2,
                "a": 3, "b": 4, "c": 5, "d": 6, "e": 7}


# ----------------------------- Pallas kernel --------------------------------
def decoder_stack_kernel(x_ref, y_ref, smask_ref, cmask_ref,
                         w_proj_ref, b_proj_ref, w_ff2_ref, b_ff2_ref, ln_ref,
                         out_ref):
    """Whole decoder stack (all layers, all batch rows) in one grid-less call."""
    BS, D = y_ref.shape
    B = smask_ref.shape[0]
    S = BS // B
    L = w_proj_ref.shape[0]
    H = NUM_HEADS
    hd = D // H

    x2 = x_ref[...]                            # (B*S, D): encoder slab, reused by every layer

    def layer_norm(v, gamma, beta):
        mean = jnp.mean(v, axis=-1, keepdims=True)
        var = jnp.mean(jnp.square(v - mean), axis=-1, keepdims=True)
        return gamma * ((v - mean) * lax.rsqrt(var + EPS)) + beta

    def softmax(s):
        m = jnp.max(s, axis=-1, keepdims=True)
        e = jnp.exp(s - m)
        return e * pl.reciprocal(jnp.sum(e, axis=-1, keepdims=True), approx=True)

    def split_heads(rows):                     # (S, H*hd) head-major cols -> (H, S, hd)
        return jnp.stack([rows[:, h * hd:(h + 1) * hd] for h in range(H)], axis=0)

    def merge_heads(vals):                     # (H, S, hd) -> (S, H*hd) head-major cols
        return jnp.concatenate([vals[h] for h in range(H)], axis=1)

    def attention_core(q_all, k_all, v_all, mask_ref):
        # q_all/k_all/v_all: (B*S, D) slabs, head-major feature columns.
        # 1/sqrt(hd) is pre-folded into q_all (via Wq/bq at prep time).
        rows = []
        for b in range(B):                     # B=2: tiny static unroll; attention only
            r = slice(b * S, (b + 1) * S)
            q = split_heads(q_all[r, :])
            k = split_heads(k_all[r, :])
            v = split_heads(v_all[r, :])
            s = jnp.einsum("hqf,hkf->hqk", q, k,
                           preferred_element_type=jnp.float32)
            p = softmax(s + mask_ref[b][None, :, :])
            vals = jnp.einsum("hqk,hkf->hqf", p, v,
                              preferred_element_type=jnp.float32)
            rows.append(merge_heads(vals))
        return jnp.concatenate(rows, axis=0)   # (B*S, D): concat(heads) layout per row

    def layer_body(l, y2):
        # --- per-layer weight views from the packed operands ---------------------
        w_qkv = w_proj_ref[l, :, 0:3 * D]          # self-attn [q|k|v], head-major, q scaled
        w_ao = w_proj_ref[l, :, 3 * D:4 * D]       # self-attn output projection
        w_kv = w_proj_ref[l, :, 4 * D:6 * D]       # cross [k|v], head-major
        w_qc = w_proj_ref[l, :, 6 * D:7 * D]       # cross q (pre-scaled)
        w_co = w_proj_ref[l, :, 7 * D:8 * D]       # cross output projection
        w_ff1 = w_proj_ref[l, :, 8 * D:10 * D]
        b_qkv = b_proj_ref[l, :, 0:3 * D]
        b_ao = b_proj_ref[l, :, 3 * D:4 * D]
        b_kv = b_proj_ref[l, :, 4 * D:6 * D]
        b_qc = b_proj_ref[l, :, 6 * D:7 * D]
        b_co = b_proj_ref[l, :, 7 * D:8 * D]
        b_ff1 = b_proj_ref[l, :, 8 * D:10 * D]
        w_ff2 = w_ff2_ref[l]
        b_ff2 = b_ff2_ref[l]
        g1, be1 = ln_ref[l, 0:1, :], ln_ref[l, 1:2, :]
        g2, be2 = ln_ref[l, 2:3, :], ln_ref[l, 3:4, :]
        g3, be3 = ln_ref[l, 4:5, :], ln_ref[l, 5:6, :]

        def self_attn(t):
            # One fused QKV matmul on the whole (B*S, D) slab.
            qkv = jnp.dot(t, w_qkv, preferred_element_type=jnp.float32) + b_qkv
            attn = attention_core(qkv[:, 0:D], qkv[:, D:2 * D], qkv[:, 2 * D:3 * D],
                                  smask_ref)
            # One slab-level output projection (concat(heads) @ Wo).
            return jnp.dot(attn, w_ao, preferred_element_type=jnp.float32) + b_ao

        # --- self attention (applied twice, per reference) + add & norm ----------
        resid = y2
        t = self_attn(y2)
        t = self_attn(t)
        y2 = layer_norm(t + resid, g1, be1)

        # --- cross attention (q from decoder stream, kv from encoder) ------------
        resid = y2
        kv = jnp.dot(x2, w_kv, preferred_element_type=jnp.float32) + b_kv
        q = jnp.dot(y2, w_qc, preferred_element_type=jnp.float32) + b_qc
        attn = attention_core(q, kv[:, 0:D], kv[:, D:2 * D], cmask_ref)
        t = jnp.dot(attn, w_co, preferred_element_type=jnp.float32) + b_co
        y2 = layer_norm(t + resid, g2, be2)

        # --- position-wise feed forward ------------------------------------------
        resid = y2
        h1 = jnp.maximum(
            jnp.dot(y2, w_ff1, preferred_element_type=jnp.float32) + b_ff1, 0.0)
        t = jnp.dot(h1, w_ff2, preferred_element_type=jnp.float32) + b_ff2
        return layer_norm(t + resid, g3, be3)

    out_ref[...] = lax.fori_loop(0, L, layer_body, y_ref[...], unroll=True)


# ----------------------------- wrapper ---------------------------------------
def decoder_stack_pallas(x, y, smask, cmask, packed):
    B, S, D = y.shape
    operands = (x.reshape(B * S, D), y.reshape(B * S, D), smask, cmask,
                packed["w_proj"], packed["b_proj"], packed["w_ff2"],
                packed["b_ff2"], packed["ln"])
    out = pl.pallas_call(
        decoder_stack_kernel,
        out_shape=jax.ShapeDtypeStruct((B * S, D), jnp.float32),
        in_specs=[pl.BlockSpec(memory_space=pltpu.MemorySpace.VMEM)
                  for _ in operands],
        out_specs=pl.BlockSpec(memory_space=pltpu.MemorySpace.VMEM),
    )(*operands)
    return out.reshape(B, S, D)


def pack_layer_params(layers):
    """Pack per-layer weights into 5 stacked operands (one-time, pure JAX).

    Column layout of w_proj / b_proj (per layer, total 10*D columns):
      [ self q | self k | self v | self out | cross k | cross v | cross q
        | cross out | ffn1 ]
    q/k/v groups are reordered head-major, and 1/sqrt(head_dim) is folded into the
    self-attn and cross-attn q weights/biases.
    """
    H, hd, D = NUM_HEADS, HEAD_DIM, D_MODEL
    scale = 1.0 / math.sqrt(hd)
    w_proj, b_proj, w_ff2, b_ff2, ln = [], [], [], [], []
    for p in layers:
        qkv_w = p["qkv_w"].reshape(D, H, 3, hd)      # (in, head, {q,k,v}, feat)
        qkv_b = p["qkv_b"].reshape(H, 3, hd)
        wq_s = (qkv_w[:, :, 0, :] * scale).reshape(D, D)
        wk_s = qkv_w[:, :, 1, :].reshape(D, D)
        wv_s = qkv_w[:, :, 2, :].reshape(D, D)
        bq_s = (qkv_b[:, 0, :] * scale).reshape(1, D)
        bk_s = qkv_b[:, 1, :].reshape(1, D)
        bv_s = qkv_b[:, 2, :].reshape(1, D)
        kv_w = p["kv_w"].reshape(D, H, 2, hd)        # (in, head, {k,v}, feat)
        kv_b = p["kv_b"].reshape(H, 2, hd)
        wk_c = kv_w[:, :, 0, :].reshape(D, D)
        wv_c = kv_w[:, :, 1, :].reshape(D, D)
        bk_c = kv_b[:, 0, :].reshape(1, D)
        bv_c = kv_b[:, 1, :].reshape(1, D)
        w_proj.append(jnp.concatenate(
            [wq_s, wk_s, wv_s, p["ao_w"], wk_c, wv_c,
             p["q_w"] * scale, p["co_w"], p["ff1_w"]], axis=1))
        b_proj.append(jnp.concatenate(
            [bq_s, bk_s, bv_s, p["ao_b"], bk_c, bv_c,
             p["q_b"] * scale, p["co_b"], p["ff1_b"]], axis=1))
        w_ff2.append(p["ff2_w"])
        b_ff2.append(p["ff2_b"])
        ln.append(jnp.concatenate(
            [p["g1"], p["be1"], p["g2"], p["be2"], p["g3"], p["be3"]], axis=0))
    return dict(w_proj=jnp.stack(w_proj), b_proj=jnp.stack(b_proj),
                w_ff2=jnp.stack(w_ff2), b_ff2=jnp.stack(b_ff2),
                ln=jnp.stack(ln))


# ----------------------------- glue (non-kernel) ------------------------------
def positional_encoding(d_model, max_len):
    even_i = jnp.arange(0, d_model, 2, dtype=jnp.float32)
    denominator = jnp.power(10000.0, even_i / d_model)
    position = jnp.arange(max_len, dtype=jnp.float32).reshape(max_len, 1)
    even_pe = jnp.sin(position / denominator)
    odd_pe = jnp.cos(position / denominator)
    stacked = jnp.stack([even_pe, odd_pe], axis=2)
    return stacked.reshape(max_len, d_model)


def batch_tokenize(batch, start_token, end_token):
    # TODO(synk): string tokenization has no Pallas equivalent; done on host.
    out = []
    for obj in batch:
        ids = []
        for tok in list(obj):
            if tok == "":
                continue
            ids.append(OBJ_TO_INDEX.get(tok, 0))
        if start_token:
            ids.insert(0, OBJ_TO_INDEX[START_TOKEN])
        if end_token:
            ids.append(OBJ_TO_INDEX[END_TOKEN])
        while len(ids) < MAX_SEQ:
            ids.append(OBJ_TO_INDEX[PADDING_TOKEN])
        ids = ids[:MAX_SEQ]
        out.append(ids)
    return jnp.array(out, dtype=jnp.int32)


def init_params(key):
    def lin(k, din, dout, scale=0.05):
        kw, kb = jax.random.split(k)
        w = scale * jax.random.normal(kw, (din, dout), jnp.float32)
        b = scale * jax.random.normal(kb, (1, dout), jnp.float32)
        return w, b

    key, k_emb = jax.random.split(key)
    embedding = 0.05 * jax.random.normal(k_emb, (len(OBJ_TO_INDEX), D_MODEL), jnp.float32)

    layers = []
    for _ in range(NUM_LAYERS):
        key, *ks = jax.random.split(key, 8)
        qkv_w, qkv_b = lin(ks[0], D_MODEL, 3 * D_MODEL)
        ao_w, ao_b = lin(ks[1], D_MODEL, D_MODEL)
        kv_w, kv_b = lin(ks[2], D_MODEL, 2 * D_MODEL)
        q_w, q_b = lin(ks[3], D_MODEL, D_MODEL)
        co_w, co_b = lin(ks[4], D_MODEL, D_MODEL)
        ff1_w, ff1_b = lin(ks[5], D_MODEL, FFN_HIDDEN)
        ff2_w, ff2_b = lin(ks[6], FFN_HIDDEN, D_MODEL)
        ones = jnp.ones((1, D_MODEL), jnp.float32)
        zeros = jnp.zeros((1, D_MODEL), jnp.float32)
        layers.append(dict(
            qkv_w=qkv_w, qkv_b=qkv_b, ao_w=ao_w, ao_b=ao_b, g1=ones, be1=zeros,
            kv_w=kv_w, kv_b=kv_b, q_w=q_w, q_b=q_b, co_w=co_w, co_b=co_b,
            g2=ones, be2=zeros,
            ff1_w=ff1_w, ff1_b=ff1_b, ff2_w=ff2_w, ff2_b=ff2_b, g3=ones, be3=zeros))
    return dict(embedding=embedding, layers=layers)


@jax.jit
def _forward_jit(embedding, packed, tok, x, smask, cmask):
    # SentenceEmbedding: embed -> + positional encoding (dropout = identity).
    y = jnp.take(embedding, tok, axis=0) + positional_encoding(D_MODEL, MAX_SEQ)[None, :, :]
    # SequentialDecoder: whole stack fused into one Pallas kernel.
    return decoder_stack_pallas(x, y, smask, cmask, packed)


def decoder_forward(params, packed, x, y_batch, self_attention_mask,
                    cross_attention_mask, start_token=True, end_token=True):
    tok = batch_tokenize(y_batch, start_token, end_token)      # host-side
    return _forward_jit(params["embedding"], packed, tok, x,
                        self_attention_mask, cross_attention_mask)


# ----------------------------- pure-JAX reference ------------------------------
def _ref_layer_norm(v, gamma, beta):
    mean = jnp.mean(v, axis=-1, keepdims=True)
    var = jnp.mean((v - mean) ** 2, axis=-1, keepdims=True)
    return gamma * ((v - mean) / jnp.sqrt(var + EPS)) + beta


def _ref_self_attn(y, mask, p):
    B, S, D = y.shape
    H, hd = NUM_HEADS, HEAD_DIM
    qkv = y @ p["qkv_w"] + p["qkv_b"]
    qkv = qkv.reshape(B, S, H, 3 * hd).transpose(0, 2, 1, 3)
    q, k, v = qkv[..., :hd], qkv[..., hd:2 * hd], qkv[..., 2 * hd:]
    s = q @ jnp.swapaxes(k, -1, -2) / math.sqrt(hd) + mask[:, None]
    a = jax.nn.softmax(s, axis=-1)
    vals = (a @ v).transpose(0, 2, 1, 3).reshape(B, S, D)
    return vals @ p["ao_w"] + p["ao_b"]


def _ref_cross_attn(x, y, mask, p):
    B, S, D = y.shape
    H, hd = NUM_HEADS, HEAD_DIM
    kv = x @ p["kv_w"] + p["kv_b"]
    kv = kv.reshape(B, S, H, 2 * hd).transpose(0, 2, 1, 3)
    k, v = kv[..., :hd], kv[..., hd:]
    q = (y @ p["q_w"] + p["q_b"]).reshape(B, S, H, hd).transpose(0, 2, 1, 3)
    s = q @ jnp.swapaxes(k, -1, -2) / math.sqrt(hd) + mask[:, None]
    a = jax.nn.softmax(s, axis=-1)
    vals = (a @ v).transpose(0, 2, 1, 3).reshape(B, S, D)
    return vals @ p["co_w"] + p["co_b"]


def decoder_forward_ref(params, x, y, smask, cmask):
    for p in params["layers"]:
        resid = y
        y = _ref_self_attn(y, smask, p)
        y = _ref_self_attn(y, smask, p)
        y = _ref_layer_norm(y + resid, p["g1"], p["be1"])
        resid = y
        y = _ref_cross_attn(x, y, cmask, p)
        y = _ref_layer_norm(y + resid, p["g2"], p["be2"])
        resid = y
        h = jnp.maximum(y @ p["ff1_w"] + p["ff1_b"], 0.0)
        y = h @ p["ff2_w"] + p["ff2_b"]
        y = _ref_layer_norm(y + resid, p["g3"], p["be3"])
    return y


# ----------------------------- main -------------------------------------------
if __name__ == "__main__":
    key = jax.random.PRNGKey(0)
    key, kx = jax.random.split(key)

    params = init_params(key)
    packed = pack_layer_params(params["layers"])

    # Encoder output x : (B, S, D)
    x = jax.random.normal(kx, (BATCH, MAX_SEQ, D_MODEL), jnp.float32)

    # Decoder input as raw token sequences (strings), tokenized on host.
    y_batch = ["abcd", "bcdea"]

    # Additive masks: causal self-attention mask, zero cross-attention mask.
    causal = jnp.where(
        jnp.arange(MAX_SEQ)[:, None] >= jnp.arange(MAX_SEQ)[None, :], 0.0, -1e9
    ).astype(jnp.float32)
    self_attention_mask = jnp.broadcast_to(causal, (BATCH, MAX_SEQ, MAX_SEQ))
    cross_attention_mask = jnp.zeros((BATCH, MAX_SEQ, MAX_SEQ), jnp.float32)

    out = decoder_forward(params, packed, x, y_batch,
                          self_attention_mask, cross_attention_mask,
                          start_token=True, end_token=True)
    out = jax.block_until_ready(out)

    # Validate against a plain-JAX transcription of the PyTorch module.
    tok = batch_tokenize(y_batch, True, True)
    y_emb = jnp.take(params["embedding"], tok, axis=0) \
        + positional_encoding(D_MODEL, MAX_SEQ)[None, :, :]
    ref = decoder_forward_ref(params, x, y_emb,
                              self_attention_mask, cross_attention_mask)

    assert out.shape == (BATCH, MAX_SEQ, D_MODEL)
    assert bool(jnp.all(jnp.isfinite(out)))
    assert bool(jnp.allclose(out, ref, atol=3e-2, rtol=3e-2)), \
        float(jnp.max(jnp.abs(out - ref)))
    print("KERNEL_OK")
</pallas_src>

<mosaic_0001>
module attributes {stable_mosaic.version = 11 : i64} {
  func.func @decoder_stack_kernel(%arg0: memref<16x32xf32, #tpu.memory_space<vmem>>, %arg1: memref<16x32xf32, #tpu.memory_space<vmem>>, %arg2: memref<2x8x8xf32, #tpu.memory_space<vmem>>, %arg3: memref<2x8x8xf32, #tpu.memory_space<vmem>>, %arg4: memref<2x32x320xf32, #tpu.memory_space<vmem>>, %arg5: memref<2x1x320xf32, #tpu.memory_space<vmem>>, %arg6: memref<2x64x32xf32, #tpu.memory_space<vmem>>, %arg7: memref<2x1x32xf32, #tpu.memory_space<vmem>>, %arg8: memref<2x6x32xf32, #tpu.memory_space<vmem>>, %arg9: memref<16x32xf32, #tpu.memory_space<vmem>>) attributes {dimension_semantics = [], scalar_prefetch = 0 : i64, scratch_operands = 0 : i64, tpu.core_type = #tpu.core_type<tc>} {
    %c0 = arith.constant 0 : index
    %c0_0 = arith.constant 0 : index
    %0 = vector.load %arg0[%c0, %c0_0] : memref<16x32xf32, #tpu.memory_space<vmem>>, vector<16x32xf32>
    %c0_1 = arith.constant 0 : index
    %c0_2 = arith.constant 0 : index
    %1 = vector.load %arg1[%c0_1, %c0_2] : memref<16x32xf32, #tpu.memory_space<vmem>>, vector<16x32xf32>
    %c0_i32 = arith.constant 0 : i32
    %2 = arith.index_cast %c0_i32 : i32 to index
    %c0_3 = arith.constant 0 : index
    %c0_4 = arith.constant 0 : index
    %3 = vector.load %arg4[%2, %c0_3, %c0_4] : memref<2x32x320xf32, #tpu.memory_space<vmem>>, vector<1x32x96xf32>
    %4 = vector.shape_cast %3 : vector<1x32x96xf32> to vector<32x96xf32>
    %5 = arith.index_cast %c0_i32 : i32 to index
    %c0_5 = arith.constant 0 : index
    %c96 = arith.constant 96 : index
    %6 = vector.load %arg4[%5, %c0_5, %c96] : memref<2x32x320xf32, #tpu.memory_space<vmem>>, vector<1x32x32xf32>
    %7 = vector.shape_cast %6 : vector<1x32x32xf32> to vector<32x32xf32>
    %8 = arith.index_cast %c0_i32 : i32 to index
    %c0_6 = arith.constant 0 : index
    %c128 = arith.constant 128 : index
    %9 = vector.load %arg4[%8, %c0_6, %c128] : memref<2x32x320xf32, #tpu.memory_space<vmem>>, vector<1x32x64xf32>
    %10 = vector.shape_cast %9 : vector<1x32x64xf32> to vector<32x64xf32>
    %11 = arith.index_cast %c0_i32 : i32 to index
    %c0_7 = arith.constant 0 : index
    %c192 = arith.constant 192 : index
    %12 = vector.load %arg4[%11, %c0_7, %c192] : memref<2x32x320xf32, #tpu.memory_space<vmem>>, vector<1x32x32xf32>
    %13 = vector.shape_cast %12 : vector<1x32x32xf32> to vector<32x32xf32>
    %14 = arith.index_cast %c0_i32 : i32 to index
    %c0_8 = arith.constant 0 : index
    %c224 = arith.constant 224 : index
    %15 = vector.load %arg4[%14, %c0_8, %c224] : memref<2x32x320xf32, #tpu.memory_space<vmem>>, vector<1x32x32xf32>
    %16 = vector.shape_cast %15 : vector<1x32x32xf32> to vector<32x32xf32>
    %17 = arith.index_cast %c0_i32 : i32 to index
    %c0_9 = arith.constant 0 : index
    %c256 = arith.constant 256 : index
    %18 = vector.load %arg4[%17, %c0_9, %c256] : memref<2x32x320xf32, #tpu.memory_space<vmem>>, vector<1x32x64xf32>
    %19 = vector.shape_cast %18 : vector<1x32x64xf32> to vector<32x64xf32>
    %20 = arith.index_cast %c0_i32 : i32 to index
    %c0_10 = arith.constant 0 : index
    %c0_11 = arith.constant 0 : index
    %21 = vector.load %arg5[%20, %c0_10, %c0_11] : memref<2x1x320xf32, #tpu.memory_space<vmem>>, vector<1x1x96xf32>
    %22 = vector.shape_cast %21 : vector<1x1x96xf32> to vector<1x96xf32>
    %23 = arith.index_cast %c0_i32 : i32 to index
    %c0_12 = arith.constant 0 : index
    %c96_13 = arith.constant 96 : index
    %24 = vector.load %arg5[%23, %c0_12, %c96_13] : memref<2x1x320xf32, #tpu.memory_space<vmem>>, vector<1x1x32xf32>
    %25 = vector.shape_cast %24 : vector<1x1x32xf32> to vector<1x32xf32>
    %26 = arith.index_cast %c0_i32 : i32 to index
    %c0_14 = arith.constant 0 : index
    %c128_15 = arith.constant 128 : index
    %27 = vector.load %arg5[%26, %c0_14, %c128_15] : memref<2x1x320xf32, #tpu.memory_space<vmem>>, vector<1x1x64xf32>
    %28 = vector.shape_cast %27 : vector<1x1x64xf32> to vector<1x64xf32>
    %29 = arith.index_cast %c0_i32 : i32 to index
    %c0_16 = arith.constant 0 : index
    %c192_17 = arith.constant 192 : index
    %30 = vector.load %arg5[%29, %c0_16, %c192_17] : memref<2x1x320xf32, #tpu.memory_space<vmem>>, vector<1x1x32xf32>
    %31 = vector.shape_cast %30 : vector<1x1x32xf32> to vector<1x32xf32>
    %32 = arith.index_cast %c0_i32 : i32 to index
    %c0_18 = arith.constant 0 : index
    %c224_19 = arith.constant 224 : index
    %33 = vector.load %arg5[%32, %c0_18, %c224_19] : memref<2x1x320xf32, #tpu.memory_space<vmem>>, vector<1x1x32xf32>
    %34 = vector.shape_cast %33 : vector<1x1x32xf32> to vector<1x32xf32>
    %35 = arith.index_cast %c0_i32 : i32 to index
    %c0_20 = arith.constant 0 : index
    %c256_21 = arith.constant 256 : index
    %36 = vector.load %arg5[%35, %c0_20, %c256_21] : memref<2x1x320xf32, #tpu.memory_space<vmem>>, vector<1x1x64xf32>
    %37 = vector.shape_cast %36 : vector<1x1x64xf32> to vector<1x64xf32>
    %38 = arith.index_cast %c0_i32 : i32 to index
    %c0_22 = arith.constant 0 : index
    %c0_23 = arith.constant 0 : index
    %39 = vector.load %arg6[%38, %c0_22, %c0_23] : memref<2x64x32xf32, #tpu.memory_space<vmem>>, vector<1x64x32xf32>
    %40 = vector.shape_cast %39 : vector<1x64x32xf32> to vector<64x32xf32>
    %41 = arith.index_cast %c0_i32 : i32 to index
    %c0_24 = arith.constant 0 : index
    %c0_25 = arith.constant 0 : index
    %42 = vector.load %arg7[%41, %c0_24, %c0_25] : memref<2x1x32xf32, #tpu.memory_space<vmem>>, vector<1x1x32xf32>
    %43 = vector.shape_cast %42 : vector<1x1x32xf32> to vector<1x32xf32>
    %44 = arith.index_cast %c0_i32 : i32 to index
    %c0_26 = arith.constant 0 : index
    %c0_27 = arith.constant 0 : index
    %45 = vector.load %arg8[%44, %c0_26, %c0_27] : memref<2x6x32xf32, #tpu.memory_space<vmem>>, vector<1x1x32xf32>
    %46 = vector.shape_cast %45 : vector<1x1x32xf32> to vector<1x32xf32>
    %47 = arith.index_cast %c0_i32 : i32 to index
    %c1 = arith.constant 1 : index
    %c0_28 = arith.constant 0 : index
    %48 = vector.load %arg8[%47, %c1, %c0_28] : memref<2x6x32xf32, #tpu.memory_space<vmem>>, vector<1x1x32xf32>
    %49 = vector.shape_cast %48 : vector<1x1x32xf32> to vector<1x32xf32>
    %50 = arith.index_cast %c0_i32 : i32 to index
    %c2 = arith.constant 2 : index
    %c0_29 = arith.constant 0 : index
    %51 = vector.load %arg8[%50, %c2, %c0_29] : memref<2x6x32xf32, #tpu.memory_space<vmem>>, vector<1x1x32xf32>
    %52 = vector.shape_cast %51 : vector<1x1x32xf32> to vector<1x32xf32>
    %53 = arith.index_cast %c0_i32 : i32 to index
    %c3 = arith.constant 3 : index
    %c0_30 = arith.constant 0 : index
    %54 = vector.load %arg8[%53, %c3, %c0_30] : memref<2x6x32xf32, #tpu.memory_space<vmem>>, vector<1x1x32xf32>
    %55 = vector.shape_cast %54 : vector<1x1x32xf32> to vector<1x32xf32>
    %56 = arith.index_cast %c0_i32 : i32 to index
    %c4 = arith.constant 4 : index
    %c0_31 = arith.constant 0 : index
    %57 = vector.load %arg8[%56, %c4, %c0_31] : memref<2x6x32xf32, #tpu.memory_space<vmem>>, vector<1x1x32xf32>
    %58 = vector.shape_cast %57 : vector<1x1x32xf32> to vector<1x32xf32>
    %59 = arith.index_cast %c0_i32 : i32 to index
    %c5 = arith.constant 5 : index
    %c0_32 = arith.constant 0 : index
    %60 = vector.load %arg8[%59, %c5, %c0_32] : memref<2x6x32xf32, #tpu.memory_space<vmem>>, vector<1x1x32xf32>
    %61 = vector.shape_cast %60 : vector<1x1x32xf32> to vector<1x32xf32>
    %cst = arith.constant dense<0.000000e+00> : vector<16x96xf32>
    %62 = tpu.matmul %1, %4, %cst {dimension_numbers = #tpu.dot_dimension_numbers<[1], [0], [0], [1], [0, 0, 1, 1], [], []>} : vector<16x32xf32>, vector<32x96xf32>, vector<16x96xf32> -> vector<16x96xf32>
    %63 = vector.broadcast %22 : vector<1x96xf32> to vector<16x96xf32>
    %64 = arith.addf %62, %63 : vector<16x96xf32>
    %65 = vector.extract_strided_slice %64 {offsets = [0, 0], sizes = [16, 32], strides = [1, 1]} : vector<16x96xf32> to vector<16x32xf32>
    %66 = vector.extract_strided_slice %64 {offsets = [0, 32], sizes = [16, 32], strides = [1, 1]} : vector<16x96xf32> to vector<16x32xf32>
    %67 = vector.extract_strided_slice %64 {offsets = [0, 64], sizes = [16, 32], strides = [1, 1]} : vector<16x96xf32> to vector<16x32xf32>
    %68 = vector.extract_strided_slice %65 {offsets = [0, 0], sizes = [8, 32], strides = [1, 1]} : vector<16x32xf32> to vector<8x32xf32>
    %69 = vector.extract_strided_slice %68 {offsets = [0, 0], sizes = [8, 8], strides = [1, 1]} : vector<8x32xf32> to vector<8x8xf32>
    %70 = vector.extract_strided_slice %68 {offsets = [0, 8], sizes = [8, 8], strides = [1, 1]} : vector<8x32xf32> to vector<8x8xf32>
    %71 = vector.extract_strided_slice %68 {offsets = [0, 16], sizes = [8, 8], strides = [1, 1]} : vector<8x32xf32> to vector<8x8xf32>
    %72 = vector.extract_strided_slice %68 {offsets = [0, 24], sizes = [8, 8], strides = [1, 1]} : vector<8x32xf32> to vector<8x8xf32>
    %73 = vector.shape_cast %69 : vector<8x8xf32> to vector<1x8x8xf32>
    %74 = vector.shape_cast %70 : vector<8x8xf32> to vector<1x8x8xf32>
    %75 = vector.shape_cast %71 : vector<8x8xf32> to vector<1x8x8xf32>
    %76 = vector.shape_cast %72 : vector<8x8xf32> to vector<1x8x8xf32>
    %77 = tpu.concatenate %73, %74, %75, %76 in 0 : vector<1x8x8xf32>, vector<1x8x8xf32>, vector<1x8x8xf32>, vector<1x8x8xf32> -> vector<4x8x8xf32>
    %78 = vector.extract_strided_slice %66 {offsets = [0, 0], sizes = [8, 32], strides = [1, 1]} : vector<16x32xf32> to vector<8x32xf32>
    %79 = vector.extract_strided_slice %78 {offsets = [0, 0], sizes = [8, 8], strides = [1, 1]} : vector<8x32xf32> to vector<8x8xf32>
    %80 = vector.extract_strided_slice %78 {offsets = [0, 8], sizes = [8, 8], strides = [1, 1]} : vector<8x32xf32> to vector<8x8xf32>
    %81 = vector.extract_strided_slice %78 {offsets = [0, 16], sizes = [8, 8], strides = [1, 1]} : vector<8x32xf32> to vector<8x8xf32>
    %82 = vector.extract_strided_slice %78 {offsets = [0, 24], sizes = [8, 8], strides = [1, 1]} : vector<8x32xf32> to vector<8x8xf32>
    %83 = vector.shape_cast %79 : vector<8x8xf32> to vector<1x8x8xf32>
    %84 = vector.shape_cast %80 : vector<8x8xf32> to vector<1x8x8xf32>
    %85 = vector.shape_cast %81 : vector<8x8xf32> to vector<1x8x8xf32>
    %86 = vector.shape_cast %82 : vector<8x8xf32> to vector<1x8x8xf32>
    %87 = tpu.concatenate %83, %84, %85, %86 in 0 : vector<1x8x8xf32>, vector<1x8x8xf32>, vector<1x8x8xf32>, vector<1x8x8xf32> -> vector<4x8x8xf32>
    %88 = vector.extract_strided_slice %67 {offsets = [0, 0], sizes = [8, 32], strides = [1, 1]} : vector<16x32xf32> to vector<8x32xf32>
    %89 = vector.extract_strided_slice %88 {offsets = [0, 0], sizes = [8, 8], strides = [1, 1]} : vector<8x32xf32> to vector<8x8xf32>
    %90 = vector.extract_strided_slice %88 {offsets = [0, 8], sizes = [8, 8], strides = [1, 1]} : vector<8x32xf32> to vector<8x8xf32>
    %91 = vector.extract_strided_slice %88 {offsets = [0, 16], sizes = [8, 8], strides = [1, 1]} : vector<8x32xf32> to vector<8x8xf32>
    %92 = vector.extract_strided_slice %88 {offsets = [0, 24], sizes = [8, 8], strides = [1, 1]} : vector<8x32xf32> to vector<8x8xf32>
    %93 = vector.shape_cast %89 : vector<8x8xf32> to vector<1x8x8xf32>
    %94 = vector.shape_cast %90 : vector<8x8xf32> to vector<1x8x8xf32>
    %95 = vector.shape_cast %91 : vector<8x8xf32> to vector<1x8x8xf32>
    %96 = vector.shape_cast %92 : vector<8x8xf32> to vector<1x8x8xf32>
    %97 = tpu.concatenate %93, %94, %95, %96 in 0 : vector<1x8x8xf32>, vector<1x8x8xf32>, vector<1x8x8xf32>, vector<1x8x8xf32> -> vector<4x8x8xf32>
    "tpu.trace_start"() <{level = 10 : i32, message = "hqf,hkf->hqk"}> : () -> ()
    %cst_33 = arith.constant dense<0.000000e+00> : vector<4x8x8xf32>
    %98 = tpu.matmul %77, %87, %cst_33 {dimension_numbers = #tpu.dot_dimension_numbers<[2], [2], [1], [1], [0, 0, 0, 1, 1, 1], [0], [0]>} : vector<4x8x8xf32>, vector<4x8x8xf32>, vector<4x8x8xf32> -> vector<4x8x8xf32>
    "tpu.trace_stop"() : () -> ()
    %c0_34 = arith.constant 0 : index
    %c0_35 = arith.constant 0 : index
    %c0_36 = arith.constant 0 : index
    %99 = vector.load %arg2[%c0_34, %c0_35, %c0_36] : memref<2x8x8xf32, #tpu.memory_space<vmem>>, vector<1x8x8xf32>
    %100 = vector.shape_cast %99 : vector<1x8x8xf32> to vector<8x8xf32>
    %101 = vector.shape_cast %100 : vector<8x8xf32> to vector<1x8x8xf32>
    %102 = vector.broadcast %101 : vector<1x8x8xf32> to vector<4x8x8xf32>
    %103 = arith.addf %98, %102 : vector<4x8x8xf32>
    %cst_37 = arith.constant dense<0xFF800000> : vector<4x8xf32>
    %104 = vector.multi_reduction <maximumf>, %103, %cst_37 [2] : vector<4x8x8xf32> to vector<4x8xf32>
    %105 = vector.shape_cast %104 : vector<4x8xf32> to vector<4x8x1xf32>
    %106 = vector.broadcast %105 : vector<4x8x1xf32> to vector<4x8x8xf32>
    %107 = arith.subf %103, %106 : vector<4x8x8xf32>
    %108 = math.exp %107 : vector<4x8x8xf32>
    %cst_38 = arith.constant dense<0.000000e+00> : vector<4x8xf32>
    %109 = vector.multi_reduction <add>, %108, %cst_38 [2] : vector<4x8x8xf32> to vector<4x8xf32>
    %110 = vector.shape_cast %109 : vector<4x8xf32> to vector<4x8x1xf32>
    %111 = tpu.reciprocal %110 {approx = true} : vector<4x8x1xf32> -> vector<4x8x1xf32>
    %112 = vector.broadcast %111 : vector<4x8x1xf32> to vector<4x8x8xf32>
    %113 = arith.mulf %108, %112 : vector<4x8x8xf32>
    "tpu.trace_start"() <{level = 10 : i32, message = "hqk,hkf->hqf"}> : () -> ()
    %cst_39 = arith.constant dense<0.000000e+00> : vector<4x8x8xf32>
    %114 = tpu.matmul %113, %97, %cst_39 {dimension_numbers = #tpu.dot_dimension_numbers<[2], [1], [1], [2], [0, 0, 0, 1, 1, 2], [0], [0]>} : vector<4x8x8xf32>, vector<4x8x8xf32>, vector<4x8x8xf32> -> vector<4x8x8xf32>
    "tpu.trace_stop"() : () -> ()
    %115 = vector.extract_strided_slice %114 {offsets = [0, 0, 0], sizes = [1, 8, 8], strides = [1, 1, 1]} : vector<4x8x8xf32> to vector<1x8x8xf32>
    %116 = vector.shape_cast %115 : vector<1x8x8xf32> to vector<8x8xf32>
    %117 = vector.extract_strided_slice %114 {offsets = [1, 0, 0], sizes = [1, 8, 8], strides = [1, 1, 1]} : vector<4x8x8xf32> to vector<1x8x8xf32>
    %118 = vector.shape_cast %117 : vector<1x8x8xf32> to vector<8x8xf32>
    %119 = vector.extract_strided_slice %114 {offsets = [2, 0, 0], sizes = [1, 8, 8], strides = [1, 1, 1]} : vector<4x8x8xf32> to vector<1x8x8xf32>
    %120 = vector.shape_cast %119 : vector<1x8x8xf32> to vector<8x8xf32>
    %121 = vector.extract_strided_slice %114 {offsets = [3, 0, 0], sizes = [1, 8, 8], strides = [1, 1, 1]} : vector<4x8x8xf32> to vector<1x8x8xf32>
    %122 = vector.shape_cast %121 : vector<1x8x8xf32> to vector<8x8xf32>
    %123 = tpu.concatenate %116, %118, %120, %122 in 1 : vector<8x8xf32>, vector<8x8xf32>, vector<8x8xf32>, vector<8x8xf32> -> vector<8x32xf32>
    %124 = vector.extract_strided_slice %65 {offsets = [8, 0], sizes = [8, 32], strides = [1, 1]} : vector<16x32xf32> to vector<8x32xf32>
    %125 = vector.extract_strided_slice %124 {offsets = [0, 0], sizes = [8, 8], strides = [1, 1]} : vector<8x32xf32> to vector<8x8xf32>
    %126 = vector.extract_strided_slice %124 {offsets = [0, 8], sizes = [8, 8], strides = [1, 1]} : vector<8x32xf32> to vector<8x8xf32>
    %127 = vector.extract_strided_slice %124 {offsets = [0, 16], sizes = [8, 8], strides = [1, 1]} : vector<8x32xf32> to vector<8x8xf32>
    %128 = vector.extract_strided_slice %124 {offsets = [0, 24], sizes = [8, 8], strides = [1, 1]} : vector<8x32xf32> to vector<8x8xf32>
    %129 = vector.shape_cast %125 : vector<8x8xf32> to vector<1x8x8xf32>
    %130 = vector.shape_cast %126 : vector<8x8xf32> to vector<1x8x8xf32>
    %131 = vector.shape_cast %127 : vector<8x8xf32> to vector<1x8x8xf32>
    %132 = vector.shape_cast %128 : vector<8x8xf32> to vector<1x8x8xf32>
    %133 = tpu.concatenate %129, %130, %131, %132 in 0 : vector<1x8x8xf32>, vector<1x8x8xf32>, vector<1x8x8xf32>, vector<1x8x8xf32> -> vector<4x8x8xf32>
    %134 = vector.extract_strided_slice %66 {offsets = [8, 0], sizes = [8, 32], strides = [1, 1]} : vector<16x32xf32> to vector<8x32xf32>
    %135 = vector.extract_strided_slice %134 {offsets = [0, 0], sizes = [8, 8], strides = [1, 1]} : vector<8x32xf32> to vector<8x8xf32>
    %136 = vector.extract_strided_slice %134 {offsets = [0, 8], sizes = [8, 8], strides = [1, 1]} : vector<8x32xf32> to vector<8x8xf32>
    %137 = vector.extract_strided_slice %134 {offsets = [0, 16], sizes = [8, 8], strides = [1, 1]} : vector<8x32xf32> to vector<8x8xf32>
    %138 = vector.extract_strided_slice %134 {offsets = [0, 24], sizes = [8, 8], strides = [1, 1]} : vector<8x32xf32> to vector<8x8xf32>
    %139 = vector.shape_cast %135 : vector<8x8xf32> to vector<1x8x8xf32>
    %140 = vector.shape_cast %136 : vector<8x8xf32> to vector<1x8x8xf32>
    %141 = vector.shape_cast %137 : vector<8x8xf32> to vector<1x8x8xf32>
    %142 = vector.shape_cast %138 : vector<8x8xf32> to vector<1x8x8xf32>
    %143 = tpu.concatenate %139, %140, %141, %142 in 0 : vector<1x8x8xf32>, vector<1x8x8xf32>, vector<1x8x8xf32>, vector<1x8x8xf32> -> vector<4x8x8xf32>
    %144 = vector.extract_strided_slice %67 {offsets = [8, 0], sizes = [8, 32], strides = [1, 1]} : vector<16x32xf32> to vector<8x32xf32>
    %145 = vector.extract_strided_slice %144 {offsets = [0, 0], sizes = [8, 8], strides = [1, 1]} : vector<8x32xf32> to vector<8x8xf32>
    %146 = vector.extract_strided_slice %144 {offsets = [0, 8], sizes = [8, 8], strides = [1, 1]} : vector<8x32xf32> to vector<8x8xf32>
    %147 = vector.extract_strided_slice %144 {offsets = [0, 16], sizes = [8, 8], strides = [1, 1]} : vector<8x32xf32> to vector<8x8xf32>
    %148 = vector.extract_strided_slice %144 {offsets = [0, 24], sizes = [8, 8], strides = [1, 1]} : vector<8x32xf32> to vector<8x8xf32>
    %149 = vector.shape_cast %145 : vector<8x8xf32> to vector<1x8x8xf32>
    %150 = vector.shape_cast %146 : vector<8x8xf32> to vector<1x8x8xf32>
    %151 = vector.shape_cast %147 : vector<8x8xf32> to vector<1x8x8xf32>
    %152 = vector.shape_cast %148 : vector<8x8xf32> to vector<1x8x8xf32>
    %153 = tpu.concatenate %149, %150, %151, %152 in 0 : vector<1x8x8xf32>, vector<1x8x8xf32>, vector<1x8x8xf32>, vector<1x8x8xf32> -> vector<4x8x8xf32>
    "tpu.trace_start"() <{level = 10 : i32, message = "hqf,hkf->hqk"}> : () -> ()
    %cst_40 = arith.constant dense<0.000000e+00> : vector<4x8x8xf32>
    %154 = tpu.matmul %133, %143, %cst_40 {dimension_numbers = #tpu.dot_dimension_numbers<[2], [2], [1], [1], [0, 0, 0, 1, 1, 1], [0], [0]>} : vector<4x8x8xf32>, vector<4x8x8xf32>, vector<4x8x8xf32> -> vector<4x8x8xf32>
    "tpu.trace_stop"() : () -> ()
    %c1_41 = arith.constant 1 : index
    %c0_42 = arith.constant 0 : index
    %c0_43 = arith.constant 0 : index
    %155 = vector.load %arg2[%c1_41, %c0_42, %c0_43] : memref<2x8x8xf32, #tpu.memory_space<vmem>>, vector<1x8x8xf32>
    %156 = vector.shape_cast %155 : vector<1x8x8xf32> to vector<8x8xf32>
    %157 = vector.shape_cast %156 : vector<8x8xf32> to vector<1x8x8xf32>
    %158 = vector.broadcast %157 : vector<1x8x8xf32> to vector<4x8x8xf32>
    %159 = arith.addf %154, %158 : vector<4x8x8xf32>
    %cst_44 = arith.constant dense<0xFF800000> : vector<4x8xf32>
    %160 = vector.multi_reduction <maximumf>, %159, %cst_44 [2] : vector<4x8x8xf32> to vector<4x8xf32>
    %161 = vector.shape_cast %160 : vector<4x8xf32> to vector<4x8x1xf32>
    %162 = vector.broadcast %161 : vector<4x8x1xf32> to vector<4x8x8xf32>
    %163 = arith.subf %159, %162 : vector<4x8x8xf32>
    %164 = math.exp %163 : vector<4x8x8xf32>
    %cst_45 = arith.constant dense<0.000000e+00> : vector<4x8xf32>
    %165 = vector.multi_reduction <add>, %164, %cst_45 [2] : vector<4x8x8xf32> to vector<4x8xf32>
    %166 = vector.shape_cast %165 : vector<4x8xf32> to vector<4x8x1xf32>
    %167 = tpu.reciprocal %166 {approx = true} : vector<4x8x1xf32> -> vector<4x8x1xf32>
    %168 = vector.broadcast %167 : vector<4x8x1xf32> to vector<4x8x8xf32>
    %169 = arith.mulf %164, %168 : vector<4x8x8xf32>
    "tpu.trace_start"() <{level = 10 : i32, message = "hqk,hkf->hqf"}> : () -> ()
    %cst_46 = arith.constant dense<0.000000e+00> : vector<4x8x8xf32>
    %170 = tpu.matmul %169, %153, %cst_46 {dimension_numbers = #tpu.dot_dimension_numbers<[2], [1], [1], [2], [0, 0, 0, 1, 1, 2], [0], [0]>} : vector<4x8x8xf32>, vector<4x8x8xf32>, vector<4x8x8xf32> -> vector<4x8x8xf32>
    "tpu.trace_stop"() : () -> ()
    %171 = vector.extract_strided_slice %170 {offsets = [0, 0, 0], sizes = [1, 8, 8], strides = [1, 1, 1]} : vector<4x8x8xf32> to vector<1x8x8xf32>
    %172 = vector.shape_cast %171 : vector<1x8x8xf32> to vector<8x8xf32>
    %173 = vector.extract_strided_slice %170 {offsets = [1, 0, 0], sizes = [1, 8, 8], strides = [1, 1, 1]} : vector<4x8x8xf32> to vector<1x8x8xf32>
    %174 = vector.shape_cast %173 : vector<1x8x8xf32> to vector<8x8xf32>
    %175 = vector.extract_strided_slice %170 {offsets = [2, 0, 0], sizes = [1, 8, 8], strides = [1, 1, 1]} : vector<4x8x8xf32> to vector<1x8x8xf32>
    %176 = vector.shape_cast %175 : vector<1x8x8xf32> to vector<8x8xf32>
    %177 = vector.extract_strided_slice %170 {offsets = [3, 0, 0], sizes = [1, 8, 8], strides = [1, 1, 1]} : vector<4x8x8xf32> to vector<1x8x8xf32>
    %178 = vector.shape_cast %177 : vector<1x8x8xf32> to vector<8x8xf32>
    %179 = tpu.concatenate %172, %174, %176, %178 in 1 : vector<8x8xf32>, vector<8x8xf32>, vector<8x8xf32>, vector<8x8xf32> -> vector<8x32xf32>
    %180 = tpu.concatenate %123, %179 in 0 : vector<8x32xf32>, vector<8x32xf32> -> vector<16x32xf32>
    %cst_47 = arith.constant dense<0.000000e+00> : vector<16x32xf32>
    %181 = tpu.matmul %180, %7, %cst_47 {dimension_numbers = #tpu.dot_dimension_numbers<[1], [0], [0], [1], [0, 0, 1, 1], [], []>} : vector<16x32xf32>, vector<32x32xf32>, vector<16x32xf32> -> vector<16x32xf32>
    %182 = vector.broadcast %25 : vector<1x32xf32> to vector<16x32xf32>
    %183 = arith.addf %181, %182 : vector<16x32xf32>
    %cst_48 = arith.constant dense<0.000000e+00> : vector<16x96xf32>
    %184 = tpu.matmul %183, %4, %cst_48 {dimension_numbers = #tpu.dot_dimension_numbers<[1], [0], [0], [1], [0, 0, 1, 1], [], []>} : vector<16x32xf32>, vector<32x96xf32>, vector<16x96xf32> -> vector<16x96xf32>
    %185 = vector.broadcast %22 : vector<1x96xf32> to vector<16x96xf32>
    %186 = arith.addf %184, %185 : vector<16x96xf32>
    %187 = vector.extract_strided_slice %186 {offsets = [0, 0], sizes = [16, 32], strides = [1, 1]} : vector<16x96xf32> to vector<16x32xf32>
    %188 = vector.extract_strided_slice %186 {offsets = [0, 32], sizes = [16, 32], strides = [1, 1]} : vector<16x96xf32> to vector<16x32xf32>
    %189 = vector.extract_strided_slice %186 {offsets = [0, 64], sizes = [16, 32], strides = [1, 1]} : vector<16x96xf32> to vector<16x32xf32>
    %190 = vector.extract_strided_slice %187 {offsets = [0, 0], sizes = [8, 32], strides = [1, 1]} : vector<16x32xf32> to vector<8x32xf32>
    %191 = vector.extract_strided_slice %190 {offsets = [0, 0], sizes = [8, 8], strides = [1, 1]} : vector<8x32xf32> to vector<8x8xf32>
    %192 = vector.extract_strided_slice %190 {offsets = [0, 8], sizes = [8, 8], strides = [1, 1]} : vector<8x32xf32> to vector<8x8xf32>
    %193 = vector.extract_strided_slice %190 {offsets = [0, 16], sizes = [8, 8], strides = [1, 1]} : vector<8x32xf32> to vector<8x8xf32>
    %194 = vector.extract_strided_slice %190 {offsets = [0, 24], sizes = [8, 8], strides = [1, 1]} : vector<8x32xf32> to vector<8x8xf32>
    %195 = vector.shape_cast %191 : vector<8x8xf32> to vector<1x8x8xf32>
    %196 = vector.shape_cast %192 : vector<8x8xf32> to vector<1x8x8xf32>
    %197 = vector.shape_cast %193 : vector<8x8xf32> to vector<1x8x8xf32>
    %198 = vector.shape_cast %194 : vector<8x8xf32> to vector<1x8x8xf32>
    %199 = tpu.concatenate %195, %196, %197, %198 in 0 : vector<1x8x8xf32>, vector<1x8x8xf32>, vector<1x8x8xf32>, vector<1x8x8xf32> -> vector<4x8x8xf32>
    %200 = vector.extract_strided_slice %188 {offsets = [0, 0], sizes = [8, 32], strides = [1, 1]} : vector<16x32xf32> to vector<8x32xf32>
    %201 = vector.extract_strided_slice %200 {offsets = [0, 0], sizes = [8, 8], strides = [1, 1]} : vector<8x32xf32> to vector<8x8xf32>
    %202 = vector.extract_strided_slice %200 {offsets = [0, 8], sizes = [8, 8], strides = [1, 1]} : vector<8x32xf32> to vector<8x8xf32>
    %203 = vector.extract_strided_slice %200 {offsets = [0, 16], sizes = [8, 8], strides = [1, 1]} : vector<8x32xf32> to vector<8x8xf32>
    %204 = vector.extract_strided_slice %200 {offsets = [0, 24], sizes = [8, 8], strides = [1, 1]} : vector<8x32xf32> to vector<8x8xf32>
    %205 = vector.shape_cast %201 : vector<8x8xf32> to vector<1x8x8xf32>
    %206 = vector.shape_cast %202 : vector<8x8xf32> to vector<1x8x8xf32>
    %207 = vector.shape_cast %203 : vector<8x8xf32> to vector<1x8x8xf32>
    %208 = vector.shape_cast %204 : vector<8x8xf32> to vector<1x8x8xf32>
    %209 = tpu.concatenate %205, %206, %207, %208 in 0 : vector<1x8x8xf32>, vector<1x8x8xf32>, vector<1x8x8xf32>, vector<1x8x8xf32> -> vector<4x8x8xf32>
    %210 = vector.extract_strided_slice %189 {offsets = [0, 0], sizes = [8, 32], strides = [1, 1]} : vector<16x32xf32> to vector<8x32xf32>
    %211 = vector.extract_strided_slice %210 {offsets = [0, 0], sizes = [8, 8], strides = [1, 1]} : vector<8x32xf32> to vector<8x8xf32>
    %212 = vector.extract_strided_slice %210 {offsets = [0, 8], sizes = [8, 8], strides = [1, 1]} : vector<8x32xf32> to vector<8x8xf32>
    %213 = vector.extract_strided_slice %210 {offsets = [0, 16], sizes = [8, 8], strides = [1, 1]} : vector<8x32xf32> to vector<8x8xf32>
    %214 = vector.extract_strided_slice %210 {offsets = [0, 24], sizes = [8, 8], strides = [1, 1]} : vector<8x32xf32> to vector<8x8xf32>
    %215 = vector.shape_cast %211 : vector<8x8xf32> to vector<1x8x8xf32>
    %216 = vector.shape_cast %212 : vector<8x8xf32> to vector<1x8x8xf32>
    %217 = vector.shape_cast %213 : vector<8x8xf32> to vector<1x8x8xf32>
    %218 = vector.shape_cast %214 : vector<8x8xf32> to vector<1x8x8xf32>
    %219 = tpu.concatenate %215, %216, %217, %218 in 0 : vector<1x8x8xf32>, vector<1x8x8xf32>, vector<1x8x8xf32>, vector<1x8x8xf32> -> vector<4x8x8xf32>
    "tpu.trace_start"() <{level = 10 : i32, message = "hqf,hkf->hqk"}> : () -> ()
    %cst_49 = arith.constant dense<0.000000e+00> : vector<4x8x8xf32>
    %220 = tpu.matmul %199, %209, %cst_49 {dimension_numbers = #tpu.dot_dimension_numbers<[2], [2], [1], [1], [0, 0, 0, 1, 1, 1], [0], [0]>} : vector<4x8x8xf32>, vector<4x8x8xf32>, vector<4x8x8xf32> -> vector<4x8x8xf32>
    "tpu.trace_stop"() : () -> ()
    %c0_50 = arith.constant 0 : index
    %c0_51 = arith.constant 0 : index
    %c0_52 = arith.constant 0 : index
    %221 = vector.load %arg2[%c0_50, %c0_51, %c0_52] : memref<2x8x8xf32, #tpu.memory_space<vmem>>, vector<1x8x8xf32>
    %222 = vector.shape_cast %221 : vector<1x8x8xf32> to vector<8x8xf32>
    %223 = vector.shape_cast %222 : vector<8x8xf32> to vector<1x8x8xf32>
    %224 = vector.broadcast %223 : vector<1x8x8xf32> to vector<4x8x8xf32>
    %225 = arith.addf %220, %224 : vector<4x8x8xf32>
    %cst_53 = arith.constant dense<0xFF800000> : vector<4x8xf32>
    %226 = vector.multi_reduction <maximumf>, %225, %cst_53 [2] : vector<4x8x8xf32> to vector<4x8xf32>
    %227 = vector.shape_cast %226 : vector<4x8xf32> to vector<4x8x1xf32>
    %228 = vector.broadcast %227 : vector<4x8x1xf32> to vector<4x8x8xf32>
    %229 = arith.subf %225, %228 : vector<4x8x8xf32>
    %230 = math.exp %229 : vector<4x8x8xf32>
    %cst_54 = arith.constant dense<0.000000e+00> : vector<4x8xf32>
    %231 = vector.multi_reduction <add>, %230, %cst_54 [2] : vector<4x8x8xf32> to vector<4x8xf32>
    %232 = vector.shape_cast %231 : vector<4x8xf32> to vector<4x8x1xf32>
    %233 = tpu.reciprocal %232 {approx = true} : vector<4x8x1xf32> -> vector<4x8x1xf32>
    %234 = vector.broadcast %233 : vector<4x8x1xf32> to vector<4x8x8xf32>
    %235 = arith.mulf %230, %234 : vector<4x8x8xf32>
    "tpu.trace_start"() <{level = 10 : i32, message = "hqk,hkf->hqf"}> : () -> ()
    %cst_55 = arith.constant dense<0.000000e+00> : vector<4x8x8xf32>
    %236 = tpu.matmul %235, %219, %cst_55 {dimension_numbers = #tpu.dot_dimension_numbers<[2], [1], [1], [2], [0, 0, 0, 1, 1, 2], [0], [0]>} : vector<4x8x8xf32>, vector<4x8x8xf32>, vector<4x8x8xf32> -> vector<4x8x8xf32>
    "tpu.trace_stop"() : () -> ()
    %237 = vector.extract_strided_slice %236 {offsets = [0, 0, 0], sizes = [1, 8, 8], strides = [1, 1, 1]} : vector<4x8x8xf32> to vector<1x8x8xf32>
    %238 = vector.shape_cast %237 : vector<1x8x8xf32> to vector<8x8xf32>
    %239 = vector.extract_strided_slice %236 {offsets = [1, 0, 0], sizes = [1, 8, 8], strides = [1, 1, 1]} : vector<4x8x8xf32> to vector<1x8x8xf32>
    %240 = vector.shape_cast %239 : vector<1x8x8xf32> to vector<8x8xf32>
    %241 = vector.extract_strided_slice %236 {offsets = [2, 0, 0], sizes = [1, 8, 8], strides = [1, 1, 1]} : vector<4x8x8xf32> to vector<1x8x8xf32>
    %242 = vector.shape_cast %241 : vector<1x8x8xf32> to vector<8x8xf32>
    %243 = vector.extract_strided_slice %236 {offsets = [3, 0, 0], sizes = [1, 8, 8], strides = [1, 1, 1]} : vector<4x8x8xf32> to vector<1x8x8xf32>
    %244 = vector.shape_cast %243 : vector<1x8x8xf32> to vector<8x8xf32>
    %245 = tpu.concatenate %238, %240, %242, %244 in 1 : vector<8x8xf32>, vector<8x8xf32>, vector<8x8xf32>, vector<8x8xf32> -> vector<8x32xf32>
    %246 = vector.extract_strided_slice %187 {offsets = [8, 0], sizes = [8, 32], strides = [1, 1]} : vector<16x32xf32> to vector<8x32xf32>
    %247 = vector.extract_strided_slice %246 {offsets = [0, 0], sizes = [8, 8], strides = [1, 1]} : vector<8x32xf32> to vector<8x8xf32>
    %248 = vector.extract_strided_slice %246 {offsets = [0, 8], sizes = [8, 8], strides = [1, 1]} : vector<8x32xf32> to vector<8x8xf32>
    %249 = vector.extract_strided_slice %246 {offsets = [0, 16], sizes = [8, 8], strides = [1, 1]} : vector<8x32xf32> to vector<8x8xf32>
    %250 = vector.extract_strided_slice %246 {offsets = [0, 24], sizes = [8, 8], strides = [1, 1]} : vector<8x32xf32> to vector<8x8xf32>
    %251 = vector.shape_cast %247 : vector<8x8xf32> to vector<1x8x8xf32>
    %252 = vector.shape_cast %248 : vector<8x8xf32> to vector<1x8x8xf32>
    %253 = vector.shape_cast %249 : vector<8x8xf32> to vector<1x8x8xf32>
    %254 = vector.shape_cast %250 : vector<8x8xf32> to vector<1x8x8xf32>
    %255 = tpu.concatenate %251, %252, %253, %254 in 0 : vector<1x8x8xf32>, vector<1x8x8xf32>, vector<1x8x8xf32>, vector<1x8x8xf32> -> vector<4x8x8xf32>
    %256 = vector.extract_strided_slice %188 {offsets = [8, 0], sizes = [8, 32], strides = [1, 1]} : vector<16x32xf32> to vector<8x32xf32>
    %257 = vector.extract_strided_slice %256 {offsets = [0, 0], sizes = [8, 8], strides = [1, 1]} : vector<8x32xf32> to vector<8x8xf32>
    %258 = vector.extract_strided_slice %256 {offsets = [0, 8], sizes = [8, 8], strides = [1, 1]} : vector<8x32xf32> to vector<8x8xf32>
    %259 = vector.extract_strided_slice %256 {offsets = [0, 16], sizes = [8, 8], strides = [1, 1]} : vector<8x32xf32> to vector<8x8xf32>
    %260 = vector.extract_strided_slice %256 {offsets = [0, 24], sizes = [8, 8], strides = [1, 1]} : vector<8x32xf32> to vector<8x8xf32>
    %261 = vector.shape_cast %257 : vector<8x8xf32> to vector<1x8x8xf32>
    %262 = vector.shape_cast %258 : vector<8x8xf32> to vector<1x8x8xf32>
    %263 = vector.shape_cast %259 : vector<8x8xf32> to vector<1x8x8xf32>
    %264 = vector.shape_cast %260 : vector<8x8xf32> to vector<1x8x8xf32>
    %265 = tpu.concatenate %261, %262, %263, %264 in 0 : vector<1x8x8xf32>, vector<1x8x8xf32>, vector<1x8x8xf32>, vector<1x8x8xf32> -> vector<4x8x8xf32>
    %266 = vector.extract_strided_slice %189 {offsets = [8, 0], sizes = [8, 32], strides = [1, 1]} : vector<16x32xf32> to vector<8x32xf32>
    %267 = vector.extract_strided_slice %266 {offsets = [0, 0], sizes = [8, 8], strides = [1, 1]} : vector<8x32xf32> to vector<8x8xf32>
    %268 = vector.extract_strided_slice %266 {offsets = [0, 8], sizes = [8, 8], strides = [1, 1]} : vector<8x32xf32> to vector<8x8xf32>
    %269 = vector.extract_strided_slice %266 {offsets = [0, 16], sizes = [8, 8], strides = [1, 1]} : vector<8x32xf32> to vector<8x8xf32>
    %270 = vector.extract_strided_slice %266 {offsets = [0, 24], sizes = [8, 8], strides = [1, 1]} : vector<8x32xf32> to vector<8x8xf32>
    %271 = vector.shape_cast %267 : vector<8x8xf32> to vector<1x8x8xf32>
    %272 = vector.shape_cast %268 : vector<8x8xf32> to vector<1x8x8xf32>
    %273 = vector.shape_cast %269 : vector<8x8xf32> to vector<1x8x8xf32>
    %274 = vector.shape_cast %270 : vector<8x8xf32> to vector<1x8x8xf32>
    %275 = tpu.concatenate %271, %272, %273, %274 in 0 : vector<1x8x8xf32>, vector<1x8x8xf32>, vector<1x8x8xf32>, vector<1x8x8xf32> -> vector<4x8x8xf32>
    "tpu.trace_start"() <{level = 10 : i32, message = "hqf,hkf->hqk"}> : () -> ()
    %cst_56 = arith.constant dense<0.000000e+00> : vector<4x8x8xf32>
    %276 = tpu.matmul %255, %265, %cst_56 {dimension_numbers = #tpu.dot_dimension_numbers<[2], [2], [1], [1], [0, 0, 0, 1, 1, 1], [0], [0]>} : vector<4x8x8xf32>, vector<4x8x8xf32>, vector<4x8x8xf32> -> vector<4x8x8xf32>
    "tpu.trace_stop"() : () -> ()
    %c1_57 = arith.constant 1 : index
    %c0_58 = arith.constant 0 : index
    %c0_59 = arith.constant 0 : index
    %277 = vector.load %arg2[%c1_57, %c0_58, %c0_59] : memref<2x8x8xf32, #tpu.memory_space<vmem>>, vector<1x8x8xf32>
    %278 = vector.shape_cast %277 : vector<1x8x8xf32> to vector<8x8xf32>
    %279 = vector.shape_cast %278 : vector<8x8xf32> to vector<1x8x8xf32>
    %280 = vector.broadcast %279 : vector<1x8x8xf32> to vector<4x8x8xf32>
    %281 = arith.addf %276, %280 : vector<4x8x8xf32>
    %cst_60 = arith.constant dense<0xFF800000> : vector<4x8xf32>
    %282 = vector.multi_reduction <maximumf>, %281, %cst_60 [2] : vector<4x8x8xf32> to vector<4x8xf32>
    %283 = vector.shape_cast %282 : vector<4x8xf32> to vector<4x8x1xf32>
    %284 = vector.broadcast %283 : vector<4x8x1xf32> to vector<4x8x8xf32>
    %285 = arith.subf %281, %284 : vector<4x8x8xf32>
    %286 = math.exp %285 : vector<4x8x8xf32>
    %cst_61 = arith.constant dense<0.000000e+00> : vector<4x8xf32>
    %287 = vector.multi_reduction <add>, %286, %cst_61 [2] : vector<4x8x8xf32> to vector<4x8xf32>
    %288 = vector.shape_cast %287 : vector<4x8xf32> to vector<4x8x1xf32>
    %289 = tpu.reciprocal %288 {approx = true} : vector<4x8x1xf32> -> vector<4x8x1xf32>
    %290 = vector.broadcast %289 : vector<4x8x1xf32> to vector<4x8x8xf32>
    %291 = arith.mulf %286, %290 : vector<4x8x8xf32>
    "tpu.trace_start"() <{level = 10 : i32, message = "hqk,hkf->hqf"}> : () -> ()
    %cst_62 = arith.constant dense<0.000000e+00> : vector<4x8x8xf32>
    %292 = tpu.matmul %291, %275, %cst_62 {dimension_numbers = #tpu.dot_dimension_numbers<[2], [1], [1], [2], [0, 0, 0, 1, 1, 2], [0], [0]>} : vector<4x8x8xf32>, vector<4x8x8xf32>, vector<4x8x8xf32> -> vector<4x8x8xf32>
    "tpu.trace_stop"() : () -> ()
    %293 = vector.extract_strided_slice %292 {offsets = [0, 0, 0], sizes = [1, 8, 8], strides = [1, 1, 1]} : vector<4x8x8xf32> to vector<1x8x8xf32>
    %294 = vector.shape_cast %293 : vector<1x8x8xf32> to vector<8x8xf32>
    %295 = vector.extract_strided_slice %292 {offsets = [1, 0, 0], sizes = [1, 8, 8], strides = [1, 1, 1]} : vector<4x8x8xf32> to vector<1x8x8xf32>
    %296 = vector.shape_cast %295 : vector<1x8x8xf32> to vector<8x8xf32>
    %297 = vector.extract_strided_slice %292 {offsets = [2, 0, 0], sizes = [1, 8, 8], strides = [1, 1, 1]} : vector<4x8x8xf32> to vector<1x8x8xf32>
    %298 = vector.shape_cast %297 : vector<1x8x8xf32> to vector<8x8xf32>
    %299 = vector.extract_strided_slice %292 {offsets = [3, 0, 0], sizes = [1, 8, 8], strides = [1, 1, 1]} : vector<4x8x8xf32> to vector<1x8x8xf32>
    %300 = vector.shape_cast %299 : vector<1x8x8xf32> to vector<8x8xf32>
    %301 = tpu.concatenate %294, %296, %298, %300 in 1 : vector<8x8xf32>, vector<8x8xf32>, vector<8x8xf32>, vector<8x8xf32> -> vector<8x32xf32>
    %302 = tpu.concatenate %245, %301 in 0 : vector<8x32xf32>, vector<8x32xf32> -> vector<16x32xf32>
    %cst_63 = arith.constant dense<0.000000e+00> : vector<16x32xf32>
    %303 = tpu.matmul %302, %7, %cst_63 {dimension_numbers = #tpu.dot_dimension_numbers<[1], [0], [0], [1], [0, 0, 1, 1], [], []>} : vector<16x32xf32>, vector<32x32xf32>, vector<16x32xf32> -> vector<16x32xf32>
    %304 = vector.broadcast %25 : vector<1x32xf32> to vector<16x32xf32>
    %305 = arith.addf %303, %304 : vector<16x32xf32>
    %306 = arith.addf %305, %1 : vector<16x32xf32>
    %cst_64 = arith.constant dense<0.000000e+00> : vector<16xf32>
    %307 = vector.multi_reduction <add>, %306, %cst_64 [1] : vector<16x32xf32> to vector<16xf32>
    %308 = vector.shape_cast %307 : vector<16xf32> to vector<16x1xf32>
    %cst_65 = arith.constant 3.200000e+01 : f32
    %309 = vector.broadcast %cst_65 : f32 to vector<16x1xf32>
    %310 = arith.divf %308, %309 : vector<16x1xf32>
    %311 = vector.broadcast %310 : vector<16x1xf32> to vector<16x32xf32>
    %312 = arith.subf %306, %311 : vector<16x32xf32>
    %313 = arith.mulf %312, %312 : vector<16x32xf32>
    %cst_66 = arith.constant dense<0.000000e+00> : vector<16xf32>
    %314 = vector.multi_reduction <add>, %313, %cst_66 [1] : vector<16x32xf32> to vector<16xf32>
    %315 = vector.shape_cast %314 : vector<16xf32> to vector<16x1xf32>
    %cst_67 = arith.constant 3.200000e+01 : f32
    %316 = vector.broadcast %cst_67 : f32 to vector<16x1xf32>
    %317 = arith.divf %315, %316 : vector<16x1xf32>
    %318 = vector.broadcast %310 : vector<16x1xf32> to vector<16x32xf32>
    %319 = arith.subf %306, %318 : vector<16x32xf32>
    %cst_68 = arith.constant 9.99999974E-6 : f32
    %320 = vector.broadcast %cst_68 : f32 to vector<16x1xf32>
    %321 = arith.addf %317, %320 : vector<16x1xf32>
    %322 = math.rsqrt %321 : vector<16x1xf32>
    %323 = vector.broadcast %322 : vector<16x1xf32> to vector<16x32xf32>
    %324 = arith.mulf %319, %323 : vector<16x32xf32>
    %325 = vector.broadcast %46 : vector<1x32xf32> to vector<16x32xf32>
    %326 = arith.mulf %325, %324 : vector<16x32xf32>
    %327 = vector.broadcast %49 : vector<1x32xf32> to vector<16x32xf32>
    %328 = arith.addf %326, %327 : vector<16x32xf32>
    %cst_69 = arith.constant dense<0.000000e+00> : vector<16x64xf32>
    %329 = tpu.matmul %0, %10, %cst_69 {dimension_numbers = #tpu.dot_dimension_numbers<[1], [0], [0], [1], [0, 0, 1, 1], [], []>} : vector<16x32xf32>, vector<32x64xf32>, vector<16x64xf32> -> vector<16x64xf32>
    %330 = vector.broadcast %28 : vector<1x64xf32> to vector<16x64xf32>
    %331 = arith.addf %329, %330 : vector<16x64xf32>
    %cst_70 = arith.constant dense<0.000000e+00> : vector<16x32xf32>
    %332 = tpu.matmul %328, %13, %cst_70 {dimension_numbers = #tpu.dot_dimension_numbers<[1], [0], [0], [1], [0, 0, 1, 1], [], []>} : vector<16x32xf32>, vector<32x32xf32>, vector<16x32xf32> -> vector<16x32xf32>
    %333 = vector.broadcast %31 : vector<1x32xf32> to vector<16x32xf32>
    %334 = arith.addf %332, %333 : vector<16x32xf32>
    %335 = vector.extract_strided_slice %331 {offsets = [0, 0], sizes = [16, 32], strides = [1, 1]} : vector<16x64xf32> to vector<16x32xf32>
    %336 = vector.extract_strided_slice %331 {offsets = [0, 32], sizes = [16, 32], strides = [1, 1]} : vector<16x64xf32> to vector<16x32xf32>
    %337 = vector.extract_strided_slice %334 {offsets = [0, 0], sizes = [8, 32], strides = [1, 1]} : vector<16x32xf32> to vector<8x32xf32>
    %338 = vector.extract_strided_slice %337 {offsets = [0, 0], sizes = [8, 8], strides = [1, 1]} : vector<8x32xf32> to vector<8x8xf32>
    %339 = vector.extract_strided_slice %337 {offsets = [0, 8], sizes = [8, 8], strides = [1, 1]} : vector<8x32xf32> to vector<8x8xf32>
    %340 = vector.extract_strided_slice %337 {offsets = [0, 16], sizes = [8, 8], strides = [1, 1]} : vector<8x32xf32> to vector<8x8xf32>
    %341 = vector.extract_strided_slice %337 {offsets = [0, 24], sizes = [8, 8], strides = [1, 1]} : vector<8x32xf32> to vector<8x8xf32>
    %342 = vector.shape_cast %338 : vector<8x8xf32> to vector<1x8x8xf32>
    %343 = vector.shape_cast %339 : vector<8x8xf32> to vector<1x8x8xf32>
    %344 = vector.shape_cast %340 : vector<8x8xf32> to vector<1x8x8xf32>
    %345 = vector.shape_cast %341 : vector<8x8xf32> to vector<1x8x8xf32>
    %346 = tpu.concatenate %342, %343, %344, %345 in 0 : vector<1x8x8xf32>, vector<1x8x8xf32>, vector<1x8x8xf32>, vector<1x8x8xf32> -> vector<4x8x8xf32>
    %347 = vector.extract_strided_slice %335 {offsets = [0, 0], sizes = [8, 32], strides = [1, 1]} : vector<16x32xf32> to vector<8x32xf32>
    %348 = vector.extract_strided_slice %347 {offsets = [0, 0], sizes = [8, 8], strides = [1, 1]} : vector<8x32xf32> to vector<8x8xf32>
    %349 = vector.extract_strided_slice %347 {offsets = [0, 8], sizes = [8, 8], strides = [1, 1]} : vector<8x32xf32> to vector<8x8xf32>
    %350 = vector.extract_strided_slice %347 {offsets = [0, 16], sizes = [8, 8], strides = [1, 1]} : vector<8x32xf32> to vector<8x8xf32>
    %351 = vector.extract_strided_slice %347 {offsets = [0, 24], sizes = [8, 8], strides = [1, 1]} : vector<8x32xf32> to vector<8x8xf32>
    %352 = vector.shape_cast %348 : vector<8x8xf32> to vector<1x8x8xf32>
    %353 = vector.shape_cast %349 : vector<8x8xf32> to vector<1x8x8xf32>
    %354 = vector.shape_cast %350 : vector<8x8xf32> to vector<1x8x8xf32>
    %355 = vector.shape_cast %351 : vector<8x8xf32> to vector<1x8x8xf32>
    %356 = tpu.concatenate %352, %353, %354, %355 in 0 : vector<1x8x8xf32>, vector<1x8x8xf32>, vector<1x8x8xf32>, vector<1x8x8xf32> -> vector<4x8x8xf32>
    %357 = vector.extract_strided_slice %336 {offsets = [0, 0], sizes = [8, 32], strides = [1, 1]} : vector<16x32xf32> to vector<8x32xf32>
    %358 = vector.extract_strided_slice %357 {offsets = [0, 0], sizes = [8, 8], strides = [1, 1]} : vector<8x32xf32> to vector<8x8xf32>
    %359 = vector.extract_strided_slice %357 {offsets = [0, 8], sizes = [8, 8], strides = [1, 1]} : vector<8x32xf32> to vector<8x8xf32>
    %360 = vector.extract_strided_slice %357 {offsets = [0, 16], sizes = [8, 8], strides = [1, 1]} : vector<8x32xf32> to vector<8x8xf32>
    %361 = vector.extract_strided_slice %357 {offsets = [0, 24], sizes = [8, 8], strides = [1, 1]} : vector<8x32xf32> to vector<8x8xf32>
    %362 = vector.shape_cast %358 : vector<8x8xf32> to vector<1x8x8xf32>
    %363 = vector.shape_cast %359 : vector<8x8xf32> to vector<1x8x8xf32>
    %364 = vector.shape_cast %360 : vector<8x8xf32> to vector<1x8x8xf32>
    %365 = vector.shape_cast %361 : vector<8x8xf32> to vector<1x8x8xf32>
    %366 = tpu.concatenate %362, %363, %364, %365 in 0 : vector<1x8x8xf32>, vector<1x8x8xf32>, vector<1x8x8xf32>, vector<1x8x8xf32> -> vector<4x8x8xf32>
    "tpu.trace_start"() <{level = 10 : i32, message = "hqf,hkf->hqk"}> : () -> ()
    %cst_71 = arith.constant dense<0.000000e+00> : vector<4x8x8xf32>
    %367 = tpu.matmul %346, %356, %cst_71 {dimension_numbers = #tpu.dot_dimension_numbers<[2], [2], [1], [1], [0, 0, 0, 1, 1, 1], [0], [0]>} : vector<4x8x8xf32>, vector<4x8x8xf32>, vector<4x8x8xf32> -> vector<4x8x8xf32>
    "tpu.trace_stop"() : () -> ()
    %c0_72 = arith.constant 0 : index
    %c0_73 = arith.constant 0 : index
    %c0_74 = arith.constant 0 : index
    %368 = vector.load %arg3[%c0_72, %c0_73, %c0_74] : memref<2x8x8xf32, #tpu.memory_space<vmem>>, vector<1x8x8xf32>
    %369 = vector.shape_cast %368 : vector<1x8x8xf32> to vector<8x8xf32>
    %370 = vector.shape_cast %369 : vector<8x8xf32> to vector<1x8x8xf32>
    %371 = vector.broadcast %370 : vector<1x8x8xf32> to vector<4x8x8xf32>
    %372 = arith.addf %367, %371 : vector<4x8x8xf32>
    %cst_75 = arith.constant dense<0xFF800000> : vector<4x8xf32>
    %373 = vector.multi_reduction <maximumf>, %372, %cst_75 [2] : vector<4x8x8xf32> to vector<4x8xf32>
    %374 = vector.shape_cast %373 : vector<4x8xf32> to vector<4x8x1xf32>
    %375 = vector.broadcast %374 : vector<4x8x1xf32> to vector<4x8x8xf32>
    %376 = arith.subf %372, %375 : vector<4x8x8xf32>
    %377 = math.exp %376 : vector<4x8x8xf32>
    %cst_76 = arith.constant dense<0.000000e+00> : vector<4x8xf32>
    %378 = vector.multi_reduction <add>, %377, %cst_76 [2] : vector<4x8x8xf32> to vector<4x8xf32>
    %379 = vector.shape_cast %378 : vector<4x8xf32> to vector<4x8x1xf32>
    %380 = tpu.reciprocal %379 {approx = true} : vector<4x8x1xf32> -> vector<4x8x1xf32>
    %381 = vector.broadcast %380 : vector<4x8x1xf32> to vector<4x8x8xf32>
    %382 = arith.mulf %377, %381 : vector<4x8x8xf32>
    "tpu.trace_start"() <{level = 10 : i32, message = "hqk,hkf->hqf"}> : () -> ()
    %cst_77 = arith.constant dense<0.000000e+00> : vector<4x8x8xf32>
    %383 = tpu.matmul %382, %366, %cst_77 {dimension_numbers = #tpu.dot_dimension_numbers<[2], [1], [1], [2], [0, 0, 0, 1, 1, 2], [0], [0]>} : vector<4x8x8xf32>, vector<4x8x8xf32>, vector<4x8x8xf32> -> vector<4x8x8xf32>
    "tpu.trace_stop"() : () -> ()
    %384 = vector.extract_strided_slice %383 {offsets = [0, 0, 0], sizes = [1, 8, 8], strides = [1, 1, 1]} : vector<4x8x8xf32> to vector<1x8x8xf32>
    %385 = vector.shape_cast %384 : vector<1x8x8xf32> to vector<8x8xf32>
    %386 = vector.extract_strided_slice %383 {offsets = [1, 0, 0], sizes = [1, 8, 8], strides = [1, 1, 1]} : vector<4x8x8xf32> to vector<1x8x8xf32>
    %387 = vector.shape_cast %386 : vector<1x8x8xf32> to vector<8x8xf32>
    %388 = vector.extract_strided_slice %383 {offsets = [2, 0, 0], sizes = [1, 8, 8], strides = [1, 1, 1]} : vector<4x8x8xf32> to vector<1x8x8xf32>
    %389 = vector.shape_cast %388 : vector<1x8x8xf32> to vector<8x8xf32>
    %390 = vector.extract_strided_slice %383 {offsets = [3, 0, 0], sizes = [1, 8, 8], strides = [1, 1, 1]} : vector<4x8x8xf32> to vector<1x8x8xf32>
    %391 = vector.shape_cast %390 : vector<1x8x8xf32> to vector<8x8xf32>
    %392 = tpu.concatenate %385, %387, %389, %391 in 1 : vector<8x8xf32>, vector<8x8xf32>, vector<8x8xf32>, vector<8x8xf32> -> vector<8x32xf32>
    %393 = vector.extract_strided_slice %334 {offsets = [8, 0], sizes = [8, 32], strides = [1, 1]} : vector<16x32xf32> to vector<8x32xf32>
    %394 = vector.extract_strided_slice %393 {offsets = [0, 0], sizes = [8, 8], strides = [1, 1]} : vector<8x32xf32> to vector<8x8xf32>
    %395 = vector.extract_strided_slice %393 {offsets = [0, 8], sizes = [8, 8], strides = [1, 1]} : vector<8x32xf32> to vector<8x8xf32>
    %396 = vector.extract_strided_slice %393 {offsets = [0, 16], sizes = [8, 8], strides = [1, 1]} : vector<8x32xf32> to vector<8x8xf32>
    %397 = vector.extract_strided_slice %393 {offsets = [0, 24], sizes = [8, 8], strides = [1, 1]} : vector<8x32xf32> to vector<8x8xf32>
    %398 = vector.shape_cast %394 : vector<8x8xf32> to vector<1x8x8xf32>
    %399 = vector.shape_cast %395 : vector<8x8xf32> to vector<1x8x8xf32>
    %400 = vector.shape_cast %396 : vector<8x8xf32> to vector<1x8x8xf32>
    %401 = vector.shape_cast %397 : vector<8x8xf32> to vector<1x8x8xf32>
    %402 = tpu.concatenate %398, %399, %400, %401 in 0 : vector<1x8x8xf32>, vector<1x8x8xf32>, vector<1x8x8xf32>, vector<1x8x8xf32> -> vector<4x8x8xf32>
    %403 = vector.extract_strided_slice %335 {offsets = [8, 0], sizes = [8, 32], strides = [1, 1]} : vector<16x32xf32> to vector<8x32xf32>
    %404 = vector.extract_strided_slice %403 {offsets = [0, 0], sizes = [8, 8], strides = [1, 1]} : vector<8x32xf32> to vector<8x8xf32>
    %405 = vector.extract_strided_slice %403 {offsets = [0, 8], sizes = [8, 8], strides = [1, 1]} : vector<8x32xf32> to vector<8x8xf32>
    %406 = vector.extract_strided_slice %403 {offsets = [0, 16], sizes = [8, 8], strides = [1, 1]} : vector<8x32xf32> to vector<8x8xf32>
    %407 = vector.extract_strided_slice %403 {offsets = [0, 24], sizes = [8, 8], strides = [1, 1]} : vector<8x32xf32> to vector<8x8xf32>
    %408 = vector.shape_cast %404 : vector<8x8xf32> to vector<1x8x8xf32>
    %409 = vector.shape_cast %405 : vector<8x8xf32> to vector<1x8x8xf32>
    %410 = vector.shape_cast %406 : vector<8x8xf32> to vector<1x8x8xf32>
    %411 = vector.shape_cast %407 : vector<8x8xf32> to vector<1x8x8xf32>
    %412 = tpu.concatenate %408, %409, %410, %411 in 0 : vector<1x8x8xf32>, vector<1x8x8xf32>, vector<1x8x8xf32>, vector<1x8x8xf32> -> vector<4x8x8xf32>
    %413 = vector.extract_strided_slice %336 {offsets = [8, 0], sizes = [8, 32], strides = [1, 1]} : vector<16x32xf32> to vector<8x32xf32>
    %414 = vector.extract_strided_slice %413 {offsets = [0, 0], sizes = [8, 8], strides = [1, 1]} : vector<8x32xf32> to vector<8x8xf32>
    %415 = vector.extract_strided_slice %413 {offsets = [0, 8], sizes = [8, 8], strides = [1, 1]} : vector<8x32xf32> to vector<8x8xf32>
    %416 = vector.extract_strided_slice %413 {offsets = [0, 16], sizes = [8, 8], strides = [1, 1]} : vector<8x32xf32> to vector<8x8xf32>
    %417 = vector.extract_strided_slice %413 {offsets = [0, 24], sizes = [8, 8], strides = [1, 1]} : vector<8x32xf32> to vector<8x8xf32>
    %418 = vector.shape_cast %414 : vector<8x8xf32> to vector<1x8x8xf32>
    %419 = vector.shape_cast %415 : vector<8x8xf32> to vector<1x8x8xf32>
    %420 = vector.shape_cast %416 : vector<8x8xf32> to vector<1x8x8xf32>
    %421 = vector.shape_cast %417 : vector<8x8xf32> to vector<1x8x8xf32>
    %422 = tpu.concatenate %418, %419, %420, %421 in 0 : vector<1x8x8xf32>, vector<1x8x8xf32>, vector<1x8x8xf32>, vector<1x8x8xf32> -> vector<4x8x8xf32>
    "tpu.trace_start"() <{level = 10 : i32, message = "hqf,hkf->hqk"}> : () -> ()
    %cst_78 = arith.constant dense<0.000000e+00> : vector<4x8x8xf32>
    %423 = tpu.matmul %402, %412, %cst_78 {dimension_numbers = #tpu.dot_dimension_numbers<[2], [2], [1], [1], [0, 0, 0, 1, 1, 1], [0], [0]>} : vector<4x8x8xf32>, vector<4x8x8xf32>, vector<4x8x8xf32> -> vector<4x8x8xf32>
    "tpu.trace_stop"() : () -> ()
    %c1_79 = arith.constant 1 : index
    %c0_80 = arith.constant 0 : index
    %c0_81 = arith.constant 0 : index
    %424 = vector.load %arg3[%c1_79, %c0_80, %c0_81] : memref<2x8x8xf32, #tpu.memory_space<vmem>>, vector<1x8x8xf32>
    %425 = vector.shape_cast %424 : vector<1x8x8xf32> to vector<8x8xf32>
    %426 = vector.shape_cast %425 : vector<8x8xf32> to vector<1x8x8xf32>
    %427 = vector.broadcast %426 : vector<1x8x8xf32> to vector<4x8x8xf32>
    %428 = arith.addf %423, %427 : vector<4x8x8xf32>
    %cst_82 = arith.constant dense<0xFF800000> : vector<4x8xf32>
    %429 = vector.multi_reduction <maximumf>, %428, %cst_82 [2] : vector<4x8x8xf32> to vector<4x8xf32>
    %430 = vector.shape_cast %429 : vector<4x8xf32> to vector<4x8x1xf32>
    %431 = vector.broadcast %430 : vector<4x8x1xf32> to vector<4x8x8xf32>
    %432 = arith.subf %428, %431 : vector<4x8x8xf32>
    %433 = math.exp %432 : vector<4x8x8xf32>
    %cst_83 = arith.constant dense<0.000000e+00> : vector<4x8xf32>
    %434 = vector.multi_reduction <add>, %433, %cst_83 [2] : vector<4x8x8xf32> to vector<4x8xf32>
    %435 = vector.shape_cast %434 : vector<4x8xf32> to vector<4x8x1xf32>
    %436 = tpu.reciprocal %435 {approx = true} : vector<4x8x1xf32> -> vector<4x8x1xf32>
    %437 = vector.broadcast %436 : vector<4x8x1xf32> to vector<4x8x8xf32>
    %438 = arith.mulf %433, %437 : vector<4x8x8xf32>
    "tpu.trace_start"() <{level = 10 : i32, message = "hqk,hkf->hqf"}> : () -> ()
    %cst_84 = arith.constant dense<0.000000e+00> : vector<4x8x8xf32>
    %439 = tpu.matmul %438, %422, %cst_84 {dimension_numbers = #tpu.dot_dimension_numbers<[2], [1], [1], [2], [0, 0, 0, 1, 1, 2], [0], [0]>} : vector<4x8x8xf32>, vector<4x8x8xf32>, vector<4x8x8xf32> -> vector<4x8x8xf32>
    "tpu.trace_stop"() : () -> ()
    %440 = vector.extract_strided_slice %439 {offsets = [0, 0, 0], sizes = [1, 8, 8], strides = [1, 1, 1]} : vector<4x8x8xf32> to vector<1x8x8xf32>
    %441 = vector.shape_cast %440 : vector<1x8x8xf32> to vector<8x8xf32>
    %442 = vector.extract_strided_slice %439 {offsets = [1, 0, 0], sizes = [1, 8, 8], strides = [1, 1, 1]} : vector<4x8x8xf32> to vector<1x8x8xf32>
    %443 = vector.shape_cast %442 : vector<1x8x8xf32> to vector<8x8xf32>
    %444 = vector.extract_strided_slice %439 {offsets = [2, 0, 0], sizes = [1, 8, 8], strides = [1, 1, 1]} : vector<4x8x8xf32> to vector<1x8x8xf32>
    %445 = vector.shape_cast %444 : vector<1x8x8xf32> to vector<8x8xf32>
    %446 = vector.extract_strided_slice %439 {offsets = [3, 0, 0], sizes = [1, 8, 8], strides = [1, 1, 1]} : vector<4x8x8xf32> to vector<1x8x8xf32>
    %447 = vector.shape_cast %446 : vector<1x8x8xf32> to vector<8x8xf32>
    %448 = tpu.concatenate %441, %443, %445, %447 in 1 : vector<8x8xf32>, vector<8x8xf32>, vector<8x8xf32>, vector<8x8xf32> -> vector<8x32xf32>
    %449 = tpu.concatenate %392, %448 in 0 : vector<8x32xf32>, vector<8x32xf32> -> vector<16x32xf32>
    %cst_85 = arith.constant dense<0.000000e+00> : vector<16x32xf32>
    %450 = tpu.matmul %449, %16, %cst_85 {dimension_numbers = #tpu.dot_dimension_numbers<[1], [0], [0], [1], [0, 0, 1, 1], [], []>} : vector<16x32xf32>, vector<32x32xf32>, vector<16x32xf32> -> vector<16x32xf32>
    %451 = vector.broadcast %34 : vector<1x32xf32> to vector<16x32xf32>
    %452 = arith.addf %450, %451 : vector<16x32xf32>
    %453 = arith.addf %452, %328 : vector<16x32xf32>
    %cst_86 = arith.constant dense<0.000000e+00> : vector<16xf32>
    %454 = vector.multi_reduction <add>, %453, %cst_86 [1] : vector<16x32xf32> to vector<16xf32>
    %455 = vector.shape_cast %454 : vector<16xf32> to vector<16x1xf32>
    %cst_87 = arith.constant 3.200000e+01 : f32
    %456 = vector.broadcast %cst_87 : f32 to vector<16x1xf32>
    %457 = arith.divf %455, %456 : vector<16x1xf32>
    %458 = vector.broadcast %457 : vector<16x1xf32> to vector<16x32xf32>
    %459 = arith.subf %453, %458 : vector<16x32xf32>
    %460 = arith.mulf %459, %459 : vector<16x32xf32>
    %cst_88 = arith.constant dense<0.000000e+00> : vector<16xf32>
    %461 = vector.multi_reduction <add>, %460, %cst_88 [1] : vector<16x32xf32> to vector<16xf32>
    %462 = vector.shape_cast %461 : vector<16xf32> to vector<16x1xf32>
    %cst_89 = arith.constant 3.200000e+01 : f32
    %463 = vector.broadcast %cst_89 : f32 to vector<16x1xf32>
    %464 = arith.divf %462, %463 : vector<16x1xf32>
    %465 = vector.broadcast %457 : vector<16x1xf32> to vector<16x32xf32>
    %466 = arith.subf %453, %465 : vector<16x32xf32>
    %cst_90 = arith.constant 9.99999974E-6 : f32
    %467 = vector.broadcast %cst_90 : f32 to vector<16x1xf32>
    %468 = arith.addf %464, %467 : vector<16x1xf32>
    %469 = math.rsqrt %468 : vector<16x1xf32>
    %470 = vector.broadcast %469 : vector<16x1xf32> to vector<16x32xf32>
    %471 = arith.mulf %466, %470 : vector<16x32xf32>
    %472 = vector.broadcast %52 : vector<1x32xf32> to vector<16x32xf32>
    %473 = arith.mulf %472, %471 : vector<16x32xf32>
    %474 = vector.broadcast %55 : vector<1x32xf32> to vector<16x32xf32>
    %475 = arith.addf %473, %474 : vector<16x32xf32>
    %cst_91 = arith.constant dense<0.000000e+00> : vector<16x64xf32>
    %476 = tpu.matmul %475, %19, %cst_91 {dimension_numbers = #tpu.dot_dimension_numbers<[1], [0], [0], [1], [0, 0, 1, 1], [], []>} : vector<16x32xf32>, vector<32x64xf32>, vector<16x64xf32> -> vector<16x64xf32>
    %477 = vector.broadcast %37 : vector<1x64xf32> to vector<16x64xf32>
    %478 = arith.addf %476, %477 : vector<16x64xf32>
    %cst_92 = arith.constant 0.000000e+00 : f32
    %479 = vector.broadcast %cst_92 : f32 to vector<16x64xf32>
    %480 = arith.maximumf %478, %479 : vector<16x64xf32>
    %cst_93 = arith.constant dense<0.000000e+00> : vector<16x32xf32>
    %481 = tpu.matmul %480, %40, %cst_93 {dimension_numbers = #tpu.dot_dimension_numbers<[1], [0], [0], [1], [0, 0, 1, 1], [], []>} : vector<16x64xf32>, vector<64x32xf32>, vector<16x32xf32> -> vector<16x32xf32>
    %482 = vector.broadcast %43 : vector<1x32xf32> to vector<16x32xf32>
    %483 = arith.addf %481, %482 : vector<16x32xf32>
    %484 = arith.addf %483, %475 : vector<16x32xf32>
    %cst_94 = arith.constant dense<0.000000e+00> : vector<16xf32>
    %485 = vector.multi_reduction <add>, %484, %cst_94 [1] : vector<16x32xf32> to vector<16xf32>
    %486 = vector.shape_cast %485 : vector<16xf32> to vector<16x1xf32>
    %cst_95 = arith.constant 3.200000e+01 : f32
    %487 = vector.broadcast %cst_95 : f32 to vector<16x1xf32>
    %488 = arith.divf %486, %487 : vector<16x1xf32>
    %489 = vector.broadcast %488 : vector<16x1xf32> to vector<16x32xf32>
    %490 = arith.subf %484, %489 : vector<16x32xf32>
    %491 = arith.mulf %490, %490 : vector<16x32xf32>
    %cst_96 = arith.constant dense<0.000000e+00> : vector<16xf32>
    %492 = vector.multi_reduction <add>, %491, %cst_96 [1] : vector<16x32xf32> to vector<16xf32>
    %493 = vector.shape_cast %492 : vector<16xf32> to vector<16x1xf32>
    %cst_97 = arith.constant 3.200000e+01 : f32
    %494 = vector.broadcast %cst_97 : f32 to vector<16x1xf32>
    %495 = arith.divf %493, %494 : vector<16x1xf32>
    %496 = vector.broadcast %488 : vector<16x1xf32> to vector<16x32xf32>
    %497 = arith.subf %484, %496 : vector<16x32xf32>
    %cst_98 = arith.constant 9.99999974E-6 : f32
    %498 = vector.broadcast %cst_98 : f32 to vector<16x1xf32>
    %499 = arith.addf %495, %498 : vector<16x1xf32>
    %500 = math.rsqrt %499 : vector<16x1xf32>
    %501 = vector.broadcast %500 : vector<16x1xf32> to vector<16x32xf32>
    %502 = arith.mulf %497, %501 : vector<16x32xf32>
    %503 = vector.broadcast %58 : vector<1x32xf32> to vector<16x32xf32>
    %504 = arith.mulf %503, %502 : vector<16x32xf32>
    %505 = vector.broadcast %61 : vector<1x32xf32> to vector<16x32xf32>
    %506 = arith.addf %504, %505 : vector<16x32xf32>
    %c1_i32 = arith.constant 1 : i32
    %507 = arith.index_cast %c1_i32 : i32 to index
    %c0_99 = arith.constant 0 : index
    %c0_100 = arith.constant 0 : index
    %508 = vector.load %arg4[%507, %c0_99, %c0_100] : memref<2x32x320xf32, #tpu.memory_space<vmem>>, vector<1x32x96xf32>
    %509 = vector.shape_cast %508 : vector<1x32x96xf32> to vector<32x96xf32>
    %510 = arith.index_cast %c1_i32 : i32 to index
    %c0_101 = arith.constant 0 : index
    %c96_102 = arith.constant 96 : index
    %511 = vector.load %arg4[%510, %c0_101, %c96_102] : memref<2x32x320xf32, #tpu.memory_space<vmem>>, vector<1x32x32xf32>
    %512 = vector.shape_cast %511 : vector<1x32x32xf32> to vector<32x32xf32>
    %513 = arith.index_cast %c1_i32 : i32 to index
    %c0_103 = arith.constant 0 : index
    %c128_104 = arith.constant 128 : index
    %514 = vector.load %arg4[%513, %c0_103, %c128_104] : memref<2x32x320xf32, #tpu.memory_space<vmem>>, vector<1x32x64xf32>
    %515 = vector.shape_cast %514 : vector<1x32x64xf32> to vector<32x64xf32>
    %516 = arith.index_cast %c1_i32 : i32 to index
    %c0_105 = arith.constant 0 : index
    %c192_106 = arith.constant 192 : index
    %517 = vector.load %arg4[%516, %c0_105, %c192_106] : memref<2x32x320xf32, #tpu.memory_space<vmem>>, vector<1x32x32xf32>
    %518 = vector.shape_cast %517 : vector<1x32x32xf32> to vector<32x32xf32>
    %519 = arith.index_cast %c1_i32 : i32 to index
    %c0_107 = arith.constant 0 : index
    %c224_108 = arith.constant 224 : index
    %520 = vector.load %arg4[%519, %c0_107, %c224_108] : memref<2x32x320xf32, #tpu.memory_space<vmem>>, vector<1x32x32xf32>
    %521 = vector.shape_cast %520 : vector<1x32x32xf32> to vector<32x32xf32>
    %522 = arith.index_cast %c1_i32 : i32 to index
    %c0_109 = arith.constant 0 : index
    %c256_110 = arith.constant 256 : index
    %523 = vector.load %arg4[%522, %c0_109, %c256_110] : memref<2x32x320xf32, #tpu.memory_space<vmem>>, vector<1x32x64xf32>
    %524 = vector.shape_cast %523 : vector<1x32x64xf32> to vector<32x64xf32>
    %525 = arith.index_cast %c1_i32 : i32 to index
    %c0_111 = arith.constant 0 : index
    %c0_112 = arith.constant 0 : index
    %526 = vector.load %arg5[%525, %c0_111, %c0_112] : memref<2x1x320xf32, #tpu.memory_space<vmem>>, vector<1x1x96xf32>
    %527 = vector.shape_cast %526 : vector<1x1x96xf32> to vector<1x96xf32>
    %528 = arith.index_cast %c1_i32 : i32 to index
    %c0_113 = arith.constant 0 : index
    %c96_114 = arith.constant 96 : index
    %529 = vector.load %arg5[%528, %c0_113, %c96_114] : memref<2x1x320xf32, #tpu.memory_space<vmem>>, vector<1x1x32xf32>
    %530 = vector.shape_cast %529 : vector<1x1x32xf32> to vector<1x32xf32>
    %531 = arith.index_cast %c1_i32 : i32 to index
    %c0_115 = arith.constant 0 : index
    %c128_116 = arith.constant 128 : index
    %532 = vector.load %arg5[%531, %c0_115, %c128_116] : memref<2x1x320xf32, #tpu.memory_space<vmem>>, vector<1x1x64xf32>
    %533 = vector.shape_cast %532 : vector<1x1x64xf32> to vector<1x64xf32>
    %534 = arith.index_cast %c1_i32 : i32 to index
    %c0_117 = arith.constant 0 : index
    %c192_118 = arith.constant 192 : index
    %535 = vector.load %arg5[%534, %c0_117, %c192_118] : memref<2x1x320xf32, #tpu.memory_space<vmem>>, vector<1x1x32xf32>
    %536 = vector.shape_cast %535 : vector<1x1x32xf32> to vector<1x32xf32>
    %537 = arith.index_cast %c1_i32 : i32 to index
    %c0_119 = arith.constant 0 : index
    %c224_120 = arith.constant 224 : index
    %538 = vector.load %arg5[%537, %c0_119, %c224_120] : memref<2x1x320xf32, #tpu.memory_space<vmem>>, vector<1x1x32xf32>
    %539 = vector.shape_cast %538 : vector<1x1x32xf32> to vector<1x32xf32>
    %540 = arith.index_cast %c1_i32 : i32 to index
    %c0_121 = arith.constant 0 : index
    %c256_122 = arith.constant 256 : index
    %541 = vector.load %arg5[%540, %c0_121, %c256_122] : memref<2x1x320xf32, #tpu.memory_space<vmem>>, vector<1x1x64xf32>
    %542 = vector.shape_cast %541 : vector<1x1x64xf32> to vector<1x64xf32>
    %543 = arith.index_cast %c1_i32 : i32 to index
    %c0_123 = arith.constant 0 : index
    %c0_124 = arith.constant 0 : index
    %544 = vector.load %arg6[%543, %c0_123, %c0_124] : memref<2x64x32xf32, #tpu.memory_space<vmem>>, vector<1x64x32xf32>
    %545 = vector.shape_cast %544 : vector<1x64x32xf32> to vector<64x32xf32>
    %546 = arith.index_cast %c1_i32 : i32 to index
    %c0_125 = arith.constant 0 : index
    %c0_126 = arith.constant 0 : index
    %547 = vector.load %arg7[%546, %c0_125, %c0_126] : memref<2x1x32xf32, #tpu.memory_space<vmem>>, vector<1x1x32xf32>
    %548 = vector.shape_cast %547 : vector<1x1x32xf32> to vector<1x32xf32>
    %549 = arith.index_cast %c1_i32 : i32 to index
    %c0_127 = arith.constant 0 : index
    %c0_128 = arith.constant 0 : index
    %550 = vector.load %arg8[%549, %c0_127, %c0_128] : memref<2x6x32xf32, #tpu.memory_space<vmem>>, vector<1x1x32xf32>
    %551 = vector.shape_cast %550 : vector<1x1x32xf32> to vector<1x32xf32>
    %552 = arith.index_cast %c1_i32 : i32 to index
    %c1_129 = arith.constant 1 : index
    %c0_130 = arith.constant 0 : index
    %553 = vector.load %arg8[%552, %c1_129, %c0_130] : memref<2x6x32xf32, #tpu.memory_space<vmem>>, vector<1x1x32xf32>
    %554 = vector.shape_cast %553 : vector<1x1x32xf32> to vector<1x32xf32>
    %555 = arith.index_cast %c1_i32 : i32 to index
    %c2_131 = arith.constant 2 : index
    %c0_132 = arith.constant 0 : index
    %556 = vector.load %arg8[%555, %c2_131, %c0_132] : memref<2x6x32xf32, #tpu.memory_space<vmem>>, vector<1x1x32xf32>
    %557 = vector.shape_cast %556 : vector<1x1x32xf32> to vector<1x32xf32>
    %558 = arith.index_cast %c1_i32 : i32 to index
    %c3_133 = arith.constant 3 : index
    %c0_134 = arith.constant 0 : index
    %559 = vector.load %arg8[%558, %c3_133, %c0_134] : memref<2x6x32xf32, #tpu.memory_space<vmem>>, vector<1x1x32xf32>
    %560 = vector.shape_cast %559 : vector<1x1x32xf32> to vector<1x32xf32>
    %561 = arith.index_cast %c1_i32 : i32 to index
    %c4_135 = arith.constant 4 : index
    %c0_136 = arith.constant 0 : index
    %562 = vector.load %arg8[%561, %c4_135, %c0_136] : memref<2x6x32xf32, #tpu.memory_space<vmem>>, vector<1x1x32xf32>
    %563 = vector.shape_cast %562 : vector<1x1x32xf32> to vector<1x32xf32>
    %564 = arith.index_cast %c1_i32 : i32 to index
    %c5_137 = arith.constant 5 : index
    %c0_138 = arith.constant 0 : index
    %565 = vector.load %arg8[%564, %c5_137, %c0_138] : memref<2x6x32xf32, #tpu.memory_space<vmem>>, vector<1x1x32xf32>
    %566 = vector.shape_cast %565 : vector<1x1x32xf32> to vector<1x32xf32>
    %cst_139 = arith.constant dense<0.000000e+00> : vector<16x96xf32>
    %567 = tpu.matmul %506, %509, %cst_139 {dimension_numbers = #tpu.dot_dimension_numbers<[1], [0], [0], [1], [0, 0, 1, 1], [], []>} : vector<16x32xf32>, vector<32x96xf32>, vector<16x96xf32> -> vector<16x96xf32>
    %568 = vector.broadcast %527 : vector<1x96xf32> to vector<16x96xf32>
    %569 = arith.addf %567, %568 : vector<16x96xf32>
    %570 = vector.extract_strided_slice %569 {offsets = [0, 0], sizes = [16, 32], strides = [1, 1]} : vector<16x96xf32> to vector<16x32xf32>
    %571 = vector.extract_strided_slice %569 {offsets = [0, 32], sizes = [16, 32], strides = [1, 1]} : vector<16x96xf32> to vector<16x32xf32>
    %572 = vector.extract_strided_slice %569 {offsets = [0, 64], sizes = [16, 32], strides = [1, 1]} : vector<16x96xf32> to vector<16x32xf32>
    %573 = vector.extract_strided_slice %570 {offsets = [0, 0], sizes = [8, 32], strides = [1, 1]} : vector<16x32xf32> to vector<8x32xf32>
    %574 = vector.extract_strided_slice %573 {offsets = [0, 0], sizes = [8, 8], strides = [1, 1]} : vector<8x32xf32> to vector<8x8xf32>
    %575 = vector.extract_strided_slice %573 {offsets = [0, 8], sizes = [8, 8], strides = [1, 1]} : vector<8x32xf32> to vector<8x8xf32>
    %576 = vector.extract_strided_slice %573 {offsets = [0, 16], sizes = [8, 8], strides = [1, 1]} : vector<8x32xf32> to vector<8x8xf32>
    %577 = vector.extract_strided_slice %573 {offsets = [0, 24], sizes = [8, 8], strides = [1, 1]} : vector<8x32xf32> to vector<8x8xf32>
    %578 = vector.shape_cast %574 : vector<8x8xf32> to vector<1x8x8xf32>
    %579 = vector.shape_cast %575 : vector<8x8xf32> to vector<1x8x8xf32>
    %580 = vector.shape_cast %576 : vector<8x8xf32> to vector<1x8x8xf32>
    %581 = vector.shape_cast %577 : vector<8x8xf32> to vector<1x8x8xf32>
    %582 = tpu.concatenate %578, %579, %580, %581 in 0 : vector<1x8x8xf32>, vector<1x8x8xf32>, vector<1x8x8xf32>, vector<1x8x8xf32> -> vector<4x8x8xf32>
    %583 = vector.extract_strided_slice %571 {offsets = [0, 0], sizes = [8, 32], strides = [1, 1]} : vector<16x32xf32> to vector<8x32xf32>
    %584 = vector.extract_strided_slice %583 {offsets = [0, 0], sizes = [8, 8], strides = [1, 1]} : vector<8x32xf32> to vector<8x8xf32>
    %585 = vector.extract_strided_slice %583 {offsets = [0, 8], sizes = [8, 8], strides = [1, 1]} : vector<8x32xf32> to vector<8x8xf32>
    %586 = vector.extract_strided_slice %583 {offsets = [0, 16], sizes = [8, 8], strides = [1, 1]} : vector<8x32xf32> to vector<8x8xf32>
    %587 = vector.extract_strided_slice %583 {offsets = [0, 24], sizes = [8, 8], strides = [1, 1]} : vector<8x32xf32> to vector<8x8xf32>
    %588 = vector.shape_cast %584 : vector<8x8xf32> to vector<1x8x8xf32>
    %589 = vector.shape_cast %585 : vector<8x8xf32> to vector<1x8x8xf32>
    %590 = vector.shape_cast %586 : vector<8x8xf32> to vector<1x8x8xf32>
    %591 = vector.shape_cast %587 : vector<8x8xf32> to vector<1x8x8xf32>
    %592 = tpu.concatenate %588, %589, %590, %591 in 0 : vector<1x8x8xf32>, vector<1x8x8xf32>, vector<1x8x8xf32>, vector<1x8x8xf32> -> vector<4x8x8xf32>
    %593 = vector.extract_strided_slice %572 {offsets = [0, 0], sizes = [8, 32], strides = [1, 1]} : vector<16x32xf32> to vector<8x32xf32>
    %594 = vector.extract_strided_slice %593 {offsets = [0, 0], sizes = [8, 8], strides = [1, 1]} : vector<8x32xf32> to vector<8x8xf32>
    %595 = vector.extract_strided_slice %593 {offsets = [0, 8], sizes = [8, 8], strides = [1, 1]} : vector<8x32xf32> to vector<8x8xf32>
    %596 = vector.extract_strided_slice %593 {offsets = [0, 16], sizes = [8, 8], strides = [1, 1]} : vector<8x32xf32> to vector<8x8xf32>
    %597 = vector.extract_strided_slice %593 {offsets = [0, 24], sizes = [8, 8], strides = [1, 1]} : vector<8x32xf32> to vector<8x8xf32>
    %598 = vector.shape_cast %594 : vector<8x8xf32> to vector<1x8x8xf32>
    %599 = vector.shape_cast %595 : vector<8x8xf32> to vector<1x8x8xf32>
    %600 = vector.shape_cast %596 : vector<8x8xf32> to vector<1x8x8xf32>
    %601 = vector.shape_cast %597 : vector<8x8xf32> to vector<1x8x8xf32>
    %602 = tpu.concatenate %598, %599, %600, %601 in 0 : vector<1x8x8xf32>, vector<1x8x8xf32>, vector<1x8x8xf32>, vector<1x8x8xf32> -> vector<4x8x8xf32>
    "tpu.trace_start"() <{level = 10 : i32, message = "hqf,hkf->hqk"}> : () -> ()
    %cst_140 = arith.constant dense<0.000000e+00> : vector<4x8x8xf32>
    %603 = tpu.matmul %582, %592, %cst_140 {dimension_numbers = #tpu.dot_dimension_numbers<[2], [2], [1], [1], [0, 0, 0, 1, 1, 1], [0], [0]>} : vector<4x8x8xf32>, vector<4x8x8xf32>, vector<4x8x8xf32> -> vector<4x8x8xf32>
    "tpu.trace_stop"() : () -> ()
    %c0_141 = arith.constant 0 : index
    %c0_142 = arith.constant 0 : index
    %c0_143 = arith.constant 0 : index
    %604 = vector.load %arg2[%c0_141, %c0_142, %c0_143] : memref<2x8x8xf32, #tpu.memory_space<vmem>>, vector<1x8x8xf32>
    %605 = vector.shape_cast %604 : vector<1x8x8xf32> to vector<8x8xf32>
    %606 = vector.shape_cast %605 : vector<8x8xf32> to vector<1x8x8xf32>
    %607 = vector.broadcast %606 : vector<1x8x8xf32> to vector<4x8x8xf32>
    %608 = arith.addf %603, %607 : vector<4x8x8xf32>
    %cst_144 = arith.constant dense<0xFF800000> : vector<4x8xf32>
    %609 = vector.multi_reduction <maximumf>, %608, %cst_144 [2] : vector<4x8x8xf32> to vector<4x8xf32>
    %610 = vector.shape_cast %609 : vector<4x8xf32> to vector<4x8x1xf32>
    %611 = vector.broadcast %610 : vector<4x8x1xf32> to vector<4x8x8xf32>
    %612 = arith.subf %608, %611 : vector<4x8x8xf32>
    %613 = math.exp %612 : vector<4x8x8xf32>
    %cst_145 = arith.constant dense<0.000000e+00> : vector<4x8xf32>
    %614 = vector.multi_reduction <add>, %613, %cst_145 [2] : vector<4x8x8xf32> to vector<4x8xf32>
    %615 = vector.shape_cast %614 : vector<4x8xf32> to vector<4x8x1xf32>
    %616 = tpu.reciprocal %615 {approx = true} : vector<4x8x1xf32> -> vector<4x8x1xf32>
    %617 = vector.broadcast %616 : vector<4x8x1xf32> to vector<4x8x8xf32>
    %618 = arith.mulf %613, %617 : vector<4x8x8xf32>
    "tpu.trace_start"() <{level = 10 : i32, message = "hqk,hkf->hqf"}> : () -> ()
    %cst_146 = arith.constant dense<0.000000e+00> : vector<4x8x8xf32>
    %619 = tpu.matmul %618, %602, %cst_146 {dimension_numbers = #tpu.dot_dimension_numbers<[2], [1], [1], [2], [0, 0, 0, 1, 1, 2], [0], [0]>} : vector<4x8x8xf32>, vector<4x8x8xf32>, vector<4x8x8xf32> -> vector<4x8x8xf32>
    "tpu.trace_stop"() : () -> ()
    %620 = vector.extract_strided_slice %619 {offsets = [0, 0, 0], sizes = [1, 8, 8], strides = [1, 1, 1]} : vector<4x8x8xf32> to vector<1x8x8xf32>
    %621 = vector.shape_cast %620 : vector<1x8x8xf32> to vector<8x8xf32>
    %622 = vector.extract_strided_slice %619 {offsets = [1, 0, 0], sizes = [1, 8, 8], strides = [1, 1, 1]} : vector<4x8x8xf32> to vector<1x8x8xf32>
    %623 = vector.shape_cast %622 : vector<1x8x8xf32> to vector<8x8xf32>
    %624 = vector.extract_strided_slice %619 {offsets = [2, 0, 0], sizes = [1, 8, 8], strides = [1, 1, 1]} : vector<4x8x8xf32> to vector<1x8x8xf32>
    %625 = vector.shape_cast %624 : vector<1x8x8xf32> to vector<8x8xf32>
    %626 = vector.extract_strided_slice %619 {offsets = [3, 0, 0], sizes = [1, 8, 8], strides = [1, 1, 1]} : vector<4x8x8xf32> to vector<1x8x8xf32>
    %627 = vector.shape_cast %626 : vector<1x8x8xf32> to vector<8x8xf32>
    %628 = tpu.concatenate %621, %623, %625, %627 in 1 : vector<8x8xf32>, vector<8x8xf32>, vector<8x8xf32>, vector<8x8xf32> -> vector<8x32xf32>
    %629 = vector.extract_strided_slice %570 {offsets = [8, 0], sizes = [8, 32], strides = [1, 1]} : vector<16x32xf32> to vector<8x32xf32>
    %630 = vector.extract_strided_slice %629 {offsets = [0, 0], sizes = [8, 8], strides = [1, 1]} : vector<8x32xf32> to vector<8x8xf32>
    %631 = vector.extract_strided_slice %629 {offsets = [0, 8], sizes = [8, 8], strides = [1, 1]} : vector<8x32xf32> to vector<8x8xf32>
    %632 = vector.extract_strided_slice %629 {offsets = [0, 16], sizes = [8, 8], strides = [1, 1]} : vector<8x32xf32> to vector<8x8xf32>
    %633 = vector.extract_strided_slice %629 {offsets = [0, 24], sizes = [8, 8], strides = [1, 1]} : vector<8x32xf32> to vector<8x8xf32>
    %634 = vector.shape_cast %630 : vector<8x8xf32> to vector<1x8x8xf32>
    %635 = vector.shape_cast %631 : vector<8x8xf32> to vector<1x8x8xf32>
    %636 = vector.shape_cast %632 : vector<8x8xf32> to vector<1x8x8xf32>
    %637 = vector.shape_cast %633 : vector<8x8xf32> to vector<1x8x8xf32>
    %638 = tpu.concatenate %634, %635, %636, %637 in 0 : vector<1x8x8xf32>, vector<1x8x8xf32>, vector<1x8x8xf32>, vector<1x8x8xf32> -> vector<4x8x8xf32>
    %639 = vector.extract_strided_slice %571 {offsets = [8, 0], sizes = [8, 32], strides = [1, 1]} : vector<16x32xf32> to vector<8x32xf32>
    %640 = vector.extract_strided_slice %639 {offsets = [0, 0], sizes = [8, 8], strides = [1, 1]} : vector<8x32xf32> to vector<8x8xf32>
    %641 = vector.extract_strided_slice %639 {offsets = [0, 8], sizes = [8, 8], strides = [1, 1]} : vector<8x32xf32> to vector<8x8xf32>
    %642 = vector.extract_strided_slice %639 {offsets = [0, 16], sizes = [8, 8], strides = [1, 1]} : vector<8x32xf32> to vector<8x8xf32>
    %643 = vector.extract_strided_slice %639 {offsets = [0, 24], sizes = [8, 8], strides = [1, 1]} : vector<8x32xf32> to vector<8x8xf32>
    %644 = vector.shape_cast %640 : vector<8x8xf32> to vector<1x8x8xf32>
    %645 = vector.shape_cast %641 : vector<8x8xf32> to vector<1x8x8xf32>
    %646 = vector.shape_cast %642 : vector<8x8xf32> to vector<1x8x8xf32>
    %647 = vector.shape_cast %643 : vector<8x8xf32> to vector<1x8x8xf32>
    %648 = tpu.concatenate %644, %645, %646, %647 in 0 : vector<1x8x8xf32>, vector<1x8x8xf32>, vector<1x8x8xf32>, vector<1x8x8xf32> -> vector<4x8x8xf32>
    %649 = vector.extract_strided_slice %572 {offsets = [8, 0], sizes = [8, 32], strides = [1, 1]} : vector<16x32xf32> to vector<8x32xf32>
    %650 = vector.extract_strided_slice %649 {offsets = [0, 0], sizes = [8, 8], strides = [1, 1]} : vector<8x32xf32> to vector<8x8xf32>
    %651 = vector.extract_strided_slice %649 {offsets = [0, 8], sizes = [8, 8], strides = [1, 1]} : vector<8x32xf32> to vector<8x8xf32>
    %652 = vector.extract_strided_slice %649 {offsets = [0, 16], sizes = [8, 8], strides = [1, 1]} : vector<8x32xf32> to vector<8x8xf32>
    %653 = vector.extract_strided_slice %649 {offsets = [0, 24], sizes = [8, 8], strides = [1, 1]} : vector<8x32xf32> to vector<8x8xf32>
    %654 = vector.shape_cast %650 : vector<8x8xf32> to vector<1x8x8xf32>
    %655 = vector.shape_cast %651 : vector<8x8xf32> to vector<1x8x8xf32>
    %656 = vector.shape_cast %652 : vector<8x8xf32> to vector<1x8x8xf32>
    %657 = vector.shape_cast %653 : vector<8x8xf32> to vector<1x8x8xf32>
    %658 = tpu.concatenate %654, %655, %656, %657 in 0 : vector<1x8x8xf32>, vector<1x8x8xf32>, vector<1x8x8xf32>, vector<1x8x8xf32> -> vector<4x8x8xf32>
    "tpu.trace_start"() <{level = 10 : i32, message = "hqf,hkf->hqk"}> : () -> ()
    %cst_147 = arith.constant dense<0.000000e+00> : vector<4x8x8xf32>
    %659 = tpu.matmul %638, %648, %cst_147 {dimension_numbers = #tpu.dot_dimension_numbers<[2], [2], [1], [1], [0, 0, 0, 1, 1, 1], [0], [0]>} : vector<4x8x8xf32>, vector<4x8x8xf32>, vector<4x8x8xf32> -> vector<4x8x8xf32>
    "tpu.trace_stop"() : () -> ()
    %c1_148 = arith.constant 1 : index
    %c0_149 = arith.constant 0 : index
    %c0_150 = arith.constant 0 : index
    %660 = vector.load %arg2[%c1_148, %c0_149, %c0_150] : memref<2x8x8xf32, #tpu.memory_space<vmem>>, vector<1x8x8xf32>
    %661 = vector.shape_cast %660 : vector<1x8x8xf32> to vector<8x8xf32>
    %662 = vector.shape_cast %661 : vector<8x8xf32> to vector<1x8x8xf32>
    %663 = vector.broadcast %662 : vector<1x8x8xf32> to vector<4x8x8xf32>
    %664 = arith.addf %659, %663 : vector<4x8x8xf32>
    %cst_151 = arith.constant dense<0xFF800000> : vector<4x8xf32>
    %665 = vector.multi_reduction <maximumf>, %664, %cst_151 [2] : vector<4x8x8xf32> to vector<4x8xf32>
    %666 = vector.shape_cast %665 : vector<4x8xf32> to vector<4x8x1xf32>
    %667 = vector.broadcast %666 : vector<4x8x1xf32> to vector<4x8x8xf32>
    %668 = arith.subf %664, %667 : vector<4x8x8xf32>
    %669 = math.exp %668 : vector<4x8x8xf32>
    %cst_152 = arith.constant dense<0.000000e+00> : vector<4x8xf32>
    %670 = vector.multi_reduction <add>, %669, %cst_152 [2] : vector<4x8x8xf32> to vector<4x8xf32>
    %671 = vector.shape_cast %670 : vector<4x8xf32> to vector<4x8x1xf32>
    %672 = tpu.reciprocal %671 {approx = true} : vector<4x8x1xf32> -> vector<4x8x1xf32>
    %673 = vector.broadcast %672 : vector<4x8x1xf32> to vector<4x8x8xf32>
    %674 = arith.mulf %669, %673 : vector<4x8x8xf32>
    "tpu.trace_start"() <{level = 10 : i32, message = "hqk,hkf->hqf"}> : () -> ()
    %cst_153 = arith.constant dense<0.000000e+00> : vector<4x8x8xf32>
    %675 = tpu.matmul %674, %658, %cst_153 {dimension_numbers = #tpu.dot_dimension_numbers<[2], [1], [1], [2], [0, 0, 0, 1, 1, 2], [0], [0]>} : vector<4x8x8xf32>, vector<4x8x8xf32>, vector<4x8x8xf32> -> vector<4x8x8xf32>
    "tpu.trace_stop"() : () -> ()
    %676 = vector.extract_strided_slice %675 {offsets = [0, 0, 0], sizes = [1, 8, 8], strides = [1, 1, 1]} : vector<4x8x8xf32> to vector<1x8x8xf32>
    %677 = vector.shape_cast %676 : vector<1x8x8xf32> to vector<8x8xf32>
    %678 = vector.extract_strided_slice %675 {offsets = [1, 0, 0], sizes = [1, 8, 8], strides = [1, 1, 1]} : vector<4x8x8xf32> to vector<1x8x8xf32>
    %679 = vector.shape_cast %678 : vector<1x8x8xf32> to vector<8x8xf32>
    %680 = vector.extract_strided_slice %675 {offsets = [2, 0, 0], sizes = [1, 8, 8], strides = [1, 1, 1]} : vector<4x8x8xf32> to vector<1x8x8xf32>
    %681 = vector.shape_cast %680 : vector<1x8x8xf32> to vector<8x8xf32>
    %682 = vector.extract_strided_slice %675 {offsets = [3, 0, 0], sizes = [1, 8, 8], strides = [1, 1, 1]} : vector<4x8x8xf32> to vector<1x8x8xf32>
    %683 = vector.shape_cast %682 : vector<1x8x8xf32> to vector<8x8xf32>
    %684 = tpu.concatenate %677, %679, %681, %683 in 1 : vector<8x8xf32>, vector<8x8xf32>, vector<8x8xf32>, vector<8x8xf32> -> vector<8x32xf32>
    %685 = tpu.concatenate %628, %684 in 0 : vector<8x32xf32>, vector<8x32xf32> -> vector<16x32xf32>
    %cst_154 = arith.constant dense<0.000000e+00> : vector<16x32xf32>
    %686 = tpu.matmul %685, %512, %cst_154 {dimension_numbers = #tpu.dot_dimension_numbers<[1], [0], [0], [1], [0, 0, 1, 1], [], []>} : vector<16x32xf32>, vector<32x32xf32>, vector<16x32xf32> -> vector<16x32xf32>
    %687 = vector.broadcast %530 : vector<1x32xf32> to vector<16x32xf32>
    %688 = arith.addf %686, %687 : vector<16x32xf32>
    %cst_155 = arith.constant dense<0.000000e+00> : vector<16x96xf32>
    %689 = tpu.matmul %688, %509, %cst_155 {dimension_numbers = #tpu.dot_dimension_numbers<[1], [0], [0], [1], [0, 0, 1, 1], [], []>} : vector<16x32xf32>, vector<32x96xf32>, vector<16x96xf32> -> vector<16x96xf32>
    %690 = vector.broadcast %527 : vector<1x96xf32> to vector<16x96xf32>
    %691 = arith.addf %689, %690 : vector<16x96xf32>
    %692 = vector.extract_strided_slice %691 {offsets = [0, 0], sizes = [16, 32], strides = [1, 1]} : vector<16x96xf32> to vector<16x32xf32>
    %693 = vector.extract_strided_slice %691 {offsets = [0, 32], sizes = [16, 32], strides = [1, 1]} : vector<16x96xf32> to vector<16x32xf32>
    %694 = vector.extract_strided_slice %691 {offsets = [0, 64], sizes = [16, 32], strides = [1, 1]} : vector<16x96xf32> to vector<16x32xf32>
    %695 = vector.extract_strided_slice %692 {offsets = [0, 0], sizes = [8, 32], strides = [1, 1]} : vector<16x32xf32> to vector<8x32xf32>
    %696 = vector.extract_strided_slice %695 {offsets = [0, 0], sizes = [8, 8], strides = [1, 1]} : vector<8x32xf32> to vector<8x8xf32>
    %697 = vector.extract_strided_slice %695 {offsets = [0, 8], sizes = [8, 8], strides = [1, 1]} : vector<8x32xf32> to vector<8x8xf32>
    %698 = vector.extract_strided_slice %695 {offsets = [0, 16], sizes = [8, 8], strides = [1, 1]} : vector<8x32xf32> to vector<8x8xf32>
    %699 = vector.extract_strided_slice %695 {offsets = [0, 24], sizes = [8, 8], strides = [1, 1]} : vector<8x32xf32> to vector<8x8xf32>
    %700 = vector.shape_cast %696 : vector<8x8xf32> to vector<1x8x8xf32>
    %701 = vector.shape_cast %697 : vector<8x8xf32> to vector<1x8x8xf32>
    %702 = vector.shape_cast %698 : vector<8x8xf32> to vector<1x8x8xf32>
    %703 = vector.shape_cast %699 : vector<8x8xf32> to vector<1x8x8xf32>
    %704 = tpu.concatenate %700, %701, %702, %703 in 0 : vector<1x8x8xf32>, vector<1x8x8xf32>, vector<1x8x8xf32>, vector<1x8x8xf32> -> vector<4x8x8xf32>
    %705 = vector.extract_strided_slice %693 {offsets = [0, 0], sizes = [8, 32], strides = [1, 1]} : vector<16x32xf32> to vector<8x32xf32>
    %706 = vector.extract_strided_slice %705 {offsets = [0, 0], sizes = [8, 8], strides = [1, 1]} : vector<8x32xf32> to vector<8x8xf32>
    %707 = vector.extract_strided_slice %705 {offsets = [0, 8], sizes = [8, 8], strides = [1, 1]} : vector<8x32xf32> to vector<8x8xf32>
    %708 = vector.extract_strided_slice %705 {offsets = [0, 16], sizes = [8, 8], strides = [1, 1]} : vector<8x32xf32> to vector<8x8xf32>
    %709 = vector.extract_strided_slice %705 {offsets = [0, 24], sizes = [8, 8], strides = [1, 1]} : vector<8x32xf32> to vector<8x8xf32>
    %710 = vector.shape_cast %706 : vector<8x8xf32> to vector<1x8x8xf32>
    %711 = vector.shape_cast %707 : vector<8x8xf32> to vector<1x8x8xf32>
    %712 = vector.shape_cast %708 : vector<8x8xf32> to vector<1x8x8xf32>
    %713 = vector.shape_cast %709 : vector<8x8xf32> to vector<1x8x8xf32>
    %714 = tpu.concatenate %710, %711, %712, %713 in 0 : vector<1x8x8xf32>, vector<1x8x8xf32>, vector<1x8x8xf32>, vector<1x8x8xf32> -> vector<4x8x8xf32>
    %715 = vector.extract_strided_slice %694 {offsets = [0, 0], sizes = [8, 32], strides = [1, 1]} : vector<16x32xf32> to vector<8x32xf32>
    %716 = vector.extract_strided_slice %715 {offsets = [0, 0], sizes = [8, 8], strides = [1, 1]} : vector<8x32xf32> to vector<8x8xf32>
    %717 = vector.extract_strided_slice %715 {offsets = [0, 8], sizes = [8, 8], strides = [1, 1]} : vector<8x32xf32> to vector<8x8xf32>
    %718 = vector.extract_strided_slice %715 {offsets = [0, 16], sizes = [8, 8], strides = [1, 1]} : vector<8x32xf32> to vector<8x8xf32>
    %719 = vector.extract_strided_slice %715 {offsets = [0, 24], sizes = [8, 8], strides = [1, 1]} : vector<8x32xf32> to vector<8x8xf32>
    %720 = vector.shape_cast %716 : vector<8x8xf32> to vector<1x8x8xf32>
    %721 = vector.shape_cast %717 : vector<8x8xf32> to vector<1x8x8xf32>
    %722 = vector.shape_cast %718 : vector<8x8xf32> to vector<1x8x8xf32>
    %723 = vector.shape_cast %719 : vector<8x8xf32> to vector<1x8x8xf32>
    %724 = tpu.concatenate %720, %721, %722, %723 in 0 : vector<1x8x8xf32>, vector<1x8x8xf32>, vector<1x8x8xf32>, vector<1x8x8xf32> -> vector<4x8x8xf32>
    "tpu.trace_start"() <{level = 10 : i32, message = "hqf,hkf->hqk"}> : () -> ()
    %cst_156 = arith.constant dense<0.000000e+00> : vector<4x8x8xf32>
    %725 = tpu.matmul %704, %714, %cst_156 {dimension_numbers = #tpu.dot_dimension_numbers<[2], [2], [1], [1], [0, 0, 0, 1, 1, 1], [0], [0]>} : vector<4x8x8xf32>, vector<4x8x8xf32>, vector<4x8x8xf32> -> vector<4x8x8xf32>
    "tpu.trace_stop"() : () -> ()
    %c0_157 = arith.constant 0 : index
    %c0_158 = arith.constant 0 : index
    %c0_159 = arith.constant 0 : index
    %726 = vector.load %arg2[%c0_157, %c0_158, %c0_159] : memref<2x8x8xf32, #tpu.memory_space<vmem>>, vector<1x8x8xf32>
    %727 = vector.shape_cast %726 : vector<1x8x8xf32> to vector<8x8xf32>
    %728 = vector.shape_cast %727 : vector<8x8xf32> to vector<1x8x8xf32>
    %729 = vector.broadcast %728 : vector<1x8x8xf32> to vector<4x8x8xf32>
    %730 = arith.addf %725, %729 : vector<4x8x8xf32>
    %cst_160 = arith.constant dense<0xFF800000> : vector<4x8xf32>
    %731 = vector.multi_reduction <maximumf>, %730, %cst_160 [2] : vector<4x8x8xf32> to vector<4x8xf32>
    %732 = vector.shape_cast %731 : vector<4x8xf32> to vector<4x8x1xf32>
    %733 = vector.broadcast %732 : vector<4x8x1xf32> to vector<4x8x8xf32>
    %734 = arith.subf %730, %733 : vector<4x8x8xf32>
    %735 = math.exp %734 : vector<4x8x8xf32>
    %cst_161 = arith.constant dense<0.000000e+00> : vector<4x8xf32>
    %736 = vector.multi_reduction <add>, %735, %cst_161 [2] : vector<4x8x8xf32> to vector<4x8xf32>
    %737 = vector.shape_cast %736 : vector<4x8xf32> to vector<4x8x1xf32>
    %738 = tpu.reciprocal %737 {approx = true} : vector<4x8x1xf32> -> vector<4x8x1xf32>
    %739 = vector.broadcast %738 : vector<4x8x1xf32> to vector<4x8x8xf32>
    %740 = arith.mulf %735, %739 : vector<4x8x8xf32>
    "tpu.trace_start"() <{level = 10 : i32, message = "hqk,hkf->hqf"}> : () -> ()
    %cst_162 = arith.constant dense<0.000000e+00> : vector<4x8x8xf32>
    %741 = tpu.matmul %740, %724, %cst_162 {dimension_numbers = #tpu.dot_dimension_numbers<[2], [1], [1], [2], [0, 0, 0, 1, 1, 2], [0], [0]>} : vector<4x8x8xf32>, vector<4x8x8xf32>, vector<4x8x8xf32> -> vector<4x8x8xf32>
    "tpu.trace_stop"() : () -> ()
    %742 = vector.extract_strided_slice %741 {offsets = [0, 0, 0], sizes = [1, 8, 8], strides = [1, 1, 1]} : vector<4x8x8xf32> to vector<1x8x8xf32>
    %743 = vector.shape_cast %742 : vector<1x8x8xf32> to vector<8x8xf32>
    %744 = vector.extract_strided_slice %741 {offsets = [1, 0, 0], sizes = [1, 8, 8], strides = [1, 1, 1]} : vector<4x8x8xf32> to vector<1x8x8xf32>
    %745 = vector.shape_cast %744 : vector<1x8x8xf32> to vector<8x8xf32>
    %746 = vector.extract_strided_slice %741 {offsets = [2, 0, 0], sizes = [1, 8, 8], strides = [1, 1, 1]} : vector<4x8x8xf32> to vector<1x8x8xf32>
    %747 = vector.shape_cast %746 : vector<1x8x8xf32> to vector<8x8xf32>
    %748 = vector.extract_strided_slice %741 {offsets = [3, 0, 0], sizes = [1, 8, 8], strides = [1, 1, 1]} : vector<4x8x8xf32> to vector<1x8x8xf32>
    %749 = vector.shape_cast %748 : vector<1x8x8xf32> to vector<8x8xf32>
    %750 = tpu.concatenate %743, %745, %747, %749 in 1 : vector<8x8xf32>, vector<8x8xf32>, vector<8x8xf32>, vector<8x8xf32> -> vector<8x32xf32>
    %751 = vector.extract_strided_slice %692 {offsets = [8, 0], sizes = [8, 32], strides = [1, 1]} : vector<16x32xf32> to vector<8x32xf32>
    %752 = vector.extract_strided_slice %751 {offsets = [0, 0], sizes = [8, 8], strides = [1, 1]} : vector<8x32xf32> to vector<8x8xf32>
    %753 = vector.extract_strided_slice %751 {offsets = [0, 8], sizes = [8, 8], strides = [1, 1]} : vector<8x32xf32> to vector<8x8xf32>
    %754 = vector.extract_strided_slice %751 {offsets = [0, 16], sizes = [8, 8], strides = [1, 1]} : vector<8x32xf32> to vector<8x8xf32>
    %755 = vector.extract_strided_slice %751 {offsets = [0, 24], sizes = [8, 8], strides = [1, 1]} : vector<8x32xf32> to vector<8x8xf32>
    %756 = vector.shape_cast %752 : vector<8x8xf32> to vector<1x8x8xf32>
    %757 = vector.shape_cast %753 : vector<8x8xf32> to vector<1x8x8xf32>
    %758 = vector.shape_cast %754 : vector<8x8xf32> to vector<1x8x8xf32>
    %759 = vector.shape_cast %755 : vector<8x8xf32> to vector<1x8x8xf32>
    %760 = tpu.concatenate %756, %757, %758, %759 in 0 : vector<1x8x8xf32>, vector<1x8x8xf32>, vector<1x8x8xf32>, vector<1x8x8xf32> -> vector<4x8x8xf32>
    %761 = vector.extract_strided_slice %693 {offsets = [8, 0], sizes = [8, 32], strides = [1, 1]} : vector<16x32xf32> to vector<8x32xf32>
    %762 = vector.extract_strided_slice %761 {offsets = [0, 0], sizes = [8, 8], strides = [1, 1]} : vector<8x32xf32> to vector<8x8xf32>
    %763 = vector.extract_strided_slice %761 {offsets = [0, 8], sizes = [8, 8], strides = [1, 1]} : vector<8x32xf32> to vector<8x8xf32>
    %764 = vector.extract_strided_slice %761 {offsets = [0, 16], sizes = [8, 8], strides = [1, 1]} : vector<8x32xf32> to vector<8x8xf32>
    %765 = vector.extract_strided_slice %761 {offsets = [0, 24], sizes = [8, 8], strides = [1, 1]} : vector<8x32xf32> to vector<8x8xf32>
    %766 = vector.shape_cast %762 : vector<8x8xf32> to vector<1x8x8xf32>
    %767 = vector.shape_cast %763 : vector<8x8xf32> to vector<1x8x8xf32>
    %768 = vector.shape_cast %764 : vector<8x8xf32> to vector<1x8x8xf32>
    %769 = vector.shape_cast %765 : vector<8x8xf32> to vector<1x8x8xf32>
    %770 = tpu.concatenate %766, %767, %768, %769 in 0 : vector<1x8x8xf32>, vector<1x8x8xf32>, vector<1x8x8xf32>, vector<1x8x8xf32> -> vector<4x8x8xf32>
    %771 = vector.extract_strided_slice %694 {offsets = [8, 0], sizes = [8, 32], strides = [1, 1]} : vector<16x32xf32> to vector<8x32xf32>
    %772 = vector.extract_strided_slice %771 {offsets = [0, 0], sizes = [8, 8], strides = [1, 1]} : vector<8x32xf32> to vector<8x8xf32>
    %773 = vector.extract_strided_slice %771 {offsets = [0, 8], sizes = [8, 8], strides = [1, 1]} : vector<8x32xf32> to vector<8x8xf32>
    %774 = vector.extract_strided_slice %771 {offsets = [0, 16], sizes = [8, 8], strides = [1, 1]} : vector<8x32xf32> to vector<8x8xf32>
    %775 = vector.extract_strided_slice %771 {offsets = [0, 24], sizes = [8, 8], strides = [1, 1]} : vector<8x32xf32> to vector<8x8xf32>
    %776 = vector.shape_cast %772 : vector<8x8xf32> to vector<1x8x8xf32>
    %777 = vector.shape_cast %773 : vector<8x8xf32> to vector<1x8x8xf32>
    %778 = vector.shape_cast %774 : vector<8x8xf32> to vector<1x8x8xf32>
    %779 = vector.shape_cast %775 : vector<8x8xf32> to vector<1x8x8xf32>
    %780 = tpu.concatenate %776, %777, %778, %779 in 0 : vector<1x8x8xf32>, vector<1x8x8xf32>, vector<1x8x8xf32>, vector<1x8x8xf32> -> vector<4x8x8xf32>
    "tpu.trace_start"() <{level = 10 : i32, message = "hqf,hkf->hqk"}> : () -> ()
    %cst_163 = arith.constant dense<0.000000e+00> : vector<4x8x8xf32>
    %781 = tpu.matmul %760, %770, %cst_163 {dimension_numbers = #tpu.dot_dimension_numbers<[2], [2], [1], [1], [0, 0, 0, 1, 1, 1], [0], [0]>} : vector<4x8x8xf32>, vector<4x8x8xf32>, vector<4x8x8xf32> -> vector<4x8x8xf32>
    "tpu.trace_stop"() : () -> ()
    %c1_164 = arith.constant 1 : index
    %c0_165 = arith.constant 0 : index
    %c0_166 = arith.constant 0 : index
    %782 = vector.load %arg2[%c1_164, %c0_165, %c0_166] : memref<2x8x8xf32, #tpu.memory_space<vmem>>, vector<1x8x8xf32>
    %783 = vector.shape_cast %782 : vector<1x8x8xf32> to vector<8x8xf32>
    %784 = vector.shape_cast %783 : vector<8x8xf32> to vector<1x8x8xf32>
    %785 = vector.broadcast %784 : vector<1x8x8xf32> to vector<4x8x8xf32>
    %786 = arith.addf %781, %785 : vector<4x8x8xf32>
    %cst_167 = arith.constant dense<0xFF800000> : vector<4x8xf32>
    %787 = vector.multi_reduction <maximumf>, %786, %cst_167 [2] : vector<4x8x8xf32> to vector<4x8xf32>
    %788 = vector.shape_cast %787 : vector<4x8xf32> to vector<4x8x1xf32>
    %789 = vector.broadcast %788 : vector<4x8x1xf32> to vector<4x8x8xf32>
    %790 = arith.subf %786, %789 : vector<4x8x8xf32>
    %791 = math.exp %790 : vector<4x8x8xf32>
    %cst_168 = arith.constant dense<0.000000e+00> : vector<4x8xf32>
    %792 = vector.multi_reduction <add>, %791, %cst_168 [2] : vector<4x8x8xf32> to vector<4x8xf32>
    %793 = vector.shape_cast %792 : vector<4x8xf32> to vector<4x8x1xf32>
    %794 = tpu.reciprocal %793 {approx = true} : vector<4x8x1xf32> -> vector<4x8x1xf32>
    %795 = vector.broadcast %794 : vector<4x8x1xf32> to vector<4x8x8xf32>
    %796 = arith.mulf %791, %795 : vector<4x8x8xf32>
    "tpu.trace_start"() <{level = 10 : i32, message = "hqk,hkf->hqf"}> : () -> ()
    %cst_169 = arith.constant dense<0.000000e+00> : vector<4x8x8xf32>
    %797 = tpu.matmul %796, %780, %cst_169 {dimension_numbers = #tpu.dot_dimension_numbers<[2], [1], [1], [2], [0, 0, 0, 1, 1, 2], [0], [0]>} : vector<4x8x8xf32>, vector<4x8x8xf32>, vector<4x8x8xf32> -> vector<4x8x8xf32>
    "tpu.trace_stop"() : () -> ()
    %798 = vector.extract_strided_slice %797 {offsets = [0, 0, 0], sizes = [1, 8, 8], strides = [1, 1, 1]} : vector<4x8x8xf32> to vector<1x8x8xf32>
    %799 = vector.shape_cast %798 : vector<1x8x8xf32> to vector<8x8xf32>
    %800 = vector.extract_strided_slice %797 {offsets = [1, 0, 0], sizes = [1, 8, 8], strides = [1, 1, 1]} : vector<4x8x8xf32> to vector<1x8x8xf32>
    %801 = vector.shape_cast %800 : vector<1x8x8xf32> to vector<8x8xf32>
    %802 = vector.extract_strided_slice %797 {offsets = [2, 0, 0], sizes = [1, 8, 8], strides = [1, 1, 1]} : vector<4x8x8xf32> to vector<1x8x8xf32>
    %803 = vector.shape_cast %802 : vector<1x8x8xf32> to vector<8x8xf32>
    %804 = vector.extract_strided_slice %797 {offsets = [3, 0, 0], sizes = [1, 8, 8], strides = [1, 1, 1]} : vector<4x8x8xf32> to vector<1x8x8xf32>
    %805 = vector.shape_cast %804 : vector<1x8x8xf32> to vector<8x8xf32>
    %806 = tpu.concatenate %799, %801, %803, %805 in 1 : vector<8x8xf32>, vector<8x8xf32>, vector<8x8xf32>, vector<8x8xf32> -> vector<8x32xf32>
    %807 = tpu.concatenate %750, %806 in 0 : vector<8x32xf32>, vector<8x32xf32> -> vector<16x32xf32>
    %cst_170 = arith.constant dense<0.000000e+00> : vector<16x32xf32>
    %808 = tpu.matmul %807, %512, %cst_170 {dimension_numbers = #tpu.dot_dimension_numbers<[1], [0], [0], [1], [0, 0, 1, 1], [], []>} : vector<16x32xf32>, vector<32x32xf32>, vector<16x32xf32> -> vector<16x32xf32>
    %809 = vector.broadcast %530 : vector<1x32xf32> to vector<16x32xf32>
    %810 = arith.addf %808, %809 : vector<16x32xf32>
    %811 = arith.addf %810, %506 : vector<16x32xf32>
    %cst_171 = arith.constant dense<0.000000e+00> : vector<16xf32>
    %812 = vector.multi_reduction <add>, %811, %cst_171 [1] : vector<16x32xf32> to vector<16xf32>
    %813 = vector.shape_cast %812 : vector<16xf32> to vector<16x1xf32>
    %cst_172 = arith.constant 3.200000e+01 : f32
    %814 = vector.broadcast %cst_172 : f32 to vector<16x1xf32>
    %815 = arith.divf %813, %814 : vector<16x1xf32>
    %816 = vector.broadcast %815 : vector<16x1xf32> to vector<16x32xf32>
    %817 = arith.subf %811, %816 : vector<16x32xf32>
    %818 = arith.mulf %817, %817 : vector<16x32xf32>
    %cst_173 = arith.constant dense<0.000000e+00> : vector<16xf32>
    %819 = vector.multi_reduction <add>, %818, %cst_173 [1] : vector<16x32xf32> to vector<16xf32>
    %820 = vector.shape_cast %819 : vector<16xf32> to vector<16x1xf32>
    %cst_174 = arith.constant 3.200000e+01 : f32
    %821 = vector.broadcast %cst_174 : f32 to vector<16x1xf32>
    %822 = arith.divf %820, %821 : vector<16x1xf32>
    %823 = vector.broadcast %815 : vector<16x1xf32> to vector<16x32xf32>
    %824 = arith.subf %811, %823 : vector<16x32xf32>
    %cst_175 = arith.constant 9.99999974E-6 : f32
    %825 = vector.broadcast %cst_175 : f32 to vector<16x1xf32>
    %826 = arith.addf %822, %825 : vector<16x1xf32>
    %827 = math.rsqrt %826 : vector<16x1xf32>
    %828 = vector.broadcast %827 : vector<16x1xf32> to vector<16x32xf32>
    %829 = arith.mulf %824, %828 : vector<16x32xf32>
    %830 = vector.broadcast %551 : vector<1x32xf32> to vector<16x32xf32>
    %831 = arith.mulf %830, %829 : vector<16x32xf32>
    %832 = vector.broadcast %554 : vector<1x32xf32> to vector<16x32xf32>
    %833 = arith.addf %831, %832 : vector<16x32xf32>
    %cst_176 = arith.constant dense<0.000000e+00> : vector<16x64xf32>
    %834 = tpu.matmul %0, %515, %cst_176 {dimension_numbers = #tpu.dot_dimension_numbers<[1], [0], [0], [1], [0, 0, 1, 1], [], []>} : vector<16x32xf32>, vector<32x64xf32>, vector<16x64xf32> -> vector<16x64xf32>
    %835 = vector.broadcast %533 : vector<1x64xf32> to vector<16x64xf32>
    %836 = arith.addf %834, %835 : vector<16x64xf32>
    %cst_177 = arith.constant dense<0.000000e+00> : vector<16x32xf32>
    %837 = tpu.matmul %833, %518, %cst_177 {dimension_numbers = #tpu.dot_dimension_numbers<[1], [0], [0], [1], [0, 0, 1, 1], [], []>} : vector<16x32xf32>, vector<32x32xf32>, vector<16x32xf32> -> vector<16x32xf32>
    %838 = vector.broadcast %536 : vector<1x32xf32> to vector<16x32xf32>
    %839 = arith.addf %837, %838 : vector<16x32xf32>
    %840 = vector.extract_strided_slice %836 {offsets = [0, 0], sizes = [16, 32], strides = [1, 1]} : vector<16x64xf32> to vector<16x32xf32>
    %841 = vector.extract_strided_slice %836 {offsets = [0, 32], sizes = [16, 32], strides = [1, 1]} : vector<16x64xf32> to vector<16x32xf32>
    %842 = vector.extract_strided_slice %839 {offsets = [0, 0], sizes = [8, 32], strides = [1, 1]} : vector<16x32xf32> to vector<8x32xf32>
    %843 = vector.extract_strided_slice %842 {offsets = [0, 0], sizes = [8, 8], strides = [1, 1]} : vector<8x32xf32> to vector<8x8xf32>
    %844 = vector.extract_strided_slice %842 {offsets = [0, 8], sizes = [8, 8], strides = [1, 1]} : vector<8x32xf32> to vector<8x8xf32>
    %845 = vector.extract_strided_slice %842 {offsets = [0, 16], sizes = [8, 8], strides = [1, 1]} : vector<8x32xf32> to vector<8x8xf32>
    %846 = vector.extract_strided_slice %842 {offsets = [0, 24], sizes = [8, 8], strides = [1, 1]} : vector<8x32xf32> to vector<8x8xf32>
    %847 = vector.shape_cast %843 : vector<8x8xf32> to vector<1x8x8xf32>
    %848 = vector.shape_cast %844 : vector<8x8xf32> to vector<1x8x8xf32>
    %849 = vector.shape_cast %845 : vector<8x8xf32> to vector<1x8x8xf32>
    %850 = vector.shape_cast %846 : vector<8x8xf32> to vector<1x8x8xf32>
    %851 = tpu.concatenate %847, %848, %849, %850 in 0 : vector<1x8x8xf32>, vector<1x8x8xf32>, vector<1x8x8xf32>, vector<1x8x8xf32> -> vector<4x8x8xf32>
    %852 = vector.extract_strided_slice %840 {offsets = [0, 0], sizes = [8, 32], strides = [1, 1]} : vector<16x32xf32> to vector<8x32xf32>
    %853 = vector.extract_strided_slice %852 {offsets = [0, 0], sizes = [8, 8], strides = [1, 1]} : vector<8x32xf32> to vector<8x8xf32>
    %854 = vector.extract_strided_slice %852 {offsets = [0, 8], sizes = [8, 8], strides = [1, 1]} : vector<8x32xf32> to vector<8x8xf32>
    %855 = vector.extract_strided_slice %852 {offsets = [0, 16], sizes = [8, 8], strides = [1, 1]} : vector<8x32xf32> to vector<8x8xf32>
    %856 = vector.extract_strided_slice %852 {offsets = [0, 24], sizes = [8, 8], strides = [1, 1]} : vector<8x32xf32> to vector<8x8xf32>
    %857 = vector.shape_cast %853 : vector<8x8xf32> to vector<1x8x8xf32>
    %858 = vector.shape_cast %854 : vector<8x8xf32> to vector<1x8x8xf32>
    %859 = vector.shape_cast %855 : vector<8x8xf32> to vector<1x8x8xf32>
    %860 = vector.shape_cast %856 : vector<8x8xf32> to vector<1x8x8xf32>
    %861 = tpu.concatenate %857, %858, %859, %860 in 0 : vector<1x8x8xf32>, vector<1x8x8xf32>, vector<1x8x8xf32>, vector<1x8x8xf32> -> vector<4x8x8xf32>
    %862 = vector.extract_strided_slice %841 {offsets = [0, 0], sizes = [8, 32], strides = [1, 1]} : vector<16x32xf32> to vector<8x32xf32>
    %863 = vector.extract_strided_slice %862 {offsets = [0, 0], sizes = [8, 8], strides = [1, 1]} : vector<8x32xf32> to vector<8x8xf32>
    %864 = vector.extract_strided_slice %862 {offsets = [0, 8], sizes = [8, 8], strides = [1, 1]} : vector<8x32xf32> to vector<8x8xf32>
    %865 = vector.extract_strided_slice %862 {offsets = [0, 16], sizes = [8, 8], strides = [1, 1]} : vector<8x32xf32> to vector<8x8xf32>
    %866 = vector.extract_strided_slice %862 {offsets = [0, 24], sizes = [8, 8], strides = [1, 1]} : vector<8x32xf32> to vector<8x8xf32>
    %867 = vector.shape_cast %863 : vector<8x8xf32> to vector<1x8x8xf32>
    %868 = vector.shape_cast %864 : vector<8x8xf32> to vector<1x8x8xf32>
    %869 = vector.shape_cast %865 : vector<8x8xf32> to vector<1x8x8xf32>
    %870 = vector.shape_cast %866 : vector<8x8xf32> to vector<1x8x8xf32>
    %871 = tpu.concatenate %867, %868, %869, %870 in 0 : vector<1x8x8xf32>, vector<1x8x8xf32>, vector<1x8x8xf32>, vector<1x8x8xf32> -> vector<4x8x8xf32>
    "tpu.trace_start"() <{level = 10 : i32, message = "hqf,hkf->hqk"}> : () -> ()
    %cst_178 = arith.constant dense<0.000000e+00> : vector<4x8x8xf32>
    %872 = tpu.matmul %851, %861, %cst_178 {dimension_numbers = #tpu.dot_dimension_numbers<[2], [2], [1], [1], [0, 0, 0, 1, 1, 1], [0], [0]>} : vector<4x8x8xf32>, vector<4x8x8xf32>, vector<4x8x8xf32> -> vector<4x8x8xf32>
    "tpu.trace_stop"() : () -> ()
    %c0_179 = arith.constant 0 : index
    %c0_180 = arith.constant 0 : index
    %c0_181 = arith.constant 0 : index
    %873 = vector.load %arg3[%c0_179, %c0_180, %c0_181] : memref<2x8x8xf32, #tpu.memory_space<vmem>>, vector<1x8x8xf32>
    %874 = vector.shape_cast %873 : vector<1x8x8xf32> to vector<8x8xf32>
    %875 = vector.shape_cast %874 : vector<8x8xf32> to vector<1x8x8xf32>
    %876 = vector.broadcast %875 : vector<1x8x8xf32> to vector<4x8x8xf32>
    %877 = arith.addf %872, %876 : vector<4x8x8xf32>
    %cst_182 = arith.constant dense<0xFF800000> : vector<4x8xf32>
    %878 = vector.multi_reduction <maximumf>, %877, %cst_182 [2] : vector<4x8x8xf32> to vector<4x8xf32>
    %879 = vector.shape_cast %878 : vector<4x8xf32> to vector<4x8x1xf32>
    %880 = vector.broadcast %879 : vector<4x8x1xf32> to vector<4x8x8xf32>
    %881 = arith.subf %877, %880 : vector<4x8x8xf32>
    %882 = math.exp %881 : vector<4x8x8xf32>
    %cst_183 = arith.constant dense<0.000000e+00> : vector<4x8xf32>
    %883 = vector.multi_reduction <add>, %882, %cst_183 [2] : vector<4x8x8xf32> to vector<4x8xf32>
    %884 = vector.shape_cast %883 : vector<4x8xf32> to vector<4x8x1xf32>
    %885 = tpu.reciprocal %884 {approx = true} : vector<4x8x1xf32> -> vector<4x8x1xf32>
    %886 = vector.broadcast %885 : vector<4x8x1xf32> to vector<4x8x8xf32>
    %887 = arith.mulf %882, %886 : vector<4x8x8xf32>
    "tpu.trace_start"() <{level = 10 : i32, message = "hqk,hkf->hqf"}> : () -> ()
    %cst_184 = arith.constant dense<0.000000e+00> : vector<4x8x8xf32>
    %888 = tpu.matmul %887, %871, %cst_184 {dimension_numbers = #tpu.dot_dimension_numbers<[2], [1], [1], [2], [0, 0, 0, 1, 1, 2], [0], [0]>} : vector<4x8x8xf32>, vector<4x8x8xf32>, vector<4x8x8xf32> -> vector<4x8x8xf32>
    "tpu.trace_stop"() : () -> ()
    %889 = vector.extract_strided_slice %888 {offsets = [0, 0, 0], sizes = [1, 8, 8], strides = [1, 1, 1]} : vector<4x8x8xf32> to vector<1x8x8xf32>
    %890 = vector.shape_cast %889 : vector<1x8x8xf32> to vector<8x8xf32>
    %891 = vector.extract_strided_slice %888 {offsets = [1, 0, 0], sizes = [1, 8, 8], strides = [1, 1, 1]} : vector<4x8x8xf32> to vector<1x8x8xf32>
    %892 = vector.shape_cast %891 : vector<1x8x8xf32> to vector<8x8xf32>
    %893 = vector.extract_strided_slice %888 {offsets = [2, 0, 0], sizes = [1, 8, 8], strides = [1, 1, 1]} : vector<4x8x8xf32> to vector<1x8x8xf32>
    %894 = vector.shape_cast %893 : vector<1x8x8xf32> to vector<8x8xf32>
    %895 = vector.extract_strided_slice %888 {offsets = [3, 0, 0], sizes = [1, 8, 8], strides = [1, 1, 1]} : vector<4x8x8xf32> to vector<1x8x8xf32>
    %896 = vector.shape_cast %895 : vector<1x8x8xf32> to vector<8x8xf32>
    %897 = tpu.concatenate %890, %892, %894, %896 in 1 : vector<8x8xf32>, vector<8x8xf32>, vector<8x8xf32>, vector<8x8xf32> -> vector<8x32xf32>
    %898 = vector.extract_strided_slice %839 {offsets = [8, 0], sizes = [8, 32], strides = [1, 1]} : vector<16x32xf32> to vector<8x32xf32>
    %899 = vector.extract_strided_slice %898 {offsets = [0, 0], sizes = [8, 8], strides = [1, 1]} : vector<8x32xf32> to vector<8x8xf32>
    %900 = vector.extract_strided_slice %898 {offsets = [0, 8], sizes = [8, 8], strides = [1, 1]} : vector<8x32xf32> to vector<8x8xf32>
    %901 = vector.extract_strided_slice %898 {offsets = [0, 16], sizes = [8, 8], strides = [1, 1]} : vector<8x32xf32> to vector<8x8xf32>
    %902 = vector.extract_strided_slice %898 {offsets = [0, 24], sizes = [8, 8], strides = [1, 1]} : vector<8x32xf32> to vector<8x8xf32>
    %903 = vector.shape_cast %899 : vector<8x8xf32> to vector<1x8x8xf32>
    %904 = vector.shape_cast %900 : vector<8x8xf32> to vector<1x8x8xf32>
    %905 = vector.shape_cast %901 : vector<8x8xf32> to vector<1x8x8xf32>
    %906 = vector.shape_cast %902 : vector<8x8xf32> to vector<1x8x8xf32>
    %907 = tpu.concatenate %903, %904, %905, %906 in 0 : vector<1x8x8xf32>, vector<1x8x8xf32>, vector<1x8x8xf32>, vector<1x8x8xf32> -> vector<4x8x8xf32>
    %908 = vector.extract_strided_slice %840 {offsets = [8, 0], sizes = [8, 32], strides = [1, 1]} : vector<16x32xf32> to vector<8x32xf32>
    %909 = vector.extract_strided_slice %908 {offsets = [0, 0], sizes = [8, 8], strides = [1, 1]} : vector<8x32xf32> to vector<8x8xf32>
    %910 = vector.extract_strided_slice %908 {offsets = [0, 8], sizes = [8, 8], strides = [1, 1]} : vector<8x32xf32> to vector<8x8xf32>
    %911 = vector.extract_strided_slice %908 {offsets = [0, 16], sizes = [8, 8], strides = [1, 1]} : vector<8x32xf32> to vector<8x8xf32>
    %912 = vector.extract_strided_slice %908 {offsets = [0, 24], sizes = [8, 8], strides = [1, 1]} : vector<8x32xf32> to vector<8x8xf32>
    %913 = vector.shape_cast %909 : vector<8x8xf32> to vector<1x8x8xf32>
    %914 = vector.shape_cast %910 : vector<8x8xf32> to vector<1x8x8xf32>
    %915 = vector.shape_cast %911 : vector<8x8xf32> to vector<1x8x8xf32>
    %916 = vector.shape_cast %912 : vector<8x8xf32> to vector<1x8x8xf32>
    %917 = tpu.concatenate %913, %914, %915, %916 in 0 : vector<1x8x8xf32>, vector<1x8x8xf32>, vector<1x8x8xf32>, vector<1x8x8xf32> -> vector<4x8x8xf32>
    %918 = vector.extract_strided_slice %841 {offsets = [8, 0], sizes = [8, 32], strides = [1, 1]} : vector<16x32xf32> to vector<8x32xf32>
    %919 = vector.extract_strided_slice %918 {offsets = [0, 0], sizes = [8, 8], strides = [1, 1]} : vector<8x32xf32> to vector<8x8xf32>
    %920 = vector.extract_strided_slice %918 {offsets = [0, 8], sizes = [8, 8], strides = [1, 1]} : vector<8x32xf32> to vector<8x8xf32>
    %921 = vector.extract_strided_slice %918 {offsets = [0, 16], sizes = [8, 8], strides = [1, 1]} : vector<8x32xf32> to vector<8x8xf32>
    %922 = vector.extract_strided_slice %918 {offsets = [0, 24], sizes = [8, 8], strides = [1, 1]} : vector<8x32xf32> to vector<8x8xf32>
    %923 = vector.shape_cast %919 : vector<8x8xf32> to vector<1x8x8xf32>
    %924 = vector.shape_cast %920 : vector<8x8xf32> to vector<1x8x8xf32>
    %925 = vector.shape_cast %921 : vector<8x8xf32> to vector<1x8x8xf32>
    %926 = vector.shape_cast %922 : vector<8x8xf32> to vector<1x8x8xf32>
    %927 = tpu.concatenate %923, %924, %925, %926 in 0 : vector<1x8x8xf32>, vector<1x8x8xf32>, vector<1x8x8xf32>, vector<1x8x8xf32> -> vector<4x8x8xf32>
    "tpu.trace_start"() <{level = 10 : i32, message = "hqf,hkf->hqk"}> : () -> ()
    %cst_185 = arith.constant dense<0.000000e+00> : vector<4x8x8xf32>
    %928 = tpu.matmul %907, %917, %cst_185 {dimension_numbers = #tpu.dot_dimension_numbers<[2], [2], [1], [1], [0, 0, 0, 1, 1, 1], [0], [0]>} : vector<4x8x8xf32>, vector<4x8x8xf32>, vector<4x8x8xf32> -> vector<4x8x8xf32>
    "tpu.trace_stop"() : () -> ()
    %c1_186 = arith.constant 1 : index
    %c0_187 = arith.constant 0 : index
    %c0_188 = arith.constant 0 : index
    %929 = vector.load %arg3[%c1_186, %c0_187, %c0_188] : memref<2x8x8xf32, #tpu.memory_space<vmem>>, vector<1x8x8xf32>
    %930 = vector.shape_cast %929 : vector<1x8x8xf32> to vector<8x8xf32>
    %931 = vector.shape_cast %930 : vector<8x8xf32> to vector<1x8x8xf32>
    %932 = vector.broadcast %931 : vector<1x8x8xf32> to vector<4x8x8xf32>
    %933 = arith.addf %928, %932 : vector<4x8x8xf32>
    %cst_189 = arith.constant dense<0xFF800000> : vector<4x8xf32>
    %934 = vector.multi_reduction <maximumf>, %933, %cst_189 [2] : vector<4x8x8xf32> to vector<4x8xf32>
    %935 = vector.shape_cast %934 : vector<4x8xf32> to vector<4x8x1xf32>
    %936 = vector.broadcast %935 : vector<4x8x1xf32> to vector<4x8x8xf32>
    %937 = arith.subf %933, %936 : vector<4x8x8xf32>
    %938 = math.exp %937 : vector<4x8x8xf32>
    %cst_190 = arith.constant dense<0.000000e+00> : vector<4x8xf32>
    %939 = vector.multi_reduction <add>, %938, %cst_190 [2] : vector<4x8x8xf32> to vector<4x8xf32>
    %940 = vector.shape_cast %939 : vector<4x8xf32> to vector<4x8x1xf32>
    %941 = tpu.reciprocal %940 {approx = true} : vector<4x8x1xf32> -> vector<4x8x1xf32>
    %942 = vector.broadcast %941 : vector<4x8x1xf32> to vector<4x8x8xf32>
    %943 = arith.mulf %938, %942 : vector<4x8x8xf32>
    "tpu.trace_start"() <{level = 10 : i32, message = "hqk,hkf->hqf"}> : () -> ()
    %cst_191 = arith.constant dense<0.000000e+00> : vector<4x8x8xf32>
    %944 = tpu.matmul %943, %927, %cst_191 {dimension_numbers = #tpu.dot_dimension_numbers<[2], [1], [1], [2], [0, 0, 0, 1, 1, 2], [0], [0]>} : vector<4x8x8xf32>, vector<4x8x8xf32>, vector<4x8x8xf32> -> vector<4x8x8xf32>
    "tpu.trace_stop"() : () -> ()
    %945 = vector.extract_strided_slice %944 {offsets = [0, 0, 0], sizes = [1, 8, 8], strides = [1, 1, 1]} : vector<4x8x8xf32> to vector<1x8x8xf32>
    %946 = vector.shape_cast %945 : vector<1x8x8xf32> to vector<8x8xf32>
    %947 = vector.extract_strided_slice %944 {offsets = [1, 0, 0], sizes = [1, 8, 8], strides = [1, 1, 1]} : vector<4x8x8xf32> to vector<1x8x8xf32>
    %948 = vector.shape_cast %947 : vector<1x8x8xf32> to vector<8x8xf32>
    %949 = vector.extract_strided_slice %944 {offsets = [2, 0, 0], sizes = [1, 8, 8], strides = [1, 1, 1]} : vector<4x8x8xf32> to vector<1x8x8xf32>
    %950 = vector.shape_cast %949 : vector<1x8x8xf32> to vector<8x8xf32>
    %951 = vector.extract_strided_slice %944 {offsets = [3, 0, 0], sizes = [1, 8, 8], strides = [1, 1, 1]} : vector<4x8x8xf32> to vector<1x8x8xf32>
    %952 = vector.shape_cast %951 : vector<1x8x8xf32> to vector<8x8xf32>
    %953 = tpu.concatenate %946, %948, %950, %952 in 1 : vector<8x8xf32>, vector<8x8xf32>, vector<8x8xf32>, vector<8x8xf32> -> vector<8x32xf32>
    %954 = tpu.concatenate %897, %953 in 0 : vector<8x32xf32>, vector<8x32xf32> -> vector<16x32xf32>
    %cst_192 = arith.constant dense<0.000000e+00> : vector<16x32xf32>
    %955 = tpu.matmul %954, %521, %cst_192 {dimension_numbers = #tpu.dot_dimension_numbers<[1], [0], [0], [1], [0, 0, 1, 1], [], []>} : vector<16x32xf32>, vector<32x32xf32>, vector<16x32xf32> -> vector<16x32xf32>
    %956 = vector.broadcast %539 : vector<1x32xf32> to vector<16x32xf32>
    %957 = arith.addf %955, %956 : vector<16x32xf32>
    %958 = arith.addf %957, %833 : vector<16x32xf32>
    %cst_193 = arith.constant dense<0.000000e+00> : vector<16xf32>
    %959 = vector.multi_reduction <add>, %958, %cst_193 [1] : vector<16x32xf32> to vector<16xf32>
    %960 = vector.shape_cast %959 : vector<16xf32> to vector<16x1xf32>
    %cst_194 = arith.constant 3.200000e+01 : f32
    %961 = vector.broadcast %cst_194 : f32 to vector<16x1xf32>
    %962 = arith.divf %960, %961 : vector<16x1xf32>
    %963 = vector.broadcast %962 : vector<16x1xf32> to vector<16x32xf32>
    %964 = arith.subf %958, %963 : vector<16x32xf32>
    %965 = arith.mulf %964, %964 : vector<16x32xf32>
    %cst_195 = arith.constant dense<0.000000e+00> : vector<16xf32>
    %966 = vector.multi_reduction <add>, %965, %cst_195 [1] : vector<16x32xf32> to vector<16xf32>
    %967 = vector.shape_cast %966 : vector<16xf32> to vector<16x1xf32>
    %cst_196 = arith.constant 3.200000e+01 : f32
    %968 = vector.broadcast %cst_196 : f32 to vector<16x1xf32>
    %969 = arith.divf %967, %968 : vector<16x1xf32>
    %970 = vector.broadcast %962 : vector<16x1xf32> to vector<16x32xf32>
    %971 = arith.subf %958, %970 : vector<16x32xf32>
    %cst_197 = arith.constant 9.99999974E-6 : f32
    %972 = vector.broadcast %cst_197 : f32 to vector<16x1xf32>
    %973 = arith.addf %969, %972 : vector<16x1xf32>
    %974 = math.rsqrt %973 : vector<16x1xf32>
    %975 = vector.broadcast %974 : vector<16x1xf32> to vector<16x32xf32>
    %976 = arith.mulf %971, %975 : vector<16x32xf32>
    %977 = vector.broadcast %557 : vector<1x32xf32> to vector<16x32xf32>
    %978 = arith.mulf %977, %976 : vector<16x32xf32>
    %979 = vector.broadcast %560 : vector<1x32xf32> to vector<16x32xf32>
    %980 = arith.addf %978, %979 : vector<16x32xf32>
    %cst_198 = arith.constant dense<0.000000e+00> : vector<16x64xf32>
    %981 = tpu.matmul %980, %524, %cst_198 {dimension_numbers = #tpu.dot_dimension_numbers<[1], [0], [0], [1], [0, 0, 1, 1], [], []>} : vector<16x32xf32>, vector<32x64xf32>, vector<16x64xf32> -> vector<16x64xf32>
    %982 = vector.broadcast %542 : vector<1x64xf32> to vector<16x64xf32>
    %983 = arith.addf %981, %982 : vector<16x64xf32>
    %cst_199 = arith.constant 0.000000e+00 : f32
    %984 = vector.broadcast %cst_199 : f32 to vector<16x64xf32>
    %985 = arith.maximumf %983, %984 : vector<16x64xf32>
    %cst_200 = arith.constant dense<0.000000e+00> : vector<16x32xf32>
    %986 = tpu.matmul %985, %545, %cst_200 {dimension_numbers = #tpu.dot_dimension_numbers<[1], [0], [0], [1], [0, 0, 1, 1], [], []>} : vector<16x64xf32>, vector<64x32xf32>, vector<16x32xf32> -> vector<16x32xf32>
    %987 = vector.broadcast %548 : vector<1x32xf32> to vector<16x32xf32>
    %988 = arith.addf %986, %987 : vector<16x32xf32>
    %989 = arith.addf %988, %980 : vector<16x32xf32>
    %cst_201 = arith.constant dense<0.000000e+00> : vector<16xf32>
    %990 = vector.multi_reduction <add>, %989, %cst_201 [1] : vector<16x32xf32> to vector<16xf32>
    %991 = vector.shape_cast %990 : vector<16xf32> to vector<16x1xf32>
    %cst_202 = arith.constant 3.200000e+01 : f32
    %992 = vector.broadcast %cst_202 : f32 to vector<16x1xf32>
    %993 = arith.divf %991, %992 : vector<16x1xf32>
    %994 = vector.broadcast %993 : vector<16x1xf32> to vector<16x32xf32>
    %995 = arith.subf %989, %994 : vector<16x32xf32>
    %996 = arith.mulf %995, %995 : vector<16x32xf32>
    %cst_203 = arith.constant dense<0.000000e+00> : vector<16xf32>
    %997 = vector.multi_reduction <add>, %996, %cst_203 [1] : vector<16x32xf32> to vector<16xf32>
    %998 = vector.shape_cast %997 : vector<16xf32> to vector<16x1xf32>
    %cst_204 = arith.constant 3.200000e+01 : f32
    %999 = vector.broadcast %cst_204 : f32 to vector<16x1xf32>
    %1000 = arith.divf %998, %999 : vector<16x1xf32>
    %1001 = vector.broadcast %993 : vector<16x1xf32> to vector<16x32xf32>
    %1002 = arith.subf %989, %1001 : vector<16x32xf32>
    %cst_205 = arith.constant 9.99999974E-6 : f32
    %1003 = vector.broadcast %cst_205 : f32 to vector<16x1xf32>
    %1004 = arith.addf %1000, %1003 : vector<16x1xf32>
    %1005 = math.rsqrt %1004 : vector<16x1xf32>
    %1006 = vector.broadcast %1005 : vector<16x1xf32> to vector<16x32xf32>
    %1007 = arith.mulf %1002, %1006 : vector<16x32xf32>
    %1008 = vector.broadcast %563 : vector<1x32xf32> to vector<16x32xf32>
    %1009 = arith.mulf %1008, %1007 : vector<16x32xf32>
    %1010 = vector.broadcast %566 : vector<1x32xf32> to vector<16x32xf32>
    %1011 = arith.addf %1009, %1010 : vector<16x32xf32>
    %c2_i32 = arith.constant 2 : i32
    %c0_206 = arith.constant 0 : index
    %c0_207 = arith.constant 0 : index
    %1012 = vector.load %arg9[%c0_206, %c0_207] : memref<16x32xf32, #tpu.memory_space<vmem>>, vector<16x32xf32>
    tpu.vector_store %arg9[%c0_206, %c0_207], %1011 {strides = array<i32>} : memref<16x32xf32, #tpu.memory_space<vmem>>, vector<16x32xf32>,
    return
  }
}

</mosaic_0001>

<llo_original>
// kernel: _forward_jit.1
$region0: #{_forward_jit.1}
  #allocation0 [shape = 'u32[]', space=smem, size = 0x4, offset = 0x4, fixed_abs, tag = 'smem constant byte address 0x4 - core index']
  #allocation1 [shape = 'u32[72,128]{1,0:T(1,128)}', space=vmem, size = 0x9000, scoped, tag = 'internal scratch']
  %s0 = inlined_call_operand.vmem [shape: f32[16,32], index: 0, kind: input, shape index: {}]
  %s1 = inlined_call_operand.vmem [shape: f32[16,32], index: 1, kind: input, shape index: {}]
  %s2 = inlined_call_operand.vmem [shape: f32[2,8,8], index: 2, kind: input, shape index: {}]
  %s3 = inlined_call_operand.vmem [shape: f32[2,8,8], index: 3, kind: input, shape index: {}]
  %s4 = inlined_call_operand.vmem [shape: f32[2,32,320], index: 4, kind: input, shape index: {}]
  %s5 = inlined_call_operand.vmem [shape: f32[2,1,320], index: 5, kind: input, shape index: {}]
  %s6 = inlined_call_operand.vmem [shape: f32[2,64,32], index: 6, kind: input, shape index: {}]
  %s7 = inlined_call_operand.vmem [shape: f32[2,1,32], index: 7, kind: input, shape index: {}]
  %s8 = inlined_call_operand.vmem [shape: f32[2,6,32], index: 8, kind: input, shape index: {}]
  %s9 = inlined_call_operand.hbm [shape: f32[16,32], index: 9, kind: output, shape index: {}]
  %s10 = sld [smem:[#allocation0]]
  $region46: #{_forward_jit.1} parent=0
    _
  %s12 = ssub.s32 1, %s10
  %s13 = scalar_select 0, %s12, %s10
  $region1: #{_forward_jit.1} parent=0
    #allocation2 [shape = 'u8[8192]{0}', space=vmem, size = 0x2000, scoped, tag = 'output window, operand 0, single buffered']
    #allocation3 [shape = 's32[1]{0}', space=sflag, size = 0x4, scoped, tag = 'scoped memory for _forward_jit.1']
    %14 = vsyncpa [#allocation3], 0
    // Predicated region
    $region2: #{_forward_jit.1} parent=1 // pred_check
      _
    $region3: #{_forward_jit.1} parent=1 // pred_check_branch
      %16 = sbr.rel (0) target = $region5
    $region4: #{_forward_jit.1} parent=1 // pred_region
      _
    $region5: #{_forward_jit.1} parent=1 // pred_fallthru
      _
    // Predicated region
    $region6: #{_forward_jit.1} parent=1 // pred_check
      _
    $region7: #{_forward_jit.1} parent=1 // pred_check_branch
      %18 = sbr.rel (0) target = $region9
    $region8: #{_forward_jit.1} parent=1 // pred_region
      _
    $region9: #{_forward_jit.1} parent=1 // pred_fallthru
      _
    // Predicated region
    $region10: #{_forward_jit.1} parent=1 // pred_check
      _
    $region11: #{_forward_jit.1} parent=1 // pred_check_branch
      %20 = sbr.rel (0) target = $region13
    $region12: #{_forward_jit.1} parent=1 // pred_region
      _
    $region13: #{_forward_jit.1} parent=1 // pred_fallthru
      _
    // Predicated region
    $region14: #{_forward_jit.1} parent=1 // pred_check
      _
    $region15: #{_forward_jit.1} parent=1 // pred_check_branch
      %22 = sbr.rel (0) target = $region17
    $region16: #{_forward_jit.1} parent=1 // pred_region
      _
    $region17: #{_forward_jit.1} parent=1 // pred_fallthru
      _
    // Predicated region
    $region18: #{_forward_jit.1} parent=1 // pred_check
      _
    $region19: #{_forward_jit.1} parent=1 // pred_check_branch
      %24 = sbr.rel (0) target = $region21
    $region20: #{_forward_jit.1} parent=1 // pred_region
      _
    $region21: #{_forward_jit.1} parent=1 // pred_fallthru
      _
    // Predicated region
    $region22: #{_forward_jit.1} parent=1 // pred_check
      _
    $region23: #{_forward_jit.1} parent=1 // pred_check_branch
      %26 = sbr.rel (0) target = $region25
    $region24: #{_forward_jit.1} parent=1 // pred_region
      _
    $region25: #{_forward_jit.1} parent=1 // pred_fallthru
      _
    // Predicated region
    $region26: #{_forward_jit.1} parent=1 // pred_check
      _
    $region27: #{_forward_jit.1} parent=1 // pred_check_branch
      %28 = sbr.rel (0) target = $region29
    $region28: #{_forward_jit.1} parent=1 // pred_region
      _
    $region29: #{_forward_jit.1} parent=1 // pred_fallthru
      _
    // Predicated region
    $region30: #{_forward_jit.1} parent=1 // pred_check
      _
    $region31: #{_forward_jit.1} parent=1 // pred_check_branch
      %30 = sbr.rel (0) target = $region33
    $region32: #{_forward_jit.1} parent=1 // pred_region
      _
    $region33: #{_forward_jit.1} parent=1 // pred_fallthru
      _
    // Predicated region
    $region34: #{_forward_jit.1} parent=1 // pred_check
      _
    $region35: #{_forward_jit.1} parent=1 // pred_check_branch
      %32 = sbr.rel (0) target = $region37
    $region36: #{_forward_jit.1} parent=1 // pred_region
      _
    $region37: #{_forward_jit.1} parent=1 // pred_fallthru
      _
    %v33 = vld [vmem:[%s0] sm:$0xff]
    %v34 = vld [vmem:[%s0 + $0x8] sm:$0xff]
    %v35 = vld [vmem:[%s1] sm:$0xff]
    %v36 = vld [vmem:[%s1 + $0x8] sm:$0xff]
    %v37 = vld [vmem:[%s4] sm:$0xff]
    %v38 = vld [vmem:[%s4 + $0x18] sm:$0xff]
    %v39 = vld [vmem:[%s4 + $0x30] sm:$0xff]
    %v40 = vld [vmem:[%s4 + $0x48] sm:$0xff]
    %v41 = vld [vmem:[%s4 + $0x8] sm:$0xff]
    %v42 = vld [vmem:[%s4 + $0x20] sm:$0xff]
    %v43 = vld [vmem:[%s4 + $0x38] sm:$0xff]
    %v44 = vld [vmem:[%s4 + $0x50] sm:$0xff]
    %v45 = vld [vmem:[%s4 + $0x10] sm:$0xff]
    %v46 = vld [vmem:[%s4 + $0x28] sm:$0xff]
    %v47 = vld [vmem:[%s4 + $0x40] sm:$0xff]
    %v48 = vld [vmem:[%s4 + $0x58] sm:$0xff]
    %v49 = vld [vmem:[%s5] sm:$0x1]
    %v50 = vld [vmem:[%s5 + $0x1] sm:$0x1]
    %v51 = vld [vmem:[%s5 + $0x2] sm:$0x1]
    %v52 = vld [vmem:[%s6] sm:$0xff]
    %v53 = vld [vmem:[%s6 + $0x8] sm:$0xff]
    %v54 = vld [vmem:[%s6 + $0x10] sm:$0xff]
    %v55 = vld [vmem:[%s6 + $0x18] sm:$0xff]
    %v56 = vld [vmem:[%s6 + $0x20] sm:$0xff]
    %v57 = vld [vmem:[%s6 + $0x28] sm:$0xff]
    %v58 = vld [vmem:[%s6 + $0x30] sm:$0xff]
    %v59 = vld [vmem:[%s6 + $0x38] sm:$0xff]
    %v60 = vld [vmem:[%s7] sm:$0x1]
    %v61 = vld [vmem:[%s8] sm:$0x1]
    %v62 = vld [vmem:[%s8 + $0x1] sm:$0x1]
    %v63 = vld [vmem:[%s8 + $0x2] sm:$0x1]
    %v64 = vld [vmem:[%s8 + $0x3] sm:$0x1]
    %v65 = vld [vmem:[%s8 + $0x4] sm:$0x1]
    %v66 = vld [vmem:[%s8 + $0x5] sm:$0x1]
    %v68 = vperm.slane %v49, 0
    %vm70 = vcmask 261120
    %v72 = vsel %vm70, %v35, 0
    %v75 = vsel %vm70, %v36, 0
    %77 = vmatpush.msra.mxu0 0.0
    %78 = vmatpush.msra.mxu0 0.0
    %79 = vmatpush.msra.mxu0 0.0
    %80 = vmatpush.msra.mxu0 0.0
    %81 = vmatpush.msra.mxu0 0.0
    %82 = vmatpush.msra.mxu0 0.0
    %83 = vmatpush.msra.mxu0 0.0
    %84 = vmatpush.msra.mxu0 0.0
    %85 = vmatpush.msra.mxu0 0.0
    %86 = vmatpush.msra.mxu0 0.0
    %87 = vmatpush.msra.mxu0 0.0
    %88 = vmatpush.msra.mxu0 0.0
    %89 = vmatpush.msra.mxu0 %v40
    %90 = vmatpush.msra.mxu0 %v39
    %91 = vmatpush.msra.mxu0 %v38
    %92 = vmatpush.msra.mxu0 %v37
    %93 = vmatmul.f32.gmra.mxu0 %v72
    %v94 = vpop.f32.mrf.mxu0
    %v95 = vadd.f32 %v68, %v94
    %96 = vmatmul.f32.gmra.mxu0 %v75
    %v97 = vpop.f32.mrf.mxu0
    %v98 = vadd.f32 %v68, %v97
    %99 = vdwg.mxu0
    %101 = vrot.lane.b32.xlu0 %v95, 120
    %v102 = vpop.permute.xlu0 %101
    %103 = vrot.lane.b32.xlu0 %v95, 112
    %v104 = vpop.permute.xlu0 %103
    %105 = vrot.lane.b32.xlu0 %v95, 104
    %v106 = vpop.permute.xlu0 %105
    %v107 = vld [vmem:[%s2] sm:$0xff]
    %108 = vrot.lane.b32.xlu0 %v95, 96
    %v109 = vpop.permute.xlu0 %108
    %vm110 = vcmask 64512
    %v111 = vsel %vm110, %v95, 0
    %v113 = vsel %vm110, %v109, 0
    %115 = vmatpush.xpose.msra.mxu0 0.0
    %116 = vmatpush.xpose.msra.mxu0 0.0
    %117 = vmatpush.xpose.msra.mxu0 0.0
    %118 = vmatpush.xpose.msra.mxu0 0.0
    %119 = vmatpush.xpose.msra.mxu0 0.0
    %120 = vmatpush.xpose.msra.mxu0 0.0
    %121 = vmatpush.xpose.msra.mxu0 0.0
    %122 = vmatpush.xpose.msra.mxu0 0.0
    %123 = vmatpush.xpose.msra.mxu0 0.0
    %124 = vmatpush.xpose.msra.mxu0 0.0
    %125 = vmatpush.xpose.msra.mxu0 0.0
    %126 = vmatpush.xpose.msra.mxu0 0.0
    %127 = vmatpush.xpose.msra.mxu0 0.0
    %128 = vmatpush.xpose.msra.mxu0 0.0
    %129 = vmatpush.xpose.msra.mxu0 0.0
    %130 = vmatpush.xpose.msra.mxu0 %v113
    %131 = vmatmul.f32.gmra.mxu0 %v111
    %v132 = vpop.f32.mrf.mxu0
    %v133 = vadd.f32 %v107, %v132
    %134 = vdwg.mxu0
    %135 = vrot.lane.b32.xlu0 %v102, 96
    %v136 = vpop.permute.xlu0 %135
    %v137 = vsel %vm110, %v102, 0
    %v139 = vsel %vm110, %v136, 0
    %141 = vmatpush.xpose.msra.mxu0 0.0
    %142 = vmatpush.xpose.msra.mxu0 0.0
    %143 = vmatpush.xpose.msra.mxu0 0.0
    %144 = vmatpush.xpose.msra.mxu0 0.0
    %145 = vmatpush.xpose.msra.mxu0 0.0
    %146 = vmatpush.xpose.msra.mxu0 0.0
    %147 = vmatpush.xpose.msra.mxu0 0.0
    %148 = vmatpush.xpose.msra.mxu0 0.0
    %149 = vmatpush.xpose.msra.mxu0 0.0
    %150 = vmatpush.xpose.msra.mxu0 0.0
    %151 = vmatpush.xpose.msra.mxu0 0.0
    %152 = vmatpush.xpose.msra.mxu0 0.0
    %153 = vmatpush.xpose.msra.mxu0 0.0
    %154 = vmatpush.xpose.msra.mxu0 0.0
    %155 = vmatpush.xpose.msra.mxu0 0.0
    %156 = vmatpush.xpose.msra.mxu0 %v139
    %157 = vmatmul.f32.gmra.mxu0 %v137
    %v158 = vpop.f32.mrf.mxu0
    %v159 = vadd.f32 %v107, %v158
    %160 = vdwg.mxu0
    %161 = vrot.lane.b32.xlu0 %v104, 96
    %v162 = vpop.permute.xlu0 %161
    %v163 = vsel %vm110, %v104, 0
    %v165 = vsel %vm110, %v162, 0
    %167 = vmatpush.xpose.msra.mxu0 0.0
    %168 = vmatpush.xpose.msra.mxu0 0.0
    %169 = vmatpush.xpose.msra.mxu0 0.0
    %170 = vmatpush.xpose.msra.mxu0 0.0
    %171 = vmatpush.xpose.msra.mxu0 0.0
    %172 = vmatpush.xpose.msra.mxu0 0.0
    %173 = vmatpush.xpose.msra.mxu0 0.0
    %174 = vmatpush.xpose.msra.mxu0 0.0
    %175 = vmatpush.xpose.msra.mxu0 0.0
    %176 = vmatpush.xpose.msra.mxu0 0.0
    %177 = vmatpush.xpose.msra.mxu0 0.0
    %178 = vmatpush.xpose.msra.mxu0 0.0
    %179 = vmatpush.xpose.msra.mxu0 0.0
    %180 = vmatpush.xpose.msra.mxu0 0.0
    %181 = vmatpush.xpose.msra.mxu0 0.0
    %182 = vmatpush.xpose.msra.mxu0 %v165
    %183 = vmatmul.f32.gmra.mxu0 %v163
    %v184 = vpop.f32.mrf.mxu0
    %v185 = vadd.f32 %v107, %v184
    %186 = vdwg.mxu0
    %187 = vrot.lane.b32.xlu0 %v106, 96
    %v188 = vpop.permute.xlu0 %187
    %v189 = vsel %vm110, %v106, 0
    %v191 = vsel %vm110, %v188, 0
    %193 = vmatpush.xpose.msra.mxu0 0.0
    %194 = vmatpush.xpose.msra.mxu0 0.0
    %195 = vmatpush.xpose.msra.mxu0 0.0
    %196 = vmatpush.xpose.msra.mxu0 0.0
    %197 = vmatpush.xpose.msra.mxu0 0.0
    %198 = vmatpush.xpose.msra.mxu0 0.0
    %199 = vmatpush.xpose.msra.mxu0 0.0
    %200 = vmatpush.xpose.msra.mxu0 0.0
    %201 = vmatpush.xpose.msra.mxu0 0.0
    %202 = vmatpush.xpose.msra.mxu0 0.0
    %203 = vmatpush.xpose.msra.mxu0 0.0
    %204 = vmatpush.xpose.msra.mxu0 0.0
    %205 = vmatpush.xpose.msra.mxu0 0.0
    %206 = vmatpush.xpose.msra.mxu0 0.0
    %207 = vmatpush.xpose.msra.mxu0 0.0
    %208 = vmatpush.xpose.msra.mxu0 %v191
    %209 = vmatmul.f32.gmra.mxu0 %v189
    %v210 = vpop.f32.mrf.mxu0
    %v211 = vadd.f32 %v107, %v210
    %212 = vdwg.mxu0
    %v213 = vsel %vm110, %v133, -inf
    %214 = vmax.xlane.f32.xlu0 %v213
    %v215 = vpop.xlane.xlu0 %214
    %v216 = vsel %vm110, %v159, -inf
    %217 = vmax.xlane.f32.xlu0 %v216
    %v218 = vpop.xlane.xlu0 %217
    %v219 = vsel %vm110, %v185, -inf
    %220 = vmax.xlane.f32.xlu0 %v219
    %v221 = vpop.xlane.xlu0 %220
    %v222 = vsel %vm110, %v211, -inf
    %223 = vmax.xlane.f32.xlu0 %v222
    %v224 = vpop.xlane.xlu0 %223
    %v225 = vsub.f32 %v133, %v215
    %v226 = vsub.f32 %v159, %v218
    %v227 = vsub.f32 %v185, %v221
    %v228 = vsub.f32 %v211, %v224
    %v229 = vmul.f32 %v225, 1.442695
    %v230 = vpow.pop %v229
    %v231 = vmul.f32 %v226, 1.442695
    %v232 = vpow.pop %v231
    %v233 = vmul.f32 %v227, 1.442695
    %v234 = vpow.pop %v233
    %v235 = vmul.f32 %v228, 1.442695
    %v236 = vpow.pop %v235
    %v237 = vsel %vm110, %v230, 0.0
    %238 = vadd.xlane.f32.xlu0 %v237
    %v239 = vpop.xlane.xlu0 %238
    %v240 = vsel %vm110, %v232, 0.0
    %241 = vadd.xlane.f32.xlu0 %v240
    %v242 = vpop.xlane.xlu0 %241
    %v243 = vsel %vm110, %v234, 0.0
    %244 = vadd.xlane.f32.xlu0 %v243
    %v245 = vpop.xlane.xlu0 %244
    %v246 = vsel %vm110, %v236, 0.0
    %247 = vadd.xlane.f32.xlu0 %v246
    %v248 = vpop.xlane.xlu0 %247
    %v249 = vrcp.pop %v239
    %v250 = vrcp.pop %v242
    %v251 = vrcp.pop %v245
    %v252 = vrcp.pop %v248
    %v253 = vmul.f32 %v230, %v249
    %v254 = vmul.f32 %v232, %v250
    %v255 = vmul.f32 %v234, %v251
    %v256 = vmul.f32 %v236, %v252
    %257 = vrot.lane.b32.xlu0 %v95, 64
    %v258 = vpop.permute.xlu0 %257
    %v261 = vsel %vm110, %v253, 0
    %263 = vmatpush.msra.mxu0 0.0
    %264 = vmatpush.msra.mxu0 0.0
    %265 = vmatpush.msra.mxu0 0.0
    %266 = vmatpush.msra.mxu0 0.0
    %267 = vmatpush.msra.mxu0 0.0
    %268 = vmatpush.msra.mxu0 0.0
    %269 = vmatpush.msra.mxu0 0.0
    %270 = vmatpush.msra.mxu0 0.0
    %271 = vmatpush.msra.mxu0 0.0
    %272 = vmatpush.msra.mxu0 0.0
    %273 = vmatpush.msra.mxu0 0.0
    %274 = vmatpush.msra.mxu0 0.0
    %275 = vmatpush.msra.mxu0 0.0
    %276 = vmatpush.msra.mxu0 0.0
    %277 = vmatpush.msra.mxu0 0.0
    %278 = vmatpush.msra.mxu0 %v258
    %279 = vmatmul.f32.gmra.mxu0 %v261
    %v280 = vpop.f32.mrf.mxu0
    %v281 = vadd.f32 0.0, %v280
    %282 = vdwg.mxu0
    %283 = vrot.lane.b32.xlu0 %v102, 64
    %v284 = vpop.permute.xlu0 %283
    %v287 = vsel %vm110, %v254, 0
    %289 = vmatpush.msra.mxu0 0.0
    %290 = vmatpush.msra.mxu0 0.0
    %291 = vmatpush.msra.mxu0 0.0
    %292 = vmatpush.msra.mxu0 0.0
    %293 = vmatpush.msra.mxu0 0.0
    %294 = vmatpush.msra.mxu0 0.0
    %295 = vmatpush.msra.mxu0 0.0
    %296 = vmatpush.msra.mxu0 0.0
    %297 = vmatpush.msra.mxu0 0.0
    %298 = vmatpush.msra.mxu0 0.0
    %299 = vmatpush.msra.mxu0 0.0
    %300 = vmatpush.msra.mxu0 0.0
    %301 = vmatpush.msra.mxu0 0.0
    %302 = vmatpush.msra.mxu0 0.0
    %303 = vmatpush.msra.mxu0 0.0
    %304 = vmatpush.msra.mxu0 %v284
    %305 = vmatmul.f32.gmra.mxu0 %v287
    %v306 = vpop.f32.mrf.mxu0
    %v307 = vadd.f32 0.0, %v306
    %308 = vdwg.mxu0
    %309 = vrot.lane.b32.xlu0 %v104, 64
    %v310 = vpop.permute.xlu0 %309
    %v313 = vsel %vm110, %v255, 0
    %315 = vmatpush.msra.mxu0 0.0
    %316 = vmatpush.msra.mxu0 0.0
    %317 = vmatpush.msra.mxu0 0.0
    %318 = vmatpush.msra.mxu0 0.0
    %319 = vmatpush.msra.mxu0 0.0
    %320 = vmatpush.msra.mxu0 0.0
    %321 = vmatpush.msra.mxu0 0.0
    %322 = vmatpush.msra.mxu0 0.0
    %323 = vmatpush.msra.mxu0 0.0
    %324 = vmatpush.msra.mxu0 0.0
    %325 = vmatpush.msra.mxu0 0.0
    %326 = vmatpush.msra.mxu0 0.0
    %327 = vmatpush.msra.mxu0 0.0
    %328 = vmatpush.msra.mxu0 0.0
    %329 = vmatpush.msra.mxu0 0.0
    %330 = vmatpush.msra.mxu0 %v310
    %331 = vmatmul.f32.gmra.mxu0 %v313
    %v332 = vpop.f32.mrf.mxu0
    %v333 = vadd.f32 0.0, %v332
    %334 = vdwg.mxu0
    %335 = vrot.lane.b32.xlu0 %v106, 64
    %v336 = vpop.permute.xlu0 %335
    %v339 = vsel %vm110, %v256, 0
    %341 = vmatpush.msra.mxu0 0.0
    %342 = vmatpush.msra.mxu0 0.0
    %343 = vmatpush.msra.mxu0 0.0
    %344 = vmatpush.msra.mxu0 0.0
    %345 = vmatpush.msra.mxu0 0.0
    %346 = vmatpush.msra.mxu0 0.0
    %347 = vmatpush.msra.mxu0 0.0
    %348 = vmatpush.msra.mxu0 0.0
    %349 = vmatpush.msra.mxu0 0.0
    %350 = vmatpush.msra.mxu0 0.0
    %351 = vmatpush.msra.mxu0 0.0
    %352 = vmatpush.msra.mxu0 0.0
    %353 = vmatpush.msra.mxu0 0.0
    %354 = vmatpush.msra.mxu0 0.0
    %355 = vmatpush.msra.mxu0 0.0
    %356 = vmatpush.msra.mxu0 %v336
    %357 = vmatmul.f32.gmra.mxu0 %v339
    %v358 = vpop.f32.mrf.mxu0
    %v359 = vadd.f32 0.0, %v358
    %360 = vdwg.mxu0
    %362 = vrot.lane.b32.xlu0 %v307, 8
    %v363 = vpop.permute.xlu0 %362
    %366 = vrot.lane.b32.xlu0 %v333, 16
    %v367 = vpop.permute.xlu0 %366
    %370 = vrot.lane.b32.xlu0 %v359, 24
    %v371 = vpop.permute.xlu0 %370
    %v373 = vsel %vm110, %v281, %v363
    %vm374 = vcmask 130048
    %v375 = vsel %vm374, %v373, %v367
    %vm376 = vcmask 195584
    %v377 = vsel %vm376, %v375, %v371
    %379 = vrot.lane.b32.xlu0 %v98, 120
    %v380 = vpop.permute.xlu0 %379
    %381 = vrot.lane.b32.xlu0 %v98, 112
    %v382 = vpop.permute.xlu0 %381
    %383 = vrot.lane.b32.xlu0 %v98, 104
    %v384 = vpop.permute.xlu0 %383
    %s385 = scalar_lea.vmem %s2, 8
    %v386 = vld [vmem:[%s385] sm:$0xff]
    %387 = vrot.lane.b32.xlu0 %v98, 96
    %v388 = vpop.permute.xlu0 %387
    %v389 = vsel %vm110, %v98, 0
    %v391 = vsel %vm110, %v388, 0
    %393 = vmatpush.xpose.msra.mxu0 0.0
    %394 = vmatpush.xpose.msra.mxu0 0.0
    %395 = vmatpush.xpose.msra.mxu0 0.0
    %396 = vmatpush.xpose.msra.mxu0 0.0
    %397 = vmatpush.xpose.msra.mxu0 0.0
    %398 = vmatpush.xpose.msra.mxu0 0.0
    %399 = vmatpush.xpose.msra.mxu0 0.0
    %400 = vmatpush.xpose.msra.mxu0 0.0
    %401 = vmatpush.xpose.msra.mxu0 0.0
    %402 = vmatpush.xpose.msra.mxu0 0.0
    %403 = vmatpush.xpose.msra.mxu0 0.0
    %404 = vmatpush.xpose.msra.mxu0 0.0
    %405 = vmatpush.xpose.msra.mxu0 0.0
    %406 = vmatpush.xpose.msra.mxu0 0.0
    %407 = vmatpush.xpose.msra.mxu0 0.0
    %408 = vmatpush.xpose.msra.mxu0 %v391
    %409 = vmatmul.f32.gmra.mxu0 %v389
    %v410 = vpop.f32.mrf.mxu0
    %v411 = vadd.f32 %v386, %v410
    %412 = vdwg.mxu0
    %413 = vrot.lane.b32.xlu0 %v380, 96
    %v414 = vpop.permute.xlu0 %413
    %v415 = vsel %vm110, %v380, 0
    %v417 = vsel %vm110, %v414, 0
    %419 = vmatpush.xpose.msra.mxu0 0.0
    %420 = vmatpush.xpose.msra.mxu0 0.0
    %421 = vmatpush.xpose.msra.mxu0 0.0
    %422 = vmatpush.xpose.msra.mxu0 0.0
    %423 = vmatpush.xpose.msra.mxu0 0.0
    %424 = vmatpush.xpose.msra.mxu0 0.0
    %425 = vmatpush.xpose.msra.mxu0 0.0
    %426 = vmatpush.xpose.msra.mxu0 0.0
    %427 = vmatpush.xpose.msra.mxu0 0.0
    %428 = vmatpush.xpose.msra.mxu0 0.0
    %429 = vmatpush.xpose.msra.mxu0 0.0
    %430 = vmatpush.xpose.msra.mxu0 0.0
    %431 = vmatpush.xpose.msra.mxu0 0.0
    %432 = vmatpush.xpose.msra.mxu0 0.0
    %433 = vmatpush.xpose.msra.mxu0 0.0
    %434 = vmatpush.xpose.msra.mxu0 %v417
    %435 = vmatmul.f32.gmra.mxu0 %v415
    %v436 = vpop.f32.mrf.mxu0
    %v437 = vadd.f32 %v386, %v436
    %438 = vdwg.mxu0
    %439 = vrot.lane.b32.xlu0 %v382, 96
    %v440 = vpop.permute.xlu0 %439
    %v441 = vsel %vm110, %v382, 0
    %v443 = vsel %vm110, %v440, 0
    %445 = vmatpush.xpose.msra.mxu0 0.0
    %446 = vmatpush.xpose.msra.mxu0 0.0
    %447 = vmatpush.xpose.msra.mxu0 0.0
    %448 = vmatpush.xpose.msra.mxu0 0.0
    %449 = vmatpush.xpose.msra.mxu0 0.0
    %450 = vmatpush.xpose.msra.mxu0 0.0
    %451 = vmatpush.xpose.msra.mxu0 0.0
    %452 = vmatpush.xpose.msra.mxu0 0.0
    %453 = vmatpush.xpose.msra.mxu0 0.0
    %454 = vmatpush.xpose.msra.mxu0 0.0
    %455 = vmatpush.xpose.msra.mxu0 0.0
    %456 = vmatpush.xpose.msra.mxu0 0.0
    %457 = vmatpush.xpose.msra.mxu0 0.0
    %458 = vmatpush.xpose.msra.mxu0 0.0
    %459 = vmatpush.xpose.msra.mxu0 0.0
    %460 = vmatpush.xpose.msra.mxu0 %v443
    %461 = vmatmul.f32.gmra.mxu0 %v441
    %v462 = vpop.f32.mrf.mxu0
    %v463 = vadd.f32 %v386, %v462
    %464 = vdwg.mxu0
    %465 = vrot.lane.b32.xlu0 %v384, 96
    %v466 = vpop.permute.xlu0 %465
    %v467 = vsel %vm110, %v384, 0
    %v469 = vsel %vm110, %v466, 0
    %471 = vmatpush.xpose.msra.mxu0 0.0
    %472 = vmatpush.xpose.msra.mxu0 0.0
    %473 = vmatpush.xpose.msra.mxu0 0.0
    %474 = vmatpush.xpose.msra.mxu0 0.0
    %475 = vmatpush.xpose.msra.mxu0 0.0
    %476 = vmatpush.xpose.msra.mxu0 0.0
    %477 = vmatpush.xpose.msra.mxu0 0.0
    %478 = vmatpush.xpose.msra.mxu0 0.0
    %479 = vmatpush.xpose.msra.mxu0 0.0
    %480 = vmatpush.xpose.msra.mxu0 0.0
    %481 = vmatpush.xpose.msra.mxu0 0.0
    %482 = vmatpush.xpose.msra.mxu0 0.0
    %483 = vmatpush.xpose.msra.mxu0 0.0
    %484 = vmatpush.xpose.msra.mxu0 0.0
    %485 = vmatpush.xpose.msra.mxu0 0.0
    %486 = vmatpush.xpose.msra.mxu0 %v469
    %487 = vmatmul.f32.gmra.mxu0 %v467
    %v488 = vpop.f32.mrf.mxu0
    %v489 = vadd.f32 %v386, %v488
    %490 = vdwg.mxu0
    %v491 = vsel %vm110, %v411, -inf
    %492 = vmax.xlane.f32.xlu0 %v491
    %v493 = vpop.xlane.xlu0 %492
    %v494 = vsel %vm110, %v437, -inf
    %495 = vmax.xlane.f32.xlu0 %v494
    %v496 = vpop.xlane.xlu0 %495
    %v497 = vsel %vm110, %v463, -inf
    %498 = vmax.xlane.f32.xlu0 %v497
    %v499 = vpop.xlane.xlu0 %498
    %v500 = vsel %vm110, %v489, -inf
    %501 = vmax.xlane.f32.xlu0 %v500
    %v502 = vpop.xlane.xlu0 %501
    %v503 = vsub.f32 %v411, %v493
    %v504 = vsub.f32 %v437, %v496
    %v505 = vsub.f32 %v463, %v499
    %v506 = vsub.f32 %v489, %v502
    %v507 = vmul.f32 %v503, 1.442695
    %v508 = vpow.pop %v507
    %v509 = vmul.f32 %v504, 1.442695
    %v510 = vpow.pop %v509
    %v511 = vmul.f32 %v505, 1.442695
    %v512 = vpow.pop %v511
    %v513 = vmul.f32 %v506, 1.442695
    %v514 = vpow.pop %v513
    %v515 = vsel %vm110, %v508, 0.0
    %516 = vadd.xlane.f32.xlu0 %v515
    %v517 = vpop.xlane.xlu0 %516
    %v518 = vsel %vm110, %v510, 0.0
    %519 = vadd.xlane.f32.xlu0 %v518
    %v520 = vpop.xlane.xlu0 %519
    %v521 = vsel %vm110, %v512, 0.0
    %522 = vadd.xlane.f32.xlu0 %v521
    %v523 = vpop.xlane.xlu0 %522
    %v524 = vsel %vm110, %v514, 0.0
    %525 = vadd.xlane.f32.xlu0 %v524
    %v526 = vpop.xlane.xlu0 %525
    %v527 = vrcp.pop %v517
    %v528 = vrcp.pop %v520
    %v529 = vrcp.pop %v523
    %v530 = vrcp.pop %v526
    %v531 = vmul.f32 %v508, %v527
    %v532 = vmul.f32 %v510, %v528
    %v533 = vmul.f32 %v512, %v529
    %v534 = vmul.f32 %v514, %v530
    %535 = vrot.lane.b32.xlu0 %v98, 64
    %v536 = vpop.permute.xlu0 %535
    %v539 = vsel %vm110, %v531, 0
    %541 = vmatpush.msra.mxu0 0.0
    %542 = vmatpush.msra.mxu0 0.0
    %543 = vmatpush.msra.mxu0 0.0
    %544 = vmatpush.msra.mxu0 0.0
    %545 = vmatpush.msra.mxu0 0.0
    %546 = vmatpush.msra.mxu0 0.0
    %547 = vmatpush.msra.mxu0 0.0
    %548 = vmatpush.msra.mxu0 0.0
    %549 = vmatpush.msra.mxu0 0.0
    %550 = vmatpush.msra.mxu0 0.0
    %551 = vmatpush.msra.mxu0 0.0
    %552 = vmatpush.msra.mxu0 0.0
    %553 = vmatpush.msra.mxu0 0.0
    %554 = vmatpush.msra.mxu0 0.0
    %555 = vmatpush.msra.mxu0 0.0
    %556 = vmatpush.msra.mxu0 %v536
    %557 = vmatmul.f32.gmra.mxu0 %v539
    %v558 = vpop.f32.mrf.mxu0
    %v559 = vadd.f32 0.0, %v558
    %560 = vdwg.mxu0
    %561 = vrot.lane.b32.xlu0 %v380, 64
    %v562 = vpop.permute.xlu0 %561
    %v565 = vsel %vm110, %v532, 0
    %567 = vmatpush.msra.mxu0 0.0
    %568 = vmatpush.msra.mxu0 0.0
    %569 = vmatpush.msra.mxu0 0.0
    %570 = vmatpush.msra.mxu0 0.0
    %571 = vmatpush.msra.mxu0 0.0
    %572 = vmatpush.msra.mxu0 0.0
    %573 = vmatpush.msra.mxu0 0.0
    %574 = vmatpush.msra.mxu0 0.0
    %575 = vmatpush.msra.mxu0 0.0
    %576 = vmatpush.msra.mxu0 0.0
    %577 = vmatpush.msra.mxu0 0.0
    %578 = vmatpush.msra.mxu0 0.0
    %579 = vmatpush.msra.mxu0 0.0
    %580 = vmatpush.msra.mxu0 0.0
    %581 = vmatpush.msra.mxu0 0.0
    %582 = vmatpush.msra.mxu0 %v562
    %583 = vmatmul.f32.gmra.mxu0 %v565
    %v584 = vpop.f32.mrf.mxu0
    %v585 = vadd.f32 0.0, %v584
    %586 = vdwg.mxu0
    %587 = vrot.lane.b32.xlu0 %v382, 64
    %v588 = vpop.permute.xlu0 %587
    %v591 = vsel %vm110, %v533, 0
    %593 = vmatpush.msra.mxu0 0.0
    %594 = vmatpush.msra.mxu0 0.0
    %595 = vmatpush.msra.mxu0 0.0
    %596 = vmatpush.msra.mxu0 0.0
    %597 = vmatpush.msra.mxu0 0.0
    %598 = vmatpush.msra.mxu0 0.0
    %599 = vmatpush.msra.mxu0 0.0
    %600 = vmatpush.msra.mxu0 0.0
    %601 = vmatpush.msra.mxu0 0.0
    %602 = vmatpush.msra.mxu0 0.0
    %603 = vmatpush.msra.mxu0 0.0
    %604 = vmatpush.msra.mxu0 0.0
    %605 = vmatpush.msra.mxu0 0.0
    %606 = vmatpush.msra.mxu0 0.0
    %607 = vmatpush.msra.mxu0 0.0
    %608 = vmatpush.msra.mxu0 %v588
    %609 = vmatmul.f32.gmra.mxu0 %v591
    %v610 = vpop.f32.mrf.mxu0
    %v611 = vadd.f32 0.0, %v610
    %612 = vdwg.mxu0
    %613 = vrot.lane.b32.xlu0 %v384, 64
    %v614 = vpop.permute.xlu0 %613
    %v617 = vsel %vm110, %v534, 0
    %619 = vmatpush.msra.mxu0 0.0
    %620 = vmatpush.msra.mxu0 0.0
    %621 = vmatpush.msra.mxu0 0.0
    %622 = vmatpush.msra.mxu0 0.0
    %623 = vmatpush.msra.mxu0 0.0
    %624 = vmatpush.msra.mxu0 0.0
    %625 = vmatpush.msra.mxu0 0.0
    %626 = vmatpush.msra.mxu0 0.0
    %627 = vmatpush.msra.mxu0 0.0
    %628 = vmatpush.msra.mxu0 0.0
    %629 = vmatpush.msra.mxu0 0.0
    %630 = vmatpush.msra.mxu0 0.0
    %631 = vmatpush.msra.mxu0 0.0
    %632 = vmatpush.msra.mxu0 0.0
    %633 = vmatpush.msra.mxu0 0.0
    %634 = vmatpush.msra.mxu0 %v614
    %635 = vmatmul.f32.gmra.mxu0 %v617
    %v636 = vpop.f32.mrf.mxu0
    %v637 = vadd.f32 0.0, %v636
    %638 = vdwg.mxu0
    %640 = vrot.lane.b32.xlu0 %v585, 8
    %v641 = vpop.permute.xlu0 %640
    %644 = vrot.lane.b32.xlu0 %v611, 16
    %v645 = vpop.permute.xlu0 %644
    %648 = vrot.lane.b32.xlu0 %v637, 24
    %v649 = vpop.permute.xlu0 %648
    %v651 = vsel %vm110, %v559, %v641
    %v652 = vsel %vm374, %v651, %v645
    %v653 = vsel %vm376, %v652, %v649
    %658 = vrot.lane.b32.xlu0 %v37, 32
    %v659 = vpop.permute.xlu0 %658
    %660 = vrot.lane.b32.xlu0 %v38, 32
    %v661 = vpop.permute.xlu0 %660
    %662 = vrot.lane.b32.xlu0 %v39, 32
    %v663 = vpop.permute.xlu0 %662
    %664 = vrot.lane.b32.xlu0 %v40, 32
    %v665 = vpop.permute.xlu0 %664
    %670 = vrot.lane.b32.xlu0 %v68, 32
    %v671 = vpop.permute.xlu0 %670
    %v674 = vsel %vm70, %v377, 0
    %v677 = vsel %vm70, %v653, 0
    %679 = vmatpush.msra.mxu0 0.0
    %680 = vmatpush.msra.mxu0 0.0
    %681 = vmatpush.msra.mxu0 0.0
    %682 = vmatpush.msra.mxu0 0.0
    %683 = vmatpush.msra.mxu0 0.0
    %684 = vmatpush.msra.mxu0 0.0
    %685 = vmatpush.msra.mxu0 0.0
    %686 = vmatpush.msra.mxu0 0.0
    %687 = vmatpush.msra.mxu0 0.0
    %688 = vmatpush.msra.mxu0 0.0
    %689 = vmatpush.msra.mxu0 0.0
    %690 = vmatpush.msra.mxu0 0.0
    %691 = vmatpush.msra.mxu0 %v665
    %692 = vmatpush.msra.mxu0 %v663
    %693 = vmatpush.msra.mxu0 %v661
    %694 = vmatpush.msra.mxu0 %v659
    %695 = vmatmul.f32.gmra.mxu0 %v674
    %v696 = vpop.f32.mrf.mxu0
    %v697 = vadd.f32 %v671, %v696
    %698 = vmatmul.f32.gmra.mxu0 %v677
    %v699 = vpop.f32.mrf.mxu0
    %v700 = vadd.f32 %v671, %v699
    %701 = vdwg.mxu0
    %v703 = vsel %vm70, %v697, 0
    %v706 = vsel %vm70, %v700, 0
    %708 = vmatpush.msra.mxu0 0.0
    %709 = vmatpush.msra.mxu0 0.0
    %710 = vmatpush.msra.mxu0 0.0
    %711 = vmatpush.msra.mxu0 0.0
    %712 = vmatpush.msra.mxu0 0.0
    %713 = vmatpush.msra.mxu0 0.0
    %714 = vmatpush.msra.mxu0 0.0
    %715 = vmatpush.msra.mxu0 0.0
    %716 = vmatpush.msra.mxu0 0.0
    %717 = vmatpush.msra.mxu0 0.0
    %718 = vmatpush.msra.mxu0 0.0
    %719 = vmatpush.msra.mxu0 0.0
    %720 = vmatpush.msra.mxu0 %v40
    %721 = vmatpush.msra.mxu0 %v39
    %722 = vmatpush.msra.mxu0 %v38
    %723 = vmatpush.msra.mxu0 %v37
    %724 = vmatmul.f32.gmra.mxu0 %v703
    %v725 = vpop.f32.mrf.mxu0
    %v726 = vadd.f32 %v68, %v725
    %727 = vmatmul.f32.gmra.mxu0 %v706
    %v728 = vpop.f32.mrf.mxu0
    %v729 = vadd.f32 %v68, %v728
    %730 = vdwg.mxu0
    %732 = vrot.lane.b32.xlu0 %v726, 120
    %v733 = vpop.permute.xlu0 %732
    %734 = vrot.lane.b32.xlu0 %v726, 112
    %v735 = vpop.permute.xlu0 %734
    %736 = vrot.lane.b32.xlu0 %v726, 104
    %v737 = vpop.permute.xlu0 %736
    %v738 = vld [vmem:[%s2] sm:$0xff]
    %739 = vrot.lane.b32.xlu0 %v726, 96
    %v740 = vpop.permute.xlu0 %739
    %v741 = vsel %vm110, %v726, 0
    %v743 = vsel %vm110, %v740, 0
    %745 = vmatpush.xpose.msra.mxu0 0.0
    %746 = vmatpush.xpose.msra.mxu0 0.0
    %747 = vmatpush.xpose.msra.mxu0 0.0
    %748 = vmatpush.xpose.msra.mxu0 0.0
    %749 = vmatpush.xpose.msra.mxu0 0.0
    %750 = vmatpush.xpose.msra.mxu0 0.0
    %751 = vmatpush.xpose.msra.mxu0 0.0
    %752 = vmatpush.xpose.msra.mxu0 0.0
    %753 = vmatpush.xpose.msra.mxu0 0.0
    %754 = vmatpush.xpose.msra.mxu0 0.0
    %755 = vmatpush.xpose.msra.mxu0 0.0
    %756 = vmatpush.xpose.msra.mxu0 0.0
    %757 = vmatpush.xpose.msra.mxu0 0.0
    %758 = vmatpush.xpose.msra.mxu0 0.0
    %759 = vmatpush.xpose.msra.mxu0 0.0
    %760 = vmatpush.xpose.msra.mxu0 %v743
    %761 = vmatmul.f32.gmra.mxu0 %v741
    %v762 = vpop.f32.mrf.mxu0
    %v763 = vadd.f32 %v738, %v762
    %764 = vdwg.mxu0
    %765 = vrot.lane.b32.xlu0 %v733, 96
    %v766 = vpop.permute.xlu0 %765
    %v767 = vsel %vm110, %v733, 0
    %v769 = vsel %vm110, %v766, 0
    %771 = vmatpush.xpose.msra.mxu0 0.0
    %772 = vmatpush.xpose.msra.mxu0 0.0
    %773 = vmatpush.xpose.msra.mxu0 0.0
    %774 = vmatpush.xpose.msra.mxu0 0.0
    %775 = vmatpush.xpose.msra.mxu0 0.0
    %776 = vmatpush.xpose.msra.mxu0 0.0
    %777 = vmatpush.xpose.msra.mxu0 0.0
    %778 = vmatpush.xpose.msra.mxu0 0.0
    %779 = vmatpush.xpose.msra.mxu0 0.0
    %780 = vmatpush.xpose.msra.mxu0 0.0
    %781 = vmatpush.xpose.msra.mxu0 0.0
    %782 = vmatpush.xpose.msra.mxu0 0.0
    %783 = vmatpush.xpose.msra.mxu0 0.0
    %784 = vmatpush.xpose.msra.mxu0 0.0
    %785 = vmatpush.xpose.msra.mxu0 0.0
    %786 = vmatpush.xpose.msra.mxu0 %v769
    %787 = vmatmul.f32.gmra.mxu0 %v767
    %v788 = vpop.f32.mrf.mxu0
    %v789 = vadd.f32 %v738, %v788
    %790 = vdwg.mxu0
    %791 = vrot.lane.b32.xlu0 %v735, 96
    %v792 = vpop.permute.xlu0 %791
    %v793 = vsel %vm110, %v735, 0
    %v795 = vsel %vm110, %v792, 0
    %797 = vmatpush.xpose.msra.mxu0 0.0
    %798 = vmatpush.xpose.msra.mxu0 0.0
    %799 = vmatpush.xpose.msra.mxu0 0.0
    %800 = vmatpush.xpose.msra.mxu0 0.0
    %801 = vmatpush.xpose.msra.mxu0 0.0
    %802 = vmatpush.xpose.msra.mxu0 0.0
    %803 = vmatpush.xpose.msra.mxu0 0.0
    %804 = vmatpush.xpose.msra.mxu0 0.0
    %805 = vmatpush.xpose.msra.mxu0 0.0
    %806 = vmatpush.xpose.msra.mxu0 0.0
    %807 = vmatpush.xpose.msra.mxu0 0.0
    %808 = vmatpush.xpose.msra.mxu0 0.0
    %809 = vmatpush.xpose.msra.mxu0 0.0
    %810 = vmatpush.xpose.msra.mxu0 0.0
    %811 = vmatpush.xpose.msra.mxu0 0.0
    %812 = vmatpush.xpose.msra.mxu0 %v795
    %813 = vmatmul.f32.gmra.mxu0 %v793
    %v814 = vpop.f32.mrf.mxu0
    %v815 = vadd.f32 %v738, %v814
    %816 = vdwg.mxu0
    %817 = vrot.lane.b32.xlu0 %v737, 96
    %v818 = vpop.permute.xlu0 %817
    %v819 = vsel %vm110, %v737, 0
    %v821 = vsel %vm110, %v818, 0
    %823 = vmatpush.xpose.msra.mxu0 0.0
    %824 = vmatpush.xpose.msra.mxu0 0.0
    %825 = vmatpush.xpose.msra.mxu0 0.0
    %826 = vmatpush.xpose.msra.mxu0 0.0
    %827 = vmatpush.xpose.msra.mxu0 0.0
    %828 = vmatpush.xpose.msra.mxu0 0.0
    %829 = vmatpush.xpose.msra.mxu0 0.0
    %830 = vmatpush.xpose.msra.mxu0 0.0
    %831 = vmatpush.xpose.msra.mxu0 0.0
    %832 = vmatpush.xpose.msra.mxu0 0.0
    %833 = vmatpush.xpose.msra.mxu0 0.0
    %834 = vmatpush.xpose.msra.mxu0 0.0
    %835 = vmatpush.xpose.msra.mxu0 0.0
    %836 = vmatpush.xpose.msra.mxu0 0.0
    %837 = vmatpush.xpose.msra.mxu0 0.0
    %838 = vmatpush.xpose.msra.mxu0 %v821
    %839 = vmatmul.f32.gmra.mxu0 %v819
    %v840 = vpop.f32.mrf.mxu0
    %v841 = vadd.f32 %v738, %v840
    %842 = vdwg.mxu0
    %v843 = vsel %vm110, %v763, -inf
    %844 = vmax.xlane.f32.xlu0 %v843
    %v845 = vpop.xlane.xlu0 %844
    %v846 = vsel %vm110, %v789, -inf
    %847 = vmax.xlane.f32.xlu0 %v846
    %v848 = vpop.xlane.xlu0 %847
    %v849 = vsel %vm110, %v815, -inf
    %850 = vmax.xlane.f32.xlu0 %v849
    %v851 = vpop.xlane.xlu0 %850
    %v852 = vsel %vm110, %v841, -inf
    %853 = vmax.xlane.f32.xlu0 %v852
    %v854 = vpop.xlane.xlu0 %853
    %v855 = vsub.f32 %v763, %v845
    %v856 = vsub.f32 %v789, %v848
    %v857 = vsub.f32 %v815, %v851
    %v858 = vsub.f32 %v841, %v854
    %v859 = vmul.f32 %v855, 1.442695
    %v860 = vpow.pop %v859
    %v861 = vmul.f32 %v856, 1.442695
    %v862 = vpow.pop %v861
    %v863 = vmul.f32 %v857, 1.442695
    %v864 = vpow.pop %v863
    %v865 = vmul.f32 %v858, 1.442695
    %v866 = vpow.pop %v865
    %v867 = vsel %vm110, %v860, 0.0
    %868 = vadd.xlane.f32.xlu0 %v867
    %v869 = vpop.xlane.xlu0 %868
    %v870 = vsel %vm110, %v862, 0.0
    %871 = vadd.xlane.f32.xlu0 %v870
    %v872 = vpop.xlane.xlu0 %871
    %v873 = vsel %vm110, %v864, 0.0
    %874 = vadd.xlane.f32.xlu0 %v873
    %v875 = vpop.xlane.xlu0 %874
    %v876 = vsel %vm110, %v866, 0.0
    %877 = vadd.xlane.f32.xlu0 %v876
    %v878 = vpop.xlane.xlu0 %877
    %v879 = vrcp.pop %v869
    %v880 = vrcp.pop %v872
    %v881 = vrcp.pop %v875
    %v882 = vrcp.pop %v878
    %v883 = vmul.f32 %v860, %v879
    %v884 = vmul.f32 %v862, %v880
    %v885 = vmul.f32 %v864, %v881
    %v886 = vmul.f32 %v866, %v882
    %887 = vrot.lane.b32.xlu0 %v726, 64
    %v888 = vpop.permute.xlu0 %887
    %v891 = vsel %vm110, %v883, 0
    %893 = vmatpush.msra.mxu0 0.0
    %894 = vmatpush.msra.mxu0 0.0
    %895 = vmatpush.msra.mxu0 0.0
    %896 = vmatpush.msra.mxu0 0.0
    %897 = vmatpush.msra.mxu0 0.0
    %898 = vmatpush.msra.mxu0 0.0
    %899 = vmatpush.msra.mxu0 0.0
    %900 = vmatpush.msra.mxu0 0.0
    %901 = vmatpush.msra.mxu0 0.0
    %902 = vmatpush.msra.mxu0 0.0
    %903 = vmatpush.msra.mxu0 0.0
    %904 = vmatpush.msra.mxu0 0.0
    %905 = vmatpush.msra.mxu0 0.0
    %906 = vmatpush.msra.mxu0 0.0
    %907 = vmatpush.msra.mxu0 0.0
    %908 = vmatpush.msra.mxu0 %v888
    %909 = vmatmul.f32.gmra.mxu0 %v891
    %v910 = vpop.f32.mrf.mxu0
    %v911 = vadd.f32 0.0, %v910
    %912 = vdwg.mxu0
    %913 = vrot.lane.b32.xlu0 %v733, 64
    %v914 = vpop.permute.xlu0 %913
    %v917 = vsel %vm110, %v884, 0
    %919 = vmatpush.msra.mxu0 0.0
    %920 = vmatpush.msra.mxu0 0.0
    %921 = vmatpush.msra.mxu0 0.0
    %922 = vmatpush.msra.mxu0 0.0
    %923 = vmatpush.msra.mxu0 0.0
    %924 = vmatpush.msra.mxu0 0.0
    %925 = vmatpush.msra.mxu0 0.0
    %926 = vmatpush.msra.mxu0 0.0
    %927 = vmatpush.msra.mxu0 0.0
    %928 = vmatpush.msra.mxu0 0.0
    %929 = vmatpush.msra.mxu0 0.0
    %930 = vmatpush.msra.mxu0 0.0
    %931 = vmatpush.msra.mxu0 0.0
    %932 = vmatpush.msra.mxu0 0.0
    %933 = vmatpush.msra.mxu0 0.0
    %934 = vmatpush.msra.mxu0 %v914
    %935 = vmatmul.f32.gmra.mxu0 %v917
    %v936 = vpop.f32.mrf.mxu0
    %v937 = vadd.f32 0.0, %v936
    %938 = vdwg.mxu0
    %939 = vrot.lane.b32.xlu0 %v735, 64
    %v940 = vpop.permute.xlu0 %939
    %v943 = vsel %vm110, %v885, 0
    %945 = vmatpush.msra.mxu0 0.0
    %946 = vmatpush.msra.mxu0 0.0
    %947 = vmatpush.msra.mxu0 0.0
    %948 = vmatpush.msra.mxu0 0.0
    %949 = vmatpush.msra.mxu0 0.0
    %950 = vmatpush.msra.mxu0 0.0
    %951 = vmatpush.msra.mxu0 0.0
    %952 = vmatpush.msra.mxu0 0.0
    %953 = vmatpush.msra.mxu0 0.0
    %954 = vmatpush.msra.mxu0 0.0
    %955 = vmatpush.msra.mxu0 0.0
    %956 = vmatpush.msra.mxu0 0.0
    %957 = vmatpush.msra.mxu0 0.0
    %958 = vmatpush.msra.mxu0 0.0
    %959 = vmatpush.msra.mxu0 0.0
    %960 = vmatpush.msra.mxu0 %v940
    %961 = vmatmul.f32.gmra.mxu0 %v943
    %v962 = vpop.f32.mrf.mxu0
    %v963 = vadd.f32 0.0, %v962
    %964 = vdwg.mxu0
    %965 = vrot.lane.b32.xlu0 %v737, 64
    %v966 = vpop.permute.xlu0 %965
    %v969 = vsel %vm110, %v886, 0
    %971 = vmatpush.msra.mxu0 0.0
    %972 = vmatpush.msra.mxu0 0.0
    %973 = vmatpush.msra.mxu0 0.0
    %974 = vmatpush.msra.mxu0 0.0
    %975 = vmatpush.msra.mxu0 0.0
    %976 = vmatpush.msra.mxu0 0.0
    %977 = vmatpush.msra.mxu0 0.0
    %978 = vmatpush.msra.mxu0 0.0
    %979 = vmatpush.msra.mxu0 0.0
    %980 = vmatpush.msra.mxu0 0.0
    %981 = vmatpush.msra.mxu0 0.0
    %982 = vmatpush.msra.mxu0 0.0
    %983 = vmatpush.msra.mxu0 0.0
    %984 = vmatpush.msra.mxu0 0.0
    %985 = vmatpush.msra.mxu0 0.0
    %986 = vmatpush.msra.mxu0 %v966
    %987 = vmatmul.f32.gmra.mxu0 %v969
    %v988 = vpop.f32.mrf.mxu0
    %v989 = vadd.f32 0.0, %v988
    %990 = vdwg.mxu0
    %992 = vrot.lane.b32.xlu0 %v937, 8
    %v993 = vpop.permute.xlu0 %992
    %996 = vrot.lane.b32.xlu0 %v963, 16
    %v997 = vpop.permute.xlu0 %996
    %1000 = vrot.lane.b32.xlu0 %v989, 24
    %v1001 = vpop.permute.xlu0 %1000
    %v1003 = vsel %vm110, %v911, %v993
    %v1004 = vsel %vm374, %v1003, %v997
    %v1005 = vsel %vm376, %v1004, %v1001
    %1007 = vrot.lane.b32.xlu0 %v729, 120
    %v1008 = vpop.permute.xlu0 %1007
    %1009 = vrot.lane.b32.xlu0 %v729, 112
    %v1010 = vpop.permute.xlu0 %1009
    %1011 = vrot.lane.b32.xlu0 %v729, 104
    %v1012 = vpop.permute.xlu0 %1011
    %v1013 = vld [vmem:[%s385] sm:$0xff]
    %1014 = vrot.lane.b32.xlu0 %v729, 96
    %v1015 = vpop.permute.xlu0 %1014
    %v1016 = vsel %vm110, %v729, 0
    %v1018 = vsel %vm110, %v1015, 0
    %1020 = vmatpush.xpose.msra.mxu0 0.0
    %1021 = vmatpush.xpose.msra.mxu0 0.0
    %1022 = vmatpush.xpose.msra.mxu0 0.0
    %1023 = vmatpush.xpose.msra.mxu0 0.0
    %1024 = vmatpush.xpose.msra.mxu0 0.0
    %1025 = vmatpush.xpose.msra.mxu0 0.0
    %1026 = vmatpush.xpose.msra.mxu0 0.0
    %1027 = vmatpush.xpose.msra.mxu0 0.0
    %1028 = vmatpush.xpose.msra.mxu0 0.0
    %1029 = vmatpush.xpose.msra.mxu0 0.0
    %1030 = vmatpush.xpose.msra.mxu0 0.0
    %1031 = vmatpush.xpose.msra.mxu0 0.0
    %1032 = vmatpush.xpose.msra.mxu0 0.0
    %1033 = vmatpush.xpose.msra.mxu0 0.0
    %1034 = vmatpush.xpose.msra.mxu0 0.0
    %1035 = vmatpush.xpose.msra.mxu0 %v1018
    %1036 = vmatmul.f32.gmra.mxu0 %v1016
    %v1037 = vpop.f32.mrf.mxu0
    %v1038 = vadd.f32 %v1013, %v1037
    %1039 = vdwg.mxu0
    %1040 = vrot.lane.b32.xlu0 %v1008, 96
    %v1041 = vpop.permute.xlu0 %1040
    %v1042 = vsel %vm110, %v1008, 0
    %v1044 = vsel %vm110, %v1041, 0
    %1046 = vmatpush.xpose.msra.mxu0 0.0
    %1047 = vmatpush.xpose.msra.mxu0 0.0
    %1048 = vmatpush.xpose.msra.mxu0 0.0
    %1049 = vmatpush.xpose.msra.mxu0 0.0
    %1050 = vmatpush.xpose.msra.mxu0 0.0
    %1051 = vmatpush.xpose.msra.mxu0 0.0
    %1052 = vmatpush.xpose.msra.mxu0 0.0
    %1053 = vmatpush.xpose.msra.mxu0 0.0
    %1054 = vmatpush.xpose.msra.mxu0 0.0
    %1055 = vmatpush.xpose.msra.mxu0 0.0
    %1056 = vmatpush.xpose.msra.mxu0 0.0
    %1057 = vmatpush.xpose.msra.mxu0 0.0
    %1058 = vmatpush.xpose.msra.mxu0 0.0
    %1059 = vmatpush.xpose.msra.mxu0 0.0
    %1060 = vmatpush.xpose.msra.mxu0 0.0
    %1061 = vmatpush.xpose.msra.mxu0 %v1044
    %1062 = vmatmul.f32.gmra.mxu0 %v1042
    %v1063 = vpop.f32.mrf.mxu0
    %v1064 = vadd.f32 %v1013, %v1063
    %1065 = vdwg.mxu0
    %1066 = vrot.lane.b32.xlu0 %v1010, 96
    %v1067 = vpop.permute.xlu0 %1066
    %v1068 = vsel %vm110, %v1010, 0
    %v1070 = vsel %vm110, %v1067, 0
    %1072 = vmatpush.xpose.msra.mxu0 0.0
    %1073 = vmatpush.xpose.msra.mxu0 0.0
    %1074 = vmatpush.xpose.msra.mxu0 0.0
    %1075 = vmatpush.xpose.msra.mxu0 0.0
    %1076 = vmatpush.xpose.msra.mxu0 0.0
    %1077 = vmatpush.xpose.msra.mxu0 0.0
    %1078 = vmatpush.xpose.msra.mxu0 0.0
    %1079 = vmatpush.xpose.msra.mxu0 0.0
    %1080 = vmatpush.xpose.msra.mxu0 0.0
    %1081 = vmatpush.xpose.msra.mxu0 0.0
    %1082 = vmatpush.xpose.msra.mxu0 0.0
    %1083 = vmatpush.xpose.msra.mxu0 0.0
    %1084 = vmatpush.xpose.msra.mxu0 0.0
    %1085 = vmatpush.xpose.msra.mxu0 0.0
    %1086 = vmatpush.xpose.msra.mxu0 0.0
    %1087 = vmatpush.xpose.msra.mxu0 %v1070
    %1088 = vmatmul.f32.gmra.mxu0 %v1068
    %v1089 = vpop.f32.mrf.mxu0
    %v1090 = vadd.f32 %v1013, %v1089
    %1091 = vdwg.mxu0
    %1092 = vrot.lane.b32.xlu0 %v1012, 96
    %v1093 = vpop.permute.xlu0 %1092
    %v1094 = vsel %vm110, %v1012, 0
    %v1096 = vsel %vm110, %v1093, 0
    %1098 = vmatpush.xpose.msra.mxu0 0.0
    %1099 = vmatpush.xpose.msra.mxu0 0.0
    %1100 = vmatpush.xpose.msra.mxu0 0.0
    %1101 = vmatpush.xpose.msra.mxu0 0.0
    %1102 = vmatpush.xpose.msra.mxu0 0.0
    %1103 = vmatpush.xpose.msra.mxu0 0.0
    %1104 = vmatpush.xpose.msra.mxu0 0.0
    %1105 = vmatpush.xpose.msra.mxu0 0.0
    %1106 = vmatpush.xpose.msra.mxu0 0.0
    %1107 = vmatpush.xpose.msra.mxu0 0.0
    %1108 = vmatpush.xpose.msra.mxu0 0.0
    %1109 = vmatpush.xpose.msra.mxu0 0.0
    %1110 = vmatpush.xpose.msra.mxu0 0.0
    %1111 = vmatpush.xpose.msra.mxu0 0.0
    %1112 = vmatpush.xpose.msra.mxu0 0.0
    %1113 = vmatpush.xpose.msra.mxu0 %v1096
    %1114 = vmatmul.f32.gmra.mxu0 %v1094
    %v1115 = vpop.f32.mrf.mxu0
    %v1116 = vadd.f32 %v1013, %v1115
    %1117 = vdwg.mxu0
    %v1118 = vsel %vm110, %v1038, -inf
    %1119 = vmax.xlane.f32.xlu0 %v1118
    %v1120 = vpop.xlane.xlu0 %1119
    %v1121 = vsel %vm110, %v1064, -inf
    %1122 = vmax.xlane.f32.xlu0 %v1121
    %v1123 = vpop.xlane.xlu0 %1122
    %v1124 = vsel %vm110, %v1090, -inf
    %1125 = vmax.xlane.f32.xlu0 %v1124
    %v1126 = vpop.xlane.xlu0 %1125
    %v1127 = vsel %vm110, %v1116, -inf
    %1128 = vmax.xlane.f32.xlu0 %v1127
    %v1129 = vpop.xlane.xlu0 %1128
    %v1130 = vsub.f32 %v1038, %v1120
    %v1131 = vsub.f32 %v1064, %v1123
    %v1132 = vsub.f32 %v1090, %v1126
    %v1133 = vsub.f32 %v1116, %v1129
    %v1134 = vmul.f32 %v1130, 1.442695
    %v1135 = vpow.pop %v1134
    %v1136 = vmul.f32 %v1131, 1.442695
    %v1137 = vpow.pop %v1136
    %v1138 = vmul.f32 %v1132, 1.442695
    %v1139 = vpow.pop %v1138
    %v1140 = vmul.f32 %v1133, 1.442695
    %v1141 = vpow.pop %v1140
    %v1142 = vsel %vm110, %v1135, 0.0
    %1143 = vadd.xlane.f32.xlu0 %v1142
    %v1144 = vpop.xlane.xlu0 %1143
    %v1145 = vsel %vm110, %v1137, 0.0
    %1146 = vadd.xlane.f32.xlu0 %v1145
    %v1147 = vpop.xlane.xlu0 %1146
    %v1148 = vsel %vm110, %v1139, 0.0
    %1149 = vadd.xlane.f32.xlu0 %v1148
    %v1150 = vpop.xlane.xlu0 %1149
    %v1151 = vsel %vm110, %v1141, 0.0
    %1152 = vadd.xlane.f32.xlu0 %v1151
    %v1153 = vpop.xlane.xlu0 %1152
    %v1154 = vrcp.pop %v1144
    %v1155 = vrcp.pop %v1147
    %v1156 = vrcp.pop %v1150
    %v1157 = vrcp.pop %v1153
    %v1158 = vmul.f32 %v1135, %v1154
    %v1159 = vmul.f32 %v1137, %v1155
    %v1160 = vmul.f32 %v1139, %v1156
    %v1161 = vmul.f32 %v1141, %v1157
    %1162 = vrot.lane.b32.xlu0 %v729, 64
    %v1163 = vpop.permute.xlu0 %1162
    %v1166 = vsel %vm110, %v1158, 0
    %1168 = vmatpush.msra.mxu0 0.0
    %1169 = vmatpush.msra.mxu0 0.0
    %1170 = vmatpush.msra.mxu0 0.0
    %1171 = vmatpush.msra.mxu0 0.0
    %1172 = vmatpush.msra.mxu0 0.0
    %1173 = vmatpush.msra.mxu0 0.0
    %1174 = vmatpush.msra.mxu0 0.0
    %1175 = vmatpush.msra.mxu0 0.0
    %1176 = vmatpush.msra.mxu0 0.0
    %1177 = vmatpush.msra.mxu0 0.0
    %1178 = vmatpush.msra.mxu0 0.0
    %1179 = vmatpush.msra.mxu0 0.0
    %1180 = vmatpush.msra.mxu0 0.0
    %1181 = vmatpush.msra.mxu0 0.0
    %1182 = vmatpush.msra.mxu0 0.0
    %1183 = vmatpush.msra.mxu0 %v1163
    %1184 = vmatmul.f32.gmra.mxu0 %v1166
    %v1185 = vpop.f32.mrf.mxu0
    %v1186 = vadd.f32 0.0, %v1185
    %1187 = vdwg.mxu0
    %1188 = vrot.lane.b32.xlu0 %v1008, 64
    %v1189 = vpop.permute.xlu0 %1188
    %v1192 = vsel %vm110, %v1159, 0
    %1194 = vmatpush.msra.mxu0 0.0
    %1195 = vmatpush.msra.mxu0 0.0
    %1196 = vmatpush.msra.mxu0 0.0
    %1197 = vmatpush.msra.mxu0 0.0
    %1198 = vmatpush.msra.mxu0 0.0
    %1199 = vmatpush.msra.mxu0 0.0
    %1200 = vmatpush.msra.mxu0 0.0
    %1201 = vmatpush.msra.mxu0 0.0
    %1202 = vmatpush.msra.mxu0 0.0
    %1203 = vmatpush.msra.mxu0 0.0
    %1204 = vmatpush.msra.mxu0 0.0
    %1205 = vmatpush.msra.mxu0 0.0
    %1206 = vmatpush.msra.mxu0 0.0
    %1207 = vmatpush.msra.mxu0 0.0
    %1208 = vmatpush.msra.mxu0 0.0
    %1209 = vmatpush.msra.mxu0 %v1189
    %1210 = vmatmul.f32.gmra.mxu0 %v1192
    %v1211 = vpop.f32.mrf.mxu0
    %v1212 = vadd.f32 0.0, %v1211
    %1213 = vdwg.mxu0
    %1214 = vrot.lane.b32.xlu0 %v1010, 64
    %v1215 = vpop.permute.xlu0 %1214
    %v1218 = vsel %vm110, %v1160, 0
    %1220 = vmatpush.msra.mxu0 0.0
    %1221 = vmatpush.msra.mxu0 0.0
    %1222 = vmatpush.msra.mxu0 0.0
    %1223 = vmatpush.msra.mxu0 0.0
    %1224 = vmatpush.msra.mxu0 0.0
    %1225 = vmatpush.msra.mxu0 0.0
    %1226 = vmatpush.msra.mxu0 0.0
    %1227 = vmatpush.msra.mxu0 0.0
    %1228 = vmatpush.msra.mxu0 0.0
    %1229 = vmatpush.msra.mxu0 0.0
    %1230 = vmatpush.msra.mxu0 0.0
    %1231 = vmatpush.msra.mxu0 0.0
    %1232 = vmatpush.msra.mxu0 0.0
    %1233 = vmatpush.msra.mxu0 0.0
    %1234 = vmatpush.msra.mxu0 0.0
    %1235 = vmatpush.msra.mxu0 %v1215
    %1236 = vmatmul.f32.gmra.mxu0 %v1218
    %v1237 = vpop.f32.mrf.mxu0
    %v1238 = vadd.f32 0.0, %v1237
    %1239 = vdwg.mxu0
    %1240 = vrot.lane.b32.xlu0 %v1012, 64
    %v1241 = vpop.permute.xlu0 %1240
    %v1244 = vsel %vm110, %v1161, 0
    %1246 = vmatpush.msra.mxu0 0.0
    %1247 = vmatpush.msra.mxu0 0.0
    %1248 = vmatpush.msra.mxu0 0.0
    %1249 = vmatpush.msra.mxu0 0.0
    %1250 = vmatpush.msra.mxu0 0.0
    %1251 = vmatpush.msra.mxu0 0.0
    %1252 = vmatpush.msra.mxu0 0.0
    %1253 = vmatpush.msra.mxu0 0.0
    %1254 = vmatpush.msra.mxu0 0.0
    %1255 = vmatpush.msra.mxu0 0.0
    %1256 = vmatpush.msra.mxu0 0.0
    %1257 = vmatpush.msra.mxu0 0.0
    %1258 = vmatpush.msra.mxu0 0.0
    %1259 = vmatpush.msra.mxu0 0.0
    %1260 = vmatpush.msra.mxu0 0.0
    %1261 = vmatpush.msra.mxu0 %v1241
    %1262 = vmatmul.f32.gmra.mxu0 %v1244
    %v1263 = vpop.f32.mrf.mxu0
    %v1264 = vadd.f32 0.0, %v1263
    %1265 = vdwg.mxu0
    %1267 = vrot.lane.b32.xlu0 %v1212, 8
    %v1268 = vpop.permute.xlu0 %1267
    %1271 = vrot.lane.b32.xlu0 %v1238, 16
    %v1272 = vpop.permute.xlu0 %1271
    %1275 = vrot.lane.b32.xlu0 %v1264, 24
    %v1276 = vpop.permute.xlu0 %1275
    %v1278 = vsel %vm110, %v1186, %v1268
    %v1279 = vsel %vm374, %v1278, %v1272
    %v1280 = vsel %vm376, %v1279, %v1276
    %v1282 = vsel %vm70, %v1005, 0
    %v1285 = vsel %vm70, %v1280, 0
    %1287 = vmatpush.msra.mxu0 0.0
    %1288 = vmatpush.msra.mxu0 0.0
    %1289 = vmatpush.msra.mxu0 0.0
    %1290 = vmatpush.msra.mxu0 0.0
    %1291 = vmatpush.msra.mxu0 0.0
    %1292 = vmatpush.msra.mxu0 0.0
    %1293 = vmatpush.msra.mxu0 0.0
    %1294 = vmatpush.msra.mxu0 0.0
    %1295 = vmatpush.msra.mxu0 0.0
    %1296 = vmatpush.msra.mxu0 0.0
    %1297 = vmatpush.msra.mxu0 0.0
    %1298 = vmatpush.msra.mxu0 0.0
    %1299 = vmatpush.msra.mxu0 %v665
    %1300 = vmatpush.msra.mxu0 %v663
    %1301 = vmatpush.msra.mxu0 %v661
    %1302 = vmatpush.msra.mxu0 %v659
    %1303 = vmatmul.f32.gmra.mxu0 %v1282
    %v1304 = vpop.f32.mrf.mxu0
    %v1305 = vadd.f32 %v671, %v1304
    %1306 = vmatmul.f32.gmra.mxu0 %v1285
    %v1307 = vpop.f32.mrf.mxu0
    %v1308 = vadd.f32 %v671, %v1307
    %1309 = vdwg.mxu0
    %v1310 = vadd.f32 %v1305, %v35
    %v1311 = vadd.f32 %v1308, %v36
    %v1312 = vsel %vm70, %v1310, 0.0
    %1313 = vadd.xlane.f32.xlu0 %v1312
    %v1314 = vpop.xlane.xlu0 %1313
    %v1315 = vsel %vm70, %v1311, 0.0
    %1316 = vadd.xlane.f32.xlu0 %v1315
    %v1317 = vpop.xlane.xlu0 %1316
    %v1318 = vrcp.pop 32.0
    %v1319 = vmul.f32 32.0, %v1318
    %v1320 = vsub.f32 1.0, %v1319
    %v1321 = vmul.f32 %v1318, %v1320
    %v1322 = vadd.f32 %v1318, %v1321
    %vm1323 = vweird.f32 %v1318
    %v1324 = vsel %vm1323, %v1318, %v1322
    %v1325 = vmul.f32 %v1314, %v1324
    %v1326 = vmul.f32 %v1317, %v1324
    %v1327 = vsub.f32 %v1310, %v1325
    %v1328 = vsub.f32 %v1311, %v1326
    %v1329 = vmul.f32 %v1327, %v1327
    %v1330 = vmul.f32 %v1328, %v1328
    %v1331 = vsel %vm70, %v1329, 0.0
    %1332 = vadd.xlane.f32.xlu0 %v1331
    %v1333 = vpop.xlane.xlu0 %1332
    %v1334 = vsel %vm70, %v1330, 0.0
    %1335 = vadd.xlane.f32.xlu0 %v1334
    %v1336 = vpop.xlane.xlu0 %1335
    %v1337 = vmul.f32 %v1333, %v1324
    %v1338 = vmul.f32 %v1336, %v1324
    %v1339 = vadd.f32 %v1337, 1e-05
    %v1340 = vadd.f32 %v1338, 1e-05
    %v1341 = vrsqrt.pop %v1339
    %v1342 = vmul.f32 %v1341, %v1339
    %v1343 = vmul.f32 %v1342, %v1341
    %v1344 = vmul.f32 0.5, %v1343
    %v1345 = vsub.f32 1.5, %v1344
    %v1346 = vmul.f32 %v1341, %v1345
    %vm1347 = vweird.f32 %v1339
    %vm1348 = vweird.f32 %v1341
    %vm1349 = vmor %vm1347, %vm1348
    %v1350 = vsel %vm1349, %v1341, %v1346
    %v1351 = vrsqrt.pop %v1340
    %v1352 = vmul.f32 %v1351, %v1340
    %v1353 = vmul.f32 %v1352, %v1351
    %v1354 = vmul.f32 0.5, %v1353
    %v1355 = vsub.f32 1.5, %v1354
    %v1356 = vmul.f32 %v1351, %v1355
    %vm1357 = vweird.f32 %v1340
    %vm1358 = vweird.f32 %v1351
    %vm1359 = vmor %vm1357, %vm1358
    %v1360 = vsel %vm1359, %v1351, %v1356
    %v1361 = vmul.f32 %v1327, %v1350
    %v1362 = vmul.f32 %v1328, %v1360
    %v1363 = vperm.slane %v61, 0
    %v1364 = vmul.f32 %v1363, %v1361
    %v1365 = vmul.f32 %v1363, %v1362
    %v1366 = vperm.slane %v62, 0
    %v1367 = vadd.f32 %v1364, %v1366
    %v1368 = vadd.f32 %v1365, %v1366
    %v1370 = vperm.slane %v50, 0
    %v1373 = vsel %vm70, %v33, 0
    %v1376 = vsel %vm70, %v34, 0
    %1378 = vmatpush.msra.mxu0 0.0
    %1379 = vmatpush.msra.mxu0 0.0
    %1380 = vmatpush.msra.mxu0 0.0
    %1381 = vmatpush.msra.mxu0 0.0
    %1382 = vmatpush.msra.mxu0 0.0
    %1383 = vmatpush.msra.mxu0 0.0
    %1384 = vmatpush.msra.mxu0 0.0
    %1385 = vmatpush.msra.mxu0 0.0
    %1386 = vmatpush.msra.mxu0 0.0
    %1387 = vmatpush.msra.mxu0 0.0
    %1388 = vmatpush.msra.mxu0 0.0
    %1389 = vmatpush.msra.mxu0 0.0
    %1390 = vmatpush.msra.mxu0 %v44
    %1391 = vmatpush.msra.mxu0 %v43
    %1392 = vmatpush.msra.mxu0 %v42
    %1393 = vmatpush.msra.mxu0 %v41
    %1394 = vmatmul.f32.gmra.mxu0 %v1373
    %v1395 = vpop.f32.mrf.mxu0
    %v1396 = vadd.f32 %v1370, %v1395
    %1397 = vmatmul.f32.gmra.mxu0 %v1376
    %v1398 = vpop.f32.mrf.mxu0
    %v1399 = vadd.f32 %v1370, %v1398
    %1400 = vdwg.mxu0
    %1405 = vrot.lane.b32.xlu0 %v41, 64
    %v1406 = vpop.permute.xlu0 %1405
    %1407 = vrot.lane.b32.xlu0 %v42, 64
    %v1408 = vpop.permute.xlu0 %1407
    %1409 = vrot.lane.b32.xlu0 %v43, 64
    %v1410 = vpop.permute.xlu0 %1409
    %1411 = vrot.lane.b32.xlu0 %v44, 64
    %v1412 = vpop.permute.xlu0 %1411
    %1417 = vrot.lane.b32.xlu0 %v1370, 64
    %v1418 = vpop.permute.xlu0 %1417
    %v1421 = vsel %vm70, %v1367, 0
    %v1424 = vsel %vm70, %v1368, 0
    %1426 = vmatpush.msra.mxu0 0.0
    %1427 = vmatpush.msra.mxu0 0.0
    %1428 = vmatpush.msra.mxu0 0.0
    %1429 = vmatpush.msra.mxu0 0.0
    %1430 = vmatpush.msra.mxu0 0.0
    %1431 = vmatpush.msra.mxu0 0.0
    %1432 = vmatpush.msra.mxu0 0.0
    %1433 = vmatpush.msra.mxu0 0.0
    %1434 = vmatpush.msra.mxu0 0.0
    %1435 = vmatpush.msra.mxu0 0.0
    %1436 = vmatpush.msra.mxu0 0.0
    %1437 = vmatpush.msra.mxu0 0.0
    %1438 = vmatpush.msra.mxu0 %v1412
    %1439 = vmatpush.msra.mxu0 %v1410
    %1440 = vmatpush.msra.mxu0 %v1408
    %1441 = vmatpush.msra.mxu0 %v1406
    %1442 = vmatmul.f32.gmra.mxu0 %v1421
    %v1443 = vpop.f32.mrf.mxu0
    %v1444 = vadd.f32 %v1418, %v1443
    %1445 = vmatmul.f32.gmra.mxu0 %v1424
    %v1446 = vpop.f32.mrf.mxu0
    %v1447 = vadd.f32 %v1418, %v1446
    %1448 = vdwg.mxu0
    %1450 = vrot.lane.b32.xlu0 %v1444, 120
    %v1451 = vpop.permute.xlu0 %1450
    %1452 = vrot.lane.b32.xlu0 %v1444, 112
    %v1453 = vpop.permute.xlu0 %1452
    %1454 = vrot.lane.b32.xlu0 %v1444, 104
    %v1455 = vpop.permute.xlu0 %1454
    %1457 = vrot.lane.b32.xlu0 %v1396, 120
    %v1458 = vpop.permute.xlu0 %1457
    %1459 = vrot.lane.b32.xlu0 %v1396, 112
    %v1460 = vpop.permute.xlu0 %1459
    %1461 = vrot.lane.b32.xlu0 %v1396, 104
    %v1462 = vpop.permute.xlu0 %1461
    %v1463 = vld [vmem:[%s3] sm:$0xff]
    %v1464 = vsel %vm110, %v1444, 0
    %v1466 = vsel %vm110, %v1396, 0
    %1468 = vmatpush.xpose.msra.mxu0 0.0
    %1469 = vmatpush.xpose.msra.mxu0 0.0
    %1470 = vmatpush.xpose.msra.mxu0 0.0
    %1471 = vmatpush.xpose.msra.mxu0 0.0
    %1472 = vmatpush.xpose.msra.mxu0 0.0
    %1473 = vmatpush.xpose.msra.mxu0 0.0
    %1474 = vmatpush.xpose.msra.mxu0 0.0
    %1475 = vmatpush.xpose.msra.mxu0 0.0
    %1476 = vmatpush.xpose.msra.mxu0 0.0
    %1477 = vmatpush.xpose.msra.mxu0 0.0
    %1478 = vmatpush.xpose.msra.mxu0 0.0
    %1479 = vmatpush.xpose.msra.mxu0 0.0
    %1480 = vmatpush.xpose.msra.mxu0 0.0
    %1481 = vmatpush.xpose.msra.mxu0 0.0
    %1482 = vmatpush.xpose.msra.mxu0 0.0
    %1483 = vmatpush.xpose.msra.mxu0 %v1466
    %1484 = vmatmul.f32.gmra.mxu0 %v1464
    %v1485 = vpop.f32.mrf.mxu0
    %v1486 = vadd.f32 %v1463, %v1485
    %1487 = vdwg.mxu0
    %v1488 = vsel %vm110, %v1451, 0
    %v1490 = vsel %vm110, %v1458, 0
    %1492 = vmatpush.xpose.msra.mxu0 0.0
    %1493 = vmatpush.xpose.msra.mxu0 0.0
    %1494 = vmatpush.xpose.msra.mxu0 0.0
    %1495 = vmatpush.xpose.msra.mxu0 0.0
    %1496 = vmatpush.xpose.msra.mxu0 0.0
    %1497 = vmatpush.xpose.msra.mxu0 0.0
    %1498 = vmatpush.xpose.msra.mxu0 0.0
    %1499 = vmatpush.xpose.msra.mxu0 0.0
    %1500 = vmatpush.xpose.msra.mxu0 0.0
    %1501 = vmatpush.xpose.msra.mxu0 0.0
    %1502 = vmatpush.xpose.msra.mxu0 0.0
    %1503 = vmatpush.xpose.msra.mxu0 0.0
    %1504 = vmatpush.xpose.msra.mxu0 0.0
    %1505 = vmatpush.xpose.msra.mxu0 0.0
    %1506 = vmatpush.xpose.msra.mxu0 0.0
    %1507 = vmatpush.xpose.msra.mxu0 %v1490
    %1508 = vmatmul.f32.gmra.mxu0 %v1488
    %v1509 = vpop.f32.mrf.mxu0
    %v1510 = vadd.f32 %v1463, %v1509
    %1511 = vdwg.mxu0
    %v1512 = vsel %vm110, %v1453, 0
    %v1514 = vsel %vm110, %v1460, 0
    %1516 = vmatpush.xpose.msra.mxu0 0.0
    %1517 = vmatpush.xpose.msra.mxu0 0.0
    %1518 = vmatpush.xpose.msra.mxu0 0.0
    %1519 = vmatpush.xpose.msra.mxu0 0.0
    %1520 = vmatpush.xpose.msra.mxu0 0.0
    %1521 = vmatpush.xpose.msra.mxu0 0.0
    %1522 = vmatpush.xpose.msra.mxu0 0.0
    %1523 = vmatpush.xpose.msra.mxu0 0.0
    %1524 = vmatpush.xpose.msra.mxu0 0.0
    %1525 = vmatpush.xpose.msra.mxu0 0.0
    %1526 = vmatpush.xpose.msra.mxu0 0.0
    %1527 = vmatpush.xpose.msra.mxu0 0.0
    %1528 = vmatpush.xpose.msra.mxu0 0.0
    %1529 = vmatpush.xpose.msra.mxu0 0.0
    %1530 = vmatpush.xpose.msra.mxu0 0.0
    %1531 = vmatpush.xpose.msra.mxu0 %v1514
    %1532 = vmatmul.f32.gmra.mxu0 %v1512
    %v1533 = vpop.f32.mrf.mxu0
    %v1534 = vadd.f32 %v1463, %v1533
    %1535 = vdwg.mxu0
    %v1536 = vsel %vm110, %v1455, 0
    %v1538 = vsel %vm110, %v1462, 0
    %1540 = vmatpush.xpose.msra.mxu0 0.0
    %1541 = vmatpush.xpose.msra.mxu0 0.0
    %1542 = vmatpush.xpose.msra.mxu0 0.0
    %1543 = vmatpush.xpose.msra.mxu0 0.0
    %1544 = vmatpush.xpose.msra.mxu0 0.0
    %1545 = vmatpush.xpose.msra.mxu0 0.0
    %1546 = vmatpush.xpose.msra.mxu0 0.0
    %1547 = vmatpush.xpose.msra.mxu0 0.0
    %1548 = vmatpush.xpose.msra.mxu0 0.0
    %1549 = vmatpush.xpose.msra.mxu0 0.0
    %1550 = vmatpush.xpose.msra.mxu0 0.0
    %1551 = vmatpush.xpose.msra.mxu0 0.0
    %1552 = vmatpush.xpose.msra.mxu0 0.0
    %1553 = vmatpush.xpose.msra.mxu0 0.0
    %1554 = vmatpush.xpose.msra.mxu0 0.0
    %1555 = vmatpush.xpose.msra.mxu0 %v1538
    %1556 = vmatmul.f32.gmra.mxu0 %v1536
    %v1557 = vpop.f32.mrf.mxu0
    %v1558 = vadd.f32 %v1463, %v1557
    %1559 = vdwg.mxu0
    %v1560 = vsel %vm110, %v1486, -inf
    %1561 = vmax.xlane.f32.xlu0 %v1560
    %v1562 = vpop.xlane.xlu0 %1561
    %v1563 = vsel %vm110, %v1510, -inf
    %1564 = vmax.xlane.f32.xlu0 %v1563
    %v1565 = vpop.xlane.xlu0 %1564
    %v1566 = vsel %vm110, %v1534, -inf
    %1567 = vmax.xlane.f32.xlu0 %v1566
    %v1568 = vpop.xlane.xlu0 %1567
    %v1569 = vsel %vm110, %v1558, -inf
    %1570 = vmax.xlane.f32.xlu0 %v1569
    %v1571 = vpop.xlane.xlu0 %1570
    %v1572 = vsub.f32 %v1486, %v1562
    %v1573 = vsub.f32 %v1510, %v1565
    %v1574 = vsub.f32 %v1534, %v1568
    %v1575 = vsub.f32 %v1558, %v1571
    %v1576 = vmul.f32 %v1572, 1.442695
    %v1577 = vpow.pop %v1576
    %v1578 = vmul.f32 %v1573, 1.442695
    %v1579 = vpow.pop %v1578
    %v1580 = vmul.f32 %v1574, 1.442695
    %v1581 = vpow.pop %v1580
    %v1582 = vmul.f32 %v1575, 1.442695
    %v1583 = vpow.pop %v1582
    %v1584 = vsel %vm110, %v1577, 0.0
    %1585 = vadd.xlane.f32.xlu0 %v1584
    %v1586 = vpop.xlane.xlu0 %1585
    %v1587 = vsel %vm110, %v1579, 0.0
    %1588 = vadd.xlane.f32.xlu0 %v1587
    %v1589 = vpop.xlane.xlu0 %1588
    %v1590 = vsel %vm110, %v1581, 0.0
    %1591 = vadd.xlane.f32.xlu0 %v1590
    %v1592 = vpop.xlane.xlu0 %1591
    %v1593 = vsel %vm110, %v1583, 0.0
    %1594 = vadd.xlane.f32.xlu0 %v1593
    %v1595 = vpop.xlane.xlu0 %1594
    %v1596 = vrcp.pop %v1586
    %v1597 = vrcp.pop %v1589
    %v1598 = vrcp.pop %v1592
    %v1599 = vrcp.pop %v1595
    %v1600 = vmul.f32 %v1577, %v1596
    %v1601 = vmul.f32 %v1579, %v1597
    %v1602 = vmul.f32 %v1581, %v1598
    %v1603 = vmul.f32 %v1583, %v1599
    %1604 = vrot.lane.b32.xlu0 %v1396, 96
    %v1605 = vpop.permute.xlu0 %1604
    %v1608 = vsel %vm110, %v1600, 0
    %1610 = vmatpush.msra.mxu0 0.0
    %1611 = vmatpush.msra.mxu0 0.0
    %1612 = vmatpush.msra.mxu0 0.0
    %1613 = vmatpush.msra.mxu0 0.0
    %1614 = vmatpush.msra.mxu0 0.0
    %1615 = vmatpush.msra.mxu0 0.0
    %1616 = vmatpush.msra.mxu0 0.0
    %1617 = vmatpush.msra.mxu0 0.0
    %1618 = vmatpush.msra.mxu0 0.0
    %1619 = vmatpush.msra.mxu0 0.0
    %1620 = vmatpush.msra.mxu0 0.0
    %1621 = vmatpush.msra.mxu0 0.0
    %1622 = vmatpush.msra.mxu0 0.0
    %1623 = vmatpush.msra.mxu0 0.0
    %1624 = vmatpush.msra.mxu0 0.0
    %1625 = vmatpush.msra.mxu0 %v1605
    %1626 = vmatmul.f32.gmra.mxu0 %v1608
    %v1627 = vpop.f32.mrf.mxu0
    %v1628 = vadd.f32 0.0, %v1627
    %1629 = vdwg.mxu0
    %1630 = vrot.lane.b32.xlu0 %v1458, 96
    %v1631 = vpop.permute.xlu0 %1630
    %v1634 = vsel %vm110, %v1601, 0
    %1636 = vmatpush.msra.mxu0 0.0
    %1637 = vmatpush.msra.mxu0 0.0
    %1638 = vmatpush.msra.mxu0 0.0
    %1639 = vmatpush.msra.mxu0 0.0
    %1640 = vmatpush.msra.mxu0 0.0
    %1641 = vmatpush.msra.mxu0 0.0
    %1642 = vmatpush.msra.mxu0 0.0
    %1643 = vmatpush.msra.mxu0 0.0
    %1644 = vmatpush.msra.mxu0 0.0
    %1645 = vmatpush.msra.mxu0 0.0
    %1646 = vmatpush.msra.mxu0 0.0
    %1647 = vmatpush.msra.mxu0 0.0
    %1648 = vmatpush.msra.mxu0 0.0
    %1649 = vmatpush.msra.mxu0 0.0
    %1650 = vmatpush.msra.mxu0 0.0
    %1651 = vmatpush.msra.mxu0 %v1631
    %1652 = vmatmul.f32.gmra.mxu0 %v1634
    %v1653 = vpop.f32.mrf.mxu0
    %v1654 = vadd.f32 0.0, %v1653
    %1655 = vdwg.mxu0
    %1656 = vrot.lane.b32.xlu0 %v1460, 96
    %v1657 = vpop.permute.xlu0 %1656
    %v1660 = vsel %vm110, %v1602, 0
    %1662 = vmatpush.msra.mxu0 0.0
    %1663 = vmatpush.msra.mxu0 0.0
    %1664 = vmatpush.msra.mxu0 0.0
    %1665 = vmatpush.msra.mxu0 0.0
    %1666 = vmatpush.msra.mxu0 0.0
    %1667 = vmatpush.msra.mxu0 0.0
    %1668 = vmatpush.msra.mxu0 0.0
    %1669 = vmatpush.msra.mxu0 0.0
    %1670 = vmatpush.msra.mxu0 0.0
    %1671 = vmatpush.msra.mxu0 0.0
    %1672 = vmatpush.msra.mxu0 0.0
    %1673 = vmatpush.msra.mxu0 0.0
    %1674 = vmatpush.msra.mxu0 0.0
    %1675 = vmatpush.msra.mxu0 0.0
    %1676 = vmatpush.msra.mxu0 0.0
    %1677 = vmatpush.msra.mxu0 %v1657
    %1678 = vmatmul.f32.gmra.mxu0 %v1660
    %v1679 = vpop.f32.mrf.mxu0
    %v1680 = vadd.f32 0.0, %v1679
    %1681 = vdwg.mxu0
    %1682 = vrot.lane.b32.xlu0 %v1462, 96
    %v1683 = vpop.permute.xlu0 %1682
    %v1686 = vsel %vm110, %v1603, 0
    %1688 = vmatpush.msra.mxu0 0.0
    %1689 = vmatpush.msra.mxu0 0.0
    %1690 = vmatpush.msra.mxu0 0.0
    %1691 = vmatpush.msra.mxu0 0.0
    %1692 = vmatpush.msra.mxu0 0.0
    %1693 = vmatpush.msra.mxu0 0.0
    %1694 = vmatpush.msra.mxu0 0.0
    %1695 = vmatpush.msra.mxu0 0.0
    %1696 = vmatpush.msra.mxu0 0.0
    %1697 = vmatpush.msra.mxu0 0.0
    %1698 = vmatpush.msra.mxu0 0.0
    %1699 = vmatpush.msra.mxu0 0.0
    %1700 = vmatpush.msra.mxu0 0.0
    %1701 = vmatpush.msra.mxu0 0.0
    %1702 = vmatpush.msra.mxu0 0.0
    %1703 = vmatpush.msra.mxu0 %v1683
    %1704 = vmatmul.f32.gmra.mxu0 %v1686
    %v1705 = vpop.f32.mrf.mxu0
    %v1706 = vadd.f32 0.0, %v1705
    %1707 = vdwg.mxu0
    %1709 = vrot.lane.b32.xlu0 %v1654, 8
    %v1710 = vpop.permute.xlu0 %1709
    %1713 = vrot.lane.b32.xlu0 %v1680, 16
    %v1714 = vpop.permute.xlu0 %1713
    %1717 = vrot.lane.b32.xlu0 %v1706, 24
    %v1718 = vpop.permute.xlu0 %1717
    %v1720 = vsel %vm110, %v1628, %v1710
    %v1721 = vsel %vm374, %v1720, %v1714
    %v1722 = vsel %vm376, %v1721, %v1718
    %1724 = vrot.lane.b32.xlu0 %v1447, 120
    %v1725 = vpop.permute.xlu0 %1724
    %1726 = vrot.lane.b32.xlu0 %v1447, 112
    %v1727 = vpop.permute.xlu0 %1726
    %1728 = vrot.lane.b32.xlu0 %v1447, 104
    %v1729 = vpop.permute.xlu0 %1728
    %1731 = vrot.lane.b32.xlu0 %v1399, 120
    %v1732 = vpop.permute.xlu0 %1731
    %1733 = vrot.lane.b32.xlu0 %v1399, 112
    %v1734 = vpop.permute.xlu0 %1733
    %1735 = vrot.lane.b32.xlu0 %v1399, 104
    %v1736 = vpop.permute.xlu0 %1735
    %s1737 = scalar_lea.vmem %s3, 8
    %v1738 = vld [vmem:[%s1737] sm:$0xff]
    %v1739 = vsel %vm110, %v1447, 0
    %v1741 = vsel %vm110, %v1399, 0
    %1743 = vmatpush.xpose.msra.mxu0 0.0
    %1744 = vmatpush.xpose.msra.mxu0 0.0
    %1745 = vmatpush.xpose.msra.mxu0 0.0
    %1746 = vmatpush.xpose.msra.mxu0 0.0
    %1747 = vmatpush.xpose.msra.mxu0 0.0
    %1748 = vmatpush.xpose.msra.mxu0 0.0
    %1749 = vmatpush.xpose.msra.mxu0 0.0
    %1750 = vmatpush.xpose.msra.mxu0 0.0
    %1751 = vmatpush.xpose.msra.mxu0 0.0
    %1752 = vmatpush.xpose.msra.mxu0 0.0
    %1753 = vmatpush.xpose.msra.mxu0 0.0
    %1754 = vmatpush.xpose.msra.mxu0 0.0
    %1755 = vmatpush.xpose.msra.mxu0 0.0
    %1756 = vmatpush.xpose.msra.mxu0 0.0
    %1757 = vmatpush.xpose.msra.mxu0 0.0
    %1758 = vmatpush.xpose.msra.mxu0 %v1741
    %1759 = vmatmul.f32.gmra.mxu0 %v1739
    %v1760 = vpop.f32.mrf.mxu0
    %v1761 = vadd.f32 %v1738, %v1760
    %1762 = vdwg.mxu0
    %v1763 = vsel %vm110, %v1725, 0
    %v1765 = vsel %vm110, %v1732, 0
    %1767 = vmatpush.xpose.msra.mxu0 0.0
    %1768 = vmatpush.xpose.msra.mxu0 0.0
    %1769 = vmatpush.xpose.msra.mxu0 0.0
    %1770 = vmatpush.xpose.msra.mxu0 0.0
    %1771 = vmatpush.xpose.msra.mxu0 0.0
    %1772 = vmatpush.xpose.msra.mxu0 0.0
    %1773 = vmatpush.xpose.msra.mxu0 0.0
    %1774 = vmatpush.xpose.msra.mxu0 0.0
    %1775 = vmatpush.xpose.msra.mxu0 0.0
    %1776 = vmatpush.xpose.msra.mxu0 0.0
    %1777 = vmatpush.xpose.msra.mxu0 0.0
    %1778 = vmatpush.xpose.msra.mxu0 0.0
    %1779 = vmatpush.xpose.msra.mxu0 0.0
    %1780 = vmatpush.xpose.msra.mxu0 0.0
    %1781 = vmatpush.xpose.msra.mxu0 0.0
    %1782 = vmatpush.xpose.msra.mxu0 %v1765
    %1783 = vmatmul.f32.gmra.mxu0 %v1763
    %v1784 = vpop.f32.mrf.mxu0
    %v1785 = vadd.f32 %v1738, %v1784
    %1786 = vdwg.mxu0
    %v1787 = vsel %vm110, %v1727, 0
    %v1789 = vsel %vm110, %v1734, 0
    %1791 = vmatpush.xpose.msra.mxu0 0.0
    %1792 = vmatpush.xpose.msra.mxu0 0.0
    %1793 = vmatpush.xpose.msra.mxu0 0.0
    %1794 = vmatpush.xpose.msra.mxu0 0.0
    %1795 = vmatpush.xpose.msra.mxu0 0.0
    %1796 = vmatpush.xpose.msra.mxu0 0.0
    %1797 = vmatpush.xpose.msra.mxu0 0.0
    %1798 = vmatpush.xpose.msra.mxu0 0.0
    %1799 = vmatpush.xpose.msra.mxu0 0.0
    %1800 = vmatpush.xpose.msra.mxu0 0.0
    %1801 = vmatpush.xpose.msra.mxu0 0.0
    %1802 = vmatpush.xpose.msra.mxu0 0.0
    %1803 = vmatpush.xpose.msra.mxu0 0.0
    %1804 = vmatpush.xpose.msra.mxu0 0.0
    %1805 = vmatpush.xpose.msra.mxu0 0.0
    %1806 = vmatpush.xpose.msra.mxu0 %v1789
    %1807 = vmatmul.f32.gmra.mxu0 %v1787
    %v1808 = vpop.f32.mrf.mxu0
    %v1809 = vadd.f32 %v1738, %v1808
    %1810 = vdwg.mxu0
    %v1811 = vsel %vm110, %v1729, 0
    %v1813 = vsel %vm110, %v1736, 0
    %1815 = vmatpush.xpose.msra.mxu0 0.0
    %1816 = vmatpush.xpose.msra.mxu0 0.0
    %1817 = vmatpush.xpose.msra.mxu0 0.0
    %1818 = vmatpush.xpose.msra.mxu0 0.0
    %1819 = vmatpush.xpose.msra.mxu0 0.0
    %1820 = vmatpush.xpose.msra.mxu0 0.0
    %1821 = vmatpush.xpose.msra.mxu0 0.0
    %1822 = vmatpush.xpose.msra.mxu0 0.0
    %1823 = vmatpush.xpose.msra.mxu0 0.0
    %1824 = vmatpush.xpose.msra.mxu0 0.0
    %1825 = vmatpush.xpose.msra.mxu0 0.0
    %1826 = vmatpush.xpose.msra.mxu0 0.0
    %1827 = vmatpush.xpose.msra.mxu0 0.0
    %1828 = vmatpush.xpose.msra.mxu0 0.0
    %1829 = vmatpush.xpose.msra.mxu0 0.0
    %1830 = vmatpush.xpose.msra.mxu0 %v1813
    %1831 = vmatmul.f32.gmra.mxu0 %v1811
    %v1832 = vpop.f32.mrf.mxu0
    %v1833 = vadd.f32 %v1738, %v1832
    %1834 = vdwg.mxu0
    %v1835 = vsel %vm110, %v1761, -inf
    %1836 = vmax.xlane.f32.xlu0 %v1835
    %v1837 = vpop.xlane.xlu0 %1836
    %v1838 = vsel %vm110, %v1785, -inf
    %1839 = vmax.xlane.f32.xlu0 %v1838
    %v1840 = vpop.xlane.xlu0 %1839
    %v1841 = vsel %vm110, %v1809, -inf
    %1842 = vmax.xlane.f32.xlu0 %v1841
    %v1843 = vpop.xlane.xlu0 %1842
    %v1844 = vsel %vm110, %v1833, -inf
    %1845 = vmax.xlane.f32.xlu0 %v1844
    %v1846 = vpop.xlane.xlu0 %1845
    %v1847 = vsub.f32 %v1761, %v1837
    %v1848 = vsub.f32 %v1785, %v1840
    %v1849 = vsub.f32 %v1809, %v1843
    %v1850 = vsub.f32 %v1833, %v1846
    %v1851 = vmul.f32 %v1847, 1.442695
    %v1852 = vpow.pop %v1851
    %v1853 = vmul.f32 %v1848, 1.442695
    %v1854 = vpow.pop %v1853
    %v1855 = vmul.f32 %v1849, 1.442695
    %v1856 = vpow.pop %v1855
    %v1857 = vmul.f32 %v1850, 1.442695
    %v1858 = vpow.pop %v1857
    %v1859 = vsel %vm110, %v1852, 0.0
    %1860 = vadd.xlane.f32.xlu0 %v1859
    %v1861 = vpop.xlane.xlu0 %1860
    %v1862 = vsel %vm110, %v1854, 0.0
    %1863 = vadd.xlane.f32.xlu0 %v1862
    %v1864 = vpop.xlane.xlu0 %1863
    %v1865 = vsel %vm110, %v1856, 0.0
    %1866 = vadd.xlane.f32.xlu0 %v1865
    %v1867 = vpop.xlane.xlu0 %1866
    %v1868 = vsel %vm110, %v1858, 0.0
    %1869 = vadd.xlane.f32.xlu0 %v1868
    %v1870 = vpop.xlane.xlu0 %1869
    %v1871 = vrcp.pop %v1861
    %v1872 = vrcp.pop %v1864
    %v1873 = vrcp.pop %v1867
    %v1874 = vrcp.pop %v1870
    %v1875 = vmul.f32 %v1852, %v1871
    %v1876 = vmul.f32 %v1854, %v1872
    %v1877 = vmul.f32 %v1856, %v1873
    %v1878 = vmul.f32 %v1858, %v1874
    %1879 = vrot.lane.b32.xlu0 %v1399, 96
    %v1880 = vpop.permute.xlu0 %1879
    %v1883 = vsel %vm110, %v1875, 0
    %1885 = vmatpush.msra.mxu0 0.0
    %1886 = vmatpush.msra.mxu0 0.0
    %1887 = vmatpush.msra.mxu0 0.0
    %1888 = vmatpush.msra.mxu0 0.0
    %1889 = vmatpush.msra.mxu0 0.0
    %1890 = vmatpush.msra.mxu0 0.0
    %1891 = vmatpush.msra.mxu0 0.0
    %1892 = vmatpush.msra.mxu0 0.0
    %1893 = vmatpush.msra.mxu0 0.0
    %1894 = vmatpush.msra.mxu0 0.0
    %1895 = vmatpush.msra.mxu0 0.0
    %1896 = vmatpush.msra.mxu0 0.0
    %1897 = vmatpush.msra.mxu0 0.0
    %1898 = vmatpush.msra.mxu0 0.0
    %1899 = vmatpush.msra.mxu0 0.0
    %1900 = vmatpush.msra.mxu0 %v1880
    %1901 = vmatmul.f32.gmra.mxu0 %v1883
    %v1902 = vpop.f32.mrf.mxu0
    %v1903 = vadd.f32 0.0, %v1902
    %1904 = vdwg.mxu0
    %1905 = vrot.lane.b32.xlu0 %v1732, 96
    %v1906 = vpop.permute.xlu0 %1905
    %v1909 = vsel %vm110, %v1876, 0
    %1911 = vmatpush.msra.mxu0 0.0
    %1912 = vmatpush.msra.mxu0 0.0
    %1913 = vmatpush.msra.mxu0 0.0
    %1914 = vmatpush.msra.mxu0 0.0
    %1915 = vmatpush.msra.mxu0 0.0
    %1916 = vmatpush.msra.mxu0 0.0
    %1917 = vmatpush.msra.mxu0 0.0
    %1918 = vmatpush.msra.mxu0 0.0
    %1919 = vmatpush.msra.mxu0 0.0
    %1920 = vmatpush.msra.mxu0 0.0
    %1921 = vmatpush.msra.mxu0 0.0
    %1922 = vmatpush.msra.mxu0 0.0
    %1923 = vmatpush.msra.mxu0 0.0
    %1924 = vmatpush.msra.mxu0 0.0
    %1925 = vmatpush.msra.mxu0 0.0
    %1926 = vmatpush.msra.mxu0 %v1906
    %1927 = vmatmul.f32.gmra.mxu0 %v1909
    %v1928 = vpop.f32.mrf.mxu0
    %v1929 = vadd.f32 0.0, %v1928
    %1930 = vdwg.mxu0
    %1931 = vrot.lane.b32.xlu0 %v1734, 96
    %v1932 = vpop.permute.xlu0 %1931
    %v1935 = vsel %vm110, %v1877, 0
    %1937 = vmatpush.msra.mxu0 0.0
    %1938 = vmatpush.msra.mxu0 0.0
    %1939 = vmatpush.msra.mxu0 0.0
    %1940 = vmatpush.msra.mxu0 0.0
    %1941 = vmatpush.msra.mxu0 0.0
    %1942 = vmatpush.msra.mxu0 0.0
    %1943 = vmatpush.msra.mxu0 0.0
    %1944 = vmatpush.msra.mxu0 0.0
    %1945 = vmatpush.msra.mxu0 0.0
    %1946 = vmatpush.msra.mxu0 0.0
    %1947 = vmatpush.msra.mxu0 0.0
    %1948 = vmatpush.msra.mxu0 0.0
    %1949 = vmatpush.msra.mxu0 0.0
    %1950 = vmatpush.msra.mxu0 0.0
    %1951 = vmatpush.msra.mxu0 0.0
    %1952 = vmatpush.msra.mxu0 %v1932
    %1953 = vmatmul.f32.gmra.mxu0 %v1935
    %v1954 = vpop.f32.mrf.mxu0
    %v1955 = vadd.f32 0.0, %v1954
    %1956 = vdwg.mxu0
    %1957 = vrot.lane.b32.xlu0 %v1736, 96
    %v1958 = vpop.permute.xlu0 %1957
    %v1961 = vsel %vm110, %v1878, 0
    %1963 = vmatpush.msra.mxu0 0.0
    %1964 = vmatpush.msra.mxu0 0.0
    %1965 = vmatpush.msra.mxu0 0.0
    %1966 = vmatpush.msra.mxu0 0.0
    %1967 = vmatpush.msra.mxu0 0.0
    %1968 = vmatpush.msra.mxu0 0.0
    %1969 = vmatpush.msra.mxu0 0.0
    %1970 = vmatpush.msra.mxu0 0.0
    %1971 = vmatpush.msra.mxu0 0.0
    %1972 = vmatpush.msra.mxu0 0.0
    %1973 = vmatpush.msra.mxu0 0.0
    %1974 = vmatpush.msra.mxu0 0.0
    %1975 = vmatpush.msra.mxu0 0.0
    %1976 = vmatpush.msra.mxu0 0.0
    %1977 = vmatpush.msra.mxu0 0.0
    %1978 = vmatpush.msra.mxu0 %v1958
    %1979 = vmatmul.f32.gmra.mxu0 %v1961
    %v1980 = vpop.f32.mrf.mxu0
    %v1981 = vadd.f32 0.0, %v1980
    %1982 = vdwg.mxu0
    %1984 = vrot.lane.b32.xlu0 %v1929, 8
    %v1985 = vpop.permute.xlu0 %1984
    %1988 = vrot.lane.b32.xlu0 %v1955, 16
    %v1989 = vpop.permute.xlu0 %1988
    %1992 = vrot.lane.b32.xlu0 %v1981, 24
    %v1993 = vpop.permute.xlu0 %1992
    %v1995 = vsel %vm110, %v1903, %v1985
    %v1996 = vsel %vm374, %v1995, %v1989
    %v1997 = vsel %vm376, %v1996, %v1993
    %1998 = vrot.lane.b32.xlu0 %v41, 32
    %v1999 = vpop.permute.xlu0 %1998
    %2000 = vrot.lane.b32.xlu0 %v42, 32
    %v2001 = vpop.permute.xlu0 %2000
    %2002 = vrot.lane.b32.xlu0 %v43, 32
    %v2003 = vpop.permute.xlu0 %2002
    %2004 = vrot.lane.b32.xlu0 %v44, 32
    %v2005 = vpop.permute.xlu0 %2004
    %2010 = vrot.lane.b32.xlu0 %v1370, 32
    %v2011 = vpop.permute.xlu0 %2010
    %v2014 = vsel %vm70, %v1722, 0
    %v2017 = vsel %vm70, %v1997, 0
    %2019 = vmatpush.msra.mxu0 0.0
    %2020 = vmatpush.msra.mxu0 0.0
    %2021 = vmatpush.msra.mxu0 0.0
    %2022 = vmatpush.msra.mxu0 0.0
    %2023 = vmatpush.msra.mxu0 0.0
    %2024 = vmatpush.msra.mxu0 0.0
    %2025 = vmatpush.msra.mxu0 0.0
    %2026 = vmatpush.msra.mxu0 0.0
    %2027 = vmatpush.msra.mxu0 0.0
    %2028 = vmatpush.msra.mxu0 0.0
    %2029 = vmatpush.msra.mxu0 0.0
    %2030 = vmatpush.msra.mxu0 0.0
    %2031 = vmatpush.msra.mxu0 %v2005
    %2032 = vmatpush.msra.mxu0 %v2003
    %2033 = vmatpush.msra.mxu0 %v2001
    %2034 = vmatpush.msra.mxu0 %v1999
    %2035 = vmatmul.f32.gmra.mxu0 %v2014
    %v2036 = vpop.f32.mrf.mxu0
    %v2037 = vadd.f32 %v2011, %v2036
    %2038 = vmatmul.f32.gmra.mxu0 %v2017
    %v2039 = vpop.f32.mrf.mxu0
    %v2040 = vadd.f32 %v2011, %v2039
    %2041 = vdwg.mxu0
    %v2042 = vadd.f32 %v2037, %v1367
    %v2043 = vadd.f32 %v2040, %v1368
    %v2044 = vsel %vm70, %v2042, 0.0
    %2045 = vadd.xlane.f32.xlu0 %v2044
    %v2046 = vpop.xlane.xlu0 %2045
    %v2047 = vsel %vm70, %v2043, 0.0
    %2048 = vadd.xlane.f32.xlu0 %v2047
    %v2049 = vpop.xlane.xlu0 %2048
    %v2050 = vmul.f32 %v2046, %v1324
    %v2051 = vmul.f32 %v2049, %v1324
    %v2052 = vsub.f32 %v2042, %v2050
    %v2053 = vsub.f32 %v2043, %v2051
    %v2054 = vmul.f32 %v2052, %v2052
    %v2055 = vmul.f32 %v2053, %v2053
    %v2056 = vsel %vm70, %v2054, 0.0
    %2057 = vadd.xlane.f32.xlu0 %v2056
    %v2058 = vpop.xlane.xlu0 %2057
    %v2059 = vsel %vm70, %v2055, 0.0
    %2060 = vadd.xlane.f32.xlu0 %v2059
    %v2061 = vpop.xlane.xlu0 %2060
    %v2062 = vmul.f32 %v2058, %v1324
    %v2063 = vmul.f32 %v2061, %v1324
    %v2064 = vadd.f32 %v2062, 1e-05
    %v2065 = vadd.f32 %v2063, 1e-05
    %v2066 = vrsqrt.pop %v2064
    %v2067 = vmul.f32 %v2066, %v2064
    %v2068 = vmul.f32 %v2067, %v2066
    %v2069 = vmul.f32 0.5, %v2068
    %v2070 = vsub.f32 1.5, %v2069
    %v2071 = vmul.f32 %v2066, %v2070
    %vm2072 = vweird.f32 %v2064
    %vm2073 = vweird.f32 %v2066
    %vm2074 = vmor %vm2072, %vm2073
    %v2075 = vsel %vm2074, %v2066, %v2071
    %v2076 = vrsqrt.pop %v2065
    %v2077 = vmul.f32 %v2076, %v2065
    %v2078 = vmul.f32 %v2077, %v2076
    %v2079 = vmul.f32 0.5, %v2078
    %v2080 = vsub.f32 1.5, %v2079
    %v2081 = vmul.f32 %v2076, %v2080
    %vm2082 = vweird.f32 %v2065
    %vm2083 = vweird.f32 %v2076
    %vm2084 = vmor %vm2082, %vm2083
    %v2085 = vsel %vm2084, %v2076, %v2081
    %v2086 = vmul.f32 %v2052, %v2075
    %v2087 = vmul.f32 %v2053, %v2085
    %v2088 = vperm.slane %v63, 0
    %v2089 = vmul.f32 %v2088, %v2086
    %v2090 = vmul.f32 %v2088, %v2087
    %v2091 = vperm.slane %v64, 0
    %v2092 = vadd.f32 %v2089, %v2091
    %v2093 = vadd.f32 %v2090, %v2091
    %v2095 = vperm.slane %v51, 0
    %v2098 = vsel %vm70, %v2092, 0
    %v2101 = vsel %vm70, %v2093, 0
    %2103 = vmatpush.msra.mxu0 0.0
    %2104 = vmatpush.msra.mxu0 0.0
    %2105 = vmatpush.msra.mxu0 0.0
    %2106 = vmatpush.msra.mxu0 0.0
    %2107 = vmatpush.msra.mxu0 0.0
    %2108 = vmatpush.msra.mxu0 0.0
    %2109 = vmatpush.msra.mxu0 0.0
    %2110 = vmatpush.msra.mxu0 0.0
    %2111 = vmatpush.msra.mxu0 0.0
    %2112 = vmatpush.msra.mxu0 0.0
    %2113 = vmatpush.msra.mxu0 0.0
    %2114 = vmatpush.msra.mxu0 0.0
    %2115 = vmatpush.msra.mxu0 %v48
    %2116 = vmatpush.msra.mxu0 %v47
    %2117 = vmatpush.msra.mxu0 %v46
    %2118 = vmatpush.msra.mxu0 %v45
    %2119 = vmatmul.f32.gmra.mxu0 %v2098
    %v2120 = vpop.f32.mrf.mxu0
    %v2121 = vadd.f32 %v2095, %v2120
    %2122 = vmatmul.f32.gmra.mxu0 %v2101
    %v2123 = vpop.f32.mrf.mxu0
    %v2124 = vadd.f32 %v2095, %v2123
    %2125 = vdwg.mxu0
    %v2126 = vmax.f32 %v2121, 0.0
    %v2127 = vmax.f32 %v2124, 0.0
    %v2129 = vperm.slane %v60, 0
    %vm2131 = vcmask 523264
    %v2133 = vsel %vm2131, %v2126, 0
    %v2136 = vsel %vm2131, %v2127, 0
    %2138 = vmatpush.msra.mxu0 0.0
    %2139 = vmatpush.msra.mxu0 0.0
    %2140 = vmatpush.msra.mxu0 0.0
    %2141 = vmatpush.msra.mxu0 0.0
    %2142 = vmatpush.msra.mxu0 0.0
    %2143 = vmatpush.msra.mxu0 0.0
    %2144 = vmatpush.msra.mxu0 0.0
    %2145 = vmatpush.msra.mxu0 0.0
    %2146 = vmatpush.msra.mxu0 %v59
    %2147 = vmatpush.msra.mxu0 %v58
    %2148 = vmatpush.msra.mxu0 %v57
    %2149 = vmatpush.msra.mxu0 %v56
    %2150 = vmatpush.msra.mxu0 %v55
    %2151 = vmatpush.msra.mxu0 %v54
    %2152 = vmatpush.msra.mxu0 %v53
    %2153 = vmatpush.msra.mxu0 %v52
    %2154 = vmatmul.f32.gmra.mxu0 %v2133
    %v2155 = vpop.f32.mrf.mxu0
    %v2156 = vadd.f32 %v2129, %v2155
    %2157 = vmatmul.f32.gmra.mxu0 %v2136
    %v2158 = vpop.f32.mrf.mxu0
    %v2159 = vadd.f32 %v2129, %v2158
    %2160 = vdwg.mxu0
    %v2161 = vadd.f32 %v2156, %v2092
    %v2162 = vadd.f32 %v2159, %v2093
    %v2163 = vsel %vm70, %v2161, 0.0
    %2164 = vadd.xlane.f32.xlu0 %v2163
    %v2165 = vpop.xlane.xlu0 %2164
    %v2166 = vsel %vm70, %v2162, 0.0
    %2167 = vadd.xlane.f32.xlu0 %v2166
    %v2168 = vpop.xlane.xlu0 %2167
    %v2169 = vmul.f32 %v2165, %v1324
    %v2170 = vmul.f32 %v2168, %v1324
    %v2171 = vsub.f32 %v2161, %v2169
    %v2172 = vsub.f32 %v2162, %v2170
    %v2173 = vmul.f32 %v2171, %v2171
    %v2174 = vmul.f32 %v2172, %v2172
    %v2175 = vsel %vm70, %v2173, 0.0
    %2176 = vadd.xlane.f32.xlu0 %v2175
    %v2177 = vpop.xlane.xlu0 %2176
    %v2178 = vsel %vm70, %v2174, 0.0
    %2179 = vadd.xlane.f32.xlu0 %v2178
    %v2180 = vpop.xlane.xlu0 %2179
    %v2181 = vmul.f32 %v2177, %v1324
    %v2182 = vmul.f32 %v2180, %v1324
    %v2183 = vadd.f32 %v2181, 1e-05
    %v2184 = vadd.f32 %v2182, 1e-05
    %v2185 = vrsqrt.pop %v2183
    %v2186 = vmul.f32 %v2185, %v2183
    %v2187 = vmul.f32 %v2186, %v2185
    %v2188 = vmul.f32 0.5, %v2187
    %v2189 = vsub.f32 1.5, %v2188
    %v2190 = vmul.f32 %v2185, %v2189
    %vm2191 = vweird.f32 %v2183
    %vm2192 = vweird.f32 %v2185
    %vm2193 = vmor %vm2191, %vm2192
    %v2194 = vsel %vm2193, %v2185, %v2190
    %v2195 = vrsqrt.pop %v2184
    %v2196 = vmul.f32 %v2195, %v2184
    %v2197 = vmul.f32 %v2196, %v2195
    %v2198 = vmul.f32 0.5, %v2197
    %v2199 = vsub.f32 1.5, %v2198
    %v2200 = vmul.f32 %v2195, %v2199
    %vm2201 = vweird.f32 %v2184
    %vm2202 = vweird.f32 %v2195
    %vm2203 = vmor %vm2201, %vm2202
    %v2204 = vsel %vm2203, %v2195, %v2200
    %v2205 = vmul.f32 %v2171, %v2194
    %v2206 = vmul.f32 %v2172, %v2204
    %v2207 = vperm.slane %v65, 0
    %v2208 = vmul.f32 %v2207, %v2205
    %v2209 = vmul.f32 %v2207, %v2206
    %v2210 = vperm.slane %v66, 0
    %v2211 = vadd.f32 %v2208, %v2210
    %v2212 = vadd.f32 %v2209, %v2210
    %s2213 = scalar_lea.vmem %s4, 96
    %v2214 = vld [vmem:[%s2213] sm:$0xff]
    %v2215 = vld [vmem:[%s2213 + $0x18] sm:$0xff]
    %v2216 = vld [vmem:[%s2213 + $0x30] sm:$0xff]
    %v2217 = vld [vmem:[%s2213 + $0x48] sm:$0xff]
    %v2218 = vld [vmem:[%s2213 + $0x8] sm:$0xff]
    %v2219 = vld [vmem:[%s2213 + $0x20] sm:$0xff]
    %v2220 = vld [vmem:[%s2213 + $0x38] sm:$0xff]
    %v2221 = vld [vmem:[%s2213 + $0x50] sm:$0xff]
    %v2222 = vld [vmem:[%s2213 + $0x10] sm:$0xff]
    %v2223 = vld [vmem:[%s2213 + $0x28] sm:$0xff]
    %v2224 = vld [vmem:[%s2213 + $0x40] sm:$0xff]
    %v2225 = vld [vmem:[%s2213 + $0x58] sm:$0xff]
    %s2226 = scalar_lea.vmem %s5, 3
    %v2227 = vld [vmem:[%s2226] sm:$0x1]
    %v2228 = vld [vmem:[%s2226 + $0x1] sm:$0x1]
    %v2229 = vld [vmem:[%s2226 + $0x2] sm:$0x1]
    %s2230 = scalar_lea.vmem %s6, 64
    %v2231 = vld [vmem:[%s2230] sm:$0xff]
    %v2232 = vld [vmem:[%s2230 + $0x8] sm:$0xff]
    %v2233 = vld [vmem:[%s2230 + $0x10] sm:$0xff]
    %v2234 = vld [vmem:[%s2230 + $0x18] sm:$0xff]
    %v2235 = vld [vmem:[%s2230 + $0x20] sm:$0xff]
    %v2236 = vld [vmem:[%s2230 + $0x28] sm:$0xff]
    %v2237 = vld [vmem:[%s2230 + $0x30] sm:$0xff]
    %v2238 = vld [vmem:[%s2230 + $0x38] sm:$0xff]
    %s2239 = scalar_lea.vmem %s7, 1
    %v2240 = vld [vmem:[%s2239] sm:$0x1]
    %s2241 = scalar_lea.vmem %s8, 8
    %v2242 = vld [vmem:[%s2241] sm:$0x1]
    %v2243 = vld [vmem:[%s2241 + $0x1] sm:$0x1]
    %v2244 = vld [vmem:[%s2241 + $0x2] sm:$0x1]
    %v2245 = vld [vmem:[%s2241 + $0x3] sm:$0x1]
    %v2246 = vld [vmem:[%s2241 + $0x4] sm:$0x1]
    %v2247 = vld [vmem:[%s2241 + $0x5] sm:$0x1]
    %v2249 = vperm.slane %v2227, 0
    %v2252 = vsel %vm70, %v2211, 0
    %v2255 = vsel %vm70, %v2212, 0
    %2257 = vmatpush.msra.mxu0 0.0
    %2258 = vmatpush.msra.mxu0 0.0
    %2259 = vmatpush.msra.mxu0 0.0
    %2260 = vmatpush.msra.mxu0 0.0
    %2261 = vmatpush.msra.mxu0 0.0
    %2262 = vmatpush.msra.mxu0 0.0
    %2263 = vmatpush.msra.mxu0 0.0
    %2264 = vmatpush.msra.mxu0 0.0
    %2265 = vmatpush.msra.mxu0 0.0
    %2266 = vmatpush.msra.mxu0 0.0
    %2267 = vmatpush.msra.mxu0 0.0
    %2268 = vmatpush.msra.mxu0 0.0
    %2269 = vmatpush.msra.mxu0 %v2217
    %2270 = vmatpush.msra.mxu0 %v2216
    %2271 = vmatpush.msra.mxu0 %v2215
    %2272 = vmatpush.msra.mxu0 %v2214
    %2273 = vmatmul.f32.gmra.mxu0 %v2252
    %v2274 = vpop.f32.mrf.mxu0
    %v2275 = vadd.f32 %v2249, %v2274
    %2276 = vmatmul.f32.gmra.mxu0 %v2255
    %v2277 = vpop.f32.mrf.mxu0
    %v2278 = vadd.f32 %v2249, %v2277
    %2279 = vdwg.mxu0
    %2281 = vrot.lane.b32.xlu0 %v2275, 120
    %v2282 = vpop.permute.xlu0 %2281
    %2283 = vrot.lane.b32.xlu0 %v2275, 112
    %v2284 = vpop.permute.xlu0 %2283
    %2285 = vrot.lane.b32.xlu0 %v2275, 104
    %v2286 = vpop.permute.xlu0 %2285
    %v2287 = vld [vmem:[%s2] sm:$0xff]
    %2288 = vrot.lane.b32.xlu0 %v2275, 96
    %v2289 = vpop.permute.xlu0 %2288
    %v2290 = vsel %vm110, %v2275, 0
    %v2292 = vsel %vm110, %v2289, 0
    %2294 = vmatpush.xpose.msra.mxu0 0.0
    %2295 = vmatpush.xpose.msra.mxu0 0.0
    %2296 = vmatpush.xpose.msra.mxu0 0.0
    %2297 = vmatpush.xpose.msra.mxu0 0.0
    %2298 = vmatpush.xpose.msra.mxu0 0.0
    %2299 = vmatpush.xpose.msra.mxu0 0.0
    %2300 = vmatpush.xpose.msra.mxu0 0.0
    %2301 = vmatpush.xpose.msra.mxu0 0.0
    %2302 = vmatpush.xpose.msra.mxu0 0.0
    %2303 = vmatpush.xpose.msra.mxu0 0.0
    %2304 = vmatpush.xpose.msra.mxu0 0.0
    %2305 = vmatpush.xpose.msra.mxu0 0.0
    %2306 = vmatpush.xpose.msra.mxu0 0.0
    %2307 = vmatpush.xpose.msra.mxu0 0.0
    %2308 = vmatpush.xpose.msra.mxu0 0.0
    %2309 = vmatpush.xpose.msra.mxu0 %v2292
    %2310 = vmatmul.f32.gmra.mxu0 %v2290
    %v2311 = vpop.f32.mrf.mxu0
    %v2312 = vadd.f32 %v2287, %v2311
    %2313 = vdwg.mxu0
    %2314 = vrot.lane.b32.xlu0 %v2282, 96
    %v2315 = vpop.permute.xlu0 %2314
    %v2316 = vsel %vm110, %v2282, 0
    %v2318 = vsel %vm110, %v2315, 0
    %2320 = vmatpush.xpose.msra.mxu0 0.0
    %2321 = vmatpush.xpose.msra.mxu0 0.0
    %2322 = vmatpush.xpose.msra.mxu0 0.0
    %2323 = vmatpush.xpose.msra.mxu0 0.0
    %2324 = vmatpush.xpose.msra.mxu0 0.0
    %2325 = vmatpush.xpose.msra.mxu0 0.0
    %2326 = vmatpush.xpose.msra.mxu0 0.0
    %2327 = vmatpush.xpose.msra.mxu0 0.0
    %2328 = vmatpush.xpose.msra.mxu0 0.0
    %2329 = vmatpush.xpose.msra.mxu0 0.0
    %2330 = vmatpush.xpose.msra.mxu0 0.0
    %2331 = vmatpush.xpose.msra.mxu0 0.0
    %2332 = vmatpush.xpose.msra.mxu0 0.0
    %2333 = vmatpush.xpose.msra.mxu0 0.0
    %2334 = vmatpush.xpose.msra.mxu0 0.0
    %2335 = vmatpush.xpose.msra.mxu0 %v2318
    %2336 = vmatmul.f32.gmra.mxu0 %v2316
    %v2337 = vpop.f32.mrf.mxu0
    %v2338 = vadd.f32 %v2287, %v2337
    %2339 = vdwg.mxu0
    %2340 = vrot.lane.b32.xlu0 %v2284, 96
    %v2341 = vpop.permute.xlu0 %2340
    %v2342 = vsel %vm110, %v2284, 0
    %v2344 = vsel %vm110, %v2341, 0
    %2346 = vmatpush.xpose.msra.mxu0 0.0
    %2347 = vmatpush.xpose.msra.mxu0 0.0
    %2348 = vmatpush.xpose.msra.mxu0 0.0
    %2349 = vmatpush.xpose.msra.mxu0 0.0
    %2350 = vmatpush.xpose.msra.mxu0 0.0
    %2351 = vmatpush.xpose.msra.mxu0 0.0
    %2352 = vmatpush.xpose.msra.mxu0 0.0
    %2353 = vmatpush.xpose.msra.mxu0 0.0
    %2354 = vmatpush.xpose.msra.mxu0 0.0
    %2355 = vmatpush.xpose.msra.mxu0 0.0
    %2356 = vmatpush.xpose.msra.mxu0 0.0
    %2357 = vmatpush.xpose.msra.mxu0 0.0
    %2358 = vmatpush.xpose.msra.mxu0 0.0
    %2359 = vmatpush.xpose.msra.mxu0 0.0
    %2360 = vmatpush.xpose.msra.mxu0 0.0
    %2361 = vmatpush.xpose.msra.mxu0 %v2344
    %2362 = vmatmul.f32.gmra.mxu0 %v2342
    %v2363 = vpop.f32.mrf.mxu0
    %v2364 = vadd.f32 %v2287, %v2363
    %2365 = vdwg.mxu0
    %2366 = vrot.lane.b32.xlu0 %v2286, 96
    %v2367 = vpop.permute.xlu0 %2366
    %v2368 = vsel %vm110, %v2286, 0
    %v2370 = vsel %vm110, %v2367, 0
    %2372 = vmatpush.xpose.msra.mxu0 0.0
    %2373 = vmatpush.xpose.msra.mxu0 0.0
    %2374 = vmatpush.xpose.msra.mxu0 0.0
    %2375 = vmatpush.xpose.msra.mxu0 0.0
    %2376 = vmatpush.xpose.msra.mxu0 0.0
    %2377 = vmatpush.xpose.msra.mxu0 0.0
    %2378 = vmatpush.xpose.msra.mxu0 0.0
    %2379 = vmatpush.xpose.msra.mxu0 0.0
    %2380 = vmatpush.xpose.msra.mxu0 0.0
    %2381 = vmatpush.xpose.msra.mxu0 0.0
    %2382 = vmatpush.xpose.msra.mxu0 0.0
    %2383 = vmatpush.xpose.msra.mxu0 0.0
    %2384 = vmatpush.xpose.msra.mxu0 0.0
    %2385 = vmatpush.xpose.msra.mxu0 0.0
    %2386 = vmatpush.xpose.msra.mxu0 0.0
    %2387 = vmatpush.xpose.msra.mxu0 %v2370
    %2388 = vmatmul.f32.gmra.mxu0 %v2368
    %v2389 = vpop.f32.mrf.mxu0
    %v2390 = vadd.f32 %v2287, %v2389
    %2391 = vdwg.mxu0
    %v2392 = vsel %vm110, %v2312, -inf
    %2393 = vmax.xlane.f32.xlu0 %v2392
    %v2394 = vpop.xlane.xlu0 %2393
    %v2395 = vsel %vm110, %v2338, -inf
    %2396 = vmax.xlane.f32.xlu0 %v2395
    %v2397 = vpop.xlane.xlu0 %2396
    %v2398 = vsel %vm110, %v2364, -inf
    %2399 = vmax.xlane.f32.xlu0 %v2398
    %v2400 = vpop.xlane.xlu0 %2399
    %v2401 = vsel %vm110, %v2390, -inf
    %2402 = vmax.xlane.f32.xlu0 %v2401
    %v2403 = vpop.xlane.xlu0 %2402
    %v2404 = vsub.f32 %v2312, %v2394
    %v2405 = vsub.f32 %v2338, %v2397
    %v2406 = vsub.f32 %v2364, %v2400
    %v2407 = vsub.f32 %v2390, %v2403
    %v2408 = vmul.f32 %v2404, 1.442695
    %v2409 = vpow.pop %v2408
    %v2410 = vmul.f32 %v2405, 1.442695
    %v2411 = vpow.pop %v2410
    %v2412 = vmul.f32 %v2406, 1.442695
    %v2413 = vpow.pop %v2412
    %v2414 = vmul.f32 %v2407, 1.442695
    %v2415 = vpow.pop %v2414
    %v2416 = vsel %vm110, %v2409, 0.0
    %2417 = vadd.xlane.f32.xlu0 %v2416
    %v2418 = vpop.xlane.xlu0 %2417
    %v2419 = vsel %vm110, %v2411, 0.0
    %2420 = vadd.xlane.f32.xlu0 %v2419
    %v2421 = vpop.xlane.xlu0 %2420
    %v2422 = vsel %vm110, %v2413, 0.0
    %2423 = vadd.xlane.f32.xlu0 %v2422
    %v2424 = vpop.xlane.xlu0 %2423
    %v2425 = vsel %vm110, %v2415, 0.0
    %2426 = vadd.xlane.f32.xlu0 %v2425
    %v2427 = vpop.xlane.xlu0 %2426
    %v2428 = vrcp.pop %v2418
    %v2429 = vrcp.pop %v2421
    %v2430 = vrcp.pop %v2424
    %v2431 = vrcp.pop %v2427
    %v2432 = vmul.f32 %v2409, %v2428
    %v2433 = vmul.f32 %v2411, %v2429
    %v2434 = vmul.f32 %v2413, %v2430
    %v2435 = vmul.f32 %v2415, %v2431
    %2436 = vrot.lane.b32.xlu0 %v2275, 64
    %v2437 = vpop.permute.xlu0 %2436
    %v2440 = vsel %vm110, %v2432, 0
    %2442 = vmatpush.msra.mxu0 0.0
    %2443 = vmatpush.msra.mxu0 0.0
    %2444 = vmatpush.msra.mxu0 0.0
    %2445 = vmatpush.msra.mxu0 0.0
    %2446 = vmatpush.msra.mxu0 0.0
    %2447 = vmatpush.msra.mxu0 0.0
    %2448 = vmatpush.msra.mxu0 0.0
    %2449 = vmatpush.msra.mxu0 0.0
    %2450 = vmatpush.msra.mxu0 0.0
    %2451 = vmatpush.msra.mxu0 0.0
    %2452 = vmatpush.msra.mxu0 0.0
    %2453 = vmatpush.msra.mxu0 0.0
    %2454 = vmatpush.msra.mxu0 0.0
    %2455 = vmatpush.msra.mxu0 0.0
    %2456 = vmatpush.msra.mxu0 0.0
    %2457 = vmatpush.msra.mxu0 %v2437
    %2458 = vmatmul.f32.gmra.mxu0 %v2440
    %v2459 = vpop.f32.mrf.mxu0
    %v2460 = vadd.f32 0.0, %v2459
    %2461 = vdwg.mxu0
    %2462 = vrot.lane.b32.xlu0 %v2282, 64
    %v2463 = vpop.permute.xlu0 %2462
    %v2466 = vsel %vm110, %v2433, 0
    %2468 = vmatpush.msra.mxu0 0.0
    %2469 = vmatpush.msra.mxu0 0.0
    %2470 = vmatpush.msra.mxu0 0.0
    %2471 = vmatpush.msra.mxu0 0.0
    %2472 = vmatpush.msra.mxu0 0.0
    %2473 = vmatpush.msra.mxu0 0.0
    %2474 = vmatpush.msra.mxu0 0.0
    %2475 = vmatpush.msra.mxu0 0.0
    %2476 = vmatpush.msra.mxu0 0.0
    %2477 = vmatpush.msra.mxu0 0.0
    %2478 = vmatpush.msra.mxu0 0.0
    %2479 = vmatpush.msra.mxu0 0.0
    %2480 = vmatpush.msra.mxu0 0.0
    %2481 = vmatpush.msra.mxu0 0.0
    %2482 = vmatpush.msra.mxu0 0.0
    %2483 = vmatpush.msra.mxu0 %v2463
    %2484 = vmatmul.f32.gmra.mxu0 %v2466
    %v2485 = vpop.f32.mrf.mxu0
    %v2486 = vadd.f32 0.0, %v2485
    %2487 = vdwg.mxu0
    %2488 = vrot.lane.b32.xlu0 %v2284, 64
    %v2489 = vpop.permute.xlu0 %2488
    %v2492 = vsel %vm110, %v2434, 0
    %2494 = vmatpush.msra.mxu0 0.0
    %2495 = vmatpush.msra.mxu0 0.0
    %2496 = vmatpush.msra.mxu0 0.0
    %2497 = vmatpush.msra.mxu0 0.0
    %2498 = vmatpush.msra.mxu0 0.0
    %2499 = vmatpush.msra.mxu0 0.0
    %2500 = vmatpush.msra.mxu0 0.0
    %2501 = vmatpush.msra.mxu0 0.0
    %2502 = vmatpush.msra.mxu0 0.0
    %2503 = vmatpush.msra.mxu0 0.0
    %2504 = vmatpush.msra.mxu0 0.0
    %2505 = vmatpush.msra.mxu0 0.0
    %2506 = vmatpush.msra.mxu0 0.0
    %2507 = vmatpush.msra.mxu0 0.0
    %2508 = vmatpush.msra.mxu0 0.0
    %2509 = vmatpush.msra.mxu0 %v2489
    %2510 = vmatmul.f32.gmra.mxu0 %v2492
    %v2511 = vpop.f32.mrf.mxu0
    %v2512 = vadd.f32 0.0, %v2511
    %2513 = vdwg.mxu0
    %2514 = vrot.lane.b32.xlu0 %v2286, 64
    %v2515 = vpop.permute.xlu0 %2514
    %v2518 = vsel %vm110, %v2435, 0
    %2520 = vmatpush.msra.mxu0 0.0
    %2521 = vmatpush.msra.mxu0 0.0
    %2522 = vmatpush.msra.mxu0 0.0
    %2523 = vmatpush.msra.mxu0 0.0
    %2524 = vmatpush.msra.mxu0 0.0
    %2525 = vmatpush.msra.mxu0 0.0
    %2526 = vmatpush.msra.mxu0 0.0
    %2527 = vmatpush.msra.mxu0 0.0
    %2528 = vmatpush.msra.mxu0 0.0
    %2529 = vmatpush.msra.mxu0 0.0
    %2530 = vmatpush.msra.mxu0 0.0
    %2531 = vmatpush.msra.mxu0 0.0
    %2532 = vmatpush.msra.mxu0 0.0
    %2533 = vmatpush.msra.mxu0 0.0
    %2534 = vmatpush.msra.mxu0 0.0
    %2535 = vmatpush.msra.mxu0 %v2515
    %2536 = vmatmul.f32.gmra.mxu0 %v2518
    %v2537 = vpop.f32.mrf.mxu0
    %v2538 = vadd.f32 0.0, %v2537
    %2539 = vdwg.mxu0
    %2541 = vrot.lane.b32.xlu0 %v2486, 8
    %v2542 = vpop.permute.xlu0 %2541
    %2545 = vrot.lane.b32.xlu0 %v2512, 16
    %v2546 = vpop.permute.xlu0 %2545
    %2549 = vrot.lane.b32.xlu0 %v2538, 24
    %v2550 = vpop.permute.xlu0 %2549
    %v2552 = vsel %vm110, %v2460, %v2542
    %v2553 = vsel %vm374, %v2552, %v2546
    %v2554 = vsel %vm376, %v2553, %v2550
    %2556 = vrot.lane.b32.xlu0 %v2278, 120
    %v2557 = vpop.permute.xlu0 %2556
    %2558 = vrot.lane.b32.xlu0 %v2278, 112
    %v2559 = vpop.permute.xlu0 %2558
    %2560 = vrot.lane.b32.xlu0 %v2278, 104
    %v2561 = vpop.permute.xlu0 %2560
    %v2562 = vld [vmem:[%s385] sm:$0xff]
    %2563 = vrot.lane.b32.xlu0 %v2278, 96
    %v2564 = vpop.permute.xlu0 %2563
    %v2565 = vsel %vm110, %v2278, 0
    %v2567 = vsel %vm110, %v2564, 0
    %2569 = vmatpush.xpose.msra.mxu0 0.0
    %2570 = vmatpush.xpose.msra.mxu0 0.0
    %2571 = vmatpush.xpose.msra.mxu0 0.0
    %2572 = vmatpush.xpose.msra.mxu0 0.0
    %2573 = vmatpush.xpose.msra.mxu0 0.0
    %2574 = vmatpush.xpose.msra.mxu0 0.0
    %2575 = vmatpush.xpose.msra.mxu0 0.0
    %2576 = vmatpush.xpose.msra.mxu0 0.0
    %2577 = vmatpush.xpose.msra.mxu0 0.0
    %2578 = vmatpush.xpose.msra.mxu0 0.0
    %2579 = vmatpush.xpose.msra.mxu0 0.0
    %2580 = vmatpush.xpose.msra.mxu0 0.0
    %2581 = vmatpush.xpose.msra.mxu0 0.0
    %2582 = vmatpush.xpose.msra.mxu0 0.0
    %2583 = vmatpush.xpose.msra.mxu0 0.0
    %2584 = vmatpush.xpose.msra.mxu0 %v2567
    %2585 = vmatmul.f32.gmra.mxu0 %v2565
    %v2586 = vpop.f32.mrf.mxu0
    %v2587 = vadd.f32 %v2562, %v2586
    %2588 = vdwg.mxu0
    %2589 = vrot.lane.b32.xlu0 %v2557, 96
    %v2590 = vpop.permute.xlu0 %2589
    %v2591 = vsel %vm110, %v2557, 0
    %v2593 = vsel %vm110, %v2590, 0
    %2595 = vmatpush.xpose.msra.mxu0 0.0
    %2596 = vmatpush.xpose.msra.mxu0 0.0
    %2597 = vmatpush.xpose.msra.mxu0 0.0
    %2598 = vmatpush.xpose.msra.mxu0 0.0
    %2599 = vmatpush.xpose.msra.mxu0 0.0
    %2600 = vmatpush.xpose.msra.mxu0 0.0
    %2601 = vmatpush.xpose.msra.mxu0 0.0
    %2602 = vmatpush.xpose.msra.mxu0 0.0
    %2603 = vmatpush.xpose.msra.mxu0 0.0
    %2604 = vmatpush.xpose.msra.mxu0 0.0
    %2605 = vmatpush.xpose.msra.mxu0 0.0
    %2606 = vmatpush.xpose.msra.mxu0 0.0
    %2607 = vmatpush.xpose.msra.mxu0 0.0
    %2608 = vmatpush.xpose.msra.mxu0 0.0
    %2609 = vmatpush.xpose.msra.mxu0 0.0
    %2610 = vmatpush.xpose.msra.mxu0 %v2593
    %2611 = vmatmul.f32.gmra.mxu0 %v2591
    %v2612 = vpop.f32.mrf.mxu0
    %v2613 = vadd.f32 %v2562, %v2612
    %2614 = vdwg.mxu0
    %2615 = vrot.lane.b32.xlu0 %v2559, 96
    %v2616 = vpop.permute.xlu0 %2615
    %v2617 = vsel %vm110, %v2559, 0
    %v2619 = vsel %vm110, %v2616, 0
    %2621 = vmatpush.xpose.msra.mxu0 0.0
    %2622 = vmatpush.xpose.msra.mxu0 0.0
    %2623 = vmatpush.xpose.msra.mxu0 0.0
    %2624 = vmatpush.xpose.msra.mxu0 0.0
    %2625 = vmatpush.xpose.msra.mxu0 0.0
    %2626 = vmatpush.xpose.msra.mxu0 0.0
    %2627 = vmatpush.xpose.msra.mxu0 0.0
    %2628 = vmatpush.xpose.msra.mxu0 0.0
    %2629 = vmatpush.xpose.msra.mxu0 0.0
    %2630 = vmatpush.xpose.msra.mxu0 0.0
    %2631 = vmatpush.xpose.msra.mxu0 0.0
    %2632 = vmatpush.xpose.msra.mxu0 0.0
    %2633 = vmatpush.xpose.msra.mxu0 0.0
    %2634 = vmatpush.xpose.msra.mxu0 0.0
    %2635 = vmatpush.xpose.msra.mxu0 0.0
    %2636 = vmatpush.xpose.msra.mxu0 %v2619
    %2637 = vmatmul.f32.gmra.mxu0 %v2617
    %v2638 = vpop.f32.mrf.mxu0
    %v2639 = vadd.f32 %v2562, %v2638
    %2640 = vdwg.mxu0
    %2641 = vrot.lane.b32.xlu0 %v2561, 96
    %v2642 = vpop.permute.xlu0 %2641
    %v2643 = vsel %vm110, %v2561, 0
    %v2645 = vsel %vm110, %v2642, 0
    %2647 = vmatpush.xpose.msra.mxu0 0.0
    %2648 = vmatpush.xpose.msra.mxu0 0.0
    %2649 = vmatpush.xpose.msra.mxu0 0.0
    %2650 = vmatpush.xpose.msra.mxu0 0.0
    %2651 = vmatpush.xpose.msra.mxu0 0.0
    %2652 = vmatpush.xpose.msra.mxu0 0.0
    %2653 = vmatpush.xpose.msra.mxu0 0.0
    %2654 = vmatpush.xpose.msra.mxu0 0.0
    %2655 = vmatpush.xpose.msra.mxu0 0.0
    %2656 = vmatpush.xpose.msra.mxu0 0.0
    %2657 = vmatpush.xpose.msra.mxu0 0.0
    %2658 = vmatpush.xpose.msra.mxu0 0.0
    %2659 = vmatpush.xpose.msra.mxu0 0.0
    %2660 = vmatpush.xpose.msra.mxu0 0.0
    %2661 = vmatpush.xpose.msra.mxu0 0.0
    %2662 = vmatpush.xpose.msra.mxu0 %v2645
    %2663 = vmatmul.f32.gmra.mxu0 %v2643
    %v2664 = vpop.f32.mrf.mxu0
    %v2665 = vadd.f32 %v2562, %v2664
    %2666 = vdwg.mxu0
    %v2667 = vsel %vm110, %v2587, -inf
    %2668 = vmax.xlane.f32.xlu0 %v2667
    %v2669 = vpop.xlane.xlu0 %2668
    %v2670 = vsel %vm110, %v2613, -inf
    %2671 = vmax.xlane.f32.xlu0 %v2670
    %v2672 = vpop.xlane.xlu0 %2671
    %v2673 = vsel %vm110, %v2639, -inf
    %2674 = vmax.xlane.f32.xlu0 %v2673
    %v2675 = vpop.xlane.xlu0 %2674
    %v2676 = vsel %vm110, %v2665, -inf
    %2677 = vmax.xlane.f32.xlu0 %v2676
    %v2678 = vpop.xlane.xlu0 %2677
    %v2679 = vsub.f32 %v2587, %v2669
    %v2680 = vsub.f32 %v2613, %v2672
    %v2681 = vsub.f32 %v2639, %v2675
    %v2682 = vsub.f32 %v2665, %v2678
    %v2683 = vmul.f32 %v2679, 1.442695
    %v2684 = vpow.pop %v2683
    %v2685 = vmul.f32 %v2680, 1.442695
    %v2686 = vpow.pop %v2685
    %v2687 = vmul.f32 %v2681, 1.442695
    %v2688 = vpow.pop %v2687
    %v2689 = vmul.f32 %v2682, 1.442695
    %v2690 = vpow.pop %v2689
    %v2691 = vsel %vm110, %v2684, 0.0
    %2692 = vadd.xlane.f32.xlu0 %v2691
    %v2693 = vpop.xlane.xlu0 %2692
    %v2694 = vsel %vm110, %v2686, 0.0
    %2695 = vadd.xlane.f32.xlu0 %v2694
    %v2696 = vpop.xlane.xlu0 %2695
    %v2697 = vsel %vm110, %v2688, 0.0
    %2698 = vadd.xlane.f32.xlu0 %v2697
    %v2699 = vpop.xlane.xlu0 %2698
    %v2700 = vsel %vm110, %v2690, 0.0
    %2701 = vadd.xlane.f32.xlu0 %v2700
    %v2702 = vpop.xlane.xlu0 %2701
    %v2703 = vrcp.pop %v2693
    %v2704 = vrcp.pop %v2696
    %v2705 = vrcp.pop %v2699
    %v2706 = vrcp.pop %v2702
    %v2707 = vmul.f32 %v2684, %v2703
    %v2708 = vmul.f32 %v2686, %v2704
    %v2709 = vmul.f32 %v2688, %v2705
    %v2710 = vmul.f32 %v2690, %v2706
    %2711 = vrot.lane.b32.xlu0 %v2278, 64
    %v2712 = vpop.permute.xlu0 %2711
    %v2715 = vsel %vm110, %v2707, 0
    %2717 = vmatpush.msra.mxu0 0.0
    %2718 = vmatpush.msra.mxu0 0.0
    %2719 = vmatpush.msra.mxu0 0.0
    %2720 = vmatpush.msra.mxu0 0.0
    %2721 = vmatpush.msra.mxu0 0.0
    %2722 = vmatpush.msra.mxu0 0.0
    %2723 = vmatpush.msra.mxu0 0.0
    %2724 = vmatpush.msra.mxu0 0.0
    %2725 = vmatpush.msra.mxu0 0.0
    %2726 = vmatpush.msra.mxu0 0.0
    %2727 = vmatpush.msra.mxu0 0.0
    %2728 = vmatpush.msra.mxu0 0.0
    %2729 = vmatpush.msra.mxu0 0.0
    %2730 = vmatpush.msra.mxu0 0.0
    %2731 = vmatpush.msra.mxu0 0.0
    %2732 = vmatpush.msra.mxu0 %v2712
    %2733 = vmatmul.f32.gmra.mxu0 %v2715
    %v2734 = vpop.f32.mrf.mxu0
    %v2735 = vadd.f32 0.0, %v2734
    %2736 = vdwg.mxu0
    %2737 = vrot.lane.b32.xlu0 %v2557, 64
    %v2738 = vpop.permute.xlu0 %2737
    %v2741 = vsel %vm110, %v2708, 0
    %2743 = vmatpush.msra.mxu0 0.0
    %2744 = vmatpush.msra.mxu0 0.0
    %2745 = vmatpush.msra.mxu0 0.0
    %2746 = vmatpush.msra.mxu0 0.0
    %2747 = vmatpush.msra.mxu0 0.0
    %2748 = vmatpush.msra.mxu0 0.0
    %2749 = vmatpush.msra.mxu0 0.0
    %2750 = vmatpush.msra.mxu0 0.0
    %2751 = vmatpush.msra.mxu0 0.0
    %2752 = vmatpush.msra.mxu0 0.0
    %2753 = vmatpush.msra.mxu0 0.0
    %2754 = vmatpush.msra.mxu0 0.0
    %2755 = vmatpush.msra.mxu0 0.0
    %2756 = vmatpush.msra.mxu0 0.0
    %2757 = vmatpush.msra.mxu0 0.0
    %2758 = vmatpush.msra.mxu0 %v2738
    %2759 = vmatmul.f32.gmra.mxu0 %v2741
    %v2760 = vpop.f32.mrf.mxu0
    %v2761 = vadd.f32 0.0, %v2760
    %2762 = vdwg.mxu0
    %2763 = vrot.lane.b32.xlu0 %v2559, 64
    %v2764 = vpop.permute.xlu0 %2763
    %v2767 = vsel %vm110, %v2709, 0
    %2769 = vmatpush.msra.mxu0 0.0
    %2770 = vmatpush.msra.mxu0 0.0
    %2771 = vmatpush.msra.mxu0 0.0
    %2772 = vmatpush.msra.mxu0 0.0
    %2773 = vmatpush.msra.mxu0 0.0
    %2774 = vmatpush.msra.mxu0 0.0
    %2775 = vmatpush.msra.mxu0 0.0
    %2776 = vmatpush.msra.mxu0 0.0
    %2777 = vmatpush.msra.mxu0 0.0
    %2778 = vmatpush.msra.mxu0 0.0
    %2779 = vmatpush.msra.mxu0 0.0
    %2780 = vmatpush.msra.mxu0 0.0
    %2781 = vmatpush.msra.mxu0 0.0
    %2782 = vmatpush.msra.mxu0 0.0
    %2783 = vmatpush.msra.mxu0 0.0
    %2784 = vmatpush.msra.mxu0 %v2764
    %2785 = vmatmul.f32.gmra.mxu0 %v2767
    %v2786 = vpop.f32.mrf.mxu0
    %v2787 = vadd.f32 0.0, %v2786
    %2788 = vdwg.mxu0
    %2789 = vrot.lane.b32.xlu0 %v2561, 64
    %v2790 = vpop.permute.xlu0 %2789
    %v2793 = vsel %vm110, %v2710, 0
    %2795 = vmatpush.msra.mxu0 0.0
    %2796 = vmatpush.msra.mxu0 0.0
    %2797 = vmatpush.msra.mxu0 0.0
    %2798 = vmatpush.msra.mxu0 0.0
    %2799 = vmatpush.msra.mxu0 0.0
    %2800 = vmatpush.msra.mxu0 0.0
    %2801 = vmatpush.msra.mxu0 0.0
    %2802 = vmatpush.msra.mxu0 0.0
    %2803 = vmatpush.msra.mxu0 0.0
    %2804 = vmatpush.msra.mxu0 0.0
    %2805 = vmatpush.msra.mxu0 0.0
    %2806 = vmatpush.msra.mxu0 0.0
    %2807 = vmatpush.msra.mxu0 0.0
    %2808 = vmatpush.msra.mxu0 0.0
    %2809 = vmatpush.msra.mxu0 0.0
    %2810 = vmatpush.msra.mxu0 %v2790
    %2811 = vmatmul.f32.gmra.mxu0 %v2793
    %v2812 = vpop.f32.mrf.mxu0
    %v2813 = vadd.f32 0.0, %v2812
    %2814 = vdwg.mxu0
    %2816 = vrot.lane.b32.xlu0 %v2761, 8
    %v2817 = vpop.permute.xlu0 %2816
    %2820 = vrot.lane.b32.xlu0 %v2787, 16
    %v2821 = vpop.permute.xlu0 %2820
    %2824 = vrot.lane.b32.xlu0 %v2813, 24
    %v2825 = vpop.permute.xlu0 %2824
    %v2827 = vsel %vm110, %v2735, %v2817
    %v2828 = vsel %vm374, %v2827, %v2821
    %v2829 = vsel %vm376, %v2828, %v2825
    %2834 = vrot.lane.b32.xlu0 %v2214, 32
    %v2835 = vpop.permute.xlu0 %2834
    %2836 = vrot.lane.b32.xlu0 %v2215, 32
    %v2837 = vpop.permute.xlu0 %2836
    %2838 = vrot.lane.b32.xlu0 %v2216, 32
    %v2839 = vpop.permute.xlu0 %2838
    %2840 = vrot.lane.b32.xlu0 %v2217, 32
    %v2841 = vpop.permute.xlu0 %2840
    %2846 = vrot.lane.b32.xlu0 %v2249, 32
    %v2847 = vpop.permute.xlu0 %2846
    %v2850 = vsel %vm70, %v2554, 0
    %v2853 = vsel %vm70, %v2829, 0
    %2855 = vmatpush.msra.mxu0 0.0
    %2856 = vmatpush.msra.mxu0 0.0
    %2857 = vmatpush.msra.mxu0 0.0
    %2858 = vmatpush.msra.mxu0 0.0
    %2859 = vmatpush.msra.mxu0 0.0
    %2860 = vmatpush.msra.mxu0 0.0
    %2861 = vmatpush.msra.mxu0 0.0
    %2862 = vmatpush.msra.mxu0 0.0
    %2863 = vmatpush.msra.mxu0 0.0
    %2864 = vmatpush.msra.mxu0 0.0
    %2865 = vmatpush.msra.mxu0 0.0
    %2866 = vmatpush.msra.mxu0 0.0
    %2867 = vmatpush.msra.mxu0 %v2841
    %2868 = vmatpush.msra.mxu0 %v2839
    %2869 = vmatpush.msra.mxu0 %v2837
    %2870 = vmatpush.msra.mxu0 %v2835
    %2871 = vmatmul.f32.gmra.mxu0 %v2850
    %v2872 = vpop.f32.mrf.mxu0
    %v2873 = vadd.f32 %v2847, %v2872
    %2874 = vmatmul.f32.gmra.mxu0 %v2853
    %v2875 = vpop.f32.mrf.mxu0
    %v2876 = vadd.f32 %v2847, %v2875
    %2877 = vdwg.mxu0
    %v2879 = vsel %vm70, %v2873, 0
    %v2882 = vsel %vm70, %v2876, 0
    %2884 = vmatpush.msra.mxu0 0.0
    %2885 = vmatpush.msra.mxu0 0.0
    %2886 = vmatpush.msra.mxu0 0.0
    %2887 = vmatpush.msra.mxu0 0.0
    %2888 = vmatpush.msra.mxu0 0.0
    %2889 = vmatpush.msra.mxu0 0.0
    %2890 = vmatpush.msra.mxu0 0.0
    %2891 = vmatpush.msra.mxu0 0.0
    %2892 = vmatpush.msra.mxu0 0.0
    %2893 = vmatpush.msra.mxu0 0.0
    %2894 = vmatpush.msra.mxu0 0.0
    %2895 = vmatpush.msra.mxu0 0.0
    %2896 = vmatpush.msra.mxu0 %v2217
    %2897 = vmatpush.msra.mxu0 %v2216
    %2898 = vmatpush.msra.mxu0 %v2215
    %2899 = vmatpush.msra.mxu0 %v2214
    %2900 = vmatmul.f32.gmra.mxu0 %v2879
    %v2901 = vpop.f32.mrf.mxu0
    %v2902 = vadd.f32 %v2249, %v2901
    %2903 = vmatmul.f32.gmra.mxu0 %v2882
    %v2904 = vpop.f32.mrf.mxu0
    %v2905 = vadd.f32 %v2249, %v2904
    %2906 = vdwg.mxu0
    %2908 = vrot.lane.b32.xlu0 %v2902, 120
    %v2909 = vpop.permute.xlu0 %2908
    %2910 = vrot.lane.b32.xlu0 %v2902, 112
    %v2911 = vpop.permute.xlu0 %2910
    %2912 = vrot.lane.b32.xlu0 %v2902, 104
    %v2913 = vpop.permute.xlu0 %2912
    %v2914 = vld [vmem:[%s2] sm:$0xff]
    %2915 = vrot.lane.b32.xlu0 %v2902, 96
    %v2916 = vpop.permute.xlu0 %2915
    %v2917 = vsel %vm110, %v2902, 0
    %v2919 = vsel %vm110, %v2916, 0
    %2921 = vmatpush.xpose.msra.mxu0 0.0
    %2922 = vmatpush.xpose.msra.mxu0 0.0
    %2923 = vmatpush.xpose.msra.mxu0 0.0
    %2924 = vmatpush.xpose.msra.mxu0 0.0
    %2925 = vmatpush.xpose.msra.mxu0 0.0
    %2926 = vmatpush.xpose.msra.mxu0 0.0
    %2927 = vmatpush.xpose.msra.mxu0 0.0
    %2928 = vmatpush.xpose.msra.mxu0 0.0
    %2929 = vmatpush.xpose.msra.mxu0 0.0
    %2930 = vmatpush.xpose.msra.mxu0 0.0
    %2931 = vmatpush.xpose.msra.mxu0 0.0
    %2932 = vmatpush.xpose.msra.mxu0 0.0
    %2933 = vmatpush.xpose.msra.mxu0 0.0
    %2934 = vmatpush.xpose.msra.mxu0 0.0
    %2935 = vmatpush.xpose.msra.mxu0 0.0
    %2936 = vmatpush.xpose.msra.mxu0 %v2919
    %2937 = vmatmul.f32.gmra.mxu0 %v2917
    %v2938 = vpop.f32.mrf.mxu0
    %v2939 = vadd.f32 %v2914, %v2938
    %2940 = vdwg.mxu0
    %2941 = vrot.lane.b32.xlu0 %v2909, 96
    %v2942 = vpop.permute.xlu0 %2941
    %v2943 = vsel %vm110, %v2909, 0
    %v2945 = vsel %vm110, %v2942, 0
    %2947 = vmatpush.xpose.msra.mxu0 0.0
    %2948 = vmatpush.xpose.msra.mxu0 0.0
    %2949 = vmatpush.xpose.msra.mxu0 0.0
    %2950 = vmatpush.xpose.msra.mxu0 0.0
    %2951 = vmatpush.xpose.msra.mxu0 0.0
    %2952 = vmatpush.xpose.msra.mxu0 0.0
    %2953 = vmatpush.xpose.msra.mxu0 0.0
    %2954 = vmatpush.xpose.msra.mxu0 0.0
    %2955 = vmatpush.xpose.msra.mxu0 0.0
    %2956 = vmatpush.xpose.msra.mxu0 0.0
    %2957 = vmatpush.xpose.msra.mxu0 0.0
    %2958 = vmatpush.xpose.msra.mxu0 0.0
    %2959 = vmatpush.xpose.msra.mxu0 0.0
    %2960 = vmatpush.xpose.msra.mxu0 0.0
    %2961 = vmatpush.xpose.msra.mxu0 0.0
    %2962 = vmatpush.xpose.msra.mxu0 %v2945
    %2963 = vmatmul.f32.gmra.mxu0 %v2943
    %v2964 = vpop.f32.mrf.mxu0
    %v2965 = vadd.f32 %v2914, %v2964
    %2966 = vdwg.mxu0
    %2967 = vrot.lane.b32.xlu0 %v2911, 96
    %v2968 = vpop.permute.xlu0 %2967
    %v2969 = vsel %vm110, %v2911, 0
    %v2971 = vsel %vm110, %v2968, 0
    %2973 = vmatpush.xpose.msra.mxu0 0.0
    %2974 = vmatpush.xpose.msra.mxu0 0.0
    %2975 = vmatpush.xpose.msra.mxu0 0.0
    %2976 = vmatpush.xpose.msra.mxu0 0.0
    %2977 = vmatpush.xpose.msra.mxu0 0.0
    %2978 = vmatpush.xpose.msra.mxu0 0.0
    %2979 = vmatpush.xpose.msra.mxu0 0.0
    %2980 = vmatpush.xpose.msra.mxu0 0.0
    %2981 = vmatpush.xpose.msra.mxu0 0.0
    %2982 = vmatpush.xpose.msra.mxu0 0.0
    %2983 = vmatpush.xpose.msra.mxu0 0.0
    %2984 = vmatpush.xpose.msra.mxu0 0.0
    %2985 = vmatpush.xpose.msra.mxu0 0.0
    %2986 = vmatpush.xpose.msra.mxu0 0.0
    %2987 = vmatpush.xpose.msra.mxu0 0.0
    %2988 = vmatpush.xpose.msra.mxu0 %v2971
    %2989 = vmatmul.f32.gmra.mxu0 %v2969
    %v2990 = vpop.f32.mrf.mxu0
    %v2991 = vadd.f32 %v2914, %v2990
    %2992 = vdwg.mxu0
    %2993 = vrot.lane.b32.xlu0 %v2913, 96
    %v2994 = vpop.permute.xlu0 %2993
    %v2995 = vsel %vm110, %v2913, 0
    %v2997 = vsel %vm110, %v2994, 0
    %2999 = vmatpush.xpose.msra.mxu0 0.0
    %3000 = vmatpush.xpose.msra.mxu0 0.0
    %3001 = vmatpush.xpose.msra.mxu0 0.0
    %3002 = vmatpush.xpose.msra.mxu0 0.0
    %3003 = vmatpush.xpose.msra.mxu0 0.0
    %3004 = vmatpush.xpose.msra.mxu0 0.0
    %3005 = vmatpush.xpose.msra.mxu0 0.0
    %3006 = vmatpush.xpose.msra.mxu0 0.0
    %3007 = vmatpush.xpose.msra.mxu0 0.0
    %3008 = vmatpush.xpose.msra.mxu0 0.0
    %3009 = vmatpush.xpose.msra.mxu0 0.0
    %3010 = vmatpush.xpose.msra.mxu0 0.0
    %3011 = vmatpush.xpose.msra.mxu0 0.0
    %3012 = vmatpush.xpose.msra.mxu0 0.0
    %3013 = vmatpush.xpose.msra.mxu0 0.0
    %3014 = vmatpush.xpose.msra.mxu0 %v2997
    %3015 = vmatmul.f32.gmra.mxu0 %v2995
    %v3016 = vpop.f32.mrf.mxu0
    %v3017 = vadd.f32 %v2914, %v3016
    %3018 = vdwg.mxu0
    %v3019 = vsel %vm110, %v2939, -inf
    %3020 = vmax.xlane.f32.xlu0 %v3019
    %v3021 = vpop.xlane.xlu0 %3020
    %v3022 = vsel %vm110, %v2965, -inf
    %3023 = vmax.xlane.f32.xlu0 %v3022
    %v3024 = vpop.xlane.xlu0 %3023
    %v3025 = vsel %vm110, %v2991, -inf
    %3026 = vmax.xlane.f32.xlu0 %v3025
    %v3027 = vpop.xlane.xlu0 %3026
    %v3028 = vsel %vm110, %v3017, -inf
    %3029 = vmax.xlane.f32.xlu0 %v3028
    %v3030 = vpop.xlane.xlu0 %3029
    %v3031 = vsub.f32 %v2939, %v3021
    %v3032 = vsub.f32 %v2965, %v3024
    %v3033 = vsub.f32 %v2991, %v3027
    %v3034 = vsub.f32 %v3017, %v3030
    %v3035 = vmul.f32 %v3031, 1.442695
    %v3036 = vpow.pop %v3035
    %v3037 = vmul.f32 %v3032, 1.442695
    %v3038 = vpow.pop %v3037
    %v3039 = vmul.f32 %v3033, 1.442695
    %v3040 = vpow.pop %v3039
    %v3041 = vmul.f32 %v3034, 1.442695
    %v3042 = vpow.pop %v3041
    %v3043 = vsel %vm110, %v3036, 0.0
    %3044 = vadd.xlane.f32.xlu0 %v3043
    %v3045 = vpop.xlane.xlu0 %3044
    %v3046 = vsel %vm110, %v3038, 0.0
    %3047 = vadd.xlane.f32.xlu0 %v3046
    %v3048 = vpop.xlane.xlu0 %3047
    %v3049 = vsel %vm110, %v3040, 0.0
    %3050 = vadd.xlane.f32.xlu0 %v3049
    %v3051 = vpop.xlane.xlu0 %3050
    %v3052 = vsel %vm110, %v3042, 0.0
    %3053 = vadd.xlane.f32.xlu0 %v3052
    %v3054 = vpop.xlane.xlu0 %3053
    %v3055 = vrcp.pop %v3045
    %v3056 = vrcp.pop %v3048
    %v3057 = vrcp.pop %v3051
    %v3058 = vrcp.pop %v3054
    %v3059 = vmul.f32 %v3036, %v3055
    %v3060 = vmul.f32 %v3038, %v3056
    %v3061 = vmul.f32 %v3040, %v3057
    %v3062 = vmul.f32 %v3042, %v3058
    %3063 = vrot.lane.b32.xlu0 %v2902, 64
    %v3064 = vpop.permute.xlu0 %3063
    %v3067 = vsel %vm110, %v3059, 0
    %3069 = vmatpush.msra.mxu0 0.0
    %3070 = vmatpush.msra.mxu0 0.0
    %3071 = vmatpush.msra.mxu0 0.0
    %3072 = vmatpush.msra.mxu0 0.0
    %3073 = vmatpush.msra.mxu0 0.0
    %3074 = vmatpush.msra.mxu0 0.0
    %3075 = vmatpush.msra.mxu0 0.0
    %3076 = vmatpush.msra.mxu0 0.0
    %3077 = vmatpush.msra.mxu0 0.0
    %3078 = vmatpush.msra.mxu0 0.0
    %3079 = vmatpush.msra.mxu0 0.0
    %3080 = vmatpush.msra.mxu0 0.0
    %3081 = vmatpush.msra.mxu0 0.0
    %3082 = vmatpush.msra.mxu0 0.0
    %3083 = vmatpush.msra.mxu0 0.0
    %3084 = vmatpush.msra.mxu0 %v3064
    %3085 = vmatmul.f32.gmra.mxu0 %v3067
    %v3086 = vpop.f32.mrf.mxu0
    %v3087 = vadd.f32 0.0, %v3086
    %3088 = vdwg.mxu0
    %3089 = vrot.lane.b32.xlu0 %v2909, 64
    %v3090 = vpop.permute.xlu0 %3089
    %v3093 = vsel %vm110, %v3060, 0
    %3095 = vmatpush.msra.mxu0 0.0
    %3096 = vmatpush.msra.mxu0 0.0
    %3097 = vmatpush.msra.mxu0 0.0
    %3098 = vmatpush.msra.mxu0 0.0
    %3099 = vmatpush.msra.mxu0 0.0
    %3100 = vmatpush.msra.mxu0 0.0
    %3101 = vmatpush.msra.mxu0 0.0
    %3102 = vmatpush.msra.mxu0 0.0
    %3103 = vmatpush.msra.mxu0 0.0
    %3104 = vmatpush.msra.mxu0 0.0
    %3105 = vmatpush.msra.mxu0 0.0
    %3106 = vmatpush.msra.mxu0 0.0
    %3107 = vmatpush.msra.mxu0 0.0
    %3108 = vmatpush.msra.mxu0 0.0
    %3109 = vmatpush.msra.mxu0 0.0
    %3110 = vmatpush.msra.mxu0 %v3090
    %3111 = vmatmul.f32.gmra.mxu0 %v3093
    %v3112 = vpop.f32.mrf.mxu0
    %v3113 = vadd.f32 0.0, %v3112
    %3114 = vdwg.mxu0
    %3115 = vrot.lane.b32.xlu0 %v2911, 64
    %v3116 = vpop.permute.xlu0 %3115
    %v3119 = vsel %vm110, %v3061, 0
    %3121 = vmatpush.msra.mxu0 0.0
    %3122 = vmatpush.msra.mxu0 0.0
    %3123 = vmatpush.msra.mxu0 0.0
    %3124 = vmatpush.msra.mxu0 0.0
    %3125 = vmatpush.msra.mxu0 0.0
    %3126 = vmatpush.msra.mxu0 0.0
    %3127 = vmatpush.msra.mxu0 0.0
    %3128 = vmatpush.msra.mxu0 0.0
    %3129 = vmatpush.msra.mxu0 0.0
    %3130 = vmatpush.msra.mxu0 0.0
    %3131 = vmatpush.msra.mxu0 0.0
    %3132 = vmatpush.msra.mxu0 0.0
    %3133 = vmatpush.msra.mxu0 0.0
    %3134 = vmatpush.msra.mxu0 0.0
    %3135 = vmatpush.msra.mxu0 0.0
    %3136 = vmatpush.msra.mxu0 %v3116
    %3137 = vmatmul.f32.gmra.mxu0 %v3119
    %v3138 = vpop.f32.mrf.mxu0
    %v3139 = vadd.f32 0.0, %v3138
    %3140 = vdwg.mxu0
    %3141 = vrot.lane.b32.xlu0 %v2913, 64
    %v3142 = vpop.permute.xlu0 %3141
    %v3145 = vsel %vm110, %v3062, 0
    %3147 = vmatpush.msra.mxu0 0.0
    %3148 = vmatpush.msra.mxu0 0.0
    %3149 = vmatpush.msra.mxu0 0.0
    %3150 = vmatpush.msra.mxu0 0.0
    %3151 = vmatpush.msra.mxu0 0.0
    %3152 = vmatpush.msra.mxu0 0.0
    %3153 = vmatpush.msra.mxu0 0.0
    %3154 = vmatpush.msra.mxu0 0.0
    %3155 = vmatpush.msra.mxu0 0.0
    %3156 = vmatpush.msra.mxu0 0.0
    %3157 = vmatpush.msra.mxu0 0.0
    %3158 = vmatpush.msra.mxu0 0.0
    %3159 = vmatpush.msra.mxu0 0.0
    %3160 = vmatpush.msra.mxu0 0.0
    %3161 = vmatpush.msra.mxu0 0.0
    %3162 = vmatpush.msra.mxu0 %v3142
    %3163 = vmatmul.f32.gmra.mxu0 %v3145
    %v3164 = vpop.f32.mrf.mxu0
    %v3165 = vadd.f32 0.0, %v3164
    %3166 = vdwg.mxu0
    %3168 = vrot.lane.b32.xlu0 %v3113, 8
    %v3169 = vpop.permute.xlu0 %3168
    %3172 = vrot.lane.b32.xlu0 %v3139, 16
    %v3173 = vpop.permute.xlu0 %3172
    %3176 = vrot.lane.b32.xlu0 %v3165, 24
    %v3177 = vpop.permute.xlu0 %3176
    %v3179 = vsel %vm110, %v3087, %v3169
    %v3180 = vsel %vm374, %v3179, %v3173
    %v3181 = vsel %vm376, %v3180, %v3177
    %3183 = vrot.lane.b32.xlu0 %v2905, 120
    %v3184 = vpop.permute.xlu0 %3183
    %3185 = vrot.lane.b32.xlu0 %v2905, 112
    %v3186 = vpop.permute.xlu0 %3185
    %3187 = vrot.lane.b32.xlu0 %v2905, 104
    %v3188 = vpop.permute.xlu0 %3187
    %v3189 = vld [vmem:[%s385] sm:$0xff]
    %3190 = vrot.lane.b32.xlu0 %v2905, 96
    %v3191 = vpop.permute.xlu0 %3190
    %v3192 = vsel %vm110, %v2905, 0
    %v3194 = vsel %vm110, %v3191, 0
    %3196 = vmatpush.xpose.msra.mxu0 0.0
    %3197 = vmatpush.xpose.msra.mxu0 0.0
    %3198 = vmatpush.xpose.msra.mxu0 0.0
    %3199 = vmatpush.xpose.msra.mxu0 0.0
    %3200 = vmatpush.xpose.msra.mxu0 0.0
    %3201 = vmatpush.xpose.msra.mxu0 0.0
    %3202 = vmatpush.xpose.msra.mxu0 0.0
    %3203 = vmatpush.xpose.msra.mxu0 0.0
    %3204 = vmatpush.xpose.msra.mxu0 0.0
    %3205 = vmatpush.xpose.msra.mxu0 0.0
    %3206 = vmatpush.xpose.msra.mxu0 0.0
    %3207 = vmatpush.xpose.msra.mxu0 0.0
    %3208 = vmatpush.xpose.msra.mxu0 0.0
    %3209 = vmatpush.xpose.msra.mxu0 0.0
    %3210 = vmatpush.xpose.msra.mxu0 0.0
    %3211 = vmatpush.xpose.msra.mxu0 %v3194
    %3212 = vmatmul.f32.gmra.mxu0 %v3192
    %v3213 = vpop.f32.mrf.mxu0
    %v3214 = vadd.f32 %v3189, %v3213
    %3215 = vdwg.mxu0
    %3216 = vrot.lane.b32.xlu0 %v3184, 96
    %v3217 = vpop.permute.xlu0 %3216
    %v3218 = vsel %vm110, %v3184, 0
    %v3220 = vsel %vm110, %v3217, 0
    %3222 = vmatpush.xpose.msra.mxu0 0.0
    %3223 = vmatpush.xpose.msra.mxu0 0.0
    %3224 = vmatpush.xpose.msra.mxu0 0.0
    %3225 = vmatpush.xpose.msra.mxu0 0.0
    %3226 = vmatpush.xpose.msra.mxu0 0.0
    %3227 = vmatpush.xpose.msra.mxu0 0.0
    %3228 = vmatpush.xpose.msra.mxu0 0.0
    %3229 = vmatpush.xpose.msra.mxu0 0.0
    %3230 = vmatpush.xpose.msra.mxu0 0.0
    %3231 = vmatpush.xpose.msra.mxu0 0.0
    %3232 = vmatpush.xpose.msra.mxu0 0.0
    %3233 = vmatpush.xpose.msra.mxu0 0.0
    %3234 = vmatpush.xpose.msra.mxu0 0.0
    %3235 = vmatpush.xpose.msra.mxu0 0.0
    %3236 = vmatpush.xpose.msra.mxu0 0.0
    %3237 = vmatpush.xpose.msra.mxu0 %v3220
    %3238 = vmatmul.f32.gmra.mxu0 %v3218
    %v3239 = vpop.f32.mrf.mxu0
    %v3240 = vadd.f32 %v3189, %v3239
    %3241 = vdwg.mxu0
    %3242 = vrot.lane.b32.xlu0 %v3186, 96
    %v3243 = vpop.permute.xlu0 %3242
    %v3244 = vsel %vm110, %v3186, 0
    %v3246 = vsel %vm110, %v3243, 0
    %3248 = vmatpush.xpose.msra.mxu0 0.0
    %3249 = vmatpush.xpose.msra.mxu0 0.0
    %3250 = vmatpush.xpose.msra.mxu0 0.0
    %3251 = vmatpush.xpose.msra.mxu0 0.0
    %3252 = vmatpush.xpose.msra.mxu0 0.0
    %3253 = vmatpush.xpose.msra.mxu0 0.0
    %3254 = vmatpush.xpose.msra.mxu0 0.0
    %3255 = vmatpush.xpose.msra.mxu0 0.0
    %3256 = vmatpush.xpose.msra.mxu0 0.0
    %3257 = vmatpush.xpose.msra.mxu0 0.0
    %3258 = vmatpush.xpose.msra.mxu0 0.0
    %3259 = vmatpush.xpose.msra.mxu0 0.0
    %3260 = vmatpush.xpose.msra.mxu0 0.0
    %3261 = vmatpush.xpose.msra.mxu0 0.0
    %3262 = vmatpush.xpose.msra.mxu0 0.0
    %3263 = vmatpush.xpose.msra.mxu0 %v3246
    %3264 = vmatmul.f32.gmra.mxu0 %v3244
    %v3265 = vpop.f32.mrf.mxu0
    %v3266 = vadd.f32 %v3189, %v3265
    %3267 = vdwg.mxu0
    %3268 = vrot.lane.b32.xlu0 %v3188, 96
    %v3269 = vpop.permute.xlu0 %3268
    %v3270 = vsel %vm110, %v3188, 0
    %v3272 = vsel %vm110, %v3269, 0
    %3274 = vmatpush.xpose.msra.mxu0 0.0
    %3275 = vmatpush.xpose.msra.mxu0 0.0
    %3276 = vmatpush.xpose.msra.mxu0 0.0
    %3277 = vmatpush.xpose.msra.mxu0 0.0
    %3278 = vmatpush.xpose.msra.mxu0 0.0
    %3279 = vmatpush.xpose.msra.mxu0 0.0
    %3280 = vmatpush.xpose.msra.mxu0 0.0
    %3281 = vmatpush.xpose.msra.mxu0 0.0
    %3282 = vmatpush.xpose.msra.mxu0 0.0
    %3283 = vmatpush.xpose.msra.mxu0 0.0
    %3284 = vmatpush.xpose.msra.mxu0 0.0
    %3285 = vmatpush.xpose.msra.mxu0 0.0
    %3286 = vmatpush.xpose.msra.mxu0 0.0
    %3287 = vmatpush.xpose.msra.mxu0 0.0
    %3288 = vmatpush.xpose.msra.mxu0 0.0
    %3289 = vmatpush.xpose.msra.mxu0 %v3272
    %3290 = vmatmul.f32.gmra.mxu0 %v3270
    %v3291 = vpop.f32.mrf.mxu0
    %v3292 = vadd.f32 %v3189, %v3291
    %3293 = vdwg.mxu0
    %v3294 = vsel %vm110, %v3214, -inf
    %3295 = vmax.xlane.f32.xlu0 %v3294
    %v3296 = vpop.xlane.xlu0 %3295
    %v3297 = vsel %vm110, %v3240, -inf
    %3298 = vmax.xlane.f32.xlu0 %v3297
    %v3299 = vpop.xlane.xlu0 %3298
    %v3300 = vsel %vm110, %v3266, -inf
    %3301 = vmax.xlane.f32.xlu0 %v3300
    %v3302 = vpop.xlane.xlu0 %3301
    %v3303 = vsel %vm110, %v3292, -inf
    %3304 = vmax.xlane.f32.xlu0 %v3303
    %v3305 = vpop.xlane.xlu0 %3304
    %v3306 = vsub.f32 %v3214, %v3296
    %v3307 = vsub.f32 %v3240, %v3299
    %v3308 = vsub.f32 %v3266, %v3302
    %v3309 = vsub.f32 %v3292, %v3305
    %v3310 = vmul.f32 %v3306, 1.442695
    %v3311 = vpow.pop %v3310
    %v3312 = vmul.f32 %v3307, 1.442695
    %v3313 = vpow.pop %v3312
    %v3314 = vmul.f32 %v3308, 1.442695
    %v3315 = vpow.pop %v3314
    %v3316 = vmul.f32 %v3309, 1.442695
    %v3317 = vpow.pop %v3316
    %v3318 = vsel %vm110, %v3311, 0.0
    %3319 = vadd.xlane.f32.xlu0 %v3318
    %v3320 = vpop.xlane.xlu0 %3319
    %v3321 = vsel %vm110, %v3313, 0.0
    %3322 = vadd.xlane.f32.xlu0 %v3321
    %v3323 = vpop.xlane.xlu0 %3322
    %v3324 = vsel %vm110, %v3315, 0.0
    %3325 = vadd.xlane.f32.xlu0 %v3324
    %v3326 = vpop.xlane.xlu0 %3325
    %v3327 = vsel %vm110, %v3317, 0.0
    %3328 = vadd.xlane.f32.xlu0 %v3327
    %v3329 = vpop.xlane.xlu0 %3328
    %v3330 = vrcp.pop %v3320
    %v3331 = vrcp.pop %v3323
    %v3332 = vrcp.pop %v3326
    %v3333 = vrcp.pop %v3329
    %v3334 = vmul.f32 %v3311, %v3330
    %v3335 = vmul.f32 %v3313, %v3331
    %v3336 = vmul.f32 %v3315, %v3332
    %v3337 = vmul.f32 %v3317, %v3333
    %3338 = vrot.lane.b32.xlu0 %v2905, 64
    %v3339 = vpop.permute.xlu0 %3338
    %v3342 = vsel %vm110, %v3334, 0
    %3344 = vmatpush.msra.mxu0 0.0
    %3345 = vmatpush.msra.mxu0 0.0
    %3346 = vmatpush.msra.mxu0 0.0
    %3347 = vmatpush.msra.mxu0 0.0
    %3348 = vmatpush.msra.mxu0 0.0
    %3349 = vmatpush.msra.mxu0 0.0
    %3350 = vmatpush.msra.mxu0 0.0
    %3351 = vmatpush.msra.mxu0 0.0
    %3352 = vmatpush.msra.mxu0 0.0
    %3353 = vmatpush.msra.mxu0 0.0
    %3354 = vmatpush.msra.mxu0 0.0
    %3355 = vmatpush.msra.mxu0 0.0
    %3356 = vmatpush.msra.mxu0 0.0
    %3357 = vmatpush.msra.mxu0 0.0
    %3358 = vmatpush.msra.mxu0 0.0
    %3359 = vmatpush.msra.mxu0 %v3339
    %3360 = vmatmul.f32.gmra.mxu0 %v3342
    %v3361 = vpop.f32.mrf.mxu0
    %v3362 = vadd.f32 0.0, %v3361
    %3363 = vdwg.mxu0
    %3364 = vrot.lane.b32.xlu0 %v3184, 64
    %v3365 = vpop.permute.xlu0 %3364
    %v3368 = vsel %vm110, %v3335, 0
    %3370 = vmatpush.msra.mxu0 0.0
    %3371 = vmatpush.msra.mxu0 0.0
    %3372 = vmatpush.msra.mxu0 0.0
    %3373 = vmatpush.msra.mxu0 0.0
    %3374 = vmatpush.msra.mxu0 0.0
    %3375 = vmatpush.msra.mxu0 0.0
    %3376 = vmatpush.msra.mxu0 0.0
    %3377 = vmatpush.msra.mxu0 0.0
    %3378 = vmatpush.msra.mxu0 0.0
    %3379 = vmatpush.msra.mxu0 0.0
    %3380 = vmatpush.msra.mxu0 0.0
    %3381 = vmatpush.msra.mxu0 0.0
    %3382 = vmatpush.msra.mxu0 0.0
    %3383 = vmatpush.msra.mxu0 0.0
    %3384 = vmatpush.msra.mxu0 0.0
    %3385 = vmatpush.msra.mxu0 %v3365
    %3386 = vmatmul.f32.gmra.mxu0 %v3368
    %v3387 = vpop.f32.mrf.mxu0
    %v3388 = vadd.f32 0.0, %v3387
    %3389 = vdwg.mxu0
    %3390 = vrot.lane.b32.xlu0 %v3186, 64
    %v3391 = vpop.permute.xlu0 %3390
    %v3394 = vsel %vm110, %v3336, 0
    %3396 = vmatpush.msra.mxu0 0.0
    %3397 = vmatpush.msra.mxu0 0.0
    %3398 = vmatpush.msra.mxu0 0.0
    %3399 = vmatpush.msra.mxu0 0.0
    %3400 = vmatpush.msra.mxu0 0.0
    %3401 = vmatpush.msra.mxu0 0.0
    %3402 = vmatpush.msra.mxu0 0.0
    %3403 = vmatpush.msra.mxu0 0.0
    %3404 = vmatpush.msra.mxu0 0.0
    %3405 = vmatpush.msra.mxu0 0.0
    %3406 = vmatpush.msra.mxu0 0.0
    %3407 = vmatpush.msra.mxu0 0.0
    %3408 = vmatpush.msra.mxu0 0.0
    %3409 = vmatpush.msra.mxu0 0.0
    %3410 = vmatpush.msra.mxu0 0.0
    %3411 = vmatpush.msra.mxu0 %v3391
    %3412 = vmatmul.f32.gmra.mxu0 %v3394
    %v3413 = vpop.f32.mrf.mxu0
    %v3414 = vadd.f32 0.0, %v3413
    %3415 = vdwg.mxu0
    %3416 = vrot.lane.b32.xlu0 %v3188, 64
    %v3417 = vpop.permute.xlu0 %3416
    %v3420 = vsel %vm110, %v3337, 0
    %3422 = vmatpush.msra.mxu0 0.0
    %3423 = vmatpush.msra.mxu0 0.0
    %3424 = vmatpush.msra.mxu0 0.0
    %3425 = vmatpush.msra.mxu0 0.0
    %3426 = vmatpush.msra.mxu0 0.0
    %3427 = vmatpush.msra.mxu0 0.0
    %3428 = vmatpush.msra.mxu0 0.0
    %3429 = vmatpush.msra.mxu0 0.0
    %3430 = vmatpush.msra.mxu0 0.0
    %3431 = vmatpush.msra.mxu0 0.0
    %3432 = vmatpush.msra.mxu0 0.0
    %3433 = vmatpush.msra.mxu0 0.0
    %3434 = vmatpush.msra.mxu0 0.0
    %3435 = vmatpush.msra.mxu0 0.0
    %3436 = vmatpush.msra.mxu0 0.0
    %3437 = vmatpush.msra.mxu0 %v3417
    %3438 = vmatmul.f32.gmra.mxu0 %v3420
    %v3439 = vpop.f32.mrf.mxu0
    %v3440 = vadd.f32 0.0, %v3439
    %3441 = vdwg.mxu0
    %3443 = vrot.lane.b32.xlu0 %v3388, 8
    %v3444 = vpop.permute.xlu0 %3443
    %3447 = vrot.lane.b32.xlu0 %v3414, 16
    %v3448 = vpop.permute.xlu0 %3447
    %3451 = vrot.lane.b32.xlu0 %v3440, 24
    %v3452 = vpop.permute.xlu0 %3451
    %v3454 = vsel %vm110, %v3362, %v3444
    %v3455 = vsel %vm374, %v3454, %v3448
    %v3456 = vsel %vm376, %v3455, %v3452
    %v3458 = vsel %vm70, %v3181, 0
    %v3461 = vsel %vm70, %v3456, 0
    %3463 = vmatpush.msra.mxu0 0.0
    %3464 = vmatpush.msra.mxu0 0.0
    %3465 = vmatpush.msra.mxu0 0.0
    %3466 = vmatpush.msra.mxu0 0.0
    %3467 = vmatpush.msra.mxu0 0.0
    %3468 = vmatpush.msra.mxu0 0.0
    %3469 = vmatpush.msra.mxu0 0.0
    %3470 = vmatpush.msra.mxu0 0.0
    %3471 = vmatpush.msra.mxu0 0.0
    %3472 = vmatpush.msra.mxu0 0.0
    %3473 = vmatpush.msra.mxu0 0.0
    %3474 = vmatpush.msra.mxu0 0.0
    %3475 = vmatpush.msra.mxu0 %v2841
    %3476 = vmatpush.msra.mxu0 %v2839
    %3477 = vmatpush.msra.mxu0 %v2837
    %3478 = vmatpush.msra.mxu0 %v2835
    %3479 = vmatmul.f32.gmra.mxu0 %v3458
    %v3480 = vpop.f32.mrf.mxu0
    %v3481 = vadd.f32 %v2847, %v3480
    %3482 = vmatmul.f32.gmra.mxu0 %v3461
    %v3483 = vpop.f32.mrf.mxu0
    %v3484 = vadd.f32 %v2847, %v3483
    %3485 = vdwg.mxu0
    %v3486 = vadd.f32 %v3481, %v2211
    %v3487 = vadd.f32 %v3484, %v2212
    %v3488 = vsel %vm70, %v3486, 0.0
    %3489 = vadd.xlane.f32.xlu0 %v3488
    %v3490 = vpop.xlane.xlu0 %3489
    %v3491 = vsel %vm70, %v3487, 0.0
    %3492 = vadd.xlane.f32.xlu0 %v3491
    %v3493 = vpop.xlane.xlu0 %3492
    %v3494 = vmul.f32 %v3490, %v1324
    %v3495 = vmul.f32 %v3493, %v1324
    %v3496 = vsub.f32 %v3486, %v3494
    %v3497 = vsub.f32 %v3487, %v3495
    %v3498 = vmul.f32 %v3496, %v3496
    %v3499 = vmul.f32 %v3497, %v3497
    %v3500 = vsel %vm70, %v3498, 0.0
    %3501 = vadd.xlane.f32.xlu0 %v3500
    %v3502 = vpop.xlane.xlu0 %3501
    %v3503 = vsel %vm70, %v3499, 0.0
    %3504 = vadd.xlane.f32.xlu0 %v3503
    %v3505 = vpop.xlane.xlu0 %3504
    %v3506 = vmul.f32 %v3502, %v1324
    %v3507 = vmul.f32 %v3505, %v1324
    %v3508 = vadd.f32 %v3506, 1e-05
    %v3509 = vadd.f32 %v3507, 1e-05
    %v3510 = vrsqrt.pop %v3508
    %v3511 = vmul.f32 %v3510, %v3508
    %v3512 = vmul.f32 %v3511, %v3510
    %v3513 = vmul.f32 0.5, %v3512
    %v3514 = vsub.f32 1.5, %v3513
    %v3515 = vmul.f32 %v3510, %v3514
    %vm3516 = vweird.f32 %v3508
    %vm3517 = vweird.f32 %v3510
    %vm3518 = vmor %vm3516, %vm3517
    %v3519 = vsel %vm3518, %v3510, %v3515
    %v3520 = vrsqrt.pop %v3509
    %v3521 = vmul.f32 %v3520, %v3509
    %v3522 = vmul.f32 %v3521, %v3520
    %v3523 = vmul.f32 0.5, %v3522
    %v3524 = vsub.f32 1.5, %v3523
    %v3525 = vmul.f32 %v3520, %v3524
    %vm3526 = vweird.f32 %v3509
    %vm3527 = vweird.f32 %v3520
    %vm3528 = vmor %vm3526, %vm3527
    %v3529 = vsel %vm3528, %v3520, %v3525
    %v3530 = vmul.f32 %v3496, %v3519
    %v3531 = vmul.f32 %v3497, %v3529
    %v3532 = vperm.slane %v2242, 0
    %v3533 = vmul.f32 %v3532, %v3530
    %v3534 = vmul.f32 %v3532, %v3531
    %v3535 = vperm.slane %v2243, 0
    %v3536 = vadd.f32 %v3533, %v3535
    %v3537 = vadd.f32 %v3534, %v3535
    %v3539 = vperm.slane %v2228, 0
    %3541 = vmatpush.msra.mxu0 0.0
    %3542 = vmatpush.msra.mxu0 0.0
    %3543 = vmatpush.msra.mxu0 0.0
    %3544 = vmatpush.msra.mxu0 0.0
    %3545 = vmatpush.msra.mxu0 0.0
    %3546 = vmatpush.msra.mxu0 0.0
    %3547 = vmatpush.msra.mxu0 0.0
    %3548 = vmatpush.msra.mxu0 0.0
    %3549 = vmatpush.msra.mxu0 0.0
    %3550 = vmatpush.msra.mxu0 0.0
    %3551 = vmatpush.msra.mxu0 0.0
    %3552 = vmatpush.msra.mxu0 0.0
    %3553 = vmatpush.msra.mxu0 %v2221
    %3554 = vmatpush.msra.mxu0 %v2220
    %3555 = vmatpush.msra.mxu0 %v2219
    %3556 = vmatpush.msra.mxu0 %v2218
    %3557 = vmatmul.f32.gmra.mxu0 %v1373
    %v3558 = vpop.f32.mrf.mxu0
    %v3559 = vadd.f32 %v3539, %v3558
    %3560 = vmatmul.f32.gmra.mxu0 %v1376
    %v3561 = vpop.f32.mrf.mxu0
    %v3562 = vadd.f32 %v3539, %v3561
    %3563 = vdwg.mxu0
    %3568 = vrot.lane.b32.xlu0 %v2218, 64
    %v3569 = vpop.permute.xlu0 %3568
    %3570 = vrot.lane.b32.xlu0 %v2219, 64
    %v3571 = vpop.permute.xlu0 %3570
    %3572 = vrot.lane.b32.xlu0 %v2220, 64
    %v3573 = vpop.permute.xlu0 %3572
    %3574 = vrot.lane.b32.xlu0 %v2221, 64
    %v3575 = vpop.permute.xlu0 %3574
    %3580 = vrot.lane.b32.xlu0 %v3539, 64
    %v3581 = vpop.permute.xlu0 %3580
    %v3584 = vsel %vm70, %v3536, 0
    %v3587 = vsel %vm70, %v3537, 0
    %3589 = vmatpush.msra.mxu0 0.0
    %3590 = vmatpush.msra.mxu0 0.0
    %3591 = vmatpush.msra.mxu0 0.0
    %3592 = vmatpush.msra.mxu0 0.0
    %3593 = vmatpush.msra.mxu0 0.0
    %3594 = vmatpush.msra.mxu0 0.0
    %3595 = vmatpush.msra.mxu0 0.0
    %3596 = vmatpush.msra.mxu0 0.0
    %3597 = vmatpush.msra.mxu0 0.0
    %3598 = vmatpush.msra.mxu0 0.0
    %3599 = vmatpush.msra.mxu0 0.0
    %3600 = vmatpush.msra.mxu0 0.0
    %3601 = vmatpush.msra.mxu0 %v3575
    %3602 = vmatpush.msra.mxu0 %v3573
    %3603 = vmatpush.msra.mxu0 %v3571
    %3604 = vmatpush.msra.mxu0 %v3569
    %3605 = vmatmul.f32.gmra.mxu0 %v3584
    %v3606 = vpop.f32.mrf.mxu0
    %v3607 = vadd.f32 %v3581, %v3606
    %3608 = vmatmul.f32.gmra.mxu0 %v3587
    %v3609 = vpop.f32.mrf.mxu0
    %v3610 = vadd.f32 %v3581, %v3609
    %3611 = vdwg.mxu0
    %3613 = vrot.lane.b32.xlu0 %v3607, 120
    %v3614 = vpop.permute.xlu0 %3613
    %3615 = vrot.lane.b32.xlu0 %v3607, 112
    %v3616 = vpop.permute.xlu0 %3615
    %3617 = vrot.lane.b32.xlu0 %v3607, 104
    %v3618 = vpop.permute.xlu0 %3617
    %3620 = vrot.lane.b32.xlu0 %v3559, 120
    %v3621 = vpop.permute.xlu0 %3620
    %3622 = vrot.lane.b32.xlu0 %v3559, 112
    %v3623 = vpop.permute.xlu0 %3622
    %3624 = vrot.lane.b32.xlu0 %v3559, 104
    %v3625 = vpop.permute.xlu0 %3624
    %v3626 = vld [vmem:[%s3] sm:$0xff]
    %v3627 = vsel %vm110, %v3607, 0
    %v3629 = vsel %vm110, %v3559, 0
    %3631 = vmatpush.xpose.msra.mxu0 0.0
    %3632 = vmatpush.xpose.msra.mxu0 0.0
    %3633 = vmatpush.xpose.msra.mxu0 0.0
    %3634 = vmatpush.xpose.msra.mxu0 0.0
    %3635 = vmatpush.xpose.msra.mxu0 0.0
    %3636 = vmatpush.xpose.msra.mxu0 0.0
    %3637 = vmatpush.xpose.msra.mxu0 0.0
    %3638 = vmatpush.xpose.msra.mxu0 0.0
    %3639 = vmatpush.xpose.msra.mxu0 0.0
    %3640 = vmatpush.xpose.msra.mxu0 0.0
    %3641 = vmatpush.xpose.msra.mxu0 0.0
    %3642 = vmatpush.xpose.msra.mxu0 0.0
    %3643 = vmatpush.xpose.msra.mxu0 0.0
    %3644 = vmatpush.xpose.msra.mxu0 0.0
    %3645 = vmatpush.xpose.msra.mxu0 0.0
    %3646 = vmatpush.xpose.msra.mxu0 %v3629
    %3647 = vmatmul.f32.gmra.mxu0 %v3627
    %v3648 = vpop.f32.mrf.mxu0
    %v3649 = vadd.f32 %v3626, %v3648
    %3650 = vdwg.mxu0
    %v3651 = vsel %vm110, %v3614, 0
    %v3653 = vsel %vm110, %v3621, 0
    %3655 = vmatpush.xpose.msra.mxu0 0.0
    %3656 = vmatpush.xpose.msra.mxu0 0.0
    %3657 = vmatpush.xpose.msra.mxu0 0.0
    %3658 = vmatpush.xpose.msra.mxu0 0.0
    %3659 = vmatpush.xpose.msra.mxu0 0.0
    %3660 = vmatpush.xpose.msra.mxu0 0.0
    %3661 = vmatpush.xpose.msra.mxu0 0.0
    %3662 = vmatpush.xpose.msra.mxu0 0.0
    %3663 = vmatpush.xpose.msra.mxu0 0.0
    %3664 = vmatpush.xpose.msra.mxu0 0.0
    %3665 = vmatpush.xpose.msra.mxu0 0.0
    %3666 = vmatpush.xpose.msra.mxu0 0.0
    %3667 = vmatpush.xpose.msra.mxu0 0.0
    %3668 = vmatpush.xpose.msra.mxu0 0.0
    %3669 = vmatpush.xpose.msra.mxu0 0.0
    %3670 = vmatpush.xpose.msra.mxu0 %v3653
    %3671 = vmatmul.f32.gmra.mxu0 %v3651
    %v3672 = vpop.f32.mrf.mxu0
    %v3673 = vadd.f32 %v3626, %v3672
    %3674 = vdwg.mxu0
    %v3675 = vsel %vm110, %v3616, 0
    %v3677 = vsel %vm110, %v3623, 0
    %3679 = vmatpush.xpose.msra.mxu0 0.0
    %3680 = vmatpush.xpose.msra.mxu0 0.0
    %3681 = vmatpush.xpose.msra.mxu0 0.0
    %3682 = vmatpush.xpose.msra.mxu0 0.0
    %3683 = vmatpush.xpose.msra.mxu0 0.0
    %3684 = vmatpush.xpose.msra.mxu0 0.0
    %3685 = vmatpush.xpose.msra.mxu0 0.0
    %3686 = vmatpush.xpose.msra.mxu0 0.0
    %3687 = vmatpush.xpose.msra.mxu0 0.0
    %3688 = vmatpush.xpose.msra.mxu0 0.0
    %3689 = vmatpush.xpose.msra.mxu0 0.0
    %3690 = vmatpush.xpose.msra.mxu0 0.0
    %3691 = vmatpush.xpose.msra.mxu0 0.0
    %3692 = vmatpush.xpose.msra.mxu0 0.0
    %3693 = vmatpush.xpose.msra.mxu0 0.0
    %3694 = vmatpush.xpose.msra.mxu0 %v3677
    %3695 = vmatmul.f32.gmra.mxu0 %v3675
    %v3696 = vpop.f32.mrf.mxu0
    %v3697 = vadd.f32 %v3626, %v3696
    %3698 = vdwg.mxu0
    %v3699 = vsel %vm110, %v3618, 0
    %v3701 = vsel %vm110, %v3625, 0
    %3703 = vmatpush.xpose.msra.mxu0 0.0
    %3704 = vmatpush.xpose.msra.mxu0 0.0
    %3705 = vmatpush.xpose.msra.mxu0 0.0
    %3706 = vmatpush.xpose.msra.mxu0 0.0
    %3707 = vmatpush.xpose.msra.mxu0 0.0
    %3708 = vmatpush.xpose.msra.mxu0 0.0
    %3709 = vmatpush.xpose.msra.mxu0 0.0
    %3710 = vmatpush.xpose.msra.mxu0 0.0
    %3711 = vmatpush.xpose.msra.mxu0 0.0
    %3712 = vmatpush.xpose.msra.mxu0 0.0
    %3713 = vmatpush.xpose.msra.mxu0 0.0
    %3714 = vmatpush.xpose.msra.mxu0 0.0
    %3715 = vmatpush.xpose.msra.mxu0 0.0
    %3716 = vmatpush.xpose.msra.mxu0 0.0
    %3717 = vmatpush.xpose.msra.mxu0 0.0
    %3718 = vmatpush.xpose.msra.mxu0 %v3701
    %3719 = vmatmul.f32.gmra.mxu0 %v3699
    %v3720 = vpop.f32.mrf.mxu0
    %v3721 = vadd.f32 %v3626, %v3720
    %3722 = vdwg.mxu0
    %v3723 = vsel %vm110, %v3649, -inf
    %3724 = vmax.xlane.f32.xlu0 %v3723
    %v3725 = vpop.xlane.xlu0 %3724
    %v3726 = vsel %vm110, %v3673, -inf
    %3727 = vmax.xlane.f32.xlu0 %v3726
    %v3728 = vpop.xlane.xlu0 %3727
    %v3729 = vsel %vm110, %v3697, -inf
    %3730 = vmax.xlane.f32.xlu0 %v3729
    %v3731 = vpop.xlane.xlu0 %3730
    %v3732 = vsel %vm110, %v3721, -inf
    %3733 = vmax.xlane.f32.xlu0 %v3732
    %v3734 = vpop.xlane.xlu0 %3733
    %v3735 = vsub.f32 %v3649, %v3725
    %v3736 = vsub.f32 %v3673, %v3728
    %v3737 = vsub.f32 %v3697, %v3731
    %v3738 = vsub.f32 %v3721, %v3734
    %v3739 = vmul.f32 %v3735, 1.442695
    %v3740 = vpow.pop %v3739
    %v3741 = vmul.f32 %v3736, 1.442695
    %v3742 = vpow.pop %v3741
    %v3743 = vmul.f32 %v3737, 1.442695
    %v3744 = vpow.pop %v3743
    %v3745 = vmul.f32 %v3738, 1.442695
    %v3746 = vpow.pop %v3745
    %v3747 = vsel %vm110, %v3740, 0.0
    %3748 = vadd.xlane.f32.xlu0 %v3747
    %v3749 = vpop.xlane.xlu0 %3748
    %v3750 = vsel %vm110, %v3742, 0.0
    %3751 = vadd.xlane.f32.xlu0 %v3750
    %v3752 = vpop.xlane.xlu0 %3751
    %v3753 = vsel %vm110, %v3744, 0.0
    %3754 = vadd.xlane.f32.xlu0 %v3753
    %v3755 = vpop.xlane.xlu0 %3754
    %v3756 = vsel %vm110, %v3746, 0.0
    %3757 = vadd.xlane.f32.xlu0 %v3756
    %v3758 = vpop.xlane.xlu0 %3757
    %v3759 = vrcp.pop %v3749
    %v3760 = vrcp.pop %v3752
    %v3761 = vrcp.pop %v3755
    %v3762 = vrcp.pop %v3758
    %v3763 = vmul.f32 %v3740, %v3759
    %v3764 = vmul.f32 %v3742, %v3760
    %v3765 = vmul.f32 %v3744, %v3761
    %v3766 = vmul.f32 %v3746, %v3762
    %3767 = vrot.lane.b32.xlu0 %v3559, 96
    %v3768 = vpop.permute.xlu0 %3767
    %v3771 = vsel %vm110, %v3763, 0
    %3773 = vmatpush.msra.mxu0 0.0
    %3774 = vmatpush.msra.mxu0 0.0
    %3775 = vmatpush.msra.mxu0 0.0
    %3776 = vmatpush.msra.mxu0 0.0
    %3777 = vmatpush.msra.mxu0 0.0
    %3778 = vmatpush.msra.mxu0 0.0
    %3779 = vmatpush.msra.mxu0 0.0
    %3780 = vmatpush.msra.mxu0 0.0
    %3781 = vmatpush.msra.mxu0 0.0
    %3782 = vmatpush.msra.mxu0 0.0
    %3783 = vmatpush.msra.mxu0 0.0
    %3784 = vmatpush.msra.mxu0 0.0
    %3785 = vmatpush.msra.mxu0 0.0
    %3786 = vmatpush.msra.mxu0 0.0
    %3787 = vmatpush.msra.mxu0 0.0
    %3788 = vmatpush.msra.mxu0 %v3768
    %3789 = vmatmul.f32.gmra.mxu0 %v3771
    %v3790 = vpop.f32.mrf.mxu0
    %v3791 = vadd.f32 0.0, %v3790
    %3792 = vdwg.mxu0
    %3793 = vrot.lane.b32.xlu0 %v3621, 96
    %v3794 = vpop.permute.xlu0 %3793
    %v3797 = vsel %vm110, %v3764, 0
    %3799 = vmatpush.msra.mxu0 0.0
    %3800 = vmatpush.msra.mxu0 0.0
    %3801 = vmatpush.msra.mxu0 0.0
    %3802 = vmatpush.msra.mxu0 0.0
    %3803 = vmatpush.msra.mxu0 0.0
    %3804 = vmatpush.msra.mxu0 0.0
    %3805 = vmatpush.msra.mxu0 0.0
    %3806 = vmatpush.msra.mxu0 0.0
    %3807 = vmatpush.msra.mxu0 0.0
    %3808 = vmatpush.msra.mxu0 0.0
    %3809 = vmatpush.msra.mxu0 0.0
    %3810 = vmatpush.msra.mxu0 0.0
    %3811 = vmatpush.msra.mxu0 0.0
    %3812 = vmatpush.msra.mxu0 0.0
    %3813 = vmatpush.msra.mxu0 0.0
    %3814 = vmatpush.msra.mxu0 %v3794
    %3815 = vmatmul.f32.gmra.mxu0 %v3797
    %v3816 = vpop.f32.mrf.mxu0
    %v3817 = vadd.f32 0.0, %v3816
    %3818 = vdwg.mxu0
    %3819 = vrot.lane.b32.xlu0 %v3623, 96
    %v3820 = vpop.permute.xlu0 %3819
    %v3823 = vsel %vm110, %v3765, 0
    %3825 = vmatpush.msra.mxu0 0.0
    %3826 = vmatpush.msra.mxu0 0.0
    %3827 = vmatpush.msra.mxu0 0.0
    %3828 = vmatpush.msra.mxu0 0.0
    %3829 = vmatpush.msra.mxu0 0.0
    %3830 = vmatpush.msra.mxu0 0.0
    %3831 = vmatpush.msra.mxu0 0.0
    %3832 = vmatpush.msra.mxu0 0.0
    %3833 = vmatpush.msra.mxu0 0.0
    %3834 = vmatpush.msra.mxu0 0.0
    %3835 = vmatpush.msra.mxu0 0.0
    %3836 = vmatpush.msra.mxu0 0.0
    %3837 = vmatpush.msra.mxu0 0.0
    %3838 = vmatpush.msra.mxu0 0.0
    %3839 = vmatpush.msra.mxu0 0.0
    %3840 = vmatpush.msra.mxu0 %v3820
    %3841 = vmatmul.f32.gmra.mxu0 %v3823
    %v3842 = vpop.f32.mrf.mxu0
    %v3843 = vadd.f32 0.0, %v3842
    %3844 = vdwg.mxu0
    %3845 = vrot.lane.b32.xlu0 %v3625, 96
    %v3846 = vpop.permute.xlu0 %3845
    %v3849 = vsel %vm110, %v3766, 0
    %3851 = vmatpush.msra.mxu0 0.0
    %3852 = vmatpush.msra.mxu0 0.0
    %3853 = vmatpush.msra.mxu0 0.0
    %3854 = vmatpush.msra.mxu0 0.0
    %3855 = vmatpush.msra.mxu0 0.0
    %3856 = vmatpush.msra.mxu0 0.0
    %3857 = vmatpush.msra.mxu0 0.0
    %3858 = vmatpush.msra.mxu0 0.0
    %3859 = vmatpush.msra.mxu0 0.0
    %3860 = vmatpush.msra.mxu0 0.0
    %3861 = vmatpush.msra.mxu0 0.0
    %3862 = vmatpush.msra.mxu0 0.0
    %3863 = vmatpush.msra.mxu0 0.0
    %3864 = vmatpush.msra.mxu0 0.0
    %3865 = vmatpush.msra.mxu0 0.0
    %3866 = vmatpush.msra.mxu0 %v3846
    %3867 = vmatmul.f32.gmra.mxu0 %v3849
    %v3868 = vpop.f32.mrf.mxu0
    %v3869 = vadd.f32 0.0, %v3868
    %3870 = vdwg.mxu0
    %3872 = vrot.lane.b32.xlu0 %v3817, 8
    %v3873 = vpop.permute.xlu0 %3872
    %3876 = vrot.lane.b32.xlu0 %v3843, 16
    %v3877 = vpop.permute.xlu0 %3876
    %3880 = vrot.lane.b32.xlu0 %v3869, 24
    %v3881 = vpop.permute.xlu0 %3880
    %v3883 = vsel %vm110, %v3791, %v3873
    %v3884 = vsel %vm374, %v3883, %v3877
    %v3885 = vsel %vm376, %v3884, %v3881
    %3887 = vrot.lane.b32.xlu0 %v3610, 120
    %v3888 = vpop.permute.xlu0 %3887
    %3889 = vrot.lane.b32.xlu0 %v3610, 112
    %v3890 = vpop.permute.xlu0 %3889
    %3891 = vrot.lane.b32.xlu0 %v3610, 104
    %v3892 = vpop.permute.xlu0 %3891
    %3894 = vrot.lane.b32.xlu0 %v3562, 120
    %v3895 = vpop.permute.xlu0 %3894
    %3896 = vrot.lane.b32.xlu0 %v3562, 112
    %v3897 = vpop.permute.xlu0 %3896
    %3898 = vrot.lane.b32.xlu0 %v3562, 104
    %v3899 = vpop.permute.xlu0 %3898
    %v3900 = vld [vmem:[%s1737] sm:$0xff]
    %v3901 = vsel %vm110, %v3610, 0
    %v3903 = vsel %vm110, %v3562, 0
    %3905 = vmatpush.xpose.msra.mxu0 0.0
    %3906 = vmatpush.xpose.msra.mxu0 0.0
    %3907 = vmatpush.xpose.msra.mxu0 0.0
    %3908 = vmatpush.xpose.msra.mxu0 0.0
    %3909 = vmatpush.xpose.msra.mxu0 0.0
    %3910 = vmatpush.xpose.msra.mxu0 0.0
    %3911 = vmatpush.xpose.msra.mxu0 0.0
    %3912 = vmatpush.xpose.msra.mxu0 0.0
    %3913 = vmatpush.xpose.msra.mxu0 0.0
    %3914 = vmatpush.xpose.msra.mxu0 0.0
    %3915 = vmatpush.xpose.msra.mxu0 0.0
    %3916 = vmatpush.xpose.msra.mxu0 0.0
    %3917 = vmatpush.xpose.msra.mxu0 0.0
    %3918 = vmatpush.xpose.msra.mxu0 0.0
    %3919 = vmatpush.xpose.msra.mxu0 0.0
    %3920 = vmatpush.xpose.msra.mxu0 %v3903
    %3921 = vmatmul.f32.gmra.mxu0 %v3901
    %v3922 = vpop.f32.mrf.mxu0
    %v3923 = vadd.f32 %v3900, %v3922
    %3924 = vdwg.mxu0
    %v3925 = vsel %vm110, %v3888, 0
    %v3927 = vsel %vm110, %v3895, 0
    %3929 = vmatpush.xpose.msra.mxu0 0.0
    %3930 = vmatpush.xpose.msra.mxu0 0.0
    %3931 = vmatpush.xpose.msra.mxu0 0.0
    %3932 = vmatpush.xpose.msra.mxu0 0.0
    %3933 = vmatpush.xpose.msra.mxu0 0.0
    %3934 = vmatpush.xpose.msra.mxu0 0.0
    %3935 = vmatpush.xpose.msra.mxu0 0.0
    %3936 = vmatpush.xpose.msra.mxu0 0.0
    %3937 = vmatpush.xpose.msra.mxu0 0.0
    %3938 = vmatpush.xpose.msra.mxu0 0.0
    %3939 = vmatpush.xpose.msra.mxu0 0.0
    %3940 = vmatpush.xpose.msra.mxu0 0.0
    %3941 = vmatpush.xpose.msra.mxu0 0.0
    %3942 = vmatpush.xpose.msra.mxu0 0.0
    %3943 = vmatpush.xpose.msra.mxu0 0.0
    %3944 = vmatpush.xpose.msra.mxu0 %v3927
    %3945 = vmatmul.f32.gmra.mxu0 %v3925
    %v3946 = vpop.f32.mrf.mxu0
    %v3947 = vadd.f32 %v3900, %v3946
    %3948 = vdwg.mxu0
    %v3949 = vsel %vm110, %v3890, 0
    %v3951 = vsel %vm110, %v3897, 0
    %3953 = vmatpush.xpose.msra.mxu0 0.0
    %3954 = vmatpush.xpose.msra.mxu0 0.0
    %3955 = vmatpush.xpose.msra.mxu0 0.0
    %3956 = vmatpush.xpose.msra.mxu0 0.0
    %3957 = vmatpush.xpose.msra.mxu0 0.0
    %3958 = vmatpush.xpose.msra.mxu0 0.0
    %3959 = vmatpush.xpose.msra.mxu0 0.0
    %3960 = vmatpush.xpose.msra.mxu0 0.0
    %3961 = vmatpush.xpose.msra.mxu0 0.0
    %3962 = vmatpush.xpose.msra.mxu0 0.0
    %3963 = vmatpush.xpose.msra.mxu0 0.0
    %3964 = vmatpush.xpose.msra.mxu0 0.0
    %3965 = vmatpush.xpose.msra.mxu0 0.0
    %3966 = vmatpush.xpose.msra.mxu0 0.0
    %3967 = vmatpush.xpose.msra.mxu0 0.0
    %3968 = vmatpush.xpose.msra.mxu0 %v3951
    %3969 = vmatmul.f32.gmra.mxu0 %v3949
    %v3970 = vpop.f32.mrf.mxu0
    %v3971 = vadd.f32 %v3900, %v3970
    %3972 = vdwg.mxu0
    %v3973 = vsel %vm110, %v3892, 0
    %v3975 = vsel %vm110, %v3899, 0
    %3977 = vmatpush.xpose.msra.mxu0 0.0
    %3978 = vmatpush.xpose.msra.mxu0 0.0
    %3979 = vmatpush.xpose.msra.mxu0 0.0
    %3980 = vmatpush.xpose.msra.mxu0 0.0
    %3981 = vmatpush.xpose.msra.mxu0 0.0
    %3982 = vmatpush.xpose.msra.mxu0 0.0
    %3983 = vmatpush.xpose.msra.mxu0 0.0
    %3984 = vmatpush.xpose.msra.mxu0 0.0
    %3985 = vmatpush.xpose.msra.mxu0 0.0
    %3986 = vmatpush.xpose.msra.mxu0 0.0
    %3987 = vmatpush.xpose.msra.mxu0 0.0
    %3988 = vmatpush.xpose.msra.mxu0 0.0
    %3989 = vmatpush.xpose.msra.mxu0 0.0
    %3990 = vmatpush.xpose.msra.mxu0 0.0
    %3991 = vmatpush.xpose.msra.mxu0 0.0
    %3992 = vmatpush.xpose.msra.mxu0 %v3975
    %3993 = vmatmul.f32.gmra.mxu0 %v3973
    %v3994 = vpop.f32.mrf.mxu0
    %v3995 = vadd.f32 %v3900, %v3994
    %3996 = vdwg.mxu0
    %v3997 = vsel %vm110, %v3923, -inf
    %3998 = vmax.xlane.f32.xlu0 %v3997
    %v3999 = vpop.xlane.xlu0 %3998
    %v4000 = vsel %vm110, %v3947, -inf
    %4001 = vmax.xlane.f32.xlu0 %v4000
    %v4002 = vpop.xlane.xlu0 %4001
    %v4003 = vsel %vm110, %v3971, -inf
    %4004 = vmax.xlane.f32.xlu0 %v4003
    %v4005 = vpop.xlane.xlu0 %4004
    %v4006 = vsel %vm110, %v3995, -inf
    %4007 = vmax.xlane.f32.xlu0 %v4006
    %v4008 = vpop.xlane.xlu0 %4007
    %v4009 = vsub.f32 %v3923, %v3999
    %v4010 = vsub.f32 %v3947, %v4002
    %v4011 = vsub.f32 %v3971, %v4005
    %v4012 = vsub.f32 %v3995, %v4008
    %v4013 = vmul.f32 %v4009, 1.442695
    %v4014 = vpow.pop %v4013
    %v4015 = vmul.f32 %v4010, 1.442695
    %v4016 = vpow.pop %v4015
    %v4017 = vmul.f32 %v4011, 1.442695
    %v4018 = vpow.pop %v4017
    %v4019 = vmul.f32 %v4012, 1.442695
    %v4020 = vpow.pop %v4019
    %v4021 = vsel %vm110, %v4014, 0.0
    %4022 = vadd.xlane.f32.xlu0 %v4021
    %v4023 = vpop.xlane.xlu0 %4022
    %v4024 = vsel %vm110, %v4016, 0.0
    %4025 = vadd.xlane.f32.xlu0 %v4024
    %v4026 = vpop.xlane.xlu0 %4025
    %v4027 = vsel %vm110, %v4018, 0.0
    %4028 = vadd.xlane.f32.xlu0 %v4027
    %v4029 = vpop.xlane.xlu0 %4028
    %v4030 = vsel %vm110, %v4020, 0.0
    %4031 = vadd.xlane.f32.xlu0 %v4030
    %v4032 = vpop.xlane.xlu0 %4031
    %v4033 = vrcp.pop %v4023
    %v4034 = vrcp.pop %v4026
    %v4035 = vrcp.pop %v4029
    %v4036 = vrcp.pop %v4032
    %v4037 = vmul.f32 %v4014, %v4033
    %v4038 = vmul.f32 %v4016, %v4034
    %v4039 = vmul.f32 %v4018, %v4035
    %v4040 = vmul.f32 %v4020, %v4036
    %4041 = vrot.lane.b32.xlu0 %v3562, 96
    %v4042 = vpop.permute.xlu0 %4041
    %v4045 = vsel %vm110, %v4037, 0
    %4047 = vmatpush.msra.mxu0 0.0
    %4048 = vmatpush.msra.mxu0 0.0
    %4049 = vmatpush.msra.mxu0 0.0
    %4050 = vmatpush.msra.mxu0 0.0
    %4051 = vmatpush.msra.mxu0 0.0
    %4052 = vmatpush.msra.mxu0 0.0
    %4053 = vmatpush.msra.mxu0 0.0
    %4054 = vmatpush.msra.mxu0 0.0
    %4055 = vmatpush.msra.mxu0 0.0
    %4056 = vmatpush.msra.mxu0 0.0
    %4057 = vmatpush.msra.mxu0 0.0
    %4058 = vmatpush.msra.mxu0 0.0
    %4059 = vmatpush.msra.mxu0 0.0
    %4060 = vmatpush.msra.mxu0 0.0
    %4061 = vmatpush.msra.mxu0 0.0
    %4062 = vmatpush.msra.mxu0 %v4042
    %4063 = vmatmul.f32.gmra.mxu0 %v4045
    %v4064 = vpop.f32.mrf.mxu0
    %v4065 = vadd.f32 0.0, %v4064
    %4066 = vdwg.mxu0
    %4067 = vrot.lane.b32.xlu0 %v3895, 96
    %v4068 = vpop.permute.xlu0 %4067
    %v4071 = vsel %vm110, %v4038, 0
    %4073 = vmatpush.msra.mxu0 0.0
    %4074 = vmatpush.msra.mxu0 0.0
    %4075 = vmatpush.msra.mxu0 0.0
    %4076 = vmatpush.msra.mxu0 0.0
    %4077 = vmatpush.msra.mxu0 0.0
    %4078 = vmatpush.msra.mxu0 0.0
    %4079 = vmatpush.msra.mxu0 0.0
    %4080 = vmatpush.msra.mxu0 0.0
    %4081 = vmatpush.msra.mxu0 0.0
    %4082 = vmatpush.msra.mxu0 0.0
    %4083 = vmatpush.msra.mxu0 0.0
    %4084 = vmatpush.msra.mxu0 0.0
    %4085 = vmatpush.msra.mxu0 0.0
    %4086 = vmatpush.msra.mxu0 0.0
    %4087 = vmatpush.msra.mxu0 0.0
    %4088 = vmatpush.msra.mxu0 %v4068
    %4089 = vmatmul.f32.gmra.mxu0 %v4071
    %v4090 = vpop.f32.mrf.mxu0
    %v4091 = vadd.f32 0.0, %v4090
    %4092 = vdwg.mxu0
    %4093 = vrot.lane.b32.xlu0 %v3897, 96
    %v4094 = vpop.permute.xlu0 %4093
    %v4097 = vsel %vm110, %v4039, 0
    %4099 = vmatpush.msra.mxu0 0.0
    %4100 = vmatpush.msra.mxu0 0.0
    %4101 = vmatpush.msra.mxu0 0.0
    %4102 = vmatpush.msra.mxu0 0.0
    %4103 = vmatpush.msra.mxu0 0.0
    %4104 = vmatpush.msra.mxu0 0.0
    %4105 = vmatpush.msra.mxu0 0.0
    %4106 = vmatpush.msra.mxu0 0.0
    %4107 = vmatpush.msra.mxu0 0.0
    %4108 = vmatpush.msra.mxu0 0.0
    %4109 = vmatpush.msra.mxu0 0.0
    %4110 = vmatpush.msra.mxu0 0.0
    %4111 = vmatpush.msra.mxu0 0.0
    %4112 = vmatpush.msra.mxu0 0.0
    %4113 = vmatpush.msra.mxu0 0.0
    %4114 = vmatpush.msra.mxu0 %v4094
    %4115 = vmatmul.f32.gmra.mxu0 %v4097
    %v4116 = vpop.f32.mrf.mxu0
    %v4117 = vadd.f32 0.0, %v4116
    %4118 = vdwg.mxu0
    %4119 = vrot.lane.b32.xlu0 %v3899, 96
    %v4120 = vpop.permute.xlu0 %4119
    %v4123 = vsel %vm110, %v4040, 0
    %4125 = vmatpush.msra.mxu0 0.0
    %4126 = vmatpush.msra.mxu0 0.0
    %4127 = vmatpush.msra.mxu0 0.0
    %4128 = vmatpush.msra.mxu0 0.0
    %4129 = vmatpush.msra.mxu0 0.0
    %4130 = vmatpush.msra.mxu0 0.0
    %4131 = vmatpush.msra.mxu0 0.0
    %4132 = vmatpush.msra.mxu0 0.0
    %4133 = vmatpush.msra.mxu0 0.0
    %4134 = vmatpush.msra.mxu0 0.0
    %4135 = vmatpush.msra.mxu0 0.0
    %4136 = vmatpush.msra.mxu0 0.0
    %4137 = vmatpush.msra.mxu0 0.0
    %4138 = vmatpush.msra.mxu0 0.0
    %4139 = vmatpush.msra.mxu0 0.0
    %4140 = vmatpush.msra.mxu0 %v4120
    %4141 = vmatmul.f32.gmra.mxu0 %v4123
    %v4142 = vpop.f32.mrf.mxu0
    %v4143 = vadd.f32 0.0, %v4142
    %4144 = vdwg.mxu0
    %4146 = vrot.lane.b32.xlu0 %v4091, 8
    %v4147 = vpop.permute.xlu0 %4146
    %4150 = vrot.lane.b32.xlu0 %v4117, 16
    %v4151 = vpop.permute.xlu0 %4150
    %4154 = vrot.lane.b32.xlu0 %v4143, 24
    %v4155 = vpop.permute.xlu0 %4154
    %v4157 = vsel %vm110, %v4065, %v4147
    %v4158 = vsel %vm374, %v4157, %v4151
    %v4159 = vsel %vm376, %v4158, %v4155
    %4160 = vrot.lane.b32.xlu0 %v2218, 32
    %v4161 = vpop.permute.xlu0 %4160
    %4162 = vrot.lane.b32.xlu0 %v2219, 32
    %v4163 = vpop.permute.xlu0 %4162
    %4164 = vrot.lane.b32.xlu0 %v2220, 32
    %v4165 = vpop.permute.xlu0 %4164
    %4166 = vrot.lane.b32.xlu0 %v2221, 32
    %v4167 = vpop.permute.xlu0 %4166
    %4172 = vrot.lane.b32.xlu0 %v3539, 32
    %v4173 = vpop.permute.xlu0 %4172
    %v4176 = vsel %vm70, %v3885, 0
    %v4179 = vsel %vm70, %v4159, 0
    %4181 = vmatpush.msra.mxu0 0.0
    %4182 = vmatpush.msra.mxu0 0.0
    %4183 = vmatpush.msra.mxu0 0.0
    %4184 = vmatpush.msra.mxu0 0.0
    %4185 = vmatpush.msra.mxu0 0.0
    %4186 = vmatpush.msra.mxu0 0.0
    %4187 = vmatpush.msra.mxu0 0.0
    %4188 = vmatpush.msra.mxu0 0.0
    %4189 = vmatpush.msra.mxu0 0.0
    %4190 = vmatpush.msra.mxu0 0.0
    %4191 = vmatpush.msra.mxu0 0.0
    %4192 = vmatpush.msra.mxu0 0.0
    %4193 = vmatpush.msra.mxu0 %v4167
    %4194 = vmatpush.msra.mxu0 %v4165
    %4195 = vmatpush.msra.mxu0 %v4163
    %4196 = vmatpush.msra.mxu0 %v4161
    %4197 = vmatmul.f32.gmra.mxu0 %v4176
    %v4198 = vpop.f32.mrf.mxu0
    %v4199 = vadd.f32 %v4173, %v4198
    %4200 = vmatmul.f32.gmra.mxu0 %v4179
    %v4201 = vpop.f32.mrf.mxu0
    %v4202 = vadd.f32 %v4173, %v4201
    %4203 = vdwg.mxu0
    %v4204 = vadd.f32 %v4199, %v3536
    %v4205 = vadd.f32 %v4202, %v3537
    %v4206 = vsel %vm70, %v4204, 0.0
    %4207 = vadd.xlane.f32.xlu0 %v4206
    %v4208 = vpop.xlane.xlu0 %4207
    %v4209 = vsel %vm70, %v4205, 0.0
    %4210 = vadd.xlane.f32.xlu0 %v4209
    %v4211 = vpop.xlane.xlu0 %4210
    %v4212 = vmul.f32 %v4208, %v1324
    %v4213 = vmul.f32 %v4211, %v1324
    %v4214 = vsub.f32 %v4204, %v4212
    %v4215 = vsub.f32 %v4205, %v4213
    %v4216 = vmul.f32 %v4214, %v4214
    %v4217 = vmul.f32 %v4215, %v4215
    %v4218 = vsel %vm70, %v4216, 0.0
    %4219 = vadd.xlane.f32.xlu0 %v4218
    %v4220 = vpop.xlane.xlu0 %4219
    %v4221 = vsel %vm70, %v4217, 0.0
    %4222 = vadd.xlane.f32.xlu0 %v4221
    %v4223 = vpop.xlane.xlu0 %4222
    %v4224 = vmul.f32 %v4220, %v1324
    %v4225 = vmul.f32 %v4223, %v1324
    %v4226 = vadd.f32 %v4224, 1e-05
    %v4227 = vadd.f32 %v4225, 1e-05
    %v4228 = vrsqrt.pop %v4226
    %v4229 = vmul.f32 %v4228, %v4226
    %v4230 = vmul.f32 %v4229, %v4228
    %v4231 = vmul.f32 0.5, %v4230
    %v4232 = vsub.f32 1.5, %v4231
    %v4233 = vmul.f32 %v4228, %v4232
    %vm4234 = vweird.f32 %v4226
    %vm4235 = vweird.f32 %v4228
    %vm4236 = vmor %vm4234, %vm4235
    %v4237 = vsel %vm4236, %v4228, %v4233
    %v4238 = vrsqrt.pop %v4227
    %v4239 = vmul.f32 %v4238, %v4227
    %v4240 = vmul.f32 %v4239, %v4238
    %v4241 = vmul.f32 0.5, %v4240
    %v4242 = vsub.f32 1.5, %v4241
    %v4243 = vmul.f32 %v4238, %v4242
    %vm4244 = vweird.f32 %v4227
    %vm4245 = vweird.f32 %v4238
    %vm4246 = vmor %vm4244, %vm4245
    %v4247 = vsel %vm4246, %v4238, %v4243
    %v4248 = vmul.f32 %v4214, %v4237
    %v4249 = vmul.f32 %v4215, %v4247
    %v4250 = vperm.slane %v2244, 0
    %v4251 = vmul.f32 %v4250, %v4248
    %v4252 = vmul.f32 %v4250, %v4249
    %v4253 = vperm.slane %v2245, 0
    %v4254 = vadd.f32 %v4251, %v4253
    %v4255 = vadd.f32 %v4252, %v4253
    %v4257 = vperm.slane %v2229, 0
    %v4260 = vsel %vm70, %v4254, 0
    %v4263 = vsel %vm70, %v4255, 0
    %4265 = vmatpush.msra.mxu0 0.0
    %4266 = vmatpush.msra.mxu0 0.0
    %4267 = vmatpush.msra.mxu0 0.0
    %4268 = vmatpush.msra.mxu0 0.0
    %4269 = vmatpush.msra.mxu0 0.0
    %4270 = vmatpush.msra.mxu0 0.0
    %4271 = vmatpush.msra.mxu0 0.0
    %4272 = vmatpush.msra.mxu0 0.0
    %4273 = vmatpush.msra.mxu0 0.0
    %4274 = vmatpush.msra.mxu0 0.0
    %4275 = vmatpush.msra.mxu0 0.0
    %4276 = vmatpush.msra.mxu0 0.0
    %4277 = vmatpush.msra.mxu0 %v2225
    %4278 = vmatpush.msra.mxu0 %v2224
    %4279 = vmatpush.msra.mxu0 %v2223
    %4280 = vmatpush.msra.mxu0 %v2222
    %4281 = vmatmul.f32.gmra.mxu0 %v4260
    %v4282 = vpop.f32.mrf.mxu0
    %v4283 = vadd.f32 %v4257, %v4282
    %4284 = vmatmul.f32.gmra.mxu0 %v4263
    %v4285 = vpop.f32.mrf.mxu0
    %v4286 = vadd.f32 %v4257, %v4285
    %4287 = vdwg.mxu0
    %v4288 = vmax.f32 %v4283, 0.0
    %v4289 = vmax.f32 %v4286, 0.0
    %v4291 = vperm.slane %v2240, 0
    %v4294 = vsel %vm2131, %v4288, 0
    %v4297 = vsel %vm2131, %v4289, 0
    %4299 = vmatpush.msra.mxu0 0.0
    %4300 = vmatpush.msra.mxu0 0.0
    %4301 = vmatpush.msra.mxu0 0.0
    %4302 = vmatpush.msra.mxu0 0.0
    %4303 = vmatpush.msra.mxu0 0.0
    %4304 = vmatpush.msra.mxu0 0.0
    %4305 = vmatpush.msra.mxu0 0.0
    %4306 = vmatpush.msra.mxu0 0.0
    %4307 = vmatpush.msra.mxu0 %v2238
    %4308 = vmatpush.msra.mxu0 %v2237
    %4309 = vmatpush.msra.mxu0 %v2236
    %4310 = vmatpush.msra.mxu0 %v2235
    %4311 = vmatpush.msra.mxu0 %v2234
    %4312 = vmatpush.msra.mxu0 %v2233
    %4313 = vmatpush.msra.mxu0 %v2232
    %4314 = vmatpush.msra.mxu0 %v2231
    %4315 = vmatmul.f32.gmra.mxu0 %v4294
    %v4316 = vpop.f32.mrf.mxu0
    %v4317 = vadd.f32 %v4291, %v4316
    %4318 = vmatmul.f32.gmra.mxu0 %v4297
    %v4319 = vpop.f32.mrf.mxu0
    %v4320 = vadd.f32 %v4291, %v4319
    %4321 = vdwg.mxu0
    %v4322 = vadd.f32 %v4317, %v4254
    %v4323 = vadd.f32 %v4320, %v4255
    %v4324 = vsel %vm70, %v4322, 0.0
    %4325 = vadd.xlane.f32.xlu0 %v4324
    %v4326 = vpop.xlane.xlu0 %4325
    %v4327 = vsel %vm70, %v4323, 0.0
    %4328 = vadd.xlane.f32.xlu0 %v4327
    %v4329 = vpop.xlane.xlu0 %4328
    %v4330 = vmul.f32 %v4326, %v1324
    %v4331 = vmul.f32 %v4329, %v1324
    %v4332 = vsub.f32 %v4322, %v4330
    %v4333 = vsub.f32 %v4323, %v4331
    %v4334 = vmul.f32 %v4332, %v4332
    %v4335 = vmul.f32 %v4333, %v4333
    %v4336 = vsel %vm70, %v4334, 0.0
    %4337 = vadd.xlane.f32.xlu0 %v4336
    %v4338 = vpop.xlane.xlu0 %4337
    %v4339 = vsel %vm70, %v4335, 0.0
    %4340 = vadd.xlane.f32.xlu0 %v4339
    %v4341 = vpop.xlane.xlu0 %4340
    %v4342 = vmul.f32 %v4338, %v1324
    %v4343 = vmul.f32 %v4341, %v1324
    %v4344 = vadd.f32 %v4342, 1e-05
    %v4345 = vadd.f32 %v4343, 1e-05
    %v4346 = vrsqrt.pop %v4344
    %v4347 = vmul.f32 %v4346, %v4344
    %v4348 = vmul.f32 %v4347, %v4346
    %v4349 = vmul.f32 0.5, %v4348
    %v4350 = vsub.f32 1.5, %v4349
    %v4351 = vmul.f32 %v4346, %v4350
    %vm4352 = vweird.f32 %v4344
    %vm4353 = vweird.f32 %v4346
    %vm4354 = vmor %vm4352, %vm4353
    %v4355 = vsel %vm4354, %v4346, %v4351
    %v4356 = vrsqrt.pop %v4345
    %v4357 = vmul.f32 %v4356, %v4345
    %v4358 = vmul.f32 %v4357, %v4356
    %v4359 = vmul.f32 0.5, %v4358
    %v4360 = vsub.f32 1.5, %v4359
    %v4361 = vmul.f32 %v4356, %v4360
    %vm4362 = vweird.f32 %v4345
    %vm4363 = vweird.f32 %v4356
    %vm4364 = vmor %vm4362, %vm4363
    %v4365 = vsel %vm4364, %v4356, %v4361
    %v4366 = vmul.f32 %v4332, %v4355
    %v4367 = vmul.f32 %v4333, %v4365
    %v4368 = vperm.slane %v2246, 0
    %v4369 = vmul.f32 %v4368, %v4366
    %v4370 = vmul.f32 %v4368, %v4367
    %v4371 = vperm.slane %v2247, 0
    %v4372 = vadd.f32 %v4369, %v4371
    %v4373 = vadd.f32 %v4370, %v4371
    %4374 = vst.msk [vmem:[#allocation2] sm:$0xff] %vm70, %v4372
    %4375 = vst.msk [vmem:[#allocation2 + $0x8] sm:$0xff] %vm70, %v4373
    // Predicated region
    $region38: #{_forward_jit.1} parent=1 // pred_check
      _
    $region39: #{_forward_jit.1} parent=1 // pred_check_branch
      %4377 = sbr.rel (0) target = $region41
    $region40: #{_forward_jit.1} parent=1 // pred_region
      %4379 = vsyncadd [#allocation3], 0
      %s4380 = sshll.u32 [#allocation2], 4
      %s4381 = int_to_ptr.vmem [resolvable:$true] %s4380
      %s4382 = sshll.u32 %s9, 4
      %s4383 = int_to_ptr.hbm [resolvable:$true] %s4382
      %4388 = dma.vmem_to_hbm [thread:$0]  %s4381, 256, %s4383, [#allocation3], 128, 128, 8
    $region41: #{_forward_jit.1} parent=1 // pred_fallthru
      _
    // Predicated region
    $region42: #{_forward_jit.1} parent=1 // pred_check
      _
    $region43: #{_forward_jit.1} parent=1 // pred_check_branch
      %4390 = sbr.rel (0) target = $region45
    $region44: #{_forward_jit.1} parent=1 // pred_region
      %4392 = dma.done [#allocation3], 256
    $region45: #{_forward_jit.1} parent=1 // pred_fallthru
      _
    %4393 = vsyncpa [#allocation3], 1

</llo_original>
